<compile_context>
chip_gen: v7x
topology: tpu7x:2x2x1
jax: 0.10.0
libtpu: 0.0.40
codegen_flags: <defaults>
</compile_context>

<pallas_src>
import functools

import jax
import jax.numpy as jnp
from jax.experimental import pallas as pl
from jax.experimental.pallas import tpu as pltpu

# ----------------------------- configuration ------------------------------
DIM = 32                      # pairwise channel dim d
HEADS = 4                     # attention heads
DIM_HEAD = 32                 # per-head dim
DIM_INNER = HEADS * DIM_HEAD  # 128
SCALE = DIM_HEAD ** -0.5
NEG_INF = -1e9
VMEM_LIMIT = 32 * 1024 * 1024


# ------------------------------- kernels ----------------------------------
def bias_kernel(x_ref, wbt_ref, o_ref):
    # x_ref:   (1, TB, N, D)  tile of rows of the pairwise map
    # wbt_ref: (H, D)         to_attn_bias weight, pre-transposed, bf16
    # o_ref:   (1, H, TB*N)   head-major, lane-dense bias output (bf16)
    tb, n, d = x_ref.shape[1], x_ref.shape[2], x_ref.shape[3]
    x2 = x_ref[0].reshape(tb * n, d).astype(jnp.bfloat16)          # (T, D)
    # (H, D) contracted with (T, D) over D -> (H, T): head-major result, no
    # in-kernel transpose, lane-dense store.
    y = jnp.einsum("hd,td->ht", wbt_ref[...], x2,
                   preferred_element_type=jnp.float32)             # (H, T) f32
    o_ref[0] = y.astype(o_ref.dtype)


def _attn_body(x_ref, bias_ref, mask_ref, wqkvg_ref, wo_ref, o_ref):
    # x_ref:     (1, TI, N, D)        tile of rows of the pairwise map
    # bias_ref:  (1, H, N, N) bf16    full per-batch attention bias
    # mask_ref:  (1, 1, N) f32 / None key mask (1 keep / 0 drop)
    # wqkvg_ref: (D, 4*DIM_INNER) bf16 fused q|k|v|gate projection (q pre-scaled)
    # wo_ref:    (DIM_INNER, D) bf16   output projection
    # o_ref:     (1, TI, N, D)
    ti, n, d = x_ref.shape[1], x_ref.shape[2], x_ref.shape[3]
    t = ti * n

    # Fused projection for every row position in the tile (one wide MXU matmul).
    x2 = x_ref[0].reshape(t, d).astype(jnp.bfloat16)                # (T, D)
    proj = jnp.dot(x2, wqkvg_ref[...],
                   preferred_element_type=jnp.float32)              # (T, 4*DI) f32
    proj = proj.reshape(ti, n, 4 * DIM_INNER)                        # (TI, N, 4*DI)

    # All output gates in a single dense EUP pass (full 128-lane vregs).
    gate_all = jax.nn.sigmoid(
        proj[:, :, 3 * DIM_INNER:4 * DIM_INNER])                     # (TI, N, DI) f32

    if mask_ref is not None:
        mkeep = mask_ref[0]                                          # (1, N)
        mask_bias = jnp.where(mkeep > 0.5, 0.0, NEG_INF)             # (1, N) f32

    acc = None
    for h in range(HEADS):
        qs = 0 * DIM_INNER + h * DIM_HEAD
        ks = 1 * DIM_INNER + h * DIM_HEAD
        vs = 2 * DIM_INNER + h * DIM_HEAD

        # scale already folded into the q columns of wqkvg.
        qh = proj[:, :, qs:qs + DIM_HEAD].astype(jnp.bfloat16)
        kh = proj[:, :, ks:ks + DIM_HEAD].astype(jnp.bfloat16)
        vh = proj[:, :, vs:vs + DIM_HEAD].astype(jnp.bfloat16)
        gh = gate_all[:, :, h * DIM_HEAD:(h + 1) * DIM_HEAD]         # (TI, N, Dh) f32

        # logits for every row in the tile (batched over rows).
        s = jnp.einsum("rqc,rkc->rqk", qh, kh,
                       preferred_element_type=jnp.float32)           # (TI, N, N) f32
        s = s + bias_ref[0, h].astype(jnp.float32)                   # bcast (N, N)
        if mask_ref is not None:
            s = s + mask_bias                                        # bcast keys

        # numerically-stable softmax, normalisation deferred past the PV matmul.
        s = s - jnp.max(s, axis=-1, keepdims=True)
        p = jnp.exp(s)                                               # f32
        denom = jnp.sum(p, axis=-1, keepdims=True)                   # (TI, N, 1)
        oh = jnp.einsum("rqk,rkc->rqc", p.astype(jnp.bfloat16), vh,
                        preferred_element_type=jnp.float32)          # (TI, N, Dh)
        oh = oh * pl.reciprocal(denom, approx=True)

        # fold gate + out-projection per head (no concatenate of head outputs).
        gated = (gh * oh).astype(jnp.bfloat16).reshape(t, DIM_HEAD)  # (T, Dh)
        term = jnp.dot(gated, wo_ref[h * DIM_HEAD:(h + 1) * DIM_HEAD, :],
                       preferred_element_type=jnp.float32)           # (T, D)
        acc = term if acc is None else acc + term

    o_ref[0] = acc.reshape(ti, n, d).astype(o_ref.dtype)


def attn_kernel_nomask(x_ref, bias_ref, wqkvg_ref, wo_ref, o_ref):
    _attn_body(x_ref, bias_ref, None, wqkvg_ref, wo_ref, o_ref)


def attn_kernel_mask(x_ref, bias_ref, mask_ref, wqkvg_ref, wo_ref, o_ref):
    _attn_body(x_ref, bias_ref, mask_ref, wqkvg_ref, wo_ref, o_ref)


# ----------------------------- tile selection ------------------------------
def _pick_bias_tile(i_dim, n_dim):
    # Largest divisor TB of I whose f32 input slab stays under ~2 MiB while the
    # flattened output width TB*N is lane-aligned (or TB == I).
    budget = 2 * 1024 * 1024
    divs = [d for d in range(1, i_dim + 1) if i_dim % d == 0]
    valid = [d for d in divs if (d * n_dim) % 128 == 0 or d == i_dim]
    fit = [d for d in valid if d * n_dim * DIM * 4 <= budget]
    return fit[-1] if fit else valid[0]


def _pick_row_tile(i_dim, n_dim):
    # Row tile TI for the attention pass: aim for >= 512 flattened rows per step
    # (MXU M-dim / step-overhead amortization) while keeping the f32 score tile
    # (TI, N, N) under ~4 MiB.
    max_ti = max(1, (4 * 1024 * 1024) // (n_dim * n_dim * 4))
    best = 1
    for d in range(1, i_dim + 1):
        if i_dim % d == 0 and d <= max_ti:
            best = d
            if d * n_dim >= 512:
                break
    return best


# ------------------------------- wrapper -----------------------------------
def init_params(key):
    ks = jax.random.split(key, 6)

    def linear(k, fan_in, fan_out):
        lim = 1.0 / jnp.sqrt(fan_in)
        return jax.random.uniform(k, (fan_in, fan_out), jnp.float32, -lim, lim)

    return {
        "wb": linear(ks[0], DIM, HEADS),       # to_attn_bias (LinearNoBias dim->heads)
        "wq": linear(ks[1], DIM, DIM_INNER),
        "wk": linear(ks[2], DIM, DIM_INNER),
        "wv": linear(ks[3], DIM, DIM_INNER),
        "wg": linear(ks[4], DIM, DIM_INNER),   # output gates
        "wo": linear(ks[5], DIM_INNER, DIM),   # to_out
    }


@functools.partial(jax.jit, static_argnames=("node_type",))
def triangle_attention(pairwise, params, mask=None, node_type="starting"):
    # pairwise: (B, I, J, D) float32, square (I == J); mask: optional (B, J).
    if node_type == "ending":
        pairwise = jnp.transpose(pairwise, (0, 2, 1, 3))

    B, I, N, D = pairwise.shape
    assert I == N and D == DIM

    # Fused / pre-cast weights (tiny one-time XLA ops inside the jit).
    # softmax scale folded into the q columns.
    wqkvg = jnp.concatenate(
        [params["wq"] * SCALE, params["wk"], params["wv"], params["wg"]], axis=1
    ).astype(jnp.bfloat16)                                   # (D, 4*DIM_INNER)
    wo = params["wo"].astype(jnp.bfloat16)                   # (DIM_INNER, D)
    wbt = params["wb"].T.astype(jnp.bfloat16)                # (HEADS, D)

    # ---- attn_bias: LinearNoBias(dim, heads), emitted head-major & lane-dense --
    TB = _pick_bias_tile(I, N)
    bias_flat = pl.pallas_call(
        bias_kernel,
        out_shape=jax.ShapeDtypeStruct((B, HEADS, I * N), jnp.bfloat16),
        grid=(B, I // TB),
        in_specs=[
            pl.BlockSpec((1, TB, N, D), lambda b, t: (b, t, 0, 0)),
            pl.BlockSpec((HEADS, D), lambda b, t: (0, 0)),
        ],
        out_specs=pl.BlockSpec((1, HEADS, TB * N), lambda b, t: (b, 0, t)),
        compiler_params=pltpu.CompilerParams(
            dimension_semantics=("parallel", "parallel"),
            vmem_limit_bytes=VMEM_LIMIT),
    )(pairwise, wbt)
    # free (metadata-only) reshape: (B, H, I*N) -> (B, H, I, N); no HBM transpose.
    attn_bias = bias_flat.reshape(B, HEADS, I, N)

    # ---- gated multi-head attention over row tiles (packed '* n d') ----
    TI = _pick_row_tile(I, N)
    x_spec = pl.BlockSpec((1, TI, N, D), lambda b, i: (b, i, 0, 0))
    bias_spec = pl.BlockSpec((1, HEADS, N, N), lambda b, i: (b, 0, 0, 0))
    w_specs = [
        pl.BlockSpec((D, 4 * DIM_INNER), lambda b, i: (0, 0)),
        pl.BlockSpec((DIM_INNER, D), lambda b, i: (0, 0)),
    ]

    if mask is None:
        kernel = attn_kernel_nomask
        in_specs = [x_spec, bias_spec] + w_specs
        args = (pairwise, attn_bias, wqkvg, wo)
    else:
        kernel = attn_kernel_mask
        mask3 = mask.astype(jnp.float32).reshape(B, 1, N)
        mask_spec = pl.BlockSpec((1, 1, N), lambda b, i: (b, 0, 0))
        in_specs = [x_spec, bias_spec, mask_spec] + w_specs
        args = (pairwise, attn_bias, mask3, wqkvg, wo)

    out = pl.pallas_call(
        kernel,
        out_shape=jax.ShapeDtypeStruct((B, I, N, D), pairwise.dtype),
        grid=(B, I // TI),
        in_specs=in_specs,
        out_specs=pl.BlockSpec((1, TI, N, D), lambda b, i: (b, i, 0, 0)),
        compiler_params=pltpu.CompilerParams(
            dimension_semantics=("parallel", "parallel"),
            vmem_limit_bytes=VMEM_LIMIT),
    )(*args)

    if node_type == "ending":
        out = jnp.transpose(out, (0, 2, 1, 3))

    # Dropout(prob=0.0, dropout_type=...) is the identity in eval / prob==0.
    # TODO(synk): structured row/col dropout for prob > 0 (stochastic, training-only).
    return out


# ----------------------------- pure-JAX reference ---------------------------
def triangle_attention_ref(pairwise, params, mask=None, node_type="starting"):
    if node_type == "ending":
        pairwise = jnp.transpose(pairwise, (0, 2, 1, 3))
    B, I, N, D = pairwise.shape

    bias = jnp.einsum("bind,dh->bhin", pairwise, params["wb"])       # (B,H,N,N)
    q = jnp.einsum("bind,de->bine", pairwise, params["wq"]) * SCALE
    k = jnp.einsum("bind,de->bine", pairwise, params["wk"])
    v = jnp.einsum("bind,de->bine", pairwise, params["wv"])
    g = jax.nn.sigmoid(jnp.einsum("bind,de->bine", pairwise, params["wg"]))

    def split(t):
        return t.reshape(B, I, N, HEADS, DIM_HEAD)

    qh, kh, vh, gh = map(split, (q, k, v, g))
    s = jnp.einsum("biqhc,bikhc->bhiqk", qh, kh)                     # (B,H,I,N,N)
    s = s + bias[:, :, None, :, :]
    if mask is not None:
        mb = jnp.where(mask.astype(jnp.float32)[:, None, None, None, :] > 0.5,
                       0.0, NEG_INF)
        s = s + mb
    p = jax.nn.softmax(s, axis=-1)
    o = jnp.einsum("bhiqk,bikhc->biqhc", p, vh)                      # (B,I,N,H,C)
    o = (o * gh).reshape(B, I, N, DIM_INNER)
    out = jnp.einsum("bine,ed->bind", o, params["wo"])
    if node_type == "ending":
        out = jnp.transpose(out, (0, 2, 1, 3))
    return out


# --------------------------------- demo ------------------------------------
if __name__ == "__main__":
    key = jax.random.PRNGKey(0)
    k_param, k_x = jax.random.split(key)

    B, N = 2, 16
    params = init_params(k_param)
    pairwise = jax.random.normal(k_x, (B, N, N, DIM), jnp.float32)
    mask = jnp.arange(N)[None, :] < jnp.array([[12], [16]])          # (B, N) bool

    cases = [
        (None, "starting"),
        (mask, "starting"),
        (mask, "ending"),
    ]
    for m, nt in cases:
        out = triangle_attention(pairwise, params, m, node_type=nt)
        out = jax.block_until_ready(out)
        assert out.shape == (B, N, N, DIM)
        assert bool(jnp.all(jnp.isfinite(out)))
        ref = triangle_attention_ref(pairwise, params, m, node_type=nt)
        err = float(jnp.max(jnp.abs(out - ref)))
        assert err < 1e-1, f"max abs err {err} (mask={m is not None}, {nt})"

    print("KERNEL_OK")
</pallas_src>

<mosaic_0001>
module attributes {stable_mosaic.version = 11 : i64} {
  func.func @bias_kernel(%arg0: i32, %arg1: i32, %arg2: memref<1x16x16x32xf32, #tpu.memory_space<vmem>>, %arg3: memref<4x32xbf16, #tpu.memory_space<vmem>>, %arg4: memref<1x4x256xbf16, #tpu.memory_space<vmem>>) attributes {dimension_semantics = [#tpu.dimension_semantics<parallel>, #tpu.dimension_semantics<parallel>], iteration_bounds = array<i64: 2, 1>, scalar_prefetch = 0 : i64, scratch_operands = 0 : i64, tpu.core_type = #tpu.core_type<tc>, window_params = [{transform_indices = @transform_0, window_bounds = array<i64: 1, 16, 16, 32>}, {pipeline_mode = #tpu.pipeline_mode<synchronous>, transform_indices = @transform_1, window_bounds = array<i64: 4, 32>}, {transform_indices = @transform_2, window_bounds = array<i64: 1, 4, 256>}]} {
    %c0 = arith.constant 0 : index
    %c0_0 = arith.constant 0 : index
    %c0_1 = arith.constant 0 : index
    %c0_2 = arith.constant 0 : index
    %0 = vector.load %arg2[%c0, %c0_0, %c0_1, %c0_2] : memref<1x16x16x32xf32, #tpu.memory_space<vmem>>, vector<1x16x16x32xf32>
    %1 = vector.shape_cast %0 : vector<1x16x16x32xf32> to vector<16x16x32xf32>
    %2 = vector.shape_cast %1 : vector<16x16x32xf32> to vector<256x32xf32>
    %3 = arith.truncf %2 : vector<256x32xf32> to vector<256x32xbf16>
    %c0_3 = arith.constant 0 : index
    %c0_4 = arith.constant 0 : index
    %4 = vector.load %arg3[%c0_3, %c0_4] : memref<4x32xbf16, #tpu.memory_space<vmem>>, vector<4x32xbf16>
    "tpu.trace_start"() <{level = 10 : i32, message = "hd,td->ht"}> : () -> ()
    %cst = arith.constant dense<0.000000e+00> : vector<4x256xf32>
    %5 = tpu.matmul %4, %3, %cst {dimension_numbers = #tpu.dot_dimension_numbers<[1], [1], [0], [0], [0, 0, 1, 0], [], []>} : vector<4x32xbf16>, vector<256x32xbf16>, vector<4x256xf32> -> vector<4x256xf32>
    "tpu.trace_stop"() : () -> ()
    %6 = arith.truncf %5 : vector<4x256xf32> to vector<4x256xbf16>
    %c0_5 = arith.constant 0 : index
    %c0_6 = arith.constant 0 : index
    %c0_7 = arith.constant 0 : index
    %7 = vector.load %arg4[%c0_5, %c0_6, %c0_7] : memref<1x4x256xbf16, #tpu.memory_space<vmem>>, vector<1x4x256xbf16>
    %8 = vector.shape_cast %7 : vector<1x4x256xbf16> to vector<4x256xbf16>
    %9 = vector.shape_cast %6 : vector<4x256xbf16> to vector<1x4x256xbf16>
    tpu.vector_store %arg4[%c0_5, %c0_6, %c0_7], %9 {strides = array<i32>} : memref<1x4x256xbf16, #tpu.memory_space<vmem>>, vector<1x4x256xbf16>,
    return
  }
  func.func @transform_0(%arg0: i32, %arg1: i32) -> (i32, i32, i32, i32) {
    %c0_i32 = arith.constant 0 : i32
    %c0_i32_0 = arith.constant 0 : i32
    %c0_i32_1 = arith.constant 0 : i32
    return %arg0, %arg1, %c0_i32, %c0_i32_0 : i32, i32, i32, i32
  }
  func.func @transform_1(%arg0: i32, %arg1: i32) -> (i32, i32) {
    %c0_i32 = arith.constant 0 : i32
    %c0_i32_0 = arith.constant 0 : i32
    %c0_i32_1 = arith.constant 0 : i32
    return %c0_i32, %c0_i32_0 : i32, i32
  }
  func.func @transform_2(%arg0: i32, %arg1: i32) -> (i32, i32, i32) {
    %c0_i32 = arith.constant 0 : i32
    %c0_i32_0 = arith.constant 0 : i32
    return %arg0, %c0_i32, %arg1 : i32, i32, i32
  }
}

module attributes {stable_mosaic.version = 11 : i64} {
  func.func @attn_kernel_nomask(%arg0: i32, %arg1: i32, %arg2: memref<1x16x16x32xf32, #tpu.memory_space<vmem>>, %arg3: memref<1x4x16x16xbf16, #tpu.memory_space<vmem>>, %arg4: memref<32x512xbf16, #tpu.memory_space<vmem>>, %arg5: memref<128x32xbf16, #tpu.memory_space<vmem>>, %arg6: memref<1x16x16x32xf32, #tpu.memory_space<vmem>>) attributes {dimension_semantics = [#tpu.dimension_semantics<parallel>, #tpu.dimension_semantics<parallel>], iteration_bounds = array<i64: 2, 1>, scalar_prefetch = 0 : i64, scratch_operands = 0 : i64, tpu.core_type = #tpu.core_type<tc>, window_params = [{transform_indices = @transform_0, window_bounds = array<i64: 1, 16, 16, 32>}, {transform_indices = @transform_1, window_bounds = array<i64: 1, 4, 16, 16>}, {pipeline_mode = #tpu.pipeline_mode<synchronous>, transform_indices = @transform_2, window_bounds = array<i64: 32, 512>}, {pipeline_mode = #tpu.pipeline_mode<synchronous>, transform_indices = @transform_3, window_bounds = array<i64: 128, 32>}, {transform_indices = @transform_4, window_bounds = array<i64: 1, 16, 16, 32>}]} {
    %c0 = arith.constant 0 : index
    %c0_0 = arith.constant 0 : index
    %c0_1 = arith.constant 0 : index
    %c0_2 = arith.constant 0 : index
    %0 = vector.load %arg2[%c0, %c0_0, %c0_1, %c0_2] : memref<1x16x16x32xf32, #tpu.memory_space<vmem>>, vector<1x16x16x32xf32>
    %1 = vector.shape_cast %0 : vector<1x16x16x32xf32> to vector<16x16x32xf32>
    %2 = vector.shape_cast %1 : vector<16x16x32xf32> to vector<256x32xf32>
    %3 = arith.truncf %2 : vector<256x32xf32> to vector<256x32xbf16>
    %c0_3 = arith.constant 0 : index
    %c0_4 = arith.constant 0 : index
    %4 = vector.load %arg4[%c0_3, %c0_4] : memref<32x512xbf16, #tpu.memory_space<vmem>>, vector<32x512xbf16>
    %cst = arith.constant dense<0.000000e+00> : vector<256x512xf32>
    %5 = tpu.matmul %3, %4, %cst {dimension_numbers = #tpu.dot_dimension_numbers<[1], [0], [0], [1], [0, 0, 1, 1], [], []>} : vector<256x32xbf16>, vector<32x512xbf16>, vector<256x512xf32> -> vector<256x512xf32>
    %6 = vector.shape_cast %5 : vector<256x512xf32> to vector<16x16x512xf32>
    %7 = vector.extract_strided_slice %6 {offsets = [0, 0, 384], sizes = [16, 16, 128], strides = [1, 1, 1]} : vector<16x16x512xf32> to vector<16x16x128xf32>
    %8 = arith.negf %7 : vector<16x16x128xf32>
    %9 = math.exp %8 : vector<16x16x128xf32>
    %cst_5 = arith.constant 1.000000e+00 : f32
    %10 = vector.broadcast %cst_5 : f32 to vector<16x16x128xf32>
    %11 = arith.addf %10, %9 : vector<16x16x128xf32>
    %12 = arith.divf %10, %11 : vector<16x16x128xf32>
    %13 = vector.extract_strided_slice %6 {offsets = [0, 0, 0], sizes = [16, 16, 32], strides = [1, 1, 1]} : vector<16x16x512xf32> to vector<16x16x32xf32>
    %14 = arith.truncf %13 : vector<16x16x32xf32> to vector<16x16x32xbf16>
    %15 = vector.extract_strided_slice %6 {offsets = [0, 0, 128], sizes = [16, 16, 32], strides = [1, 1, 1]} : vector<16x16x512xf32> to vector<16x16x32xf32>
    %16 = arith.truncf %15 : vector<16x16x32xf32> to vector<16x16x32xbf16>
    %17 = vector.extract_strided_slice %6 {offsets = [0, 0, 256], sizes = [16, 16, 32], strides = [1, 1, 1]} : vector<16x16x512xf32> to vector<16x16x32xf32>
    %18 = arith.truncf %17 : vector<16x16x32xf32> to vector<16x16x32xbf16>
    %19 = vector.extract_strided_slice %12 {offsets = [0, 0, 0], sizes = [16, 16, 32], strides = [1, 1, 1]} : vector<16x16x128xf32> to vector<16x16x32xf32>
    "tpu.trace_start"() <{level = 10 : i32, message = "rqc,rkc->rqk"}> : () -> ()
    %cst_6 = arith.constant dense<0.000000e+00> : vector<16x16x16xf32>
    %20 = tpu.matmul %14, %16, %cst_6 {dimension_numbers = #tpu.dot_dimension_numbers<[2], [2], [1], [1], [0, 0, 0, 1, 1, 1], [0], [0]>} : vector<16x16x32xbf16>, vector<16x16x32xbf16>, vector<16x16x16xf32> -> vector<16x16x16xf32>
    "tpu.trace_stop"() : () -> ()
    %c0_7 = arith.constant 0 : index
    %c0_8 = arith.constant 0 : index
    %c0_9 = arith.constant 0 : index
    %c0_10 = arith.constant 0 : index
    %21 = vector.load %arg3[%c0_7, %c0_8, %c0_9, %c0_10] : memref<1x4x16x16xbf16, #tpu.memory_space<vmem>>, vector<1x1x16x16xbf16>
    %22 = vector.shape_cast %21 : vector<1x1x16x16xbf16> to vector<16x16xbf16>
    %23 = arith.extf %22 : vector<16x16xbf16> to vector<16x16xf32>
    %24 = vector.shape_cast %23 : vector<16x16xf32> to vector<1x16x16xf32>
    %25 = vector.broadcast %24 : vector<1x16x16xf32> to vector<16x16x16xf32>
    %26 = arith.addf %20, %25 : vector<16x16x16xf32>
    %cst_11 = arith.constant dense<0xFF800000> : vector<16x16xf32>
    %27 = vector.multi_reduction <maximumf>, %26, %cst_11 [2] : vector<16x16x16xf32> to vector<16x16xf32>
    %28 = vector.shape_cast %27 : vector<16x16xf32> to vector<16x16x1xf32>
    %29 = vector.broadcast %28 : vector<16x16x1xf32> to vector<16x16x16xf32>
    %30 = arith.subf %26, %29 : vector<16x16x16xf32>
    %31 = math.exp %30 : vector<16x16x16xf32>
    %cst_12 = arith.constant dense<0.000000e+00> : vector<16x16xf32>
    %32 = vector.multi_reduction <add>, %31, %cst_12 [2] : vector<16x16x16xf32> to vector<16x16xf32>
    %33 = vector.shape_cast %32 : vector<16x16xf32> to vector<16x16x1xf32>
    %34 = arith.truncf %31 : vector<16x16x16xf32> to vector<16x16x16xbf16>
    "tpu.trace_start"() <{level = 10 : i32, message = "rqk,rkc->rqc"}> : () -> ()
    %cst_13 = arith.constant dense<0.000000e+00> : vector<16x16x32xf32>
    %35 = tpu.matmul %34, %18, %cst_13 {dimension_numbers = #tpu.dot_dimension_numbers<[2], [1], [1], [2], [0, 0, 0, 1, 1, 2], [0], [0]>} : vector<16x16x16xbf16>, vector<16x16x32xbf16>, vector<16x16x32xf32> -> vector<16x16x32xf32>
    "tpu.trace_stop"() : () -> ()
    %36 = tpu.reciprocal %33 {approx = true} : vector<16x16x1xf32> -> vector<16x16x1xf32>
    %37 = vector.broadcast %36 : vector<16x16x1xf32> to vector<16x16x32xf32>
    %38 = arith.mulf %35, %37 : vector<16x16x32xf32>
    %39 = arith.mulf %19, %38 : vector<16x16x32xf32>
    %40 = arith.truncf %39 : vector<16x16x32xf32> to vector<16x16x32xbf16>
    %41 = vector.shape_cast %40 : vector<16x16x32xbf16> to vector<256x32xbf16>
    %c0_14 = arith.constant 0 : index
    %c0_15 = arith.constant 0 : index
    %42 = vector.load %arg5[%c0_14, %c0_15] : memref<128x32xbf16, #tpu.memory_space<vmem>>, vector<32x32xbf16>
    %cst_16 = arith.constant dense<0.000000e+00> : vector<256x32xf32>
    %43 = tpu.matmul %41, %42, %cst_16 {dimension_numbers = #tpu.dot_dimension_numbers<[1], [0], [0], [1], [0, 0, 1, 1], [], []>} : vector<256x32xbf16>, vector<32x32xbf16>, vector<256x32xf32> -> vector<256x32xf32>
    %44 = vector.extract_strided_slice %6 {offsets = [0, 0, 32], sizes = [16, 16, 32], strides = [1, 1, 1]} : vector<16x16x512xf32> to vector<16x16x32xf32>
    %45 = arith.truncf %44 : vector<16x16x32xf32> to vector<16x16x32xbf16>
    %46 = vector.extract_strided_slice %6 {offsets = [0, 0, 160], sizes = [16, 16, 32], strides = [1, 1, 1]} : vector<16x16x512xf32> to vector<16x16x32xf32>
    %47 = arith.truncf %46 : vector<16x16x32xf32> to vector<16x16x32xbf16>
    %48 = vector.extract_strided_slice %6 {offsets = [0, 0, 288], sizes = [16, 16, 32], strides = [1, 1, 1]} : vector<16x16x512xf32> to vector<16x16x32xf32>
    %49 = arith.truncf %48 : vector<16x16x32xf32> to vector<16x16x32xbf16>
    %50 = vector.extract_strided_slice %12 {offsets = [0, 0, 32], sizes = [16, 16, 32], strides = [1, 1, 1]} : vector<16x16x128xf32> to vector<16x16x32xf32>
    "tpu.trace_start"() <{level = 10 : i32, message = "rqc,rkc->rqk"}> : () -> ()
    %cst_17 = arith.constant dense<0.000000e+00> : vector<16x16x16xf32>
    %51 = tpu.matmul %45, %47, %cst_17 {dimension_numbers = #tpu.dot_dimension_numbers<[2], [2], [1], [1], [0, 0, 0, 1, 1, 1], [0], [0]>} : vector<16x16x32xbf16>, vector<16x16x32xbf16>, vector<16x16x16xf32> -> vector<16x16x16xf32>
    "tpu.trace_stop"() : () -> ()
    %c0_18 = arith.constant 0 : index
    %c1 = arith.constant 1 : index
    %c0_19 = arith.constant 0 : index
    %c0_20 = arith.constant 0 : index
    %52 = vector.load %arg3[%c0_18, %c1, %c0_19, %c0_20] : memref<1x4x16x16xbf16, #tpu.memory_space<vmem>>, vector<1x1x16x16xbf16>
    %53 = vector.shape_cast %52 : vector<1x1x16x16xbf16> to vector<16x16xbf16>
    %54 = arith.extf %53 : vector<16x16xbf16> to vector<16x16xf32>
    %55 = vector.shape_cast %54 : vector<16x16xf32> to vector<1x16x16xf32>
    %56 = vector.broadcast %55 : vector<1x16x16xf32> to vector<16x16x16xf32>
    %57 = arith.addf %51, %56 : vector<16x16x16xf32>
    %cst_21 = arith.constant dense<0xFF800000> : vector<16x16xf32>
    %58 = vector.multi_reduction <maximumf>, %57, %cst_21 [2] : vector<16x16x16xf32> to vector<16x16xf32>
    %59 = vector.shape_cast %58 : vector<16x16xf32> to vector<16x16x1xf32>
    %60 = vector.broadcast %59 : vector<16x16x1xf32> to vector<16x16x16xf32>
    %61 = arith.subf %57, %60 : vector<16x16x16xf32>
    %62 = math.exp %61 : vector<16x16x16xf32>
    %cst_22 = arith.constant dense<0.000000e+00> : vector<16x16xf32>
    %63 = vector.multi_reduction <add>, %62, %cst_22 [2] : vector<16x16x16xf32> to vector<16x16xf32>
    %64 = vector.shape_cast %63 : vector<16x16xf32> to vector<16x16x1xf32>
    %65 = arith.truncf %62 : vector<16x16x16xf32> to vector<16x16x16xbf16>
    "tpu.trace_start"() <{level = 10 : i32, message = "rqk,rkc->rqc"}> : () -> ()
    %cst_23 = arith.constant dense<0.000000e+00> : vector<16x16x32xf32>
    %66 = tpu.matmul %65, %49, %cst_23 {dimension_numbers = #tpu.dot_dimension_numbers<[2], [1], [1], [2], [0, 0, 0, 1, 1, 2], [0], [0]>} : vector<16x16x16xbf16>, vector<16x16x32xbf16>, vector<16x16x32xf32> -> vector<16x16x32xf32>
    "tpu.trace_stop"() : () -> ()
    %67 = tpu.reciprocal %64 {approx = true} : vector<16x16x1xf32> -> vector<16x16x1xf32>
    %68 = vector.broadcast %67 : vector<16x16x1xf32> to vector<16x16x32xf32>
    %69 = arith.mulf %66, %68 : vector<16x16x32xf32>
    %70 = arith.mulf %50, %69 : vector<16x16x32xf32>
    %71 = arith.truncf %70 : vector<16x16x32xf32> to vector<16x16x32xbf16>
    %72 = vector.shape_cast %71 : vector<16x16x32xbf16> to vector<256x32xbf16>
    %c32 = arith.constant 32 : index
    %c0_24 = arith.constant 0 : index
    %73 = vector.load %arg5[%c32, %c0_24] : memref<128x32xbf16, #tpu.memory_space<vmem>>, vector<32x32xbf16>
    %cst_25 = arith.constant dense<0.000000e+00> : vector<256x32xf32>
    %74 = tpu.matmul %72, %73, %cst_25 {dimension_numbers = #tpu.dot_dimension_numbers<[1], [0], [0], [1], [0, 0, 1, 1], [], []>} : vector<256x32xbf16>, vector<32x32xbf16>, vector<256x32xf32> -> vector<256x32xf32>
    %75 = arith.addf %43, %74 : vector<256x32xf32>
    %76 = vector.extract_strided_slice %6 {offsets = [0, 0, 64], sizes = [16, 16, 32], strides = [1, 1, 1]} : vector<16x16x512xf32> to vector<16x16x32xf32>
    %77 = arith.truncf %76 : vector<16x16x32xf32> to vector<16x16x32xbf16>
    %78 = vector.extract_strided_slice %6 {offsets = [0, 0, 192], sizes = [16, 16, 32], strides = [1, 1, 1]} : vector<16x16x512xf32> to vector<16x16x32xf32>
    %79 = arith.truncf %78 : vector<16x16x32xf32> to vector<16x16x32xbf16>
    %80 = vector.extract_strided_slice %6 {offsets = [0, 0, 320], sizes = [16, 16, 32], strides = [1, 1, 1]} : vector<16x16x512xf32> to vector<16x16x32xf32>
    %81 = arith.truncf %80 : vector<16x16x32xf32> to vector<16x16x32xbf16>
    %82 = vector.extract_strided_slice %12 {offsets = [0, 0, 64], sizes = [16, 16, 32], strides = [1, 1, 1]} : vector<16x16x128xf32> to vector<16x16x32xf32>
    "tpu.trace_start"() <{level = 10 : i32, message = "rqc,rkc->rqk"}> : () -> ()
    %cst_26 = arith.constant dense<0.000000e+00> : vector<16x16x16xf32>
    %83 = tpu.matmul %77, %79, %cst_26 {dimension_numbers = #tpu.dot_dimension_numbers<[2], [2], [1], [1], [0, 0, 0, 1, 1, 1], [0], [0]>} : vector<16x16x32xbf16>, vector<16x16x32xbf16>, vector<16x16x16xf32> -> vector<16x16x16xf32>
    "tpu.trace_stop"() : () -> ()
    %c0_27 = arith.constant 0 : index
    %c2 = arith.constant 2 : index
    %c0_28 = arith.constant 0 : index
    %c0_29 = arith.constant 0 : index
    %84 = vector.load %arg3[%c0_27, %c2, %c0_28, %c0_29] : memref<1x4x16x16xbf16, #tpu.memory_space<vmem>>, vector<1x1x16x16xbf16>
    %85 = vector.shape_cast %84 : vector<1x1x16x16xbf16> to vector<16x16xbf16>
    %86 = arith.extf %85 : vector<16x16xbf16> to vector<16x16xf32>
    %87 = vector.shape_cast %86 : vector<16x16xf32> to vector<1x16x16xf32>
    %88 = vector.broadcast %87 : vector<1x16x16xf32> to vector<16x16x16xf32>
    %89 = arith.addf %83, %88 : vector<16x16x16xf32>
    %cst_30 = arith.constant dense<0xFF800000> : vector<16x16xf32>
    %90 = vector.multi_reduction <maximumf>, %89, %cst_30 [2] : vector<16x16x16xf32> to vector<16x16xf32>
    %91 = vector.shape_cast %90 : vector<16x16xf32> to vector<16x16x1xf32>
    %92 = vector.broadcast %91 : vector<16x16x1xf32> to vector<16x16x16xf32>
    %93 = arith.subf %89, %92 : vector<16x16x16xf32>
    %94 = math.exp %93 : vector<16x16x16xf32>
    %cst_31 = arith.constant dense<0.000000e+00> : vector<16x16xf32>
    %95 = vector.multi_reduction <add>, %94, %cst_31 [2] : vector<16x16x16xf32> to vector<16x16xf32>
    %96 = vector.shape_cast %95 : vector<16x16xf32> to vector<16x16x1xf32>
    %97 = arith.truncf %94 : vector<16x16x16xf32> to vector<16x16x16xbf16>
    "tpu.trace_start"() <{level = 10 : i32, message = "rqk,rkc->rqc"}> : () -> ()
    %cst_32 = arith.constant dense<0.000000e+00> : vector<16x16x32xf32>
    %98 = tpu.matmul %97, %81, %cst_32 {dimension_numbers = #tpu.dot_dimension_numbers<[2], [1], [1], [2], [0, 0, 0, 1, 1, 2], [0], [0]>} : vector<16x16x16xbf16>, vector<16x16x32xbf16>, vector<16x16x32xf32> -> vector<16x16x32xf32>
    "tpu.trace_stop"() : () -> ()
    %99 = tpu.reciprocal %96 {approx = true} : vector<16x16x1xf32> -> vector<16x16x1xf32>
    %100 = vector.broadcast %99 : vector<16x16x1xf32> to vector<16x16x32xf32>
    %101 = arith.mulf %98, %100 : vector<16x16x32xf32>
    %102 = arith.mulf %82, %101 : vector<16x16x32xf32>
    %103 = arith.truncf %102 : vector<16x16x32xf32> to vector<16x16x32xbf16>
    %104 = vector.shape_cast %103 : vector<16x16x32xbf16> to vector<256x32xbf16>
    %c64 = arith.constant 64 : index
    %c0_33 = arith.constant 0 : index
    %105 = vector.load %arg5[%c64, %c0_33] : memref<128x32xbf16, #tpu.memory_space<vmem>>, vector<32x32xbf16>
    %cst_34 = arith.constant dense<0.000000e+00> : vector<256x32xf32>
    %106 = tpu.matmul %104, %105, %cst_34 {dimension_numbers = #tpu.dot_dimension_numbers<[1], [0], [0], [1], [0, 0, 1, 1], [], []>} : vector<256x32xbf16>, vector<32x32xbf16>, vector<256x32xf32> -> vector<256x32xf32>
    %107 = arith.addf %75, %106 : vector<256x32xf32>
    %108 = vector.extract_strided_slice %6 {offsets = [0, 0, 96], sizes = [16, 16, 32], strides = [1, 1, 1]} : vector<16x16x512xf32> to vector<16x16x32xf32>
    %109 = arith.truncf %108 : vector<16x16x32xf32> to vector<16x16x32xbf16>
    %110 = vector.extract_strided_slice %6 {offsets = [0, 0, 224], sizes = [16, 16, 32], strides = [1, 1, 1]} : vector<16x16x512xf32> to vector<16x16x32xf32>
    %111 = arith.truncf %110 : vector<16x16x32xf32> to vector<16x16x32xbf16>
    %112 = vector.extract_strided_slice %6 {offsets = [0, 0, 352], sizes = [16, 16, 32], strides = [1, 1, 1]} : vector<16x16x512xf32> to vector<16x16x32xf32>
    %113 = arith.truncf %112 : vector<16x16x32xf32> to vector<16x16x32xbf16>
    %114 = vector.extract_strided_slice %12 {offsets = [0, 0, 96], sizes = [16, 16, 32], strides = [1, 1, 1]} : vector<16x16x128xf32> to vector<16x16x32xf32>
    "tpu.trace_start"() <{level = 10 : i32, message = "rqc,rkc->rqk"}> : () -> ()
    %cst_35 = arith.constant dense<0.000000e+00> : vector<16x16x16xf32>
    %115 = tpu.matmul %109, %111, %cst_35 {dimension_numbers = #tpu.dot_dimension_numbers<[2], [2], [1], [1], [0, 0, 0, 1, 1, 1], [0], [0]>} : vector<16x16x32xbf16>, vector<16x16x32xbf16>, vector<16x16x16xf32> -> vector<16x16x16xf32>
    "tpu.trace_stop"() : () -> ()
    %c0_36 = arith.constant 0 : index
    %c3 = arith.constant 3 : index
    %c0_37 = arith.constant 0 : index
    %c0_38 = arith.constant 0 : index
    %116 = vector.load %arg3[%c0_36, %c3, %c0_37, %c0_38] : memref<1x4x16x16xbf16, #tpu.memory_space<vmem>>, vector<1x1x16x16xbf16>
    %117 = vector.shape_cast %116 : vector<1x1x16x16xbf16> to vector<16x16xbf16>
    %118 = arith.extf %117 : vector<16x16xbf16> to vector<16x16xf32>
    %119 = vector.shape_cast %118 : vector<16x16xf32> to vector<1x16x16xf32>
    %120 = vector.broadcast %119 : vector<1x16x16xf32> to vector<16x16x16xf32>
    %121 = arith.addf %115, %120 : vector<16x16x16xf32>
    %cst_39 = arith.constant dense<0xFF800000> : vector<16x16xf32>
    %122 = vector.multi_reduction <maximumf>, %121, %cst_39 [2] : vector<16x16x16xf32> to vector<16x16xf32>
    %123 = vector.shape_cast %122 : vector<16x16xf32> to vector<16x16x1xf32>
    %124 = vector.broadcast %123 : vector<16x16x1xf32> to vector<16x16x16xf32>
    %125 = arith.subf %121, %124 : vector<16x16x16xf32>
    %126 = math.exp %125 : vector<16x16x16xf32>
    %cst_40 = arith.constant dense<0.000000e+00> : vector<16x16xf32>
    %127 = vector.multi_reduction <add>, %126, %cst_40 [2] : vector<16x16x16xf32> to vector<16x16xf32>
    %128 = vector.shape_cast %127 : vector<16x16xf32> to vector<16x16x1xf32>
    %129 = arith.truncf %126 : vector<16x16x16xf32> to vector<16x16x16xbf16>
    "tpu.trace_start"() <{level = 10 : i32, message = "rqk,rkc->rqc"}> : () -> ()
    %cst_41 = arith.constant dense<0.000000e+00> : vector<16x16x32xf32>
    %130 = tpu.matmul %129, %113, %cst_41 {dimension_numbers = #tpu.dot_dimension_numbers<[2], [1], [1], [2], [0, 0, 0, 1, 1, 2], [0], [0]>} : vector<16x16x16xbf16>, vector<16x16x32xbf16>, vector<16x16x32xf32> -> vector<16x16x32xf32>
    "tpu.trace_stop"() : () -> ()
    %131 = tpu.reciprocal %128 {approx = true} : vector<16x16x1xf32> -> vector<16x16x1xf32>
    %132 = vector.broadcast %131 : vector<16x16x1xf32> to vector<16x16x32xf32>
    %133 = arith.mulf %130, %132 : vector<16x16x32xf32>
    %134 = arith.mulf %114, %133 : vector<16x16x32xf32>
    %135 = arith.truncf %134 : vector<16x16x32xf32> to vector<16x16x32xbf16>
    %136 = vector.shape_cast %135 : vector<16x16x32xbf16> to vector<256x32xbf16>
    %c96 = arith.constant 96 : index
    %c0_42 = arith.constant 0 : index
    %137 = vector.load %arg5[%c96, %c0_42] : memref<128x32xbf16, #tpu.memory_space<vmem>>, vector<32x32xbf16>
    %cst_43 = arith.constant dense<0.000000e+00> : vector<256x32xf32>
    %138 = tpu.matmul %136, %137, %cst_43 {dimension_numbers = #tpu.dot_dimension_numbers<[1], [0], [0], [1], [0, 0, 1, 1], [], []>} : vector<256x32xbf16>, vector<32x32xbf16>, vector<256x32xf32> -> vector<256x32xf32>
    %139 = arith.addf %107, %138 : vector<256x32xf32>
    %140 = vector.shape_cast %139 : vector<256x32xf32> to vector<16x16x32xf32>
    %c0_44 = arith.constant 0 : index
    %c0_45 = arith.constant 0 : index
    %c0_46 = arith.constant 0 : index
    %c0_47 = arith.constant 0 : index
    %141 = vector.load %arg6[%c0_44, %c0_45, %c0_46, %c0_47] : memref<1x16x16x32xf32, #tpu.memory_space<vmem>>, vector<1x16x16x32xf32>
    %142 = vector.shape_cast %141 : vector<1x16x16x32xf32> to vector<16x16x32xf32>
    %143 = vector.shape_cast %140 : vector<16x16x32xf32> to vector<1x16x16x32xf32>
    tpu.vector_store %arg6[%c0_44, %c0_45, %c0_46, %c0_47], %143 {strides = array<i32>} : memref<1x16x16x32xf32, #tpu.memory_space<vmem>>, vector<1x16x16x32xf32>,
    return
  }
  func.func @transform_0(%arg0: i32, %arg1: i32) -> (i32, i32, i32, i32) {
    %c0_i32 = arith.constant 0 : i32
    %c0_i32_0 = arith.constant 0 : i32
    %c0_i32_1 = arith.constant 0 : i32
    return %arg0, %arg1, %c0_i32, %c0_i32_0 : i32, i32, i32, i32
  }
  func.func @transform_1(%arg0: i32, %arg1: i32) -> (i32, i32, i32, i32) {
    %c0_i32 = arith.constant 0 : i32
    %c0_i32_0 = arith.constant 0 : i32
    %c0_i32_1 = arith.constant 0 : i32
    %c0_i32_2 = arith.constant 0 : i32
    return %arg0, %c0_i32, %c0_i32_0, %c0_i32_1 : i32, i32, i32, i32
  }
  func.func @transform_2(%arg0: i32, %arg1: i32) -> (i32, i32) {
    %c0_i32 = arith.constant 0 : i32
    %c0_i32_0 = arith.constant 0 : i32
    %c0_i32_1 = arith.constant 0 : i32
    return %c0_i32, %c0_i32_0 : i32, i32
  }
  func.func @transform_3(%arg0: i32, %arg1: i32) -> (i32, i32) {
    %c0_i32 = arith.constant 0 : i32
    %c0_i32_0 = arith.constant 0 : i32
    %c0_i32_1 = arith.constant 0 : i32
    return %c0_i32, %c0_i32_0 : i32, i32
  }
  func.func @transform_4(%arg0: i32, %arg1: i32) -> (i32, i32, i32, i32) {
    %c0_i32 = arith.constant 0 : i32
    %c0_i32_0 = arith.constant 0 : i32
    %c0_i32_1 = arith.constant 0 : i32
    return %arg0, %arg1, %c0_i32, %c0_i32_0 : i32, i32, i32, i32
  }
}

</mosaic_0001>

<llo_original>
// kernel: triangle_attention.2
$region0: #{triangle_attention.2}
  #allocation0 [shape = 'u32[]', space=smem, size = 0x4, offset = 0x4, fixed_abs, tag = 'smem constant byte address 0x4 - core index']
  #allocation1 [shape = 'u32[144,128]{1,0:T(1,128)}', space=vmem, size = 0x12000, scoped, tag = 'internal scratch']
  %s0 = inlined_call_operand.hbm [shape: f32[2,16,16,32], index: 0, kind: input, shape index: {}]
  %s1 = inlined_call_operand.vmem [shape: bf16[4,32], index: 1, kind: input, shape index: {}]
  %s2 = inlined_call_operand.vmem [shape: bf16[2,4,256], index: 2, kind: output, shape index: {}]
  %s3 = sld [smem:[#allocation0]]
  $region45: #{triangle_attention.2} parent=0
    _
  %s5 = ssub.s32 1, %s3
  %s6 = scalar_select 0, %s5, %s3
  $region1: #{triangle_attention.2} parent=0
    #allocation2 [shape = 'u8[262144]{0}', space=vmem, size = 0x40000, scoped, tag = 'input window, operand 0']
    #allocation3 [shape = 's32[2]{0}', space=sflag, size = 0x8, scoped, tag = 'scoped memory for triangle_attention.2']
    %7 = vsyncpa [#allocation3], 0
    %s8 = scalar_lea.sflag [#allocation3], 1
    %9 = vsyncpa %s8, 0
    loop: start=0, step=1, limit=4
    $region2: #{triangle_attention.2} parent=1 // loop_pre_header
      _
    $region3: #{triangle_attention.2} parent=1 // loop_header
      %s11 = sphi 0, %s15
      %p12 = scmp.ge.s32.totalorder %s11, 4
      %s18 = sphi 0, %s30
      %s19 = sphi 0, %s26
      %s20 = sphi 0, %s18
      %s21 = sphi 0, %s19
      %s22 = sphi 0, %s20
      %s23 = sphi 0, %s21
      %s35 = sphi 0, %s37
      %s38 = sphi 0, %s35
      %s39 = sphi 0, %s38
      %s55 = sphi 0, %s39
      %s59 = sphi 0, %s59
      %s61 = sphi 0, %s59
      %s62 = sphi 0, %s61
      %s76 = sphi 0, %s62
      %s84 = sphi 0, %s86
      %s87 = sphi 0, %s84
      %s88 = sphi 0, %s87
      %s104 = sphi 0, %s88
    $region4: #{triangle_attention.2} parent=1 // loop_header_branch
      %14 = sbr.rel (%p12) target = $region8
    $region5: #{triangle_attention.2} parent=1 // loop_body
      %s16 = ssub.s32 %s11, 1
      %s17 = ssub.s32 %s11, 2
      %s24 = sadd.s32 1, %s19
      %p25 = scmp.ge.s32.totalorder %s24, 1
      %s26 = scalar_select %p25, 0, %s24
      %s27 = sadd.s32 1, %s18
      %s28 = scalar_select %p25, %s27, %s18
      %p29 = scmp.ge.s32.totalorder %s28, 2
      %s30 = scalar_select %p29, 0, %s28
      %s31 = ssub.s32 %s18, %s30
      %s32 = ssub.s32 %s19, %s26
      %s33 = sor.u32 %s31, %s32
      %p34 = scmp.eq.s32.totalorder %s33, 0
      %s36 = sadd.s32 %s35, 1
      %s37 = scalar_select %p34, %s35, %s36
      %p40 = pneg %p34
      %p41 = scmp.eq.s32.totalorder %s11, 1
      %p42 = por %p40, %p41
      %p43 = scmp.ne.s32.totalorder %s35, %s38
      %p44 = scmp.eq.s32.totalorder %s11, 0
      %p45 = por %p43, %p44
      %p46 = scmp.ne.s32.totalorder %s35, %s38
      %p47 = scmp.eq.s32.totalorder %s16, 1
      %p48 = por %p46, %p47
      %p49 = scmp.ne.s32.totalorder %s38, %s39
      %p50 = scmp.eq.s32.totalorder %s16, 0
      %p51 = por %p49, %p50
      %p52 = scmp.ne.s32.totalorder %s38, %s39
      %p53 = scmp.eq.s32.totalorder %s17, 1
      %p54 = por %p52, %p53
      %p56 = scmp.ne.s32.totalorder %s39, %s55
      %p57 = scmp.eq.s32.totalorder %s17, 0
      %p58 = por %p56, %p57
      %s60 = sadd.s32 %s59, 1
      %p63 = scmp.eq.s32.totalorder %s11, 1
      %p64 = scmp.ne.s32.totalorder %s59, %s61
      %p65 = scmp.eq.s32.totalorder %s11, 0
      %p66 = por %p64, %p65
      %p67 = scmp.ne.s32.totalorder %s59, %s61
      %p68 = scmp.eq.s32.totalorder %s16, 1
      %p69 = por %p67, %p68
      %p70 = scmp.ne.s32.totalorder %s61, %s62
      %p71 = scmp.eq.s32.totalorder %s16, 0
      %p72 = por %p70, %p71
      %p73 = scmp.ne.s32.totalorder %s61, %s62
      %p74 = scmp.eq.s32.totalorder %s17, 1
      %p75 = por %p73, %p74
      %p77 = scmp.ne.s32.totalorder %s62, %s76
      %p78 = scmp.eq.s32.totalorder %s17, 0
      %p79 = por %p77, %p78
      %s80 = ssub.s32 %s18, %s30
      %s81 = ssub.s32 %s19, %s26
      %s82 = sor.u32 %s80, %s81
      %p83 = scmp.eq.s32.totalorder %s82, 0
      %s85 = sadd.s32 %s84, 1
      %s86 = scalar_select %p83, %s84, %s85
      %p89 = pneg %p83
      %p90 = scmp.eq.s32.totalorder %s11, 1
      %p91 = por %p89, %p90
      %p92 = scmp.ne.s32.totalorder %s84, %s87
      %p93 = scmp.eq.s32.totalorder %s11, 0
      %p94 = por %p92, %p93
      %p95 = scmp.ne.s32.totalorder %s84, %s87
      %p96 = scmp.eq.s32.totalorder %s16, 1
      %p97 = por %p95, %p96
      %p98 = scmp.ne.s32.totalorder %s87, %s88
      %p99 = scmp.eq.s32.totalorder %s16, 0
      %p100 = por %p98, %p99
      %p101 = scmp.ne.s32.totalorder %s87, %s88
      %p102 = scmp.eq.s32.totalorder %s17, 1
      %p103 = por %p101, %p102
      %p105 = scmp.ne.s32.totalorder %s88, %s104
      %p106 = scmp.eq.s32.totalorder %s17, 0
      %p107 = por %p105, %p106
      %p108 = scmp.le.s32.totalorder 1, %s11
      %p109 = scmp.lt.s32.totalorder %s11, 3
      %p110 = pnand %p108, %p109
      %p111 = pneg %p110
      // Predicated region
      $region9: #{triangle_attention.2} parent=5 // pred_check
        _
      $region10: #{triangle_attention.2} parent=5 // pred_check_branch
        %113 = sbr.rel (%p110) target = $region12
      $region11: #{triangle_attention.2} parent=5 // pred_region
        %s114 = ssub.s32 %s11, 1
        // Predicated region
        $region13: #{triangle_attention.2} parent=11 // pred_check
          %p115 = pneg %p72
        $region14: #{triangle_attention.2} parent=11 // pred_check_branch
          %117 = sbr.rel (%p115) target = $region16
        $region15: #{triangle_attention.2} parent=11 // pred_region
          _
        $region16: #{triangle_attention.2} parent=11 // pred_fallthru
          _
      $region12: #{triangle_attention.2} parent=5 // pred_fallthru
        _
      %p118 = scmp.lt.s32.totalorder %s11, 2
      // Predicated region
      $region17: #{triangle_attention.2} parent=5 // pred_check
        %p119 = pneg %p118
      $region18: #{triangle_attention.2} parent=5 // pred_check_branch
        %121 = sbr.rel (%p119) target = $region20
      $region19: #{triangle_attention.2} parent=5 // pred_region
        // Predicated region
        $region21: #{triangle_attention.2} parent=19 // pred_check
          %p122 = pneg %p45
        $region22: #{triangle_attention.2} parent=19 // pred_check_branch
          %124 = sbr.rel (%p122) target = $region24
        $region23: #{triangle_attention.2} parent=19 // pred_region
          %s125 = sand.u32 %s35, 1
          %s126 = scalar_lea.sflag [#allocation3], %s125
          %s127 = sand.u32 %s35, 1
          %s128 = smul.addr %s127, 256
          %s129 = scalar_lea.vmem [#allocation2], %s128
          %s130 = smul.u32 16, %s19
          %s132 = ssub.s32 4096, 4096
          %133 = vsyncadd %s126, %s132
          %s134 = smul.addr %s130, 2
          %s135 = smul.addr %s18, 32
          %s136 = sadd.s32 %s134, %s135
          %s137 = smul.addr %s136, 128
          %s138 = scalar_lea.hbm %s0, %s137
          %s139 = sshll.u32 %s129, 4
          %s140 = int_to_ptr.vmem [resolvable:$true] %s139
          %145 = dma.hbm_to_vmem [thread:$0]  %s138, 4096, %s140, %s126, 128, 128, 8
        $region24: #{triangle_attention.2} parent=19 // pred_fallthru
          _
      $region20: #{triangle_attention.2} parent=5 // pred_fallthru
        _
      %p146 = scmp.le.s32.totalorder 1, %s11
      %p147 = scmp.lt.s32.totalorder %s11, 3
      %p148 = pnand %p146, %p147
      %p149 = pneg %p148
      // Predicated region
      $region25: #{triangle_attention.2} parent=5 // pred_check
        _
      $region26: #{triangle_attention.2} parent=5 // pred_check_branch
        %151 = sbr.rel (%p148) target = $region28
      $region27: #{triangle_attention.2} parent=5 // pred_region
        %s152 = ssub.s32 %s11, 1
        %s153 = sand.u32 %s38, 1
        %s154 = scalar_lea.sflag [#allocation3], %s153
        %s155 = sand.u32 %s38, 1
        %s156 = smul.addr %s155, 256
        %s157 = scalar_lea.vmem [#allocation2], %s156
        // Predicated region
        $region29: #{triangle_attention.2} parent=27 // pred_check
          %p158 = pneg %p51
        $region30: #{triangle_attention.2} parent=27 // pred_check_branch
          %160 = sbr.rel (%p158) target = $region32
        $region31: #{triangle_attention.2} parent=27 // pred_region
          %161 = dma.done %s154, 4096
        $region32: #{triangle_attention.2} parent=27 // pred_fallthru
          _
        %s162 = sand.u32 %s38, 1
        %s163 = scalar_lea.sflag [#allocation3], %s162
        %s164 = sand.u32 %s38, 1
        %s165 = smul.addr %s164, 256
        %s166 = scalar_lea.vmem [#allocation2], %s165
        %p167 = pneg %p51
        %p168 = pneg %p48
        %p169 = pneg %p72
        %p170 = pneg %p69
        %p171 = pneg %p100
        %p172 = pneg %p97
        %s173 = smul.u32 2, %s21
        %p174 = scmp.lt.s32.totalorder %s20, 1
        %s175 = scalar_select %p174, %s20, 1
        %p176 = scmp.lt.s32.totalorder %s173, 1
        %s177 = scalar_select %p176, %s173, 1
        %s178 = smul.addr %s175, 2
        %s179 = sadd.s32 %s177, %s178
        %s180 = smul.addr %s179, 2
        %s181 = scalar_lea.vmem %s2, %s180
        %s182 = smul.u32 16, %s21
        %s183 = smul.u32 2, %s21
        %p184 = scmp.lt.s32.totalorder %s20, 1
        %s185 = scalar_select %p184, %s20, 1
        %p186 = scmp.lt.s32.totalorder %s183, 1
        %s187 = scalar_select %p186, %s183, 1
        %s188 = smul.addr %s185, 2
        %s189 = sadd.s32 %s187, %s188
        %s190 = smul.addr %s189, 2
        %s191 = scalar_lea.vmem %s2, %s190
        %s192 = smul.u32 2, %s21
        %v194 = vld [vmem:[%s157] sm:$0xff]
        %v195 = vld [vmem:[%s157 + $0x8] sm:$0xff]
        %v196 = vld [vmem:[%s157 + $0x10] sm:$0xff]
        %v197 = vld [vmem:[%s157 + $0x18] sm:$0xff]
        %v198 = vld [vmem:[%s157 + $0x20] sm:$0xff]
        %v199 = vld [vmem:[%s157 + $0x28] sm:$0xff]
        %v200 = vld [vmem:[%s157 + $0x30] sm:$0xff]
        %v201 = vld [vmem:[%s157 + $0x38] sm:$0xff]
        %v202 = vld [vmem:[%s157 + $0x40] sm:$0xff]
        %v203 = vld [vmem:[%s157 + $0x48] sm:$0xff]
        %v204 = vld [vmem:[%s157 + $0x50] sm:$0xff]
        %v205 = vld [vmem:[%s157 + $0x58] sm:$0xff]
        %v206 = vld [vmem:[%s157 + $0x60] sm:$0xff]
        %v207 = vld [vmem:[%s157 + $0x68] sm:$0xff]
        %v208 = vld [vmem:[%s157 + $0x70] sm:$0xff]
        %v209 = vld [vmem:[%s157 + $0x78] sm:$0xff]
        %v210 = vld [vmem:[%s157 + $0x80] sm:$0xff]
        %v211 = vld [vmem:[%s157 + $0x88] sm:$0xff]
        %v212 = vld [vmem:[%s157 + $0x90] sm:$0xff]
        %v213 = vld [vmem:[%s157 + $0x98] sm:$0xff]
        %v214 = vld [vmem:[%s157 + $0xa0] sm:$0xff]
        %v215 = vld [vmem:[%s157 + $0xa8] sm:$0xff]
        %v216 = vld [vmem:[%s157 + $0xb0] sm:$0xff]
        %v217 = vld [vmem:[%s157 + $0xb8] sm:$0xff]
        %v218 = vld [vmem:[%s157 + $0xc0] sm:$0xff]
        %v219 = vld [vmem:[%s157 + $0xc8] sm:$0xff]
        %v220 = vld [vmem:[%s157 + $0xd0] sm:$0xff]
        %v221 = vld [vmem:[%s157 + $0xd8] sm:$0xff]
        %v222 = vld [vmem:[%s157 + $0xe0] sm:$0xff]
        %v223 = vld [vmem:[%s157 + $0xe8] sm:$0xff]
        %v224 = vld [vmem:[%s157 + $0xf0] sm:$0xff]
        %v225 = vld [vmem:[%s157 + $0xf8] sm:$0xff]
        %v226 = vpack.c.bf16 %v195, %v194
        %v227 = vpack.c.bf16 %v197, %v196
        %v228 = vpack.c.bf16 %v199, %v198
        %v229 = vpack.c.bf16 %v201, %v200
        %v230 = vpack.c.bf16 %v203, %v202
        %v231 = vpack.c.bf16 %v205, %v204
        %v232 = vpack.c.bf16 %v207, %v206
        %v233 = vpack.c.bf16 %v209, %v208
        %v234 = vpack.c.bf16 %v211, %v210
        %v235 = vpack.c.bf16 %v213, %v212
        %v236 = vpack.c.bf16 %v215, %v214
        %v237 = vpack.c.bf16 %v217, %v216
        %v238 = vpack.c.bf16 %v219, %v218
        %v239 = vpack.c.bf16 %v221, %v220
        %v240 = vpack.c.bf16 %v223, %v222
        %v241 = vpack.c.bf16 %v225, %v224
        %v242 = vld [vmem:[%s1] sm:$0x3]
        %vm243 = vcmask 261120
        %v245 = vsel %vm243, %v242, 0
        %v248 = vsel %vm243, %v226, 0
        %v251 = vsel %vm243, %v227, 0
        %v254 = vsel %vm243, %v228, 0
        %v257 = vsel %vm243, %v229, 0
        %v260 = vsel %vm243, %v230, 0
        %v263 = vsel %vm243, %v231, 0
        %v266 = vsel %vm243, %v232, 0
        %v269 = vsel %vm243, %v233, 0
        %v272 = vsel %vm243, %v234, 0
        %v275 = vsel %vm243, %v235, 0
        %v278 = vsel %vm243, %v236, 0
        %v281 = vsel %vm243, %v237, 0
        %v284 = vsel %vm243, %v238, 0
        %v287 = vsel %vm243, %v239, 0
        %v290 = vsel %vm243, %v240, 0
        %v293 = vsel %vm243, %v241, 0
        %295 = vmatprep.subr.bf16.mxu0 0
        %296 = vmatpush1.bf16.xpose.msra.mxu0 %v248
        %297 = vmatprep.subr.bf16.mxu0 0
        %298 = vmatpush1.bf16.xpose.msra.mxu0 %v251
        %299 = vmatprep.subr.bf16.mxu0 0
        %300 = vmatpush1.bf16.xpose.msra.mxu0 %v254
        %301 = vmatprep.subr.bf16.mxu0 0
        %302 = vmatpush1.bf16.xpose.msra.mxu0 %v257
        %303 = vmatprep.subr.bf16.mxu0 0
        %304 = vmatpush1.bf16.xpose.msra.mxu0 %v260
        %305 = vmatprep.subr.bf16.mxu0 0
        %306 = vmatpush1.bf16.xpose.msra.mxu0 %v263
        %307 = vmatprep.subr.bf16.mxu0 0
        %308 = vmatpush1.bf16.xpose.msra.mxu0 %v266
        %309 = vmatprep.subr.bf16.mxu0 0
        %310 = vmatpush1.bf16.xpose.msra.mxu0 %v269
        %311 = vmatprep.subr.bf16.mxu0 0
        %312 = vmatpush1.bf16.xpose.msra.mxu0 %v272
        %313 = vmatprep.subr.bf16.mxu0 0
        %314 = vmatpush1.bf16.xpose.msra.mxu0 %v275
        %315 = vmatprep.subr.bf16.mxu0 0
        %316 = vmatpush1.bf16.xpose.msra.mxu0 %v278
        %317 = vmatprep.subr.bf16.mxu0 0
        %318 = vmatpush1.bf16.xpose.msra.mxu0 %v281
        %319 = vmatprep.subr.bf16.mxu0 0
        %320 = vmatpush1.bf16.xpose.msra.mxu0 %v284
        %321 = vmatprep.subr.bf16.mxu0 0
        %322 = vmatpush1.bf16.xpose.msra.mxu0 %v287
        %323 = vmatprep.subr.bf16.mxu0 0
        %324 = vmatpush1.bf16.xpose.msra.mxu0 %v290
        %325 = vmatprep.subr.bf16.mxu0 0
        %326 = vmatpush1.bf16.xpose.msra.mxu0 %v293
        %327 = vmatprep.mubr.bf16.mxu0 0
        %328 = vmatmul.mubr.bf16.gmra.mrb[0].mxu0 %v245
        %v329 = vpop.f32.mrb[0].mxu0
        %v330 = vadd.f32 0.0, %v329
        %v331 = vpop.f32.mrb[0].mxu0
        %v332 = vadd.f32 0.0, %v331
        %v333 = vpop.f32.mrb[0].mxu0
        %v334 = vpop.f32.mrb[0].mxu0
        %335 = vdwg.mxu0
        %v336 = vpack.c.bf16 %v330, %v330
        %v337 = vpack.c.bf16 %v332, %v332
        %v340 = vcombine.low %v336, %v337
        %v342 = vunpack.c.l.s4 1983009808
        %v343 = vunpack.c.0.s8 %v342
        %v344 = vlaneseq
        %v345 = vshrl.u32 %v344, 7
        %v346 = vsub.s32 %v343, %v345
        %v347 = vrot.slane %v340, %v346
        %349 = vst [vmem:[%s191] sm:$0xf] %v347
        %s350 = smul.u32 2, %s21
        %p351 = scmp.lt.s32.totalorder %s20, 1
        %s352 = scalar_select %p351, %s20, 1
        %p353 = scmp.lt.s32.totalorder %s350, 1
        %s354 = scalar_select %p353, %s350, 1
        %s355 = smul.addr %s352, 2
        %s356 = sadd.s32 %s354, %s355
        %s357 = smul.addr %s356, 2
        %s358 = scalar_lea.vmem %s2, %s357
        // Predicated region
        $region33: #{triangle_attention.2} parent=27 // pred_check
          %p359 = pneg %p97
        $region34: #{triangle_attention.2} parent=27 // pred_check_branch
          %361 = sbr.rel (%p359) target = $region36
        $region35: #{triangle_attention.2} parent=27 // pred_region
          %s362 = smul.u32 2, %s21
        $region36: #{triangle_attention.2} parent=27 // pred_fallthru
          _
      $region28: #{triangle_attention.2} parent=5 // pred_fallthru
        _
      %p363 = scmp.le.s32.totalorder 2, %s11
      // Predicated region
      $region37: #{triangle_attention.2} parent=5 // pred_check
        %p364 = pneg %p363
      $region38: #{triangle_attention.2} parent=5 // pred_check_branch
        %366 = sbr.rel (%p364) target = $region40
      $region39: #{triangle_attention.2} parent=5 // pred_region
        %s367 = ssub.s32 %s11, 2
        // Predicated region
        $region41: #{triangle_attention.2} parent=39 // pred_check
          %p368 = pneg %p103
        $region42: #{triangle_attention.2} parent=39 // pred_check_branch
          %370 = sbr.rel (%p368) target = $region44
        $region43: #{triangle_attention.2} parent=39 // pred_region
          %s371 = smul.u32 2, %s23
          %p372 = scmp.lt.s32.totalorder %s22, 1
          %s373 = scalar_select %p372, %s22, 1
          %p374 = scmp.lt.s32.totalorder %s371, 1
          %s375 = scalar_select %p374, %s371, 1
          %s376 = smul.addr %s373, 2
          %s377 = sadd.s32 %s375, %s376
          %s378 = smul.addr %s377, 2
          %s379 = scalar_lea.vmem %s2, %s378
        $region44: #{triangle_attention.2} parent=39 // pred_fallthru
          _
      $region40: #{triangle_attention.2} parent=5 // pred_fallthru
        _
    $region6: #{triangle_attention.2} parent=1 // loop_footer
      %s15 = sadd.s32 1, %s11
    $region7: #{triangle_attention.2} parent=1 // loop_footer_branch
      %10 = sbr.rel target = $region3
    $region8: #{triangle_attention.2} parent=1 // loop_exit
      _
    %380 = vsyncpa [#allocation3], 1
    %s381 = scalar_lea.sflag [#allocation3], 1
    %382 = vsyncpa %s381, 1

// kernel: triangle_attention.3
$region0: #{triangle_attention.3}
  #allocation0 [shape = 'u32[]', space=smem, size = 0x4, offset = 0x4, fixed_abs, tag = 'smem constant byte address 0x4 - core index']
  #allocation1 [shape = 'u32[144,128]{1,0:T(1,128)}', space=vmem, size = 0x12000, scoped, tag = 'internal scratch']
  %s0 = inlined_call_operand.vmem [shape: f32[2,16,16,32], index: 0, kind: input, shape index: {}]
  %s1 = inlined_call_operand.vmem [shape: bf16[2,4,16,16], index: 1, kind: input, shape index: {}]
  %s2 = inlined_call_operand.vmem [shape: bf16[32,512], index: 2, kind: input, shape index: {}]
  %s3 = inlined_call_operand.vmem [shape: bf16[128,32], index: 3, kind: input, shape index: {}]
  %s4 = inlined_call_operand.hbm [shape: f32[2,16,16,32], index: 4, kind: output, shape index: {}]
  %s5 = sld [smem:[#allocation0]]
  $region49: #{triangle_attention.3} parent=0
    _
  %s7 = ssub.s32 1, %s5
  %s8 = scalar_select 0, %s7, %s5
  $region1: #{triangle_attention.3} parent=0
    #allocation2 [shape = 'u8[262144]{0}', space=vmem, size = 0x40000, scoped, tag = 'output window, operand 0']
    #allocation3 [shape = 's32[2]{0}', space=sflag, size = 0x8, scoped, tag = 'scoped memory for triangle_attention.3']
    %9 = vsyncpa [#allocation3], 0
    %s10 = scalar_lea.sflag [#allocation3], 1
    %11 = vsyncpa %s10, 0
    loop: start=0, step=1, limit=4
    $region2: #{triangle_attention.3} parent=1 // loop_pre_header
      _
    $region3: #{triangle_attention.3} parent=1 // loop_header
      %s13 = sphi 0, %s17
      %p14 = scmp.ge.s32.totalorder %s13, 4
      %s20 = sphi 0, %s32
      %s21 = sphi 0, %s28
      %s22 = sphi 0, %s20
      %s23 = sphi 0, %s21
      %s24 = sphi 0, %s22
      %s25 = sphi 0, %s23
      %s37 = sphi 0, %s39
      %s40 = sphi 0, %s37
      %s41 = sphi 0, %s40
      %s57 = sphi 0, %s41
      %s63 = sphi 0, %s65
      %s66 = sphi 0, %s63
      %s67 = sphi 0, %s66
      %s83 = sphi 0, %s67
      %s87 = sphi 0, %s87
      %s89 = sphi 0, %s87
      %s90 = sphi 0, %s89
      %s104 = sphi 0, %s90
      %s108 = sphi 0, %s108
      %s110 = sphi 0, %s108
      %s111 = sphi 0, %s110
      %s125 = sphi 0, %s111
      %s133 = sphi 0, %s135
      %s136 = sphi 0, %s133
      %s137 = sphi 0, %s136
      %s153 = sphi 0, %s137
    $region4: #{triangle_attention.3} parent=1 // loop_header_branch
      %16 = sbr.rel (%p14) target = $region8
    $region5: #{triangle_attention.3} parent=1 // loop_body
      %s18 = ssub.s32 %s13, 1
      %s19 = ssub.s32 %s13, 2
      %s26 = sadd.s32 1, %s21
      %p27 = scmp.ge.s32.totalorder %s26, 1
      %s28 = scalar_select %p27, 0, %s26
      %s29 = sadd.s32 1, %s20
      %s30 = scalar_select %p27, %s29, %s20
      %p31 = scmp.ge.s32.totalorder %s30, 2
      %s32 = scalar_select %p31, 0, %s30
      %s33 = ssub.s32 %s20, %s32
      %s34 = ssub.s32 %s21, %s28
      %s35 = sor.u32 %s33, %s34
      %p36 = scmp.eq.s32.totalorder %s35, 0
      %s38 = sadd.s32 %s37, 1
      %s39 = scalar_select %p36, %s37, %s38
      %p42 = pneg %p36
      %p43 = scmp.eq.s32.totalorder %s13, 1
      %p44 = por %p42, %p43
      %p45 = scmp.ne.s32.totalorder %s37, %s40
      %p46 = scmp.eq.s32.totalorder %s13, 0
      %p47 = por %p45, %p46
      %p48 = scmp.ne.s32.totalorder %s37, %s40
      %p49 = scmp.eq.s32.totalorder %s18, 1
      %p50 = por %p48, %p49
      %p51 = scmp.ne.s32.totalorder %s40, %s41
      %p52 = scmp.eq.s32.totalorder %s18, 0
      %p53 = por %p51, %p52
      %p54 = scmp.ne.s32.totalorder %s40, %s41
      %p55 = scmp.eq.s32.totalorder %s19, 1
      %p56 = por %p54, %p55
      %p58 = scmp.ne.s32.totalorder %s41, %s57
      %p59 = scmp.eq.s32.totalorder %s19, 0
      %p60 = por %p58, %p59
      %s61 = ssub.s32 %s20, %s32
      %p62 = scmp.eq.s32.totalorder %s61, 0
      %s64 = sadd.s32 %s63, 1
      %s65 = scalar_select %p62, %s63, %s64
      %p68 = pneg %p62
      %p69 = scmp.eq.s32.totalorder %s13, 1
      %p70 = por %p68, %p69
      %p71 = scmp.ne.s32.totalorder %s63, %s66
      %p72 = scmp.eq.s32.totalorder %s13, 0
      %p73 = por %p71, %p72
      %p74 = scmp.ne.s32.totalorder %s63, %s66
      %p75 = scmp.eq.s32.totalorder %s18, 1
      %p76 = por %p74, %p75
      %p77 = scmp.ne.s32.totalorder %s66, %s67
      %p78 = scmp.eq.s32.totalorder %s18, 0
      %p79 = por %p77, %p78
      %p80 = scmp.ne.s32.totalorder %s66, %s67
      %p81 = scmp.eq.s32.totalorder %s19, 1
      %p82 = por %p80, %p81
      %p84 = scmp.ne.s32.totalorder %s67, %s83
      %p85 = scmp.eq.s32.totalorder %s19, 0
      %p86 = por %p84, %p85
      %s88 = sadd.s32 %s87, 1
      %p91 = scmp.eq.s32.totalorder %s13, 1
      %p92 = scmp.ne.s32.totalorder %s87, %s89
      %p93 = scmp.eq.s32.totalorder %s13, 0
      %p94 = por %p92, %p93
      %p95 = scmp.ne.s32.totalorder %s87, %s89
      %p96 = scmp.eq.s32.totalorder %s18, 1
      %p97 = por %p95, %p96
      %p98 = scmp.ne.s32.totalorder %s89, %s90
      %p99 = scmp.eq.s32.totalorder %s18, 0
      %p100 = por %p98, %p99
      %p101 = scmp.ne.s32.totalorder %s89, %s90
      %p102 = scmp.eq.s32.totalorder %s19, 1
      %p103 = por %p101, %p102
      %p105 = scmp.ne.s32.totalorder %s90, %s104
      %p106 = scmp.eq.s32.totalorder %s19, 0
      %p107 = por %p105, %p106
      %s109 = sadd.s32 %s108, 1
      %p112 = scmp.eq.s32.totalorder %s13, 1
      %p113 = scmp.ne.s32.totalorder %s108, %s110
      %p114 = scmp.eq.s32.totalorder %s13, 0
      %p115 = por %p113, %p114
      %p116 = scmp.ne.s32.totalorder %s108, %s110
      %p117 = scmp.eq.s32.totalorder %s18, 1
      %p118 = por %p116, %p117
      %p119 = scmp.ne.s32.totalorder %s110, %s111
      %p120 = scmp.eq.s32.totalorder %s18, 0
      %p121 = por %p119, %p120
      %p122 = scmp.ne.s32.totalorder %s110, %s111
      %p123 = scmp.eq.s32.totalorder %s19, 1
      %p124 = por %p122, %p123
      %p126 = scmp.ne.s32.totalorder %s111, %s125
      %p127 = scmp.eq.s32.totalorder %s19, 0
      %p128 = por %p126, %p127
      %s129 = ssub.s32 %s20, %s32
      %s130 = ssub.s32 %s21, %s28
      %s131 = sor.u32 %s129, %s130
      %p132 = scmp.eq.s32.totalorder %s131, 0
      %s134 = sadd.s32 %s133, 1
      %s135 = scalar_select %p132, %s133, %s134
      %p138 = pneg %p132
      %p139 = scmp.eq.s32.totalorder %s13, 1
      %p140 = por %p138, %p139
      %p141 = scmp.ne.s32.totalorder %s133, %s136
      %p142 = scmp.eq.s32.totalorder %s13, 0
      %p143 = por %p141, %p142
      %p144 = scmp.ne.s32.totalorder %s133, %s136
      %p145 = scmp.eq.s32.totalorder %s18, 1
      %p146 = por %p144, %p145
      %p147 = scmp.ne.s32.totalorder %s136, %s137
      %p148 = scmp.eq.s32.totalorder %s18, 0
      %p149 = por %p147, %p148
      %p150 = scmp.ne.s32.totalorder %s136, %s137
      %p151 = scmp.eq.s32.totalorder %s19, 1
      %p152 = por %p150, %p151
      %p154 = scmp.ne.s32.totalorder %s137, %s153
      %p155 = scmp.eq.s32.totalorder %s19, 0
      %p156 = por %p154, %p155
      %p157 = scmp.le.s32.totalorder 1, %s13
      %p158 = scmp.lt.s32.totalorder %s13, 3
      %p159 = pnand %p157, %p158
      %p160 = pneg %p159
      // Predicated region
      $region9: #{triangle_attention.3} parent=5 // pred_check
        _
      $region10: #{triangle_attention.3} parent=5 // pred_check_branch
        %162 = sbr.rel (%p159) target = $region12
      $region11: #{triangle_attention.3} parent=5 // pred_region
        %s163 = ssub.s32 %s13, 1
        // Predicated region
        $region13: #{triangle_attention.3} parent=11 // pred_check
          %p164 = pneg %p100
        $region14: #{triangle_attention.3} parent=11 // pred_check_branch
          %166 = sbr.rel (%p164) target = $region16
        $region15: #{triangle_attention.3} parent=11 // pred_region
          _
        $region16: #{triangle_attention.3} parent=11 // pred_fallthru
          _
        // Predicated region
        $region17: #{triangle_attention.3} parent=11 // pred_check
          %p167 = pneg %p121
        $region18: #{triangle_attention.3} parent=11 // pred_check_branch
          %169 = sbr.rel (%p167) target = $region20
        $region19: #{triangle_attention.3} parent=11 // pred_region
          _
        $region20: #{triangle_attention.3} parent=11 // pred_fallthru
          _
      $region12: #{triangle_attention.3} parent=5 // pred_fallthru
        _
      %p170 = scmp.lt.s32.totalorder %s13, 2
      // Predicated region
      $region21: #{triangle_attention.3} parent=5 // pred_check
        %p171 = pneg %p170
      $region22: #{triangle_attention.3} parent=5 // pred_check_branch
        %173 = sbr.rel (%p171) target = $region24
      $region23: #{triangle_attention.3} parent=5 // pred_region
        // Predicated region
        $region25: #{triangle_attention.3} parent=23 // pred_check
          %p174 = pneg %p47
        $region26: #{triangle_attention.3} parent=23 // pred_check_branch
          %176 = sbr.rel (%p174) target = $region28
        $region27: #{triangle_attention.3} parent=23 // pred_region
          %s177 = smul.u32 16, %s21
          %p178 = scmp.lt.s32.totalorder %s20, 1
          %s179 = scalar_select %p178, %s20, 1
          %p180 = scmp.lt.s32.totalorder %s177, 15
          %s181 = scalar_select %p180, %s177, 15
          %s182 = smul.addr %s181, 2
          %s183 = smul.addr %s179, 32
          %s184 = sadd.s32 %s182, %s183
          %s185 = smul.addr %s184, 8
          %s186 = scalar_lea.vmem %s0, %s185
          %s187 = smul.u32 16, %s21
        $region28: #{triangle_attention.3} parent=23 // pred_fallthru
          _
        // Predicated region
        $region29: #{triangle_attention.3} parent=23 // pred_check
          %p188 = pneg %p73
        $region30: #{triangle_attention.3} parent=23 // pred_check_branch
          %190 = sbr.rel (%p188) target = $region32
        $region31: #{triangle_attention.3} parent=23 // pred_region
          %p191 = scmp.lt.s32.totalorder %s20, 1
          %s192 = scalar_select %p191, %s20, 1
          %s193 = smul.addr %s192, 8
          %s194 = smul.addr %s193, 4
          %s195 = scalar_lea.vmem %s1, %s194
        $region32: #{triangle_attention.3} parent=23 // pred_fallthru
          _
      $region24: #{triangle_attention.3} parent=5 // pred_fallthru
        _
      %p196 = scmp.le.s32.totalorder 1, %s13
      %p197 = scmp.lt.s32.totalorder %s13, 3
      %p198 = pnand %p196, %p197
      %p199 = pneg %p198
      // Predicated region
      $region33: #{triangle_attention.3} parent=5 // pred_check
        _
      $region34: #{triangle_attention.3} parent=5 // pred_check_branch
        %201 = sbr.rel (%p198) target = $region36
      $region35: #{triangle_attention.3} parent=5 // pred_region
        %s202 = ssub.s32 %s13, 1
        %s203 = smul.u32 16, %s23
        %p204 = scmp.lt.s32.totalorder %s22, 1
        %s205 = scalar_select %p204, %s22, 1
        %p206 = scmp.lt.s32.totalorder %s203, 15
        %s207 = scalar_select %p206, %s203, 15
        %s208 = smul.addr %s207, 2
        %s209 = smul.addr %s205, 32
        %s210 = sadd.s32 %s208, %s209
        %s211 = smul.addr %s210, 8
        %s212 = scalar_lea.vmem %s0, %s211
        %p213 = pneg %p53
        %p214 = pneg %p50
        %p215 = scmp.lt.s32.totalorder %s22, 1
        %s216 = scalar_select %p215, %s22, 1
        %s217 = smul.addr %s216, 8
        %s218 = smul.addr %s217, 4
        %s219 = scalar_lea.vmem %s1, %s218
        %p220 = pneg %p79
        %p221 = pneg %p76
        %p222 = pneg %p100
        %p223 = pneg %p97
        %p224 = pneg %p121
        %p225 = pneg %p118
        %p226 = pneg %p149
        %p227 = pneg %p146
        %s228 = sand.u32 %s136, 1
        %s229 = scalar_lea.sflag [#allocation3], %s228
        %s230 = sand.u32 %s136, 1
        %s231 = smul.addr %s230, 256
        %s232 = scalar_lea.vmem [#allocation2], %s231
        %s233 = smul.u32 16, %s23
        %p234 = scmp.lt.s32.totalorder %s22, 1
        %s235 = scalar_select %p234, %s22, 1
        %p236 = scmp.lt.s32.totalorder %s233, 15
        %s237 = scalar_select %p236, %s233, 15
        %s238 = smul.addr %s237, 2
        %s239 = smul.addr %s235, 32
        %s240 = sadd.s32 %s238, %s239
        %s241 = smul.addr %s240, 8
        %s242 = scalar_lea.vmem %s0, %s241
        %s243 = smul.u32 16, %s23
        %p244 = scmp.lt.s32.totalorder %s22, 1
        %s245 = scalar_select %p244, %s22, 1
        %s246 = smul.addr %s245, 8
        %s247 = smul.addr %s246, 4
        %s248 = scalar_lea.vmem %s1, %s247
        %s249 = smul.u32 16, %s23
        %v251 = vld [vmem:[%s242] sm:$0xff]
        %v252 = vld [vmem:[%s242 + $0x8] sm:$0xff]
        %v253 = vld [vmem:[%s242 + $0x10] sm:$0xff]
        %v254 = vld [vmem:[%s242 + $0x18] sm:$0xff]
        %v255 = vld [vmem:[%s242 + $0x20] sm:$0xff]
        %v256 = vld [vmem:[%s242 + $0x28] sm:$0xff]
        %v257 = vld [vmem:[%s242 + $0x30] sm:$0xff]
        %v258 = vld [vmem:[%s242 + $0x38] sm:$0xff]
        %v259 = vld [vmem:[%s242 + $0x40] sm:$0xff]
        %v260 = vld [vmem:[%s242 + $0x48] sm:$0xff]
        %v261 = vld [vmem:[%s242 + $0x50] sm:$0xff]
        %v262 = vld [vmem:[%s242 + $0x58] sm:$0xff]
        %v263 = vld [vmem:[%s242 + $0x60] sm:$0xff]
        %v264 = vld [vmem:[%s242 + $0x68] sm:$0xff]
        %v265 = vld [vmem:[%s242 + $0x70] sm:$0xff]
        %v266 = vld [vmem:[%s242 + $0x78] sm:$0xff]
        %v267 = vld [vmem:[%s242 + $0x80] sm:$0xff]
        %v268 = vld [vmem:[%s242 + $0x88] sm:$0xff]
        %v269 = vld [vmem:[%s242 + $0x90] sm:$0xff]
        %v270 = vld [vmem:[%s242 + $0x98] sm:$0xff]
        %v271 = vld [vmem:[%s242 + $0xa0] sm:$0xff]
        %v272 = vld [vmem:[%s242 + $0xa8] sm:$0xff]
        %v273 = vld [vmem:[%s242 + $0xb0] sm:$0xff]
        %v274 = vld [vmem:[%s242 + $0xb8] sm:$0xff]
        %v275 = vld [vmem:[%s242 + $0xc0] sm:$0xff]
        %v276 = vld [vmem:[%s242 + $0xc8] sm:$0xff]
        %v277 = vld [vmem:[%s242 + $0xd0] sm:$0xff]
        %v278 = vld [vmem:[%s242 + $0xd8] sm:$0xff]
        %v279 = vld [vmem:[%s242 + $0xe0] sm:$0xff]
        %v280 = vld [vmem:[%s242 + $0xe8] sm:$0xff]
        %v281 = vld [vmem:[%s242 + $0xf0] sm:$0xff]
        %v282 = vld [vmem:[%s242 + $0xf8] sm:$0xff]
        %v283 = vpack.c.bf16 %v252, %v251
        %v284 = vpack.c.bf16 %v254, %v253
        %v285 = vpack.c.bf16 %v256, %v255
        %v286 = vpack.c.bf16 %v258, %v257
        %v287 = vpack.c.bf16 %v260, %v259
        %v288 = vpack.c.bf16 %v262, %v261
        %v289 = vpack.c.bf16 %v264, %v263
        %v290 = vpack.c.bf16 %v266, %v265
        %v291 = vpack.c.bf16 %v268, %v267
        %v292 = vpack.c.bf16 %v270, %v269
        %v293 = vpack.c.bf16 %v272, %v271
        %v294 = vpack.c.bf16 %v274, %v273
        %v295 = vpack.c.bf16 %v276, %v275
        %v296 = vpack.c.bf16 %v278, %v277
        %v297 = vpack.c.bf16 %v280, %v279
        %v298 = vpack.c.bf16 %v282, %v281
        %v299 = vld [vmem:[%s2] sm:$0xff]
        %v300 = vld [vmem:[%s2 + $0x8] sm:$0xff]
        %v301 = vld [vmem:[%s2 + $0x10] sm:$0xff]
        %v302 = vld [vmem:[%s2 + $0x18] sm:$0xff]
        %v303 = vld [vmem:[%s2 + $0x20] sm:$0xff]
        %v304 = vld [vmem:[%s2 + $0x28] sm:$0xff]
        %v305 = vld [vmem:[%s2 + $0x30] sm:$0xff]
        %v306 = vld [vmem:[%s2 + $0x38] sm:$0xff]
        %v315 = vunpack.c.l.b16 %v299
        %v316 = vunpack.c.h.b16 %v299
        %v317 = vunpack.c.l.b16 %v300
        %v318 = vunpack.c.h.b16 %v300
        %v319 = vunpack.c.l.b16 %v301
        %v320 = vunpack.c.h.b16 %v301
        %v321 = vunpack.c.l.b16 %v302
        %v322 = vunpack.c.h.b16 %v302
        %v323 = vunpack.c.l.b16 %v303
        %v324 = vunpack.c.h.b16 %v303
        %v325 = vunpack.c.l.b16 %v304
        %v326 = vunpack.c.h.b16 %v304
        %v327 = vunpack.c.l.b16 %v305
        %v328 = vunpack.c.h.b16 %v305
        %v329 = vunpack.c.l.b16 %v306
        %v330 = vunpack.c.h.b16 %v306
        %v331 = vpack.c.b16 %v319, %v315
        %v332 = vpack.c.b16 %v320, %v316
        %v333 = vpack.c.b16 %v321, %v317
        %v334 = vpack.c.b16 %v322, %v318
        %v335 = vpack.c.b16 %v327, %v323
        %v336 = vpack.c.b16 %v328, %v324
        %v337 = vpack.c.b16 %v329, %v325
        %v338 = vpack.c.b16 %v330, %v326
        %vm347 = vcmask 261120
        %v349 = vsel %vm347, %v283, 0
        %v352 = vsel %vm347, %v284, 0
        %v355 = vsel %vm347, %v285, 0
        %v358 = vsel %vm347, %v286, 0
        %v361 = vsel %vm347, %v287, 0
        %v364 = vsel %vm347, %v288, 0
        %v367 = vsel %vm347, %v289, 0
        %v370 = vsel %vm347, %v290, 0
        %v373 = vsel %vm347, %v291, 0
        %v376 = vsel %vm347, %v292, 0
        %v379 = vsel %vm347, %v293, 0
        %v382 = vsel %vm347, %v294, 0
        %v385 = vsel %vm347, %v295, 0
        %v388 = vsel %vm347, %v296, 0
        %v391 = vsel %vm347, %v297, 0
        %v394 = vsel %vm347, %v298, 0
        %396 = vmatprep.subr.bf16.mxu0 %v332
        %397 = vmatpush1.bf16.msra.mxu0 %v331
        %398 = vmatprep.subr.bf16.mxu0 %v336
        %399 = vmatpush1.bf16.msra.mxu0 %v335
        %400 = vmatprep.subr.bf16.mxu0 0
        %401 = vmatpush1.bf16.msra.mxu0 0
        %402 = vmatprep.subr.bf16.mxu0 0
        %403 = vmatpush1.bf16.msra.mxu0 0
        %404 = vmatprep.subr.bf16.mxu0 0
        %405 = vmatpush1.bf16.msra.mxu0 0
        %406 = vmatprep.subr.bf16.mxu0 0
        %407 = vmatpush1.bf16.msra.mxu0 0
        %408 = vmatprep.subr.bf16.mxu0 0
        %409 = vmatpush1.bf16.msra.mxu0 0
        %410 = vmatprep.subr.bf16.mxu0 0
        %411 = vmatpush1.bf16.msra.mxu0 0
        %412 = vmatprep.subr.bf16.mxu0 0
        %413 = vmatpush1.bf16.msra.mxu0 0
        %414 = vmatprep.subr.bf16.mxu0 0
        %415 = vmatpush1.bf16.msra.mxu0 0
        %416 = vmatprep.subr.bf16.mxu0 0
        %417 = vmatpush1.bf16.msra.mxu0 0
        %418 = vmatprep.subr.bf16.mxu0 0
        %419 = vmatpush1.bf16.msra.mxu0 0
        %420 = vmatprep.subr.bf16.mxu0 0
        %421 = vmatpush1.bf16.msra.mxu0 0
        %422 = vmatprep.subr.bf16.mxu0 0
        %423 = vmatpush1.bf16.msra.mxu0 0
        %424 = vmatprep.subr.bf16.mxu0 0
        %425 = vmatpush1.bf16.msra.mxu0 0
        %426 = vmatprep.subr.bf16.mxu0 0
        %427 = vmatpush1.bf16.msra.mxu0 0
        %428 = vmatprep.mubr.bf16.mxu0 0
        %429 = vmatmul.mubr.bf16.gmra.mrb[0].mxu0 %v349
        %v430 = vpop.f32.mrb[0].mxu0
        %v431 = vadd.f32 0.0, %v430
        %v432 = vpop.f32.mrb[0].mxu0
        %v433 = vadd.f32 0.0, %v432
        %v434 = vpop.f32.mrb[0].mxu0
        %v435 = vadd.f32 0.0, %v434
        %v436 = vpop.f32.mrb[0].mxu0
        %v437 = vadd.f32 0.0, %v436
        %438 = vmatprep.mubr.bf16.mxu0 0
        %439 = vmatmul.mubr.bf16.gmra.mrb[0].mxu0 %v352
        %v440 = vpop.f32.mrb[0].mxu0
        %v441 = vadd.f32 0.0, %v440
        %v442 = vpop.f32.mrb[0].mxu0
        %v443 = vadd.f32 0.0, %v442
        %v444 = vpop.f32.mrb[0].mxu0
        %v445 = vadd.f32 0.0, %v444
        %v446 = vpop.f32.mrb[0].mxu0
        %v447 = vadd.f32 0.0, %v446
        %448 = vmatprep.mubr.bf16.mxu0 0
        %449 = vmatmul.mubr.bf16.gmra.mrb[0].mxu0 %v355
        %v450 = vpop.f32.mrb[0].mxu0
        %v451 = vadd.f32 0.0, %v450
        %v452 = vpop.f32.mrb[0].mxu0
        %v453 = vadd.f32 0.0, %v452
        %v454 = vpop.f32.mrb[0].mxu0
        %v455 = vadd.f32 0.0, %v454
        %v456 = vpop.f32.mrb[0].mxu0
        %v457 = vadd.f32 0.0, %v456
        %458 = vmatprep.mubr.bf16.mxu0 0
        %459 = vmatmul.mubr.bf16.gmra.mrb[0].mxu0 %v358
        %v460 = vpop.f32.mrb[0].mxu0
        %v461 = vadd.f32 0.0, %v460
        %v462 = vpop.f32.mrb[0].mxu0
        %v463 = vadd.f32 0.0, %v462
        %v464 = vpop.f32.mrb[0].mxu0
        %v465 = vadd.f32 0.0, %v464
        %v466 = vpop.f32.mrb[0].mxu0
        %v467 = vadd.f32 0.0, %v466
        %468 = vmatprep.mubr.bf16.mxu0 0
        %469 = vmatmul.mubr.bf16.gmra.mrb[0].mxu0 %v361
        %v470 = vpop.f32.mrb[0].mxu0
        %v471 = vadd.f32 0.0, %v470
        %v472 = vpop.f32.mrb[0].mxu0
        %v473 = vadd.f32 0.0, %v472
        %v474 = vpop.f32.mrb[0].mxu0
        %v475 = vadd.f32 0.0, %v474
        %v476 = vpop.f32.mrb[0].mxu0
        %v477 = vadd.f32 0.0, %v476
        %478 = vmatprep.mubr.bf16.mxu0 0
        %479 = vmatmul.mubr.bf16.gmra.mrb[0].mxu0 %v364
        %v480 = vpop.f32.mrb[0].mxu0
        %v481 = vadd.f32 0.0, %v480
        %v482 = vpop.f32.mrb[0].mxu0
        %v483 = vadd.f32 0.0, %v482
        %v484 = vpop.f32.mrb[0].mxu0
        %v485 = vadd.f32 0.0, %v484
        %v486 = vpop.f32.mrb[0].mxu0
        %v487 = vadd.f32 0.0, %v486
        %488 = vmatprep.mubr.bf16.mxu0 0
        %489 = vmatmul.mubr.bf16.gmra.mrb[0].mxu0 %v367
        %v490 = vpop.f32.mrb[0].mxu0
        %v491 = vadd.f32 0.0, %v490
        %v492 = vpop.f32.mrb[0].mxu0
        %v493 = vadd.f32 0.0, %v492
        %v494 = vpop.f32.mrb[0].mxu0
        %v495 = vadd.f32 0.0, %v494
        %v496 = vpop.f32.mrb[0].mxu0
        %v497 = vadd.f32 0.0, %v496
        %498 = vmatprep.mubr.bf16.mxu0 0
        %499 = vmatmul.mubr.bf16.gmra.mrb[0].mxu0 %v370
        %v500 = vpop.f32.mrb[0].mxu0
        %v501 = vadd.f32 0.0, %v500
        %v502 = vpop.f32.mrb[0].mxu0
        %v503 = vadd.f32 0.0, %v502
        %v504 = vpop.f32.mrb[0].mxu0
        %v505 = vadd.f32 0.0, %v504
        %v506 = vpop.f32.mrb[0].mxu0
        %v507 = vadd.f32 0.0, %v506
        %508 = vmatprep.mubr.bf16.mxu0 0
        %509 = vmatmul.mubr.bf16.gmra.mrb[0].mxu0 %v373
        %v510 = vpop.f32.mrb[0].mxu0
        %v511 = vadd.f32 0.0, %v510
        %v512 = vpop.f32.mrb[0].mxu0
        %v513 = vadd.f32 0.0, %v512
        %v514 = vpop.f32.mrb[0].mxu0
        %v515 = vadd.f32 0.0, %v514
        %v516 = vpop.f32.mrb[0].mxu0
        %v517 = vadd.f32 0.0, %v516
        %518 = vmatprep.mubr.bf16.mxu0 0
        %519 = vmatmul.mubr.bf16.gmra.mrb[0].mxu0 %v376
        %v520 = vpop.f32.mrb[0].mxu0
        %v521 = vadd.f32 0.0, %v520
        %v522 = vpop.f32.mrb[0].mxu0
        %v523 = vadd.f32 0.0, %v522
        %v524 = vpop.f32.mrb[0].mxu0
        %v525 = vadd.f32 0.0, %v524
        %v526 = vpop.f32.mrb[0].mxu0
        %v527 = vadd.f32 0.0, %v526
        %528 = vmatprep.mubr.bf16.mxu0 0
        %529 = vmatmul.mubr.bf16.gmra.mrb[0].mxu0 %v379
        %v530 = vpop.f32.mrb[0].mxu0
        %v531 = vadd.f32 0.0, %v530
        %v532 = vpop.f32.mrb[0].mxu0
        %v533 = vadd.f32 0.0, %v532
        %v534 = vpop.f32.mrb[0].mxu0
        %v535 = vadd.f32 0.0, %v534
        %v536 = vpop.f32.mrb[0].mxu0
        %v537 = vadd.f32 0.0, %v536
        %538 = vmatprep.mubr.bf16.mxu0 0
        %539 = vmatmul.mubr.bf16.gmra.mrb[0].mxu0 %v382
        %v540 = vpop.f32.mrb[0].mxu0
        %v541 = vadd.f32 0.0, %v540
        %v542 = vpop.f32.mrb[0].mxu0
        %v543 = vadd.f32 0.0, %v542
        %v544 = vpop.f32.mrb[0].mxu0
        %v545 = vadd.f32 0.0, %v544
        %v546 = vpop.f32.mrb[0].mxu0
        %v547 = vadd.f32 0.0, %v546
        %548 = vmatprep.mubr.bf16.mxu0 0
        %549 = vmatmul.mubr.bf16.gmra.mrb[0].mxu0 %v385
        %v550 = vpop.f32.mrb[0].mxu0
        %v551 = vadd.f32 0.0, %v550
        %v552 = vpop.f32.mrb[0].mxu0
        %v553 = vadd.f32 0.0, %v552
        %v554 = vpop.f32.mrb[0].mxu0
        %v555 = vadd.f32 0.0, %v554
        %v556 = vpop.f32.mrb[0].mxu0
        %v557 = vadd.f32 0.0, %v556
        %558 = vmatprep.mubr.bf16.mxu0 0
        %559 = vmatmul.mubr.bf16.gmra.mrb[0].mxu0 %v388
        %v560 = vpop.f32.mrb[0].mxu0
        %v561 = vadd.f32 0.0, %v560
        %v562 = vpop.f32.mrb[0].mxu0
        %v563 = vadd.f32 0.0, %v562
        %v564 = vpop.f32.mrb[0].mxu0
        %v565 = vadd.f32 0.0, %v564
        %v566 = vpop.f32.mrb[0].mxu0
        %v567 = vadd.f32 0.0, %v566
        %568 = vmatprep.mubr.bf16.mxu0 0
        %569 = vmatmul.mubr.bf16.gmra.mrb[0].mxu0 %v391
        %v570 = vpop.f32.mrb[0].mxu0
        %v571 = vadd.f32 0.0, %v570
        %v572 = vpop.f32.mrb[0].mxu0
        %v573 = vadd.f32 0.0, %v572
        %v574 = vpop.f32.mrb[0].mxu0
        %v575 = vadd.f32 0.0, %v574
        %v576 = vpop.f32.mrb[0].mxu0
        %v577 = vadd.f32 0.0, %v576
        %578 = vmatprep.mubr.bf16.mxu0 0
        %579 = vmatmul.mubr.bf16.gmra.mrb[0].mxu0 %v394
        %v580 = vpop.f32.mrb[0].mxu0
        %v581 = vadd.f32 0.0, %v580
        %v582 = vpop.f32.mrb[0].mxu0
        %v583 = vadd.f32 0.0, %v582
        %v584 = vpop.f32.mrb[0].mxu0
        %v585 = vadd.f32 0.0, %v584
        %v586 = vpop.f32.mrb[0].mxu0
        %v587 = vadd.f32 0.0, %v586
        %588 = vdwg.mxu0
        %589 = vmatprep.subr.bf16.mxu0 %v334
        %590 = vmatpush1.bf16.msra.mxu0 %v333
        %591 = vmatprep.subr.bf16.mxu0 %v338
        %592 = vmatpush1.bf16.msra.mxu0 %v337
        %593 = vmatprep.subr.bf16.mxu0 0
        %594 = vmatpush1.bf16.msra.mxu0 0
        %595 = vmatprep.subr.bf16.mxu0 0
        %596 = vmatpush1.bf16.msra.mxu0 0
        %597 = vmatprep.subr.bf16.mxu0 0
        %598 = vmatpush1.bf16.msra.mxu0 0
        %599 = vmatprep.subr.bf16.mxu0 0
        %600 = vmatpush1.bf16.msra.mxu0 0
        %601 = vmatprep.subr.bf16.mxu0 0
        %602 = vmatpush1.bf16.msra.mxu0 0
        %603 = vmatprep.subr.bf16.mxu0 0
        %604 = vmatpush1.bf16.msra.mxu0 0
        %605 = vmatprep.subr.bf16.mxu0 0
        %606 = vmatpush1.bf16.msra.mxu0 0
        %607 = vmatprep.subr.bf16.mxu0 0
        %608 = vmatpush1.bf16.msra.mxu0 0
        %609 = vmatprep.subr.bf16.mxu0 0
        %610 = vmatpush1.bf16.msra.mxu0 0
        %611 = vmatprep.subr.bf16.mxu0 0
        %612 = vmatpush1.bf16.msra.mxu0 0
        %613 = vmatprep.subr.bf16.mxu0 0
        %614 = vmatpush1.bf16.msra.mxu0 0
        %615 = vmatprep.subr.bf16.mxu0 0
        %616 = vmatpush1.bf16.msra.mxu0 0
        %617 = vmatprep.subr.bf16.mxu0 0
        %618 = vmatpush1.bf16.msra.mxu0 0
        %619 = vmatprep.subr.bf16.mxu0 0
        %620 = vmatpush1.bf16.msra.mxu0 0
        %621 = vmatprep.mubr.bf16.mxu0 0
        %622 = vmatmul.mubr.bf16.gmra.mrb[0].mxu0 %v349
        %v623 = vpop.f32.mrb[0].mxu0
        %v624 = vadd.f32 0.0, %v623
        %v625 = vpop.f32.mrb[0].mxu0
        %v626 = vadd.f32 0.0, %v625
        %v627 = vpop.f32.mrb[0].mxu0
        %v628 = vadd.f32 0.0, %v627
        %v629 = vpop.f32.mrb[0].mxu0
        %v630 = vadd.f32 0.0, %v629
        %631 = vmatprep.mubr.bf16.mxu0 0
        %632 = vmatmul.mubr.bf16.gmra.mrb[0].mxu0 %v352
        %v633 = vpop.f32.mrb[0].mxu0
        %v634 = vadd.f32 0.0, %v633
        %v635 = vpop.f32.mrb[0].mxu0
        %v636 = vadd.f32 0.0, %v635
        %v637 = vpop.f32.mrb[0].mxu0
        %v638 = vadd.f32 0.0, %v637
        %v639 = vpop.f32.mrb[0].mxu0
        %v640 = vadd.f32 0.0, %v639
        %641 = vmatprep.mubr.bf16.mxu0 0
        %642 = vmatmul.mubr.bf16.gmra.mrb[0].mxu0 %v355
        %v643 = vpop.f32.mrb[0].mxu0
        %v644 = vadd.f32 0.0, %v643
        %v645 = vpop.f32.mrb[0].mxu0
        %v646 = vadd.f32 0.0, %v645
        %v647 = vpop.f32.mrb[0].mxu0
        %v648 = vadd.f32 0.0, %v647
        %v649 = vpop.f32.mrb[0].mxu0
        %v650 = vadd.f32 0.0, %v649
        %651 = vmatprep.mubr.bf16.mxu0 0
        %652 = vmatmul.mubr.bf16.gmra.mrb[0].mxu0 %v358
        %v653 = vpop.f32.mrb[0].mxu0
        %v654 = vadd.f32 0.0, %v653
        %v655 = vpop.f32.mrb[0].mxu0
        %v656 = vadd.f32 0.0, %v655
        %v657 = vpop.f32.mrb[0].mxu0
        %v658 = vadd.f32 0.0, %v657
        %v659 = vpop.f32.mrb[0].mxu0
        %v660 = vadd.f32 0.0, %v659
        %661 = vmatprep.mubr.bf16.mxu0 0
        %662 = vmatmul.mubr.bf16.gmra.mrb[0].mxu0 %v361
        %v663 = vpop.f32.mrb[0].mxu0
        %v664 = vadd.f32 0.0, %v663
        %v665 = vpop.f32.mrb[0].mxu0
        %v666 = vadd.f32 0.0, %v665
        %v667 = vpop.f32.mrb[0].mxu0
        %v668 = vadd.f32 0.0, %v667
        %v669 = vpop.f32.mrb[0].mxu0
        %v670 = vadd.f32 0.0, %v669
        %671 = vmatprep.mubr.bf16.mxu0 0
        %672 = vmatmul.mubr.bf16.gmra.mrb[0].mxu0 %v364
        %v673 = vpop.f32.mrb[0].mxu0
        %v674 = vadd.f32 0.0, %v673
        %v675 = vpop.f32.mrb[0].mxu0
        %v676 = vadd.f32 0.0, %v675
        %v677 = vpop.f32.mrb[0].mxu0
        %v678 = vadd.f32 0.0, %v677
        %v679 = vpop.f32.mrb[0].mxu0
        %v680 = vadd.f32 0.0, %v679
        %681 = vmatprep.mubr.bf16.mxu0 0
        %682 = vmatmul.mubr.bf16.gmra.mrb[0].mxu0 %v367
        %v683 = vpop.f32.mrb[0].mxu0
        %v684 = vadd.f32 0.0, %v683
        %v685 = vpop.f32.mrb[0].mxu0
        %v686 = vadd.f32 0.0, %v685
        %v687 = vpop.f32.mrb[0].mxu0
        %v688 = vadd.f32 0.0, %v687
        %v689 = vpop.f32.mrb[0].mxu0
        %v690 = vadd.f32 0.0, %v689
        %691 = vmatprep.mubr.bf16.mxu0 0
        %692 = vmatmul.mubr.bf16.gmra.mrb[0].mxu0 %v370
        %v693 = vpop.f32.mrb[0].mxu0
        %v694 = vadd.f32 0.0, %v693
        %v695 = vpop.f32.mrb[0].mxu0
        %v696 = vadd.f32 0.0, %v695
        %v697 = vpop.f32.mrb[0].mxu0
        %v698 = vadd.f32 0.0, %v697
        %v699 = vpop.f32.mrb[0].mxu0
        %v700 = vadd.f32 0.0, %v699
        %701 = vmatprep.mubr.bf16.mxu0 0
        %702 = vmatmul.mubr.bf16.gmra.mrb[0].mxu0 %v373
        %v703 = vpop.f32.mrb[0].mxu0
        %v704 = vadd.f32 0.0, %v703
        %v705 = vpop.f32.mrb[0].mxu0
        %v706 = vadd.f32 0.0, %v705
        %v707 = vpop.f32.mrb[0].mxu0
        %v708 = vadd.f32 0.0, %v707
        %v709 = vpop.f32.mrb[0].mxu0
        %v710 = vadd.f32 0.0, %v709
        %711 = vmatprep.mubr.bf16.mxu0 0
        %712 = vmatmul.mubr.bf16.gmra.mrb[0].mxu0 %v376
        %v713 = vpop.f32.mrb[0].mxu0
        %v714 = vadd.f32 0.0, %v713
        %v715 = vpop.f32.mrb[0].mxu0
        %v716 = vadd.f32 0.0, %v715
        %v717 = vpop.f32.mrb[0].mxu0
        %v718 = vadd.f32 0.0, %v717
        %v719 = vpop.f32.mrb[0].mxu0
        %v720 = vadd.f32 0.0, %v719
        %721 = vmatprep.mubr.bf16.mxu0 0
        %722 = vmatmul.mubr.bf16.gmra.mrb[0].mxu0 %v379
        %v723 = vpop.f32.mrb[0].mxu0
        %v724 = vadd.f32 0.0, %v723
        %v725 = vpop.f32.mrb[0].mxu0
        %v726 = vadd.f32 0.0, %v725
        %v727 = vpop.f32.mrb[0].mxu0
        %v728 = vadd.f32 0.0, %v727
        %v729 = vpop.f32.mrb[0].mxu0
        %v730 = vadd.f32 0.0, %v729
        %731 = vmatprep.mubr.bf16.mxu0 0
        %732 = vmatmul.mubr.bf16.gmra.mrb[0].mxu0 %v382
        %v733 = vpop.f32.mrb[0].mxu0
        %v734 = vadd.f32 0.0, %v733
        %v735 = vpop.f32.mrb[0].mxu0
        %v736 = vadd.f32 0.0, %v735
        %v737 = vpop.f32.mrb[0].mxu0
        %v738 = vadd.f32 0.0, %v737
        %v739 = vpop.f32.mrb[0].mxu0
        %v740 = vadd.f32 0.0, %v739
        %741 = vmatprep.mubr.bf16.mxu0 0
        %742 = vmatmul.mubr.bf16.gmra.mrb[0].mxu0 %v385
        %v743 = vpop.f32.mrb[0].mxu0
        %v744 = vadd.f32 0.0, %v743
        %v745 = vpop.f32.mrb[0].mxu0
        %v746 = vadd.f32 0.0, %v745
        %v747 = vpop.f32.mrb[0].mxu0
        %v748 = vadd.f32 0.0, %v747
        %v749 = vpop.f32.mrb[0].mxu0
        %v750 = vadd.f32 0.0, %v749
        %751 = vmatprep.mubr.bf16.mxu0 0
        %752 = vmatmul.mubr.bf16.gmra.mrb[0].mxu0 %v388
        %v753 = vpop.f32.mrb[0].mxu0
        %v754 = vadd.f32 0.0, %v753
        %v755 = vpop.f32.mrb[0].mxu0
        %v756 = vadd.f32 0.0, %v755
        %v757 = vpop.f32.mrb[0].mxu0
        %v758 = vadd.f32 0.0, %v757
        %v759 = vpop.f32.mrb[0].mxu0
        %v760 = vadd.f32 0.0, %v759
        %761 = vmatprep.mubr.bf16.mxu0 0
        %762 = vmatmul.mubr.bf16.gmra.mrb[0].mxu0 %v391
        %v763 = vpop.f32.mrb[0].mxu0
        %v764 = vadd.f32 0.0, %v763
        %v765 = vpop.f32.mrb[0].mxu0
        %v766 = vadd.f32 0.0, %v765
        %v767 = vpop.f32.mrb[0].mxu0
        %v768 = vadd.f32 0.0, %v767
        %v769 = vpop.f32.mrb[0].mxu0
        %v770 = vadd.f32 0.0, %v769
        %771 = vmatprep.mubr.bf16.mxu0 0
        %772 = vmatmul.mubr.bf16.gmra.mrb[0].mxu0 %v394
        %v773 = vpop.f32.mrb[0].mxu0
        %v774 = vadd.f32 0.0, %v773
        %v775 = vpop.f32.mrb[0].mxu0
        %v776 = vadd.f32 0.0, %v775
        %v777 = vpop.f32.mrb[0].mxu0
        %v778 = vadd.f32 0.0, %v777
        %v779 = vpop.f32.mrb[0].mxu0
        %v780 = vadd.f32 0.0, %v779
        %781 = vdwg.mxu0
        %v782 = vxor.u32 %v626, 2147483648
        %v783 = vxor.u32 %v630, 2147483648
        %v784 = vxor.u32 %v636, 2147483648
        %v785 = vxor.u32 %v640, 2147483648
        %v786 = vxor.u32 %v646, 2147483648
        %v787 = vxor.u32 %v650, 2147483648
        %v788 = vxor.u32 %v656, 2147483648
        %v789 = vxor.u32 %v660, 2147483648
        %v790 = vxor.u32 %v666, 2147483648
        %v791 = vxor.u32 %v670, 2147483648
        %v792 = vxor.u32 %v676, 2147483648
        %v793 = vxor.u32 %v680, 2147483648
        %v794 = vxor.u32 %v686, 2147483648
        %v795 = vxor.u32 %v690, 2147483648
        %v796 = vxor.u32 %v696, 2147483648
        %v797 = vxor.u32 %v700, 2147483648
        %v798 = vxor.u32 %v706, 2147483648
        %v799 = vxor.u32 %v710, 2147483648
        %v800 = vxor.u32 %v716, 2147483648
        %v801 = vxor.u32 %v720, 2147483648
        %v802 = vxor.u32 %v726, 2147483648
        %v803 = vxor.u32 %v730, 2147483648
        %v804 = vxor.u32 %v736, 2147483648
        %v805 = vxor.u32 %v740, 2147483648
        %v806 = vxor.u32 %v746, 2147483648
        %v807 = vxor.u32 %v750, 2147483648
        %v808 = vxor.u32 %v756, 2147483648
        %v809 = vxor.u32 %v760, 2147483648
        %v810 = vxor.u32 %v766, 2147483648
        %v811 = vxor.u32 %v770, 2147483648
        %v812 = vxor.u32 %v776, 2147483648
        %v813 = vxor.u32 %v780, 2147483648
        %v814 = vmul.f32 %v782, 1.442695
        %v815 = vpow.pop %v814
        %v816 = vmul.f32 %v783, 1.442695
        %v817 = vpow.pop %v816
        %v818 = vmul.f32 %v784, 1.442695
        %v819 = vpow.pop %v818
        %v820 = vmul.f32 %v785, 1.442695
        %v821 = vpow.pop %v820
        %v822 = vmul.f32 %v786, 1.442695
        %v823 = vpow.pop %v822
        %v824 = vmul.f32 %v787, 1.442695
        %v825 = vpow.pop %v824
        %v826 = vmul.f32 %v788, 1.442695
        %v827 = vpow.pop %v826
        %v828 = vmul.f32 %v789, 1.442695
        %v829 = vpow.pop %v828
        %v830 = vmul.f32 %v790, 1.442695
        %v831 = vpow.pop %v830
        %v832 = vmul.f32 %v791, 1.442695
        %v833 = vpow.pop %v832
        %v834 = vmul.f32 %v792, 1.442695
        %v835 = vpow.pop %v834
        %v836 = vmul.f32 %v793, 1.442695
        %v837 = vpow.pop %v836
        %v838 = vmul.f32 %v794, 1.442695
        %v839 = vpow.pop %v838
        %v840 = vmul.f32 %v795, 1.442695
        %v841 = vpow.pop %v840
        %v842 = vmul.f32 %v796, 1.442695
        %v843 = vpow.pop %v842
        %v844 = vmul.f32 %v797, 1.442695
        %v845 = vpow.pop %v844
        %v846 = vmul.f32 %v798, 1.442695
        %v847 = vpow.pop %v846
        %v848 = vmul.f32 %v799, 1.442695
        %v849 = vpow.pop %v848
        %v850 = vmul.f32 %v800, 1.442695
        %v851 = vpow.pop %v850
        %v852 = vmul.f32 %v801, 1.442695
        %v853 = vpow.pop %v852
        %v854 = vmul.f32 %v802, 1.442695
        %v855 = vpow.pop %v854
        %v856 = vmul.f32 %v803, 1.442695
        %v857 = vpow.pop %v856
        %v858 = vmul.f32 %v804, 1.442695
        %v859 = vpow.pop %v858
        %v860 = vmul.f32 %v805, 1.442695
        %v861 = vpow.pop %v860
        %v862 = vmul.f32 %v806, 1.442695
        %v863 = vpow.pop %v862
        %v864 = vmul.f32 %v807, 1.442695
        %v865 = vpow.pop %v864
        %v866 = vmul.f32 %v808, 1.442695
        %v867 = vpow.pop %v866
        %v868 = vmul.f32 %v809, 1.442695
        %v869 = vpow.pop %v868
        %v870 = vmul.f32 %v810, 1.442695
        %v871 = vpow.pop %v870
        %v872 = vmul.f32 %v811, 1.442695
        %v873 = vpow.pop %v872
        %v874 = vmul.f32 %v812, 1.442695
        %v875 = vpow.pop %v874
        %v876 = vmul.f32 %v813, 1.442695
        %v877 = vpow.pop %v876
        %v878 = vadd.f32 %v815, 1.0
        %v879 = vadd.f32 %v817, 1.0
        %v880 = vadd.f32 %v819, 1.0
        %v881 = vadd.f32 %v821, 1.0
        %v882 = vadd.f32 %v823, 1.0
        %v883 = vadd.f32 %v825, 1.0
        %v884 = vadd.f32 %v827, 1.0
        %v885 = vadd.f32 %v829, 1.0
        %v886 = vadd.f32 %v831, 1.0
        %v887 = vadd.f32 %v833, 1.0
        %v888 = vadd.f32 %v835, 1.0
        %v889 = vadd.f32 %v837, 1.0
        %v890 = vadd.f32 %v839, 1.0
        %v891 = vadd.f32 %v841, 1.0
        %v892 = vadd.f32 %v843, 1.0
        %v893 = vadd.f32 %v845, 1.0
        %v894 = vadd.f32 %v847, 1.0
        %v895 = vadd.f32 %v849, 1.0
        %v896 = vadd.f32 %v851, 1.0
        %v897 = vadd.f32 %v853, 1.0
        %v898 = vadd.f32 %v855, 1.0
        %v899 = vadd.f32 %v857, 1.0
        %v900 = vadd.f32 %v859, 1.0
        %v901 = vadd.f32 %v861, 1.0
        %v902 = vadd.f32 %v863, 1.0
        %v903 = vadd.f32 %v865, 1.0
        %v904 = vadd.f32 %v867, 1.0
        %v905 = vadd.f32 %v869, 1.0
        %v906 = vadd.f32 %v871, 1.0
        %v907 = vadd.f32 %v873, 1.0
        %v908 = vadd.f32 %v875, 1.0
        %v909 = vadd.f32 %v877, 1.0
        %v910 = vrcp.pop %v878
        %v911 = vmul.f32 1.0, %v910
        %v912 = vrcp.pop %v879
        %v913 = vmul.f32 1.0, %v912
        %v914 = vrcp.pop %v880
        %v915 = vmul.f32 1.0, %v914
        %v916 = vrcp.pop %v881
        %v917 = vmul.f32 1.0, %v916
        %v918 = vrcp.pop %v882
        %v919 = vmul.f32 1.0, %v918
        %v920 = vrcp.pop %v883
        %v921 = vmul.f32 1.0, %v920
        %v922 = vrcp.pop %v884
        %v923 = vmul.f32 1.0, %v922
        %v924 = vrcp.pop %v885
        %v925 = vmul.f32 1.0, %v924
        %v926 = vrcp.pop %v886
        %v927 = vmul.f32 1.0, %v926
        %v928 = vrcp.pop %v887
        %v929 = vmul.f32 1.0, %v928
        %v930 = vrcp.pop %v888
        %v931 = vmul.f32 1.0, %v930
        %v932 = vrcp.pop %v889
        %v933 = vmul.f32 1.0, %v932
        %v934 = vrcp.pop %v890
        %v935 = vmul.f32 1.0, %v934
        %v936 = vrcp.pop %v891
        %v937 = vmul.f32 1.0, %v936
        %v938 = vrcp.pop %v892
        %v939 = vmul.f32 1.0, %v938
        %v940 = vrcp.pop %v893
        %v941 = vmul.f32 1.0, %v940
        %v942 = vrcp.pop %v894
        %v943 = vmul.f32 1.0, %v942
        %v944 = vrcp.pop %v895
        %v945 = vmul.f32 1.0, %v944
        %v946 = vrcp.pop %v896
        %v947 = vmul.f32 1.0, %v946
        %v948 = vrcp.pop %v897
        %v949 = vmul.f32 1.0, %v948
        %v950 = vrcp.pop %v898
        %v951 = vmul.f32 1.0, %v950
        %v952 = vrcp.pop %v899
        %v953 = vmul.f32 1.0, %v952
        %v954 = vrcp.pop %v900
        %v955 = vmul.f32 1.0, %v954
        %v956 = vrcp.pop %v901
        %v957 = vmul.f32 1.0, %v956
        %v958 = vrcp.pop %v902
        %v959 = vmul.f32 1.0, %v958
        %v960 = vrcp.pop %v903
        %v961 = vmul.f32 1.0, %v960
        %v962 = vrcp.pop %v904
        %v963 = vmul.f32 1.0, %v962
        %v964 = vrcp.pop %v905
        %v965 = vmul.f32 1.0, %v964
        %v966 = vrcp.pop %v906
        %v967 = vmul.f32 1.0, %v966
        %v968 = vrcp.pop %v907
        %v969 = vmul.f32 1.0, %v968
        %v970 = vrcp.pop %v908
        %v971 = vmul.f32 1.0, %v970
        %v972 = vrcp.pop %v909
        %v973 = vmul.f32 1.0, %v972
        %v974 = vpack.c.bf16 %v435, %v431
        %v975 = vpack.c.bf16 %v445, %v441
        %v976 = vpack.c.bf16 %v455, %v451
        %v977 = vpack.c.bf16 %v465, %v461
        %v978 = vpack.c.bf16 %v475, %v471
        %v979 = vpack.c.bf16 %v485, %v481
        %v980 = vpack.c.bf16 %v495, %v491
        %v981 = vpack.c.bf16 %v505, %v501
        %v982 = vpack.c.bf16 %v515, %v511
        %v983 = vpack.c.bf16 %v525, %v521
        %v984 = vpack.c.bf16 %v535, %v531
        %v985 = vpack.c.bf16 %v545, %v541
        %v986 = vpack.c.bf16 %v555, %v551
        %v987 = vpack.c.bf16 %v565, %v561
        %v988 = vpack.c.bf16 %v575, %v571
        %v989 = vpack.c.bf16 %v585, %v581
        %v990 = vpack.c.bf16 %v437, %v433
        %v991 = vpack.c.bf16 %v447, %v443
        %v992 = vpack.c.bf16 %v457, %v453
        %v993 = vpack.c.bf16 %v467, %v463
        %v994 = vpack.c.bf16 %v477, %v473
        %v995 = vpack.c.bf16 %v487, %v483
        %v996 = vpack.c.bf16 %v497, %v493
        %v997 = vpack.c.bf16 %v507, %v503
        %v998 = vpack.c.bf16 %v517, %v513
        %v999 = vpack.c.bf16 %v527, %v523
        %v1000 = vpack.c.bf16 %v537, %v533
        %v1001 = vpack.c.bf16 %v547, %v543
        %v1002 = vpack.c.bf16 %v557, %v553
        %v1003 = vpack.c.bf16 %v567, %v563
        %v1004 = vpack.c.bf16 %v577, %v573
        %v1005 = vpack.c.bf16 %v587, %v583
        %v1006 = vpack.c.bf16 %v628, %v624
        %v1007 = vpack.c.bf16 %v638, %v634
        %v1008 = vpack.c.bf16 %v648, %v644
        %v1009 = vpack.c.bf16 %v658, %v654
        %v1010 = vpack.c.bf16 %v668, %v664
        %v1011 = vpack.c.bf16 %v678, %v674
        %v1012 = vpack.c.bf16 %v688, %v684
        %v1013 = vpack.c.bf16 %v698, %v694
        %v1014 = vpack.c.bf16 %v708, %v704
        %v1015 = vpack.c.bf16 %v718, %v714
        %v1016 = vpack.c.bf16 %v728, %v724
        %v1017 = vpack.c.bf16 %v738, %v734
        %v1018 = vpack.c.bf16 %v748, %v744
        %v1019 = vpack.c.bf16 %v758, %v754
        %v1020 = vpack.c.bf16 %v768, %v764
        %v1021 = vpack.c.bf16 %v778, %v774
        %v1022 = vld [vmem:[%s248] sm:$0xf]
        %v1023 = vld [vmem:[%s248 + $0x4] sm:$0xf]
        %v1024 = vunpack.c.l.bf16 %v1022
        %v1025 = vunpack.c.l.bf16 %v1023
        %v1027 = vsel %vm347, %v974, 0
        %v1030 = vsel %vm347, %v990, 0
        %1032 = vmatprep.subr.bf16.mxu0 0
        %1033 = vmatpush1.bf16.xpose.msra.mxu0 %v1030
        %1034 = vmatprep.subr.bf16.mxu0 0
        %1035 = vmatpush1.bf16.xpose.msra.mxu0 0
        %1036 = vmatprep.subr.bf16.mxu0 0
        %1037 = vmatpush1.bf16.xpose.msra.mxu0 0
        %1038 = vmatprep.subr.bf16.mxu0 0
        %1039 = vmatpush1.bf16.xpose.msra.mxu0 0
        %1040 = vmatprep.subr.bf16.mxu0 0
        %1041 = vmatpush1.bf16.xpose.msra.mxu0 0
        %1042 = vmatprep.subr.bf16.mxu0 0
        %1043 = vmatpush1.bf16.xpose.msra.mxu0 0
        %1044 = vmatprep.subr.bf16.mxu0 0
        %1045 = vmatpush1.bf16.xpose.msra.mxu0 0
        %1046 = vmatprep.subr.bf16.mxu0 0
        %1047 = vmatpush1.bf16.xpose.msra.mxu0 0
        %1048 = vmatprep.subr.bf16.mxu0 0
        %1049 = vmatpush1.bf16.xpose.msra.mxu0 0
        %1050 = vmatprep.subr.bf16.mxu0 0
        %1051 = vmatpush1.bf16.xpose.msra.mxu0 0
        %1052 = vmatprep.subr.bf16.mxu0 0
        %1053 = vmatpush1.bf16.xpose.msra.mxu0 0
        %1054 = vmatprep.subr.bf16.mxu0 0
        %1055 = vmatpush1.bf16.xpose.msra.mxu0 0
        %1056 = vmatprep.subr.bf16.mxu0 0
        %1057 = vmatpush1.bf16.xpose.msra.mxu0 0
        %1058 = vmatprep.subr.bf16.mxu0 0
        %1059 = vmatpush1.bf16.xpose.msra.mxu0 0
        %1060 = vmatprep.subr.bf16.mxu0 0
        %1061 = vmatpush1.bf16.xpose.msra.mxu0 0
        %1062 = vmatprep.subr.bf16.mxu0 0
        %1063 = vmatpush1.bf16.xpose.msra.mxu0 0
        %1064 = vmatprep.mubr.bf16.mxu0 0
        %1065 = vmatmul.mubr.bf16.gmra.mrb[0].mxu0 %v1027
        %v1066 = vpop.f32.mrb[0].mxu0
        %v1067 = vadd.f32 %v1024, %v1066
        %v1068 = vpop.f32.mrb[0].mxu0
        %v1069 = vpop.f32.mrb[0].mxu0
        %v1070 = vadd.f32 %v1025, %v1069
        %v1071 = vpop.f32.mrb[0].mxu0
        %1072 = vdwg.mxu0
        %v1074 = vsel %vm347, %v975, 0
        %v1077 = vsel %vm347, %v991, 0
        %1079 = vmatprep.subr.bf16.mxu0 0
        %1080 = vmatpush1.bf16.xpose.msra.mxu0 %v1077
        %1081 = vmatprep.subr.bf16.mxu0 0
        %1082 = vmatpush1.bf16.xpose.msra.mxu0 0
        %1083 = vmatprep.subr.bf16.mxu0 0
        %1084 = vmatpush1.bf16.xpose.msra.mxu0 0
        %1085 = vmatprep.subr.bf16.mxu0 0
        %1086 = vmatpush1.bf16.xpose.msra.mxu0 0
        %1087 = vmatprep.subr.bf16.mxu0 0
        %1088 = vmatpush1.bf16.xpose.msra.mxu0 0
        %1089 = vmatprep.subr.bf16.mxu0 0
        %1090 = vmatpush1.bf16.xpose.msra.mxu0 0
        %1091 = vmatprep.subr.bf16.mxu0 0
        %1092 = vmatpush1.bf16.xpose.msra.mxu0 0
        %1093 = vmatprep.subr.bf16.mxu0 0
        %1094 = vmatpush1.bf16.xpose.msra.mxu0 0
        %1095 = vmatprep.subr.bf16.mxu0 0
        %1096 = vmatpush1.bf16.xpose.msra.mxu0 0
        %1097 = vmatprep.subr.bf16.mxu0 0
        %1098 = vmatpush1.bf16.xpose.msra.mxu0 0
        %1099 = vmatprep.subr.bf16.mxu0 0
        %1100 = vmatpush1.bf16.xpose.msra.mxu0 0
        %1101 = vmatprep.subr.bf16.mxu0 0
        %1102 = vmatpush1.bf16.xpose.msra.mxu0 0
        %1103 = vmatprep.subr.bf16.mxu0 0
        %1104 = vmatpush1.bf16.xpose.msra.mxu0 0
        %1105 = vmatprep.subr.bf16.mxu0 0
        %1106 = vmatpush1.bf16.xpose.msra.mxu0 0
        %1107 = vmatprep.subr.bf16.mxu0 0
        %1108 = vmatpush1.bf16.xpose.msra.mxu0 0
        %1109 = vmatprep.subr.bf16.mxu0 0
        %1110 = vmatpush1.bf16.xpose.msra.mxu0 0
        %1111 = vmatprep.mubr.bf16.mxu0 0
        %1112 = vmatmul.mubr.bf16.gmra.mrb[0].mxu0 %v1074
        %v1113 = vpop.f32.mrb[0].mxu0
        %v1114 = vadd.f32 %v1024, %v1113
        %v1115 = vpop.f32.mrb[0].mxu0
        %v1116 = vpop.f32.mrb[0].mxu0
        %v1117 = vadd.f32 %v1025, %v1116
        %v1118 = vpop.f32.mrb[0].mxu0
        %1119 = vdwg.mxu0
        %v1121 = vsel %vm347, %v976, 0
        %v1124 = vsel %vm347, %v992, 0
        %1126 = vmatprep.subr.bf16.mxu0 0
        %1127 = vmatpush1.bf16.xpose.msra.mxu0 %v1124
        %1128 = vmatprep.subr.bf16.mxu0 0
        %1129 = vmatpush1.bf16.xpose.msra.mxu0 0
        %1130 = vmatprep.subr.bf16.mxu0 0
        %1131 = vmatpush1.bf16.xpose.msra.mxu0 0
        %1132 = vmatprep.subr.bf16.mxu0 0
        %1133 = vmatpush1.bf16.xpose.msra.mxu0 0
        %1134 = vmatprep.subr.bf16.mxu0 0
        %1135 = vmatpush1.bf16.xpose.msra.mxu0 0
        %1136 = vmatprep.subr.bf16.mxu0 0
        %1137 = vmatpush1.bf16.xpose.msra.mxu0 0
        %1138 = vmatprep.subr.bf16.mxu0 0
        %1139 = vmatpush1.bf16.xpose.msra.mxu0 0
        %1140 = vmatprep.subr.bf16.mxu0 0
        %1141 = vmatpush1.bf16.xpose.msra.mxu0 0
        %1142 = vmatprep.subr.bf16.mxu0 0
        %1143 = vmatpush1.bf16.xpose.msra.mxu0 0
        %1144 = vmatprep.subr.bf16.mxu0 0
        %1145 = vmatpush1.bf16.xpose.msra.mxu0 0
        %1146 = vmatprep.subr.bf16.mxu0 0
        %1147 = vmatpush1.bf16.xpose.msra.mxu0 0
        %1148 = vmatprep.subr.bf16.mxu0 0
        %1149 = vmatpush1.bf16.xpose.msra.mxu0 0
        %1150 = vmatprep.subr.bf16.mxu0 0
        %1151 = vmatpush1.bf16.xpose.msra.mxu0 0
        %1152 = vmatprep.subr.bf16.mxu0 0
        %1153 = vmatpush1.bf16.xpose.msra.mxu0 0
        %1154 = vmatprep.subr.bf16.mxu0 0
        %1155 = vmatpush1.bf16.xpose.msra.mxu0 0
        %1156 = vmatprep.subr.bf16.mxu0 0
        %1157 = vmatpush1.bf16.xpose.msra.mxu0 0
        %1158 = vmatprep.mubr.bf16.mxu0 0
        %1159 = vmatmul.mubr.bf16.gmra.mrb[0].mxu0 %v1121
        %v1160 = vpop.f32.mrb[0].mxu0
        %v1161 = vadd.f32 %v1024, %v1160
        %v1162 = vpop.f32.mrb[0].mxu0
        %v1163 = vpop.f32.mrb[0].mxu0
        %v1164 = vadd.f32 %v1025, %v1163
        %v1165 = vpop.f32.mrb[0].mxu0
        %1166 = vdwg.mxu0
        %v1168 = vsel %vm347, %v977, 0
        %v1171 = vsel %vm347, %v993, 0
        %1173 = vmatprep.subr.bf16.mxu0 0
        %1174 = vmatpush1.bf16.xpose.msra.mxu0 %v1171
        %1175 = vmatprep.subr.bf16.mxu0 0
        %1176 = vmatpush1.bf16.xpose.msra.mxu0 0
        %1177 = vmatprep.subr.bf16.mxu0 0
        %1178 = vmatpush1.bf16.xpose.msra.mxu0 0
        %1179 = vmatprep.subr.bf16.mxu0 0
        %1180 = vmatpush1.bf16.xpose.msra.mxu0 0
        %1181 = vmatprep.subr.bf16.mxu0 0
        %1182 = vmatpush1.bf16.xpose.msra.mxu0 0
        %1183 = vmatprep.subr.bf16.mxu0 0
        %1184 = vmatpush1.bf16.xpose.msra.mxu0 0
        %1185 = vmatprep.subr.bf16.mxu0 0
        %1186 = vmatpush1.bf16.xpose.msra.mxu0 0
        %1187 = vmatprep.subr.bf16.mxu0 0
        %1188 = vmatpush1.bf16.xpose.msra.mxu0 0
        %1189 = vmatprep.subr.bf16.mxu0 0
        %1190 = vmatpush1.bf16.xpose.msra.mxu0 0
        %1191 = vmatprep.subr.bf16.mxu0 0
        %1192 = vmatpush1.bf16.xpose.msra.mxu0 0
        %1193 = vmatprep.subr.bf16.mxu0 0
        %1194 = vmatpush1.bf16.xpose.msra.mxu0 0
        %1195 = vmatprep.subr.bf16.mxu0 0
        %1196 = vmatpush1.bf16.xpose.msra.mxu0 0
        %1197 = vmatprep.subr.bf16.mxu0 0
        %1198 = vmatpush1.bf16.xpose.msra.mxu0 0
        %1199 = vmatprep.subr.bf16.mxu0 0
        %1200 = vmatpush1.bf16.xpose.msra.mxu0 0
        %1201 = vmatprep.subr.bf16.mxu0 0
        %1202 = vmatpush1.bf16.xpose.msra.mxu0 0
        %1203 = vmatprep.subr.bf16.mxu0 0
        %1204 = vmatpush1.bf16.xpose.msra.mxu0 0
        %1205 = vmatprep.mubr.bf16.mxu0 0
        %1206 = vmatmul.mubr.bf16.gmra.mrb[0].mxu0 %v1168
        %v1207 = vpop.f32.mrb[0].mxu0
        %v1208 = vadd.f32 %v1024, %v1207
        %v1209 = vpop.f32.mrb[0].mxu0
        %v1210 = vpop.f32.mrb[0].mxu0
        %v1211 = vadd.f32 %v1025, %v1210
        %v1212 = vpop.f32.mrb[0].mxu0
        %1213 = vdwg.mxu0
        %v1215 = vsel %vm347, %v978, 0
        %v1218 = vsel %vm347, %v994, 0
        %1220 = vmatprep.subr.bf16.mxu0 0
        %1221 = vmatpush1.bf16.xpose.msra.mxu0 %v1218
        %1222 = vmatprep.subr.bf16.mxu0 0
        %1223 = vmatpush1.bf16.xpose.msra.mxu0 0
        %1224 = vmatprep.subr.bf16.mxu0 0
        %1225 = vmatpush1.bf16.xpose.msra.mxu0 0
        %1226 = vmatprep.subr.bf16.mxu0 0
        %1227 = vmatpush1.bf16.xpose.msra.mxu0 0
        %1228 = vmatprep.subr.bf16.mxu0 0
        %1229 = vmatpush1.bf16.xpose.msra.mxu0 0
        %1230 = vmatprep.subr.bf16.mxu0 0
        %1231 = vmatpush1.bf16.xpose.msra.mxu0 0
        %1232 = vmatprep.subr.bf16.mxu0 0
        %1233 = vmatpush1.bf16.xpose.msra.mxu0 0
        %1234 = vmatprep.subr.bf16.mxu0 0
        %1235 = vmatpush1.bf16.xpose.msra.mxu0 0
        %1236 = vmatprep.subr.bf16.mxu0 0
        %1237 = vmatpush1.bf16.xpose.msra.mxu0 0
        %1238 = vmatprep.subr.bf16.mxu0 0
        %1239 = vmatpush1.bf16.xpose.msra.mxu0 0
        %1240 = vmatprep.subr.bf16.mxu0 0
        %1241 = vmatpush1.bf16.xpose.msra.mxu0 0
        %1242 = vmatprep.subr.bf16.mxu0 0
        %1243 = vmatpush1.bf16.xpose.msra.mxu0 0
        %1244 = vmatprep.subr.bf16.mxu0 0
        %1245 = vmatpush1.bf16.xpose.msra.mxu0 0
        %1246 = vmatprep.subr.bf16.mxu0 0
        %1247 = vmatpush1.bf16.xpose.msra.mxu0 0
        %1248 = vmatprep.subr.bf16.mxu0 0
        %1249 = vmatpush1.bf16.xpose.msra.mxu0 0
        %1250 = vmatprep.subr.bf16.mxu0 0
        %1251 = vmatpush1.bf16.xpose.msra.mxu0 0
        %1252 = vmatprep.mubr.bf16.mxu0 0
        %1253 = vmatmul.mubr.bf16.gmra.mrb[0].mxu0 %v1215
        %v1254 = vpop.f32.mrb[0].mxu0
        %v1255 = vadd.f32 %v1024, %v1254
        %v1256 = vpop.f32.mrb[0].mxu0
        %v1257 = vpop.f32.mrb[0].mxu0
        %v1258 = vadd.f32 %v1025, %v1257
        %v1259 = vpop.f32.mrb[0].mxu0
        %1260 = vdwg.mxu0
        %v1262 = vsel %vm347, %v979, 0
        %v1265 = vsel %vm347, %v995, 0
        %1267 = vmatprep.subr.bf16.mxu0 0
        %1268 = vmatpush1.bf16.xpose.msra.mxu0 %v1265
        %1269 = vmatprep.subr.bf16.mxu0 0
        %1270 = vmatpush1.bf16.xpose.msra.mxu0 0
        %1271 = vmatprep.subr.bf16.mxu0 0
        %1272 = vmatpush1.bf16.xpose.msra.mxu0 0
        %1273 = vmatprep.subr.bf16.mxu0 0
        %1274 = vmatpush1.bf16.xpose.msra.mxu0 0
        %1275 = vmatprep.subr.bf16.mxu0 0
        %1276 = vmatpush1.bf16.xpose.msra.mxu0 0
        %1277 = vmatprep.subr.bf16.mxu0 0
        %1278 = vmatpush1.bf16.xpose.msra.mxu0 0
        %1279 = vmatprep.subr.bf16.mxu0 0
        %1280 = vmatpush1.bf16.xpose.msra.mxu0 0
        %1281 = vmatprep.subr.bf16.mxu0 0
        %1282 = vmatpush1.bf16.xpose.msra.mxu0 0
        %1283 = vmatprep.subr.bf16.mxu0 0
        %1284 = vmatpush1.bf16.xpose.msra.mxu0 0
        %1285 = vmatprep.subr.bf16.mxu0 0
        %1286 = vmatpush1.bf16.xpose.msra.mxu0 0
        %1287 = vmatprep.subr.bf16.mxu0 0
        %1288 = vmatpush1.bf16.xpose.msra.mxu0 0
        %1289 = vmatprep.subr.bf16.mxu0 0
        %1290 = vmatpush1.bf16.xpose.msra.mxu0 0
        %1291 = vmatprep.subr.bf16.mxu0 0
        %1292 = vmatpush1.bf16.xpose.msra.mxu0 0
        %1293 = vmatprep.subr.bf16.mxu0 0
        %1294 = vmatpush1.bf16.xpose.msra.mxu0 0
        %1295 = vmatprep.subr.bf16.mxu0 0
        %1296 = vmatpush1.bf16.xpose.msra.mxu0 0
        %1297 = vmatprep.subr.bf16.mxu0 0
        %1298 = vmatpush1.bf16.xpose.msra.mxu0 0
        %1299 = vmatprep.mubr.bf16.mxu0 0
        %1300 = vmatmul.mubr.bf16.gmra.mrb[0].mxu0 %v1262
        %v1301 = vpop.f32.mrb[0].mxu0
        %v1302 = vadd.f32 %v1024, %v1301
        %v1303 = vpop.f32.mrb[0].mxu0
        %v1304 = vpop.f32.mrb[0].mxu0
        %v1305 = vadd.f32 %v1025, %v1304
        %v1306 = vpop.f32.mrb[0].mxu0
        %1307 = vdwg.mxu0
        %v1309 = vsel %vm347, %v980, 0
        %v1312 = vsel %vm347, %v996, 0
        %1314 = vmatprep.subr.bf16.mxu0 0
        %1315 = vmatpush1.bf16.xpose.msra.mxu0 %v1312
        %1316 = vmatprep.subr.bf16.mxu0 0
        %1317 = vmatpush1.bf16.xpose.msra.mxu0 0
        %1318 = vmatprep.subr.bf16.mxu0 0
        %1319 = vmatpush1.bf16.xpose.msra.mxu0 0
        %1320 = vmatprep.subr.bf16.mxu0 0
        %1321 = vmatpush1.bf16.xpose.msra.mxu0 0
        %1322 = vmatprep.subr.bf16.mxu0 0
        %1323 = vmatpush1.bf16.xpose.msra.mxu0 0
        %1324 = vmatprep.subr.bf16.mxu0 0
        %1325 = vmatpush1.bf16.xpose.msra.mxu0 0
        %1326 = vmatprep.subr.bf16.mxu0 0
        %1327 = vmatpush1.bf16.xpose.msra.mxu0 0
        %1328 = vmatprep.subr.bf16.mxu0 0
        %1329 = vmatpush1.bf16.xpose.msra.mxu0 0
        %1330 = vmatprep.subr.bf16.mxu0 0
        %1331 = vmatpush1.bf16.xpose.msra.mxu0 0
        %1332 = vmatprep.subr.bf16.mxu0 0
        %1333 = vmatpush1.bf16.xpose.msra.mxu0 0
        %1334 = vmatprep.subr.bf16.mxu0 0
        %1335 = vmatpush1.bf16.xpose.msra.mxu0 0
        %1336 = vmatprep.subr.bf16.mxu0 0
        %1337 = vmatpush1.bf16.xpose.msra.mxu0 0
        %1338 = vmatprep.subr.bf16.mxu0 0
        %1339 = vmatpush1.bf16.xpose.msra.mxu0 0
        %1340 = vmatprep.subr.bf16.mxu0 0
        %1341 = vmatpush1.bf16.xpose.msra.mxu0 0
        %1342 = vmatprep.subr.bf16.mxu0 0
        %1343 = vmatpush1.bf16.xpose.msra.mxu0 0
        %1344 = vmatprep.subr.bf16.mxu0 0
        %1345 = vmatpush1.bf16.xpose.msra.mxu0 0
        %1346 = vmatprep.mubr.bf16.mxu0 0
        %1347 = vmatmul.mubr.bf16.gmra.mrb[0].mxu0 %v1309
        %v1348 = vpop.f32.mrb[0].mxu0
        %v1349 = vadd.f32 %v1024, %v1348
        %v1350 = vpop.f32.mrb[0].mxu0
        %v1351 = vpop.f32.mrb[0].mxu0
        %v1352 = vadd.f32 %v1025, %v1351
        %v1353 = vpop.f32.mrb[0].mxu0
        %1354 = vdwg.mxu0
        %v1356 = vsel %vm347, %v981, 0
        %v1359 = vsel %vm347, %v997, 0
        %1361 = vmatprep.subr.bf16.mxu0 0
        %1362 = vmatpush1.bf16.xpose.msra.mxu0 %v1359
        %1363 = vmatprep.subr.bf16.mxu0 0
        %1364 = vmatpush1.bf16.xpose.msra.mxu0 0
        %1365 = vmatprep.subr.bf16.mxu0 0
        %1366 = vmatpush1.bf16.xpose.msra.mxu0 0
        %1367 = vmatprep.subr.bf16.mxu0 0
        %1368 = vmatpush1.bf16.xpose.msra.mxu0 0
        %1369 = vmatprep.subr.bf16.mxu0 0
        %1370 = vmatpush1.bf16.xpose.msra.mxu0 0
        %1371 = vmatprep.subr.bf16.mxu0 0
        %1372 = vmatpush1.bf16.xpose.msra.mxu0 0
        %1373 = vmatprep.subr.bf16.mxu0 0
        %1374 = vmatpush1.bf16.xpose.msra.mxu0 0
        %1375 = vmatprep.subr.bf16.mxu0 0
        %1376 = vmatpush1.bf16.xpose.msra.mxu0 0
        %1377 = vmatprep.subr.bf16.mxu0 0
        %1378 = vmatpush1.bf16.xpose.msra.mxu0 0
        %1379 = vmatprep.subr.bf16.mxu0 0
        %1380 = vmatpush1.bf16.xpose.msra.mxu0 0
        %1381 = vmatprep.subr.bf16.mxu0 0
        %1382 = vmatpush1.bf16.xpose.msra.mxu0 0
        %1383 = vmatprep.subr.bf16.mxu0 0
        %1384 = vmatpush1.bf16.xpose.msra.mxu0 0
        %1385 = vmatprep.subr.bf16.mxu0 0
        %1386 = vmatpush1.bf16.xpose.msra.mxu0 0
        %1387 = vmatprep.subr.bf16.mxu0 0
        %1388 = vmatpush1.bf16.xpose.msra.mxu0 0
        %1389 = vmatprep.subr.bf16.mxu0 0
        %1390 = vmatpush1.bf16.xpose.msra.mxu0 0
        %1391 = vmatprep.subr.bf16.mxu0 0
        %1392 = vmatpush1.bf16.xpose.msra.mxu0 0
        %1393 = vmatprep.mubr.bf16.mxu0 0
        %1394 = vmatmul.mubr.bf16.gmra.mrb[0].mxu0 %v1356
        %v1395 = vpop.f32.mrb[0].mxu0
        %v1396 = vadd.f32 %v1024, %v1395
        %v1397 = vpop.f32.mrb[0].mxu0
        %v1398 = vpop.f32.mrb[0].mxu0
        %v1399 = vadd.f32 %v1025, %v1398
        %v1400 = vpop.f32.mrb[0].mxu0
        %1401 = vdwg.mxu0
        %v1403 = vsel %vm347, %v982, 0
        %v1406 = vsel %vm347, %v998, 0
        %1408 = vmatprep.subr.bf16.mxu0 0
        %1409 = vmatpush1.bf16.xpose.msra.mxu0 %v1406
        %1410 = vmatprep.subr.bf16.mxu0 0
        %1411 = vmatpush1.bf16.xpose.msra.mxu0 0
        %1412 = vmatprep.subr.bf16.mxu0 0
        %1413 = vmatpush1.bf16.xpose.msra.mxu0 0
        %1414 = vmatprep.subr.bf16.mxu0 0
        %1415 = vmatpush1.bf16.xpose.msra.mxu0 0
        %1416 = vmatprep.subr.bf16.mxu0 0
        %1417 = vmatpush1.bf16.xpose.msra.mxu0 0
        %1418 = vmatprep.subr.bf16.mxu0 0
        %1419 = vmatpush1.bf16.xpose.msra.mxu0 0
        %1420 = vmatprep.subr.bf16.mxu0 0
        %1421 = vmatpush1.bf16.xpose.msra.mxu0 0
        %1422 = vmatprep.subr.bf16.mxu0 0
        %1423 = vmatpush1.bf16.xpose.msra.mxu0 0
        %1424 = vmatprep.subr.bf16.mxu0 0
        %1425 = vmatpush1.bf16.xpose.msra.mxu0 0
        %1426 = vmatprep.subr.bf16.mxu0 0
        %1427 = vmatpush1.bf16.xpose.msra.mxu0 0
        %1428 = vmatprep.subr.bf16.mxu0 0
        %1429 = vmatpush1.bf16.xpose.msra.mxu0 0
        %1430 = vmatprep.subr.bf16.mxu0 0
        %1431 = vmatpush1.bf16.xpose.msra.mxu0 0
        %1432 = vmatprep.subr.bf16.mxu0 0
        %1433 = vmatpush1.bf16.xpose.msra.mxu0 0
        %1434 = vmatprep.subr.bf16.mxu0 0
        %1435 = vmatpush1.bf16.xpose.msra.mxu0 0
        %1436 = vmatprep.subr.bf16.mxu0 0
        %1437 = vmatpush1.bf16.xpose.msra.mxu0 0
        %1438 = vmatprep.subr.bf16.mxu0 0
        %1439 = vmatpush1.bf16.xpose.msra.mxu0 0
        %1440 = vmatprep.mubr.bf16.mxu0 0
        %1441 = vmatmul.mubr.bf16.gmra.mrb[0].mxu0 %v1403
        %v1442 = vpop.f32.mrb[0].mxu0
        %v1443 = vadd.f32 %v1024, %v1442
        %v1444 = vpop.f32.mrb[0].mxu0
        %v1445 = vpop.f32.mrb[0].mxu0
        %v1446 = vadd.f32 %v1025, %v1445
        %v1447 = vpop.f32.mrb[0].mxu0
        %1448 = vdwg.mxu0
        %v1450 = vsel %vm347, %v983, 0
        %v1453 = vsel %vm347, %v999, 0
        %1455 = vmatprep.subr.bf16.mxu0 0
        %1456 = vmatpush1.bf16.xpose.msra.mxu0 %v1453
        %1457 = vmatprep.subr.bf16.mxu0 0
        %1458 = vmatpush1.bf16.xpose.msra.mxu0 0
        %1459 = vmatprep.subr.bf16.mxu0 0
        %1460 = vmatpush1.bf16.xpose.msra.mxu0 0
        %1461 = vmatprep.subr.bf16.mxu0 0
        %1462 = vmatpush1.bf16.xpose.msra.mxu0 0
        %1463 = vmatprep.subr.bf16.mxu0 0
        %1464 = vmatpush1.bf16.xpose.msra.mxu0 0
        %1465 = vmatprep.subr.bf16.mxu0 0
        %1466 = vmatpush1.bf16.xpose.msra.mxu0 0
        %1467 = vmatprep.subr.bf16.mxu0 0
        %1468 = vmatpush1.bf16.xpose.msra.mxu0 0
        %1469 = vmatprep.subr.bf16.mxu0 0
        %1470 = vmatpush1.bf16.xpose.msra.mxu0 0
        %1471 = vmatprep.subr.bf16.mxu0 0
        %1472 = vmatpush1.bf16.xpose.msra.mxu0 0
        %1473 = vmatprep.subr.bf16.mxu0 0
        %1474 = vmatpush1.bf16.xpose.msra.mxu0 0
        %1475 = vmatprep.subr.bf16.mxu0 0
        %1476 = vmatpush1.bf16.xpose.msra.mxu0 0
        %1477 = vmatprep.subr.bf16.mxu0 0
        %1478 = vmatpush1.bf16.xpose.msra.mxu0 0
        %1479 = vmatprep.subr.bf16.mxu0 0
        %1480 = vmatpush1.bf16.xpose.msra.mxu0 0
        %1481 = vmatprep.subr.bf16.mxu0 0
        %1482 = vmatpush1.bf16.xpose.msra.mxu0 0
        %1483 = vmatprep.subr.bf16.mxu0 0
        %1484 = vmatpush1.bf16.xpose.msra.mxu0 0
        %1485 = vmatprep.subr.bf16.mxu0 0
        %1486 = vmatpush1.bf16.xpose.msra.mxu0 0
        %1487 = vmatprep.mubr.bf16.mxu0 0
        %1488 = vmatmul.mubr.bf16.gmra.mrb[0].mxu0 %v1450
        %v1489 = vpop.f32.mrb[0].mxu0
        %v1490 = vadd.f32 %v1024, %v1489
        %v1491 = vpop.f32.mrb[0].mxu0
        %v1492 = vpop.f32.mrb[0].mxu0
        %v1493 = vadd.f32 %v1025, %v1492
        %v1494 = vpop.f32.mrb[0].mxu0
        %1495 = vdwg.mxu0
        %v1497 = vsel %vm347, %v984, 0
        %v1500 = vsel %vm347, %v1000, 0
        %1502 = vmatprep.subr.bf16.mxu0 0
        %1503 = vmatpush1.bf16.xpose.msra.mxu0 %v1500
        %1504 = vmatprep.subr.bf16.mxu0 0
        %1505 = vmatpush1.bf16.xpose.msra.mxu0 0
        %1506 = vmatprep.subr.bf16.mxu0 0
        %1507 = vmatpush1.bf16.xpose.msra.mxu0 0
        %1508 = vmatprep.subr.bf16.mxu0 0
        %1509 = vmatpush1.bf16.xpose.msra.mxu0 0
        %1510 = vmatprep.subr.bf16.mxu0 0
        %1511 = vmatpush1.bf16.xpose.msra.mxu0 0
        %1512 = vmatprep.subr.bf16.mxu0 0
        %1513 = vmatpush1.bf16.xpose.msra.mxu0 0
        %1514 = vmatprep.subr.bf16.mxu0 0
        %1515 = vmatpush1.bf16.xpose.msra.mxu0 0
        %1516 = vmatprep.subr.bf16.mxu0 0
        %1517 = vmatpush1.bf16.xpose.msra.mxu0 0
        %1518 = vmatprep.subr.bf16.mxu0 0
        %1519 = vmatpush1.bf16.xpose.msra.mxu0 0
        %1520 = vmatprep.subr.bf16.mxu0 0
        %1521 = vmatpush1.bf16.xpose.msra.mxu0 0
        %1522 = vmatprep.subr.bf16.mxu0 0
        %1523 = vmatpush1.bf16.xpose.msra.mxu0 0
        %1524 = vmatprep.subr.bf16.mxu0 0
        %1525 = vmatpush1.bf16.xpose.msra.mxu0 0
        %1526 = vmatprep.subr.bf16.mxu0 0
        %1527 = vmatpush1.bf16.xpose.msra.mxu0 0
        %1528 = vmatprep.subr.bf16.mxu0 0
        %1529 = vmatpush1.bf16.xpose.msra.mxu0 0
        %1530 = vmatprep.subr.bf16.mxu0 0
        %1531 = vmatpush1.bf16.xpose.msra.mxu0 0
        %1532 = vmatprep.subr.bf16.mxu0 0
        %1533 = vmatpush1.bf16.xpose.msra.mxu0 0
        %1534 = vmatprep.mubr.bf16.mxu0 0
        %1535 = vmatmul.mubr.bf16.gmra.mrb[0].mxu0 %v1497
        %v1536 = vpop.f32.mrb[0].mxu0
        %v1537 = vadd.f32 %v1024, %v1536
        %v1538 = vpop.f32.mrb[0].mxu0
        %v1539 = vpop.f32.mrb[0].mxu0
        %v1540 = vadd.f32 %v1025, %v1539
        %v1541 = vpop.f32.mrb[0].mxu0
        %1542 = vdwg.mxu0
        %v1544 = vsel %vm347, %v985, 0
        %v1547 = vsel %vm347, %v1001, 0
        %1549 = vmatprep.subr.bf16.mxu0 0
        %1550 = vmatpush1.bf16.xpose.msra.mxu0 %v1547
        %1551 = vmatprep.subr.bf16.mxu0 0
        %1552 = vmatpush1.bf16.xpose.msra.mxu0 0
        %1553 = vmatprep.subr.bf16.mxu0 0
        %1554 = vmatpush1.bf16.xpose.msra.mxu0 0
        %1555 = vmatprep.subr.bf16.mxu0 0
        %1556 = vmatpush1.bf16.xpose.msra.mxu0 0
        %1557 = vmatprep.subr.bf16.mxu0 0
        %1558 = vmatpush1.bf16.xpose.msra.mxu0 0
        %1559 = vmatprep.subr.bf16.mxu0 0
        %1560 = vmatpush1.bf16.xpose.msra.mxu0 0
        %1561 = vmatprep.subr.bf16.mxu0 0
        %1562 = vmatpush1.bf16.xpose.msra.mxu0 0
        %1563 = vmatprep.subr.bf16.mxu0 0
        %1564 = vmatpush1.bf16.xpose.msra.mxu0 0
        %1565 = vmatprep.subr.bf16.mxu0 0
        %1566 = vmatpush1.bf16.xpose.msra.mxu0 0
        %1567 = vmatprep.subr.bf16.mxu0 0
        %1568 = vmatpush1.bf16.xpose.msra.mxu0 0
        %1569 = vmatprep.subr.bf16.mxu0 0
        %1570 = vmatpush1.bf16.xpose.msra.mxu0 0
        %1571 = vmatprep.subr.bf16.mxu0 0
        %1572 = vmatpush1.bf16.xpose.msra.mxu0 0
        %1573 = vmatprep.subr.bf16.mxu0 0
        %1574 = vmatpush1.bf16.xpose.msra.mxu0 0
        %1575 = vmatprep.subr.bf16.mxu0 0
        %1576 = vmatpush1.bf16.xpose.msra.mxu0 0
        %1577 = vmatprep.subr.bf16.mxu0 0
        %1578 = vmatpush1.bf16.xpose.msra.mxu0 0
        %1579 = vmatprep.subr.bf16.mxu0 0
        %1580 = vmatpush1.bf16.xpose.msra.mxu0 0
        %1581 = vmatprep.mubr.bf16.mxu0 0
        %1582 = vmatmul.mubr.bf16.gmra.mrb[0].mxu0 %v1544
        %v1583 = vpop.f32.mrb[0].mxu0
        %v1584 = vadd.f32 %v1024, %v1583
        %v1585 = vpop.f32.mrb[0].mxu0
        %v1586 = vpop.f32.mrb[0].mxu0
        %v1587 = vadd.f32 %v1025, %v1586
        %v1588 = vpop.f32.mrb[0].mxu0
        %1589 = vdwg.mxu0
        %v1591 = vsel %vm347, %v986, 0
        %v1594 = vsel %vm347, %v1002, 0
        %1596 = vmatprep.subr.bf16.mxu0 0
        %1597 = vmatpush1.bf16.xpose.msra.mxu0 %v1594
        %1598 = vmatprep.subr.bf16.mxu0 0
        %1599 = vmatpush1.bf16.xpose.msra.mxu0 0
        %1600 = vmatprep.subr.bf16.mxu0 0
        %1601 = vmatpush1.bf16.xpose.msra.mxu0 0
        %1602 = vmatprep.subr.bf16.mxu0 0
        %1603 = vmatpush1.bf16.xpose.msra.mxu0 0
        %1604 = vmatprep.subr.bf16.mxu0 0
        %1605 = vmatpush1.bf16.xpose.msra.mxu0 0
        %1606 = vmatprep.subr.bf16.mxu0 0
        %1607 = vmatpush1.bf16.xpose.msra.mxu0 0
        %1608 = vmatprep.subr.bf16.mxu0 0
        %1609 = vmatpush1.bf16.xpose.msra.mxu0 0
        %1610 = vmatprep.subr.bf16.mxu0 0
        %1611 = vmatpush1.bf16.xpose.msra.mxu0 0
        %1612 = vmatprep.subr.bf16.mxu0 0
        %1613 = vmatpush1.bf16.xpose.msra.mxu0 0
        %1614 = vmatprep.subr.bf16.mxu0 0
        %1615 = vmatpush1.bf16.xpose.msra.mxu0 0
        %1616 = vmatprep.subr.bf16.mxu0 0
        %1617 = vmatpush1.bf16.xpose.msra.mxu0 0
        %1618 = vmatprep.subr.bf16.mxu0 0
        %1619 = vmatpush1.bf16.xpose.msra.mxu0 0
        %1620 = vmatprep.subr.bf16.mxu0 0
        %1621 = vmatpush1.bf16.xpose.msra.mxu0 0
        %1622 = vmatprep.subr.bf16.mxu0 0
        %1623 = vmatpush1.bf16.xpose.msra.mxu0 0
        %1624 = vmatprep.subr.bf16.mxu0 0
        %1625 = vmatpush1.bf16.xpose.msra.mxu0 0
        %1626 = vmatprep.subr.bf16.mxu0 0
        %1627 = vmatpush1.bf16.xpose.msra.mxu0 0
        %1628 = vmatprep.mubr.bf16.mxu0 0
        %1629 = vmatmul.mubr.bf16.gmra.mrb[0].mxu0 %v1591
        %v1630 = vpop.f32.mrb[0].mxu0
        %v1631 = vadd.f32 %v1024, %v1630
        %v1632 = vpop.f32.mrb[0].mxu0
        %v1633 = vpop.f32.mrb[0].mxu0
        %v1634 = vadd.f32 %v1025, %v1633
        %v1635 = vpop.f32.mrb[0].mxu0
        %1636 = vdwg.mxu0
        %v1638 = vsel %vm347, %v987, 0
        %v1641 = vsel %vm347, %v1003, 0
        %1643 = vmatprep.subr.bf16.mxu0 0
        %1644 = vmatpush1.bf16.xpose.msra.mxu0 %v1641
        %1645 = vmatprep.subr.bf16.mxu0 0
        %1646 = vmatpush1.bf16.xpose.msra.mxu0 0
        %1647 = vmatprep.subr.bf16.mxu0 0
        %1648 = vmatpush1.bf16.xpose.msra.mxu0 0
        %1649 = vmatprep.subr.bf16.mxu0 0
        %1650 = vmatpush1.bf16.xpose.msra.mxu0 0
        %1651 = vmatprep.subr.bf16.mxu0 0
        %1652 = vmatpush1.bf16.xpose.msra.mxu0 0
        %1653 = vmatprep.subr.bf16.mxu0 0
        %1654 = vmatpush1.bf16.xpose.msra.mxu0 0
        %1655 = vmatprep.subr.bf16.mxu0 0
        %1656 = vmatpush1.bf16.xpose.msra.mxu0 0
        %1657 = vmatprep.subr.bf16.mxu0 0
        %1658 = vmatpush1.bf16.xpose.msra.mxu0 0
        %1659 = vmatprep.subr.bf16.mxu0 0
        %1660 = vmatpush1.bf16.xpose.msra.mxu0 0
        %1661 = vmatprep.subr.bf16.mxu0 0
        %1662 = vmatpush1.bf16.xpose.msra.mxu0 0
        %1663 = vmatprep.subr.bf16.mxu0 0
        %1664 = vmatpush1.bf16.xpose.msra.mxu0 0
        %1665 = vmatprep.subr.bf16.mxu0 0
        %1666 = vmatpush1.bf16.xpose.msra.mxu0 0
        %1667 = vmatprep.subr.bf16.mxu0 0
        %1668 = vmatpush1.bf16.xpose.msra.mxu0 0
        %1669 = vmatprep.subr.bf16.mxu0 0
        %1670 = vmatpush1.bf16.xpose.msra.mxu0 0
        %1671 = vmatprep.subr.bf16.mxu0 0
        %1672 = vmatpush1.bf16.xpose.msra.mxu0 0
        %1673 = vmatprep.subr.bf16.mxu0 0
        %1674 = vmatpush1.bf16.xpose.msra.mxu0 0
        %1675 = vmatprep.mubr.bf16.mxu0 0
        %1676 = vmatmul.mubr.bf16.gmra.mrb[0].mxu0 %v1638
        %v1677 = vpop.f32.mrb[0].mxu0
        %v1678 = vadd.f32 %v1024, %v1677
        %v1679 = vpop.f32.mrb[0].mxu0
        %v1680 = vpop.f32.mrb[0].mxu0
        %v1681 = vadd.f32 %v1025, %v1680
        %v1682 = vpop.f32.mrb[0].mxu0
        %1683 = vdwg.mxu0
        %v1685 = vsel %vm347, %v988, 0
        %v1688 = vsel %vm347, %v1004, 0
        %1690 = vmatprep.subr.bf16.mxu0 0
        %1691 = vmatpush1.bf16.xpose.msra.mxu0 %v1688
        %1692 = vmatprep.subr.bf16.mxu0 0
        %1693 = vmatpush1.bf16.xpose.msra.mxu0 0
        %1694 = vmatprep.subr.bf16.mxu0 0
        %1695 = vmatpush1.bf16.xpose.msra.mxu0 0
        %1696 = vmatprep.subr.bf16.mxu0 0
        %1697 = vmatpush1.bf16.xpose.msra.mxu0 0
        %1698 = vmatprep.subr.bf16.mxu0 0
        %1699 = vmatpush1.bf16.xpose.msra.mxu0 0
        %1700 = vmatprep.subr.bf16.mxu0 0
        %1701 = vmatpush1.bf16.xpose.msra.mxu0 0
        %1702 = vmatprep.subr.bf16.mxu0 0
        %1703 = vmatpush1.bf16.xpose.msra.mxu0 0
        %1704 = vmatprep.subr.bf16.mxu0 0
        %1705 = vmatpush1.bf16.xpose.msra.mxu0 0
        %1706 = vmatprep.subr.bf16.mxu0 0
        %1707 = vmatpush1.bf16.xpose.msra.mxu0 0
        %1708 = vmatprep.subr.bf16.mxu0 0
        %1709 = vmatpush1.bf16.xpose.msra.mxu0 0
        %1710 = vmatprep.subr.bf16.mxu0 0
        %1711 = vmatpush1.bf16.xpose.msra.mxu0 0
        %1712 = vmatprep.subr.bf16.mxu0 0
        %1713 = vmatpush1.bf16.xpose.msra.mxu0 0
        %1714 = vmatprep.subr.bf16.mxu0 0
        %1715 = vmatpush1.bf16.xpose.msra.mxu0 0
        %1716 = vmatprep.subr.bf16.mxu0 0
        %1717 = vmatpush1.bf16.xpose.msra.mxu0 0
        %1718 = vmatprep.subr.bf16.mxu0 0
        %1719 = vmatpush1.bf16.xpose.msra.mxu0 0
        %1720 = vmatprep.subr.bf16.mxu0 0
        %1721 = vmatpush1.bf16.xpose.msra.mxu0 0
        %1722 = vmatprep.mubr.bf16.mxu0 0
        %1723 = vmatmul.mubr.bf16.gmra.mrb[0].mxu0 %v1685
        %v1724 = vpop.f32.mrb[0].mxu0
        %v1725 = vadd.f32 %v1024, %v1724
        %v1726 = vpop.f32.mrb[0].mxu0
        %v1727 = vpop.f32.mrb[0].mxu0
        %v1728 = vadd.f32 %v1025, %v1727
        %v1729 = vpop.f32.mrb[0].mxu0
        %1730 = vdwg.mxu0
        %v1732 = vsel %vm347, %v989, 0
        %v1735 = vsel %vm347, %v1005, 0
        %1737 = vmatprep.subr.bf16.mxu0 0
        %1738 = vmatpush1.bf16.xpose.msra.mxu0 %v1735
        %1739 = vmatprep.subr.bf16.mxu0 0
        %1740 = vmatpush1.bf16.xpose.msra.mxu0 0
        %1741 = vmatprep.subr.bf16.mxu0 0
        %1742 = vmatpush1.bf16.xpose.msra.mxu0 0
        %1743 = vmatprep.subr.bf16.mxu0 0
        %1744 = vmatpush1.bf16.xpose.msra.mxu0 0
        %1745 = vmatprep.subr.bf16.mxu0 0
        %1746 = vmatpush1.bf16.xpose.msra.mxu0 0
        %1747 = vmatprep.subr.bf16.mxu0 0
        %1748 = vmatpush1.bf16.xpose.msra.mxu0 0
        %1749 = vmatprep.subr.bf16.mxu0 0
        %1750 = vmatpush1.bf16.xpose.msra.mxu0 0
        %1751 = vmatprep.subr.bf16.mxu0 0
        %1752 = vmatpush1.bf16.xpose.msra.mxu0 0
        %1753 = vmatprep.subr.bf16.mxu0 0
        %1754 = vmatpush1.bf16.xpose.msra.mxu0 0
        %1755 = vmatprep.subr.bf16.mxu0 0
        %1756 = vmatpush1.bf16.xpose.msra.mxu0 0
        %1757 = vmatprep.subr.bf16.mxu0 0
        %1758 = vmatpush1.bf16.xpose.msra.mxu0 0
        %1759 = vmatprep.subr.bf16.mxu0 0
        %1760 = vmatpush1.bf16.xpose.msra.mxu0 0
        %1761 = vmatprep.subr.bf16.mxu0 0
        %1762 = vmatpush1.bf16.xpose.msra.mxu0 0
        %1763 = vmatprep.subr.bf16.mxu0 0
        %1764 = vmatpush1.bf16.xpose.msra.mxu0 0
        %1765 = vmatprep.subr.bf16.mxu0 0
        %1766 = vmatpush1.bf16.xpose.msra.mxu0 0
        %1767 = vmatprep.subr.bf16.mxu0 0
        %1768 = vmatpush1.bf16.xpose.msra.mxu0 0
        %1769 = vmatprep.mubr.bf16.mxu0 0
        %1770 = vmatmul.mubr.bf16.gmra.mrb[0].mxu0 %v1732
        %v1771 = vpop.f32.mrb[0].mxu0
        %v1772 = vadd.f32 %v1024, %v1771
        %v1773 = vpop.f32.mrb[0].mxu0
        %v1774 = vpop.f32.mrb[0].mxu0
        %v1775 = vadd.f32 %v1025, %v1774
        %v1776 = vpop.f32.mrb[0].mxu0
        %1777 = vdwg.mxu0
        %vm1778 = vcmask 130048
        %v1779 = vsel %vm1778, %v1067, -inf
        %1780 = vmax.xlane.f32.xlu0 %v1779
        %v1781 = vpop.xlane.xlu0 %1780
        %v1782 = vsel %vm1778, %v1070, -inf
        %1783 = vmax.xlane.f32.xlu0 %v1782
        %v1784 = vpop.xlane.xlu0 %1783
        %v1785 = vsel %vm1778, %v1114, -inf
        %1786 = vmax.xlane.f32.xlu0 %v1785
        %v1787 = vpop.xlane.xlu0 %1786
        %v1788 = vsel %vm1778, %v1117, -inf
        %1789 = vmax.xlane.f32.xlu0 %v1788
        %v1790 = vpop.xlane.xlu0 %1789
        %v1791 = vsel %vm1778, %v1161, -inf
        %1792 = vmax.xlane.f32.xlu0 %v1791
        %v1793 = vpop.xlane.xlu0 %1792
        %v1794 = vsel %vm1778, %v1164, -inf
        %1795 = vmax.xlane.f32.xlu0 %v1794
        %v1796 = vpop.xlane.xlu0 %1795
        %v1797 = vsel %vm1778, %v1208, -inf
        %1798 = vmax.xlane.f32.xlu0 %v1797
        %v1799 = vpop.xlane.xlu0 %1798
        %v1800 = vsel %vm1778, %v1211, -inf
        %1801 = vmax.xlane.f32.xlu0 %v1800
        %v1802 = vpop.xlane.xlu0 %1801
        %v1803 = vsel %vm1778, %v1255, -inf
        %1804 = vmax.xlane.f32.xlu0 %v1803
        %v1805 = vpop.xlane.xlu0 %1804
        %v1806 = vsel %vm1778, %v1258, -inf
        %1807 = vmax.xlane.f32.xlu0 %v1806
        %v1808 = vpop.xlane.xlu0 %1807
        %v1809 = vsel %vm1778, %v1302, -inf
        %1810 = vmax.xlane.f32.xlu0 %v1809
        %v1811 = vpop.xlane.xlu0 %1810
        %v1812 = vsel %vm1778, %v1305, -inf
        %1813 = vmax.xlane.f32.xlu0 %v1812
        %v1814 = vpop.xlane.xlu0 %1813
        %v1815 = vsel %vm1778, %v1349, -inf
        %1816 = vmax.xlane.f32.xlu0 %v1815
        %v1817 = vpop.xlane.xlu0 %1816
        %v1818 = vsel %vm1778, %v1352, -inf
        %1819 = vmax.xlane.f32.xlu0 %v1818
        %v1820 = vpop.xlane.xlu0 %1819
        %v1821 = vsel %vm1778, %v1396, -inf
        %1822 = vmax.xlane.f32.xlu0 %v1821
        %v1823 = vpop.xlane.xlu0 %1822
        %v1824 = vsel %vm1778, %v1399, -inf
        %1825 = vmax.xlane.f32.xlu0 %v1824
        %v1826 = vpop.xlane.xlu0 %1825
        %v1827 = vsel %vm1778, %v1443, -inf
        %1828 = vmax.xlane.f32.xlu0 %v1827
        %v1829 = vpop.xlane.xlu0 %1828
        %v1830 = vsel %vm1778, %v1446, -inf
        %1831 = vmax.xlane.f32.xlu0 %v1830
        %v1832 = vpop.xlane.xlu0 %1831
        %v1833 = vsel %vm1778, %v1490, -inf
        %1834 = vmax.xlane.f32.xlu0 %v1833
        %v1835 = vpop.xlane.xlu0 %1834
        %v1836 = vsel %vm1778, %v1493, -inf
        %1837 = vmax.xlane.f32.xlu0 %v1836
        %v1838 = vpop.xlane.xlu0 %1837
        %v1839 = vsel %vm1778, %v1537, -inf
        %1840 = vmax.xlane.f32.xlu0 %v1839
        %v1841 = vpop.xlane.xlu0 %1840
        %v1842 = vsel %vm1778, %v1540, -inf
        %1843 = vmax.xlane.f32.xlu0 %v1842
        %v1844 = vpop.xlane.xlu0 %1843
        %v1845 = vsel %vm1778, %v1584, -inf
        %1846 = vmax.xlane.f32.xlu0 %v1845
        %v1847 = vpop.xlane.xlu0 %1846
        %v1848 = vsel %vm1778, %v1587, -inf
        %1849 = vmax.xlane.f32.xlu0 %v1848
        %v1850 = vpop.xlane.xlu0 %1849
        %v1851 = vsel %vm1778, %v1631, -inf
        %1852 = vmax.xlane.f32.xlu0 %v1851
        %v1853 = vpop.xlane.xlu0 %1852
        %v1854 = vsel %vm1778, %v1634, -inf
        %1855 = vmax.xlane.f32.xlu0 %v1854
        %v1856 = vpop.xlane.xlu0 %1855
        %v1857 = vsel %vm1778, %v1678, -inf
        %1858 = vmax.xlane.f32.xlu0 %v1857
        %v1859 = vpop.xlane.xlu0 %1858
        %v1860 = vsel %vm1778, %v1681, -inf
        %1861 = vmax.xlane.f32.xlu0 %v1860
        %v1862 = vpop.xlane.xlu0 %1861
        %v1863 = vsel %vm1778, %v1725, -inf
        %1864 = vmax.xlane.f32.xlu0 %v1863
        %v1865 = vpop.xlane.xlu0 %1864
        %v1866 = vsel %vm1778, %v1728, -inf
        %1867 = vmax.xlane.f32.xlu0 %v1866
        %v1868 = vpop.xlane.xlu0 %1867
        %v1869 = vsel %vm1778, %v1772, -inf
        %1870 = vmax.xlane.f32.xlu0 %v1869
        %v1871 = vpop.xlane.xlu0 %1870
        %v1872 = vsel %vm1778, %v1775, -inf
        %1873 = vmax.xlane.f32.xlu0 %v1872
        %v1874 = vpop.xlane.xlu0 %1873
        %v1875 = vsub.f32 %v1067, %v1781
        %v1876 = vsub.f32 %v1070, %v1784
        %v1877 = vsub.f32 %v1114, %v1787
        %v1878 = vsub.f32 %v1117, %v1790
        %v1879 = vsub.f32 %v1161, %v1793
        %v1880 = vsub.f32 %v1164, %v1796
        %v1881 = vsub.f32 %v1208, %v1799
        %v1882 = vsub.f32 %v1211, %v1802
        %v1883 = vsub.f32 %v1255, %v1805
        %v1884 = vsub.f32 %v1258, %v1808
        %v1885 = vsub.f32 %v1302, %v1811
        %v1886 = vsub.f32 %v1305, %v1814
        %v1887 = vsub.f32 %v1349, %v1817
        %v1888 = vsub.f32 %v1352, %v1820
        %v1889 = vsub.f32 %v1396, %v1823
        %v1890 = vsub.f32 %v1399, %v1826
        %v1891 = vsub.f32 %v1443, %v1829
        %v1892 = vsub.f32 %v1446, %v1832
        %v1893 = vsub.f32 %v1490, %v1835
        %v1894 = vsub.f32 %v1493, %v1838
        %v1895 = vsub.f32 %v1537, %v1841
        %v1896 = vsub.f32 %v1540, %v1844
        %v1897 = vsub.f32 %v1584, %v1847
        %v1898 = vsub.f32 %v1587, %v1850
        %v1899 = vsub.f32 %v1631, %v1853
        %v1900 = vsub.f32 %v1634, %v1856
        %v1901 = vsub.f32 %v1678, %v1859
        %v1902 = vsub.f32 %v1681, %v1862
        %v1903 = vsub.f32 %v1725, %v1865
        %v1904 = vsub.f32 %v1728, %v1868
        %v1905 = vsub.f32 %v1772, %v1871
        %v1906 = vsub.f32 %v1775, %v1874
        %v1907 = vmul.f32 %v1875, 1.442695
        %v1908 = vpow.pop %v1907
        %v1909 = vmul.f32 %v1876, 1.442695
        %v1910 = vpow.pop %v1909
        %v1911 = vmul.f32 %v1877, 1.442695
        %v1912 = vpow.pop %v1911
        %v1913 = vmul.f32 %v1878, 1.442695
        %v1914 = vpow.pop %v1913
        %v1915 = vmul.f32 %v1879, 1.442695
        %v1916 = vpow.pop %v1915
        %v1917 = vmul.f32 %v1880, 1.442695
        %v1918 = vpow.pop %v1917
        %v1919 = vmul.f32 %v1881, 1.442695
        %v1920 = vpow.pop %v1919
        %v1921 = vmul.f32 %v1882, 1.442695
        %v1922 = vpow.pop %v1921
        %v1923 = vmul.f32 %v1883, 1.442695
        %v1924 = vpow.pop %v1923
        %v1925 = vmul.f32 %v1884, 1.442695
        %v1926 = vpow.pop %v1925
        %v1927 = vmul.f32 %v1885, 1.442695
        %v1928 = vpow.pop %v1927
        %v1929 = vmul.f32 %v1886, 1.442695
        %v1930 = vpow.pop %v1929
        %v1931 = vmul.f32 %v1887, 1.442695
        %v1932 = vpow.pop %v1931
        %v1933 = vmul.f32 %v1888, 1.442695
        %v1934 = vpow.pop %v1933
        %v1935 = vmul.f32 %v1889, 1.442695
        %v1936 = vpow.pop %v1935
        %v1937 = vmul.f32 %v1890, 1.442695
        %v1938 = vpow.pop %v1937
        %v1939 = vmul.f32 %v1891, 1.442695
        %v1940 = vpow.pop %v1939
        %v1941 = vmul.f32 %v1892, 1.442695
        %v1942 = vpow.pop %v1941
        %v1943 = vmul.f32 %v1893, 1.442695
        %v1944 = vpow.pop %v1943
        %v1945 = vmul.f32 %v1894, 1.442695
        %v1946 = vpow.pop %v1945
        %v1947 = vmul.f32 %v1895, 1.442695
        %v1948 = vpow.pop %v1947
        %v1949 = vmul.f32 %v1896, 1.442695
        %v1950 = vpow.pop %v1949
        %v1951 = vmul.f32 %v1897, 1.442695
        %v1952 = vpow.pop %v1951
        %v1953 = vmul.f32 %v1898, 1.442695
        %v1954 = vpow.pop %v1953
        %v1955 = vmul.f32 %v1899, 1.442695
        %v1956 = vpow.pop %v1955
        %v1957 = vmul.f32 %v1900, 1.442695
        %v1958 = vpow.pop %v1957
        %v1959 = vmul.f32 %v1901, 1.442695
        %v1960 = vpow.pop %v1959
        %v1961 = vmul.f32 %v1902, 1.442695
        %v1962 = vpow.pop %v1961
        %v1963 = vmul.f32 %v1903, 1.442695
        %v1964 = vpow.pop %v1963
        %v1965 = vmul.f32 %v1904, 1.442695
        %v1966 = vpow.pop %v1965
        %v1967 = vmul.f32 %v1905, 1.442695
        %v1968 = vpow.pop %v1967
        %v1969 = vmul.f32 %v1906, 1.442695
        %v1970 = vpow.pop %v1969
        %v1971 = vsel %vm1778, %v1908, 0.0
        %1972 = vadd.xlane.f32.xlu0 %v1971
        %v1973 = vpop.xlane.xlu0 %1972
        %v1974 = vsel %vm1778, %v1910, 0.0
        %1975 = vadd.xlane.f32.xlu0 %v1974
        %v1976 = vpop.xlane.xlu0 %1975
        %v1977 = vsel %vm1778, %v1912, 0.0
        %1978 = vadd.xlane.f32.xlu0 %v1977
        %v1979 = vpop.xlane.xlu0 %1978
        %v1980 = vsel %vm1778, %v1914, 0.0
        %1981 = vadd.xlane.f32.xlu0 %v1980
        %v1982 = vpop.xlane.xlu0 %1981
        %v1983 = vsel %vm1778, %v1916, 0.0
        %1984 = vadd.xlane.f32.xlu0 %v1983
        %v1985 = vpop.xlane.xlu0 %1984
        %v1986 = vsel %vm1778, %v1918, 0.0
        %1987 = vadd.xlane.f32.xlu0 %v1986
        %v1988 = vpop.xlane.xlu0 %1987
        %v1989 = vsel %vm1778, %v1920, 0.0
        %1990 = vadd.xlane.f32.xlu0 %v1989
        %v1991 = vpop.xlane.xlu0 %1990
        %v1992 = vsel %vm1778, %v1922, 0.0
        %1993 = vadd.xlane.f32.xlu0 %v1992
        %v1994 = vpop.xlane.xlu0 %1993
        %v1995 = vsel %vm1778, %v1924, 0.0
        %1996 = vadd.xlane.f32.xlu0 %v1995
        %v1997 = vpop.xlane.xlu0 %1996
        %v1998 = vsel %vm1778, %v1926, 0.0
        %1999 = vadd.xlane.f32.xlu0 %v1998
        %v2000 = vpop.xlane.xlu0 %1999
        %v2001 = vsel %vm1778, %v1928, 0.0
        %2002 = vadd.xlane.f32.xlu0 %v2001
        %v2003 = vpop.xlane.xlu0 %2002
        %v2004 = vsel %vm1778, %v1930, 0.0
        %2005 = vadd.xlane.f32.xlu0 %v2004
        %v2006 = vpop.xlane.xlu0 %2005
        %v2007 = vsel %vm1778, %v1932, 0.0
        %2008 = vadd.xlane.f32.xlu0 %v2007
        %v2009 = vpop.xlane.xlu0 %2008
        %v2010 = vsel %vm1778, %v1934, 0.0
        %2011 = vadd.xlane.f32.xlu0 %v2010
        %v2012 = vpop.xlane.xlu0 %2011
        %v2013 = vsel %vm1778, %v1936, 0.0
        %2014 = vadd.xlane.f32.xlu0 %v2013
        %v2015 = vpop.xlane.xlu0 %2014
        %v2016 = vsel %vm1778, %v1938, 0.0
        %2017 = vadd.xlane.f32.xlu0 %v2016
        %v2018 = vpop.xlane.xlu0 %2017
        %v2019 = vsel %vm1778, %v1940, 0.0
        %2020 = vadd.xlane.f32.xlu0 %v2019
        %v2021 = vpop.xlane.xlu0 %2020
        %v2022 = vsel %vm1778, %v1942, 0.0
        %2023 = vadd.xlane.f32.xlu0 %v2022
        %v2024 = vpop.xlane.xlu0 %2023
        %v2025 = vsel %vm1778, %v1944, 0.0
        %2026 = vadd.xlane.f32.xlu0 %v2025
        %v2027 = vpop.xlane.xlu0 %2026
        %v2028 = vsel %vm1778, %v1946, 0.0
        %2029 = vadd.xlane.f32.xlu0 %v2028
        %v2030 = vpop.xlane.xlu0 %2029
        %v2031 = vsel %vm1778, %v1948, 0.0
        %2032 = vadd.xlane.f32.xlu0 %v2031
        %v2033 = vpop.xlane.xlu0 %2032
        %v2034 = vsel %vm1778, %v1950, 0.0
        %2035 = vadd.xlane.f32.xlu0 %v2034
        %v2036 = vpop.xlane.xlu0 %2035
        %v2037 = vsel %vm1778, %v1952, 0.0
        %2038 = vadd.xlane.f32.xlu0 %v2037
        %v2039 = vpop.xlane.xlu0 %2038
        %v2040 = vsel %vm1778, %v1954, 0.0
        %2041 = vadd.xlane.f32.xlu0 %v2040
        %v2042 = vpop.xlane.xlu0 %2041
        %v2043 = vsel %vm1778, %v1956, 0.0
        %2044 = vadd.xlane.f32.xlu0 %v2043
        %v2045 = vpop.xlane.xlu0 %2044
        %v2046 = vsel %vm1778, %v1958, 0.0
        %2047 = vadd.xlane.f32.xlu0 %v2046
        %v2048 = vpop.xlane.xlu0 %2047
        %v2049 = vsel %vm1778, %v1960, 0.0
        %2050 = vadd.xlane.f32.xlu0 %v2049
        %v2051 = vpop.xlane.xlu0 %2050
        %v2052 = vsel %vm1778, %v1962, 0.0
        %2053 = vadd.xlane.f32.xlu0 %v2052
        %v2054 = vpop.xlane.xlu0 %2053
        %v2055 = vsel %vm1778, %v1964, 0.0
        %2056 = vadd.xlane.f32.xlu0 %v2055
        %v2057 = vpop.xlane.xlu0 %2056
        %v2058 = vsel %vm1778, %v1966, 0.0
        %2059 = vadd.xlane.f32.xlu0 %v2058
        %v2060 = vpop.xlane.xlu0 %2059
        %v2061 = vsel %vm1778, %v1968, 0.0
        %2062 = vadd.xlane.f32.xlu0 %v2061
        %v2063 = vpop.xlane.xlu0 %2062
        %v2064 = vsel %vm1778, %v1970, 0.0
        %2065 = vadd.xlane.f32.xlu0 %v2064
        %v2066 = vpop.xlane.xlu0 %2065
        %v2067 = vpack.c.bf16 %v1910, %v1908
        %v2068 = vpack.c.bf16 %v1914, %v1912
        %v2069 = vpack.c.bf16 %v1918, %v1916
        %v2070 = vpack.c.bf16 %v1922, %v1920
        %v2071 = vpack.c.bf16 %v1926, %v1924
        %v2072 = vpack.c.bf16 %v1930, %v1928
        %v2073 = vpack.c.bf16 %v1934, %v1932
        %v2074 = vpack.c.bf16 %v1938, %v1936
        %v2075 = vpack.c.bf16 %v1942, %v1940
        %v2076 = vpack.c.bf16 %v1946, %v1944
        %v2077 = vpack.c.bf16 %v1950, %v1948
        %v2078 = vpack.c.bf16 %v1954, %v1952
        %v2079 = vpack.c.bf16 %v1958, %v1956
        %v2080 = vpack.c.bf16 %v1962, %v1960
        %v2081 = vpack.c.bf16 %v1966, %v1964
        %v2082 = vpack.c.bf16 %v1970, %v1968
        %v2084 = vsel %vm1778, %v2067, 0
        %2086 = vmatprep.subr.bf16.mxu0 0
        %2087 = vmatpush1.bf16.msra.mxu0 %v1006
        %2088 = vmatprep.subr.bf16.mxu0 0
        %2089 = vmatpush1.bf16.msra.mxu0 0
        %2090 = vmatprep.subr.bf16.mxu0 0
        %2091 = vmatpush1.bf16.msra.mxu0 0
        %2092 = vmatprep.subr.bf16.mxu0 0
        %2093 = vmatpush1.bf16.msra.mxu0 0
        %2094 = vmatprep.subr.bf16.mxu0 0
        %2095 = vmatpush1.bf16.msra.mxu0 0
        %2096 = vmatprep.subr.bf16.mxu0 0
        %2097 = vmatpush1.bf16.msra.mxu0 0
        %2098 = vmatprep.subr.bf16.mxu0 0
        %2099 = vmatpush1.bf16.msra.mxu0 0
        %2100 = vmatprep.subr.bf16.mxu0 0
        %2101 = vmatpush1.bf16.msra.mxu0 0
        %2102 = vmatprep.subr.bf16.mxu0 0
        %2103 = vmatpush1.bf16.msra.mxu0 0
        %2104 = vmatprep.subr.bf16.mxu0 0
        %2105 = vmatpush1.bf16.msra.mxu0 0
        %2106 = vmatprep.subr.bf16.mxu0 0
        %2107 = vmatpush1.bf16.msra.mxu0 0
        %2108 = vmatprep.subr.bf16.mxu0 0
        %2109 = vmatpush1.bf16.msra.mxu0 0
        %2110 = vmatprep.subr.bf16.mxu0 0
        %2111 = vmatpush1.bf16.msra.mxu0 0
        %2112 = vmatprep.subr.bf16.mxu0 0
        %2113 = vmatpush1.bf16.msra.mxu0 0
        %2114 = vmatprep.subr.bf16.mxu0 0
        %2115 = vmatpush1.bf16.msra.mxu0 0
        %2116 = vmatprep.subr.bf16.mxu0 0
        %2117 = vmatpush1.bf16.msra.mxu0 0
        %2118 = vmatprep.mubr.bf16.mxu0 0
        %2119 = vmatmul.mubr.bf16.gmra.mrb[0].mxu0 %v2084
        %v2120 = vpop.f32.mrb[0].mxu0
        %v2121 = vadd.f32 0.0, %v2120
        %v2122 = vpop.f32.mrb[0].mxu0
        %v2123 = vpop.f32.mrb[0].mxu0
        %v2124 = vadd.f32 0.0, %v2123
        %v2125 = vpop.f32.mrb[0].mxu0
        %2126 = vdwg.mxu0
        %v2128 = vsel %vm1778, %v2068, 0
        %2130 = vmatprep.subr.bf16.mxu0 0
        %2131 = vmatpush1.bf16.msra.mxu0 %v1007
        %2132 = vmatprep.subr.bf16.mxu0 0
        %2133 = vmatpush1.bf16.msra.mxu0 0
        %2134 = vmatprep.subr.bf16.mxu0 0
        %2135 = vmatpush1.bf16.msra.mxu0 0
        %2136 = vmatprep.subr.bf16.mxu0 0
        %2137 = vmatpush1.bf16.msra.mxu0 0
        %2138 = vmatprep.subr.bf16.mxu0 0
        %2139 = vmatpush1.bf16.msra.mxu0 0
        %2140 = vmatprep.subr.bf16.mxu0 0
        %2141 = vmatpush1.bf16.msra.mxu0 0
        %2142 = vmatprep.subr.bf16.mxu0 0
        %2143 = vmatpush1.bf16.msra.mxu0 0
        %2144 = vmatprep.subr.bf16.mxu0 0
        %2145 = vmatpush1.bf16.msra.mxu0 0
        %2146 = vmatprep.subr.bf16.mxu0 0
        %2147 = vmatpush1.bf16.msra.mxu0 0
        %2148 = vmatprep.subr.bf16.mxu0 0
        %2149 = vmatpush1.bf16.msra.mxu0 0
        %2150 = vmatprep.subr.bf16.mxu0 0
        %2151 = vmatpush1.bf16.msra.mxu0 0
        %2152 = vmatprep.subr.bf16.mxu0 0
        %2153 = vmatpush1.bf16.msra.mxu0 0
        %2154 = vmatprep.subr.bf16.mxu0 0
        %2155 = vmatpush1.bf16.msra.mxu0 0
        %2156 = vmatprep.subr.bf16.mxu0 0
        %2157 = vmatpush1.bf16.msra.mxu0 0
        %2158 = vmatprep.subr.bf16.mxu0 0
        %2159 = vmatpush1.bf16.msra.mxu0 0
        %2160 = vmatprep.subr.bf16.mxu0 0
        %2161 = vmatpush1.bf16.msra.mxu0 0
        %2162 = vmatprep.mubr.bf16.mxu0 0
        %2163 = vmatmul.mubr.bf16.gmra.mrb[0].mxu0 %v2128
        %v2164 = vpop.f32.mrb[0].mxu0
        %v2165 = vadd.f32 0.0, %v2164
        %v2166 = vpop.f32.mrb[0].mxu0
        %v2167 = vpop.f32.mrb[0].mxu0
        %v2168 = vadd.f32 0.0, %v2167
        %v2169 = vpop.f32.mrb[0].mxu0
        %2170 = vdwg.mxu0
        %v2172 = vsel %vm1778, %v2069, 0
        %2174 = vmatprep.subr.bf16.mxu0 0
        %2175 = vmatpush1.bf16.msra.mxu0 %v1008
        %2176 = vmatprep.subr.bf16.mxu0 0
        %2177 = vmatpush1.bf16.msra.mxu0 0
        %2178 = vmatprep.subr.bf16.mxu0 0
        %2179 = vmatpush1.bf16.msra.mxu0 0
        %2180 = vmatprep.subr.bf16.mxu0 0
        %2181 = vmatpush1.bf16.msra.mxu0 0
        %2182 = vmatprep.subr.bf16.mxu0 0
        %2183 = vmatpush1.bf16.msra.mxu0 0
        %2184 = vmatprep.subr.bf16.mxu0 0
        %2185 = vmatpush1.bf16.msra.mxu0 0
        %2186 = vmatprep.subr.bf16.mxu0 0
        %2187 = vmatpush1.bf16.msra.mxu0 0
        %2188 = vmatprep.subr.bf16.mxu0 0
        %2189 = vmatpush1.bf16.msra.mxu0 0
        %2190 = vmatprep.subr.bf16.mxu0 0
        %2191 = vmatpush1.bf16.msra.mxu0 0
        %2192 = vmatprep.subr.bf16.mxu0 0
        %2193 = vmatpush1.bf16.msra.mxu0 0
        %2194 = vmatprep.subr.bf16.mxu0 0
        %2195 = vmatpush1.bf16.msra.mxu0 0
        %2196 = vmatprep.subr.bf16.mxu0 0
        %2197 = vmatpush1.bf16.msra.mxu0 0
        %2198 = vmatprep.subr.bf16.mxu0 0
        %2199 = vmatpush1.bf16.msra.mxu0 0
        %2200 = vmatprep.subr.bf16.mxu0 0
        %2201 = vmatpush1.bf16.msra.mxu0 0
        %2202 = vmatprep.subr.bf16.mxu0 0
        %2203 = vmatpush1.bf16.msra.mxu0 0
        %2204 = vmatprep.subr.bf16.mxu0 0
        %2205 = vmatpush1.bf16.msra.mxu0 0
        %2206 = vmatprep.mubr.bf16.mxu0 0
        %2207 = vmatmul.mubr.bf16.gmra.mrb[0].mxu0 %v2172
        %v2208 = vpop.f32.mrb[0].mxu0
        %v2209 = vadd.f32 0.0, %v2208
        %v2210 = vpop.f32.mrb[0].mxu0
        %v2211 = vpop.f32.mrb[0].mxu0
        %v2212 = vadd.f32 0.0, %v2211
        %v2213 = vpop.f32.mrb[0].mxu0
        %2214 = vdwg.mxu0
        %v2216 = vsel %vm1778, %v2070, 0
        %2218 = vmatprep.subr.bf16.mxu0 0
        %2219 = vmatpush1.bf16.msra.mxu0 %v1009
        %2220 = vmatprep.subr.bf16.mxu0 0
        %2221 = vmatpush1.bf16.msra.mxu0 0
        %2222 = vmatprep.subr.bf16.mxu0 0
        %2223 = vmatpush1.bf16.msra.mxu0 0
        %2224 = vmatprep.subr.bf16.mxu0 0
        %2225 = vmatpush1.bf16.msra.mxu0 0
        %2226 = vmatprep.subr.bf16.mxu0 0
        %2227 = vmatpush1.bf16.msra.mxu0 0
        %2228 = vmatprep.subr.bf16.mxu0 0
        %2229 = vmatpush1.bf16.msra.mxu0 0
        %2230 = vmatprep.subr.bf16.mxu0 0
        %2231 = vmatpush1.bf16.msra.mxu0 0
        %2232 = vmatprep.subr.bf16.mxu0 0
        %2233 = vmatpush1.bf16.msra.mxu0 0
        %2234 = vmatprep.subr.bf16.mxu0 0
        %2235 = vmatpush1.bf16.msra.mxu0 0
        %2236 = vmatprep.subr.bf16.mxu0 0
        %2237 = vmatpush1.bf16.msra.mxu0 0
        %2238 = vmatprep.subr.bf16.mxu0 0
        %2239 = vmatpush1.bf16.msra.mxu0 0
        %2240 = vmatprep.subr.bf16.mxu0 0
        %2241 = vmatpush1.bf16.msra.mxu0 0
        %2242 = vmatprep.subr.bf16.mxu0 0
        %2243 = vmatpush1.bf16.msra.mxu0 0
        %2244 = vmatprep.subr.bf16.mxu0 0
        %2245 = vmatpush1.bf16.msra.mxu0 0
        %2246 = vmatprep.subr.bf16.mxu0 0
        %2247 = vmatpush1.bf16.msra.mxu0 0
        %2248 = vmatprep.subr.bf16.mxu0 0
        %2249 = vmatpush1.bf16.msra.mxu0 0
        %2250 = vmatprep.mubr.bf16.mxu0 0
        %2251 = vmatmul.mubr.bf16.gmra.mrb[0].mxu0 %v2216
        %v2252 = vpop.f32.mrb[0].mxu0
        %v2253 = vadd.f32 0.0, %v2252
        %v2254 = vpop.f32.mrb[0].mxu0
        %v2255 = vpop.f32.mrb[0].mxu0
        %v2256 = vadd.f32 0.0, %v2255
        %v2257 = vpop.f32.mrb[0].mxu0
        %2258 = vdwg.mxu0
        %v2260 = vsel %vm1778, %v2071, 0
        %2262 = vmatprep.subr.bf16.mxu0 0
        %2263 = vmatpush1.bf16.msra.mxu0 %v1010
        %2264 = vmatprep.subr.bf16.mxu0 0
        %2265 = vmatpush1.bf16.msra.mxu0 0
        %2266 = vmatprep.subr.bf16.mxu0 0
        %2267 = vmatpush1.bf16.msra.mxu0 0
        %2268 = vmatprep.subr.bf16.mxu0 0
        %2269 = vmatpush1.bf16.msra.mxu0 0
        %2270 = vmatprep.subr.bf16.mxu0 0
        %2271 = vmatpush1.bf16.msra.mxu0 0
        %2272 = vmatprep.subr.bf16.mxu0 0
        %2273 = vmatpush1.bf16.msra.mxu0 0
        %2274 = vmatprep.subr.bf16.mxu0 0
        %2275 = vmatpush1.bf16.msra.mxu0 0
        %2276 = vmatprep.subr.bf16.mxu0 0
        %2277 = vmatpush1.bf16.msra.mxu0 0
        %2278 = vmatprep.subr.bf16.mxu0 0
        %2279 = vmatpush1.bf16.msra.mxu0 0
        %2280 = vmatprep.subr.bf16.mxu0 0
        %2281 = vmatpush1.bf16.msra.mxu0 0
        %2282 = vmatprep.subr.bf16.mxu0 0
        %2283 = vmatpush1.bf16.msra.mxu0 0
        %2284 = vmatprep.subr.bf16.mxu0 0
        %2285 = vmatpush1.bf16.msra.mxu0 0
        %2286 = vmatprep.subr.bf16.mxu0 0
        %2287 = vmatpush1.bf16.msra.mxu0 0
        %2288 = vmatprep.subr.bf16.mxu0 0
        %2289 = vmatpush1.bf16.msra.mxu0 0
        %2290 = vmatprep.subr.bf16.mxu0 0
        %2291 = vmatpush1.bf16.msra.mxu0 0
        %2292 = vmatprep.subr.bf16.mxu0 0
        %2293 = vmatpush1.bf16.msra.mxu0 0
        %2294 = vmatprep.mubr.bf16.mxu0 0
        %2295 = vmatmul.mubr.bf16.gmra.mrb[0].mxu0 %v2260
        %v2296 = vpop.f32.mrb[0].mxu0
        %v2297 = vadd.f32 0.0, %v2296
        %v2298 = vpop.f32.mrb[0].mxu0
        %v2299 = vpop.f32.mrb[0].mxu0
        %v2300 = vadd.f32 0.0, %v2299
        %v2301 = vpop.f32.mrb[0].mxu0
        %2302 = vdwg.mxu0
        %v2304 = vsel %vm1778, %v2072, 0
        %2306 = vmatprep.subr.bf16.mxu0 0
        %2307 = vmatpush1.bf16.msra.mxu0 %v1011
        %2308 = vmatprep.subr.bf16.mxu0 0
        %2309 = vmatpush1.bf16.msra.mxu0 0
        %2310 = vmatprep.subr.bf16.mxu0 0
        %2311 = vmatpush1.bf16.msra.mxu0 0
        %2312 = vmatprep.subr.bf16.mxu0 0
        %2313 = vmatpush1.bf16.msra.mxu0 0
        %2314 = vmatprep.subr.bf16.mxu0 0
        %2315 = vmatpush1.bf16.msra.mxu0 0
        %2316 = vmatprep.subr.bf16.mxu0 0
        %2317 = vmatpush1.bf16.msra.mxu0 0
        %2318 = vmatprep.subr.bf16.mxu0 0
        %2319 = vmatpush1.bf16.msra.mxu0 0
        %2320 = vmatprep.subr.bf16.mxu0 0
        %2321 = vmatpush1.bf16.msra.mxu0 0
        %2322 = vmatprep.subr.bf16.mxu0 0
        %2323 = vmatpush1.bf16.msra.mxu0 0
        %2324 = vmatprep.subr.bf16.mxu0 0
        %2325 = vmatpush1.bf16.msra.mxu0 0
        %2326 = vmatprep.subr.bf16.mxu0 0
        %2327 = vmatpush1.bf16.msra.mxu0 0
        %2328 = vmatprep.subr.bf16.mxu0 0
        %2329 = vmatpush1.bf16.msra.mxu0 0
        %2330 = vmatprep.subr.bf16.mxu0 0
        %2331 = vmatpush1.bf16.msra.mxu0 0
        %2332 = vmatprep.subr.bf16.mxu0 0
        %2333 = vmatpush1.bf16.msra.mxu0 0
        %2334 = vmatprep.subr.bf16.mxu0 0
        %2335 = vmatpush1.bf16.msra.mxu0 0
        %2336 = vmatprep.subr.bf16.mxu0 0
        %2337 = vmatpush1.bf16.msra.mxu0 0
        %2338 = vmatprep.mubr.bf16.mxu0 0
        %2339 = vmatmul.mubr.bf16.gmra.mrb[0].mxu0 %v2304
        %v2340 = vpop.f32.mrb[0].mxu0
        %v2341 = vadd.f32 0.0, %v2340
        %v2342 = vpop.f32.mrb[0].mxu0
        %v2343 = vpop.f32.mrb[0].mxu0
        %v2344 = vadd.f32 0.0, %v2343
        %v2345 = vpop.f32.mrb[0].mxu0
        %2346 = vdwg.mxu0
        %v2348 = vsel %vm1778, %v2073, 0
        %2350 = vmatprep.subr.bf16.mxu0 0
        %2351 = vmatpush1.bf16.msra.mxu0 %v1012
        %2352 = vmatprep.subr.bf16.mxu0 0
        %2353 = vmatpush1.bf16.msra.mxu0 0
        %2354 = vmatprep.subr.bf16.mxu0 0
        %2355 = vmatpush1.bf16.msra.mxu0 0
        %2356 = vmatprep.subr.bf16.mxu0 0
        %2357 = vmatpush1.bf16.msra.mxu0 0
        %2358 = vmatprep.subr.bf16.mxu0 0
        %2359 = vmatpush1.bf16.msra.mxu0 0
        %2360 = vmatprep.subr.bf16.mxu0 0
        %2361 = vmatpush1.bf16.msra.mxu0 0
        %2362 = vmatprep.subr.bf16.mxu0 0
        %2363 = vmatpush1.bf16.msra.mxu0 0
        %2364 = vmatprep.subr.bf16.mxu0 0
        %2365 = vmatpush1.bf16.msra.mxu0 0
        %2366 = vmatprep.subr.bf16.mxu0 0
        %2367 = vmatpush1.bf16.msra.mxu0 0
        %2368 = vmatprep.subr.bf16.mxu0 0
        %2369 = vmatpush1.bf16.msra.mxu0 0
        %2370 = vmatprep.subr.bf16.mxu0 0
        %2371 = vmatpush1.bf16.msra.mxu0 0
        %2372 = vmatprep.subr.bf16.mxu0 0
        %2373 = vmatpush1.bf16.msra.mxu0 0
        %2374 = vmatprep.subr.bf16.mxu0 0
        %2375 = vmatpush1.bf16.msra.mxu0 0
        %2376 = vmatprep.subr.bf16.mxu0 0
        %2377 = vmatpush1.bf16.msra.mxu0 0
        %2378 = vmatprep.subr.bf16.mxu0 0
        %2379 = vmatpush1.bf16.msra.mxu0 0
        %2380 = vmatprep.subr.bf16.mxu0 0
        %2381 = vmatpush1.bf16.msra.mxu0 0
        %2382 = vmatprep.mubr.bf16.mxu0 0
        %2383 = vmatmul.mubr.bf16.gmra.mrb[0].mxu0 %v2348
        %v2384 = vpop.f32.mrb[0].mxu0
        %v2385 = vadd.f32 0.0, %v2384
        %v2386 = vpop.f32.mrb[0].mxu0
        %v2387 = vpop.f32.mrb[0].mxu0
        %v2388 = vadd.f32 0.0, %v2387
        %v2389 = vpop.f32.mrb[0].mxu0
        %2390 = vdwg.mxu0
        %v2392 = vsel %vm1778, %v2074, 0
        %2394 = vmatprep.subr.bf16.mxu0 0
        %2395 = vmatpush1.bf16.msra.mxu0 %v1013
        %2396 = vmatprep.subr.bf16.mxu0 0
        %2397 = vmatpush1.bf16.msra.mxu0 0
        %2398 = vmatprep.subr.bf16.mxu0 0
        %2399 = vmatpush1.bf16.msra.mxu0 0
        %2400 = vmatprep.subr.bf16.mxu0 0
        %2401 = vmatpush1.bf16.msra.mxu0 0
        %2402 = vmatprep.subr.bf16.mxu0 0
        %2403 = vmatpush1.bf16.msra.mxu0 0
        %2404 = vmatprep.subr.bf16.mxu0 0
        %2405 = vmatpush1.bf16.msra.mxu0 0
        %2406 = vmatprep.subr.bf16.mxu0 0
        %2407 = vmatpush1.bf16.msra.mxu0 0
        %2408 = vmatprep.subr.bf16.mxu0 0
        %2409 = vmatpush1.bf16.msra.mxu0 0
        %2410 = vmatprep.subr.bf16.mxu0 0
        %2411 = vmatpush1.bf16.msra.mxu0 0
        %2412 = vmatprep.subr.bf16.mxu0 0
        %2413 = vmatpush1.bf16.msra.mxu0 0
        %2414 = vmatprep.subr.bf16.mxu0 0
        %2415 = vmatpush1.bf16.msra.mxu0 0
        %2416 = vmatprep.subr.bf16.mxu0 0
        %2417 = vmatpush1.bf16.msra.mxu0 0
        %2418 = vmatprep.subr.bf16.mxu0 0
        %2419 = vmatpush1.bf16.msra.mxu0 0
        %2420 = vmatprep.subr.bf16.mxu0 0
        %2421 = vmatpush1.bf16.msra.mxu0 0
        %2422 = vmatprep.subr.bf16.mxu0 0
        %2423 = vmatpush1.bf16.msra.mxu0 0
        %2424 = vmatprep.subr.bf16.mxu0 0
        %2425 = vmatpush1.bf16.msra.mxu0 0
        %2426 = vmatprep.mubr.bf16.mxu0 0
        %2427 = vmatmul.mubr.bf16.gmra.mrb[0].mxu0 %v2392
        %v2428 = vpop.f32.mrb[0].mxu0
        %v2429 = vadd.f32 0.0, %v2428
        %v2430 = vpop.f32.mrb[0].mxu0
        %v2431 = vpop.f32.mrb[0].mxu0
        %v2432 = vadd.f32 0.0, %v2431
        %v2433 = vpop.f32.mrb[0].mxu0
        %2434 = vdwg.mxu0
        %v2436 = vsel %vm1778, %v2075, 0
        %2438 = vmatprep.subr.bf16.mxu0 0
        %2439 = vmatpush1.bf16.msra.mxu0 %v1014
        %2440 = vmatprep.subr.bf16.mxu0 0
        %2441 = vmatpush1.bf16.msra.mxu0 0
        %2442 = vmatprep.subr.bf16.mxu0 0
        %2443 = vmatpush1.bf16.msra.mxu0 0
        %2444 = vmatprep.subr.bf16.mxu0 0
        %2445 = vmatpush1.bf16.msra.mxu0 0
        %2446 = vmatprep.subr.bf16.mxu0 0
        %2447 = vmatpush1.bf16.msra.mxu0 0
        %2448 = vmatprep.subr.bf16.mxu0 0
        %2449 = vmatpush1.bf16.msra.mxu0 0
        %2450 = vmatprep.subr.bf16.mxu0 0
        %2451 = vmatpush1.bf16.msra.mxu0 0
        %2452 = vmatprep.subr.bf16.mxu0 0
        %2453 = vmatpush1.bf16.msra.mxu0 0
        %2454 = vmatprep.subr.bf16.mxu0 0
        %2455 = vmatpush1.bf16.msra.mxu0 0
        %2456 = vmatprep.subr.bf16.mxu0 0
        %2457 = vmatpush1.bf16.msra.mxu0 0
        %2458 = vmatprep.subr.bf16.mxu0 0
        %2459 = vmatpush1.bf16.msra.mxu0 0
        %2460 = vmatprep.subr.bf16.mxu0 0
        %2461 = vmatpush1.bf16.msra.mxu0 0
        %2462 = vmatprep.subr.bf16.mxu0 0
        %2463 = vmatpush1.bf16.msra.mxu0 0
        %2464 = vmatprep.subr.bf16.mxu0 0
        %2465 = vmatpush1.bf16.msra.mxu0 0
        %2466 = vmatprep.subr.bf16.mxu0 0
        %2467 = vmatpush1.bf16.msra.mxu0 0
        %2468 = vmatprep.subr.bf16.mxu0 0
        %2469 = vmatpush1.bf16.msra.mxu0 0
        %2470 = vmatprep.mubr.bf16.mxu0 0
        %2471 = vmatmul.mubr.bf16.gmra.mrb[0].mxu0 %v2436
        %v2472 = vpop.f32.mrb[0].mxu0
        %v2473 = vadd.f32 0.0, %v2472
        %v2474 = vpop.f32.mrb[0].mxu0
        %v2475 = vpop.f32.mrb[0].mxu0
        %v2476 = vadd.f32 0.0, %v2475
        %v2477 = vpop.f32.mrb[0].mxu0
        %2478 = vdwg.mxu0
        %v2480 = vsel %vm1778, %v2076, 0
        %2482 = vmatprep.subr.bf16.mxu0 0
        %2483 = vmatpush1.bf16.msra.mxu0 %v1015
        %2484 = vmatprep.subr.bf16.mxu0 0
        %2485 = vmatpush1.bf16.msra.mxu0 0
        %2486 = vmatprep.subr.bf16.mxu0 0
        %2487 = vmatpush1.bf16.msra.mxu0 0
        %2488 = vmatprep.subr.bf16.mxu0 0
        %2489 = vmatpush1.bf16.msra.mxu0 0
        %2490 = vmatprep.subr.bf16.mxu0 0
        %2491 = vmatpush1.bf16.msra.mxu0 0
        %2492 = vmatprep.subr.bf16.mxu0 0
        %2493 = vmatpush1.bf16.msra.mxu0 0
        %2494 = vmatprep.subr.bf16.mxu0 0
        %2495 = vmatpush1.bf16.msra.mxu0 0
        %2496 = vmatprep.subr.bf16.mxu0 0
        %2497 = vmatpush1.bf16.msra.mxu0 0
        %2498 = vmatprep.subr.bf16.mxu0 0
        %2499 = vmatpush1.bf16.msra.mxu0 0
        %2500 = vmatprep.subr.bf16.mxu0 0
        %2501 = vmatpush1.bf16.msra.mxu0 0
        %2502 = vmatprep.subr.bf16.mxu0 0
        %2503 = vmatpush1.bf16.msra.mxu0 0
        %2504 = vmatprep.subr.bf16.mxu0 0
        %2505 = vmatpush1.bf16.msra.mxu0 0
        %2506 = vmatprep.subr.bf16.mxu0 0
        %2507 = vmatpush1.bf16.msra.mxu0 0
        %2508 = vmatprep.subr.bf16.mxu0 0
        %2509 = vmatpush1.bf16.msra.mxu0 0
        %2510 = vmatprep.subr.bf16.mxu0 0
        %2511 = vmatpush1.bf16.msra.mxu0 0
        %2512 = vmatprep.subr.bf16.mxu0 0
        %2513 = vmatpush1.bf16.msra.mxu0 0
        %2514 = vmatprep.mubr.bf16.mxu0 0
        %2515 = vmatmul.mubr.bf16.gmra.mrb[0].mxu0 %v2480
        %v2516 = vpop.f32.mrb[0].mxu0
        %v2517 = vadd.f32 0.0, %v2516
        %v2518 = vpop.f32.mrb[0].mxu0
        %v2519 = vpop.f32.mrb[0].mxu0
        %v2520 = vadd.f32 0.0, %v2519
        %v2521 = vpop.f32.mrb[0].mxu0
        %2522 = vdwg.mxu0
        %v2524 = vsel %vm1778, %v2077, 0
        %2526 = vmatprep.subr.bf16.mxu0 0
        %2527 = vmatpush1.bf16.msra.mxu0 %v1016
        %2528 = vmatprep.subr.bf16.mxu0 0
        %2529 = vmatpush1.bf16.msra.mxu0 0
        %2530 = vmatprep.subr.bf16.mxu0 0
        %2531 = vmatpush1.bf16.msra.mxu0 0
        %2532 = vmatprep.subr.bf16.mxu0 0
        %2533 = vmatpush1.bf16.msra.mxu0 0
        %2534 = vmatprep.subr.bf16.mxu0 0
        %2535 = vmatpush1.bf16.msra.mxu0 0
        %2536 = vmatprep.subr.bf16.mxu0 0
        %2537 = vmatpush1.bf16.msra.mxu0 0
        %2538 = vmatprep.subr.bf16.mxu0 0
        %2539 = vmatpush1.bf16.msra.mxu0 0
        %2540 = vmatprep.subr.bf16.mxu0 0
        %2541 = vmatpush1.bf16.msra.mxu0 0
        %2542 = vmatprep.subr.bf16.mxu0 0
        %2543 = vmatpush1.bf16.msra.mxu0 0
        %2544 = vmatprep.subr.bf16.mxu0 0
        %2545 = vmatpush1.bf16.msra.mxu0 0
        %2546 = vmatprep.subr.bf16.mxu0 0
        %2547 = vmatpush1.bf16.msra.mxu0 0
        %2548 = vmatprep.subr.bf16.mxu0 0
        %2549 = vmatpush1.bf16.msra.mxu0 0
        %2550 = vmatprep.subr.bf16.mxu0 0
        %2551 = vmatpush1.bf16.msra.mxu0 0
        %2552 = vmatprep.subr.bf16.mxu0 0
        %2553 = vmatpush1.bf16.msra.mxu0 0
        %2554 = vmatprep.subr.bf16.mxu0 0
        %2555 = vmatpush1.bf16.msra.mxu0 0
        %2556 = vmatprep.subr.bf16.mxu0 0
        %2557 = vmatpush1.bf16.msra.mxu0 0
        %2558 = vmatprep.mubr.bf16.mxu0 0
        %2559 = vmatmul.mubr.bf16.gmra.mrb[0].mxu0 %v2524
        %v2560 = vpop.f32.mrb[0].mxu0
        %v2561 = vadd.f32 0.0, %v2560
        %v2562 = vpop.f32.mrb[0].mxu0
        %v2563 = vpop.f32.mrb[0].mxu0
        %v2564 = vadd.f32 0.0, %v2563
        %v2565 = vpop.f32.mrb[0].mxu0
        %2566 = vdwg.mxu0
        %v2568 = vsel %vm1778, %v2078, 0
        %2570 = vmatprep.subr.bf16.mxu0 0
        %2571 = vmatpush1.bf16.msra.mxu0 %v1017
        %2572 = vmatprep.subr.bf16.mxu0 0
        %2573 = vmatpush1.bf16.msra.mxu0 0
        %2574 = vmatprep.subr.bf16.mxu0 0
        %2575 = vmatpush1.bf16.msra.mxu0 0
        %2576 = vmatprep.subr.bf16.mxu0 0
        %2577 = vmatpush1.bf16.msra.mxu0 0
        %2578 = vmatprep.subr.bf16.mxu0 0
        %2579 = vmatpush1.bf16.msra.mxu0 0
        %2580 = vmatprep.subr.bf16.mxu0 0
        %2581 = vmatpush1.bf16.msra.mxu0 0
        %2582 = vmatprep.subr.bf16.mxu0 0
        %2583 = vmatpush1.bf16.msra.mxu0 0
        %2584 = vmatprep.subr.bf16.mxu0 0
        %2585 = vmatpush1.bf16.msra.mxu0 0
        %2586 = vmatprep.subr.bf16.mxu0 0
        %2587 = vmatpush1.bf16.msra.mxu0 0
        %2588 = vmatprep.subr.bf16.mxu0 0
        %2589 = vmatpush1.bf16.msra.mxu0 0
        %2590 = vmatprep.subr.bf16.mxu0 0
        %2591 = vmatpush1.bf16.msra.mxu0 0
        %2592 = vmatprep.subr.bf16.mxu0 0
        %2593 = vmatpush1.bf16.msra.mxu0 0
        %2594 = vmatprep.subr.bf16.mxu0 0
        %2595 = vmatpush1.bf16.msra.mxu0 0
        %2596 = vmatprep.subr.bf16.mxu0 0
        %2597 = vmatpush1.bf16.msra.mxu0 0
        %2598 = vmatprep.subr.bf16.mxu0 0
        %2599 = vmatpush1.bf16.msra.mxu0 0
        %2600 = vmatprep.subr.bf16.mxu0 0
        %2601 = vmatpush1.bf16.msra.mxu0 0
        %2602 = vmatprep.mubr.bf16.mxu0 0
        %2603 = vmatmul.mubr.bf16.gmra.mrb[0].mxu0 %v2568
        %v2604 = vpop.f32.mrb[0].mxu0
        %v2605 = vadd.f32 0.0, %v2604
        %v2606 = vpop.f32.mrb[0].mxu0
        %v2607 = vpop.f32.mrb[0].mxu0
        %v2608 = vadd.f32 0.0, %v2607
        %v2609 = vpop.f32.mrb[0].mxu0
        %2610 = vdwg.mxu0
        %v2612 = vsel %vm1778, %v2079, 0
        %2614 = vmatprep.subr.bf16.mxu0 0
        %2615 = vmatpush1.bf16.msra.mxu0 %v1018
        %2616 = vmatprep.subr.bf16.mxu0 0
        %2617 = vmatpush1.bf16.msra.mxu0 0
        %2618 = vmatprep.subr.bf16.mxu0 0
        %2619 = vmatpush1.bf16.msra.mxu0 0
        %2620 = vmatprep.subr.bf16.mxu0 0
        %2621 = vmatpush1.bf16.msra.mxu0 0
        %2622 = vmatprep.subr.bf16.mxu0 0
        %2623 = vmatpush1.bf16.msra.mxu0 0
        %2624 = vmatprep.subr.bf16.mxu0 0
        %2625 = vmatpush1.bf16.msra.mxu0 0
        %2626 = vmatprep.subr.bf16.mxu0 0
        %2627 = vmatpush1.bf16.msra.mxu0 0
        %2628 = vmatprep.subr.bf16.mxu0 0
        %2629 = vmatpush1.bf16.msra.mxu0 0
        %2630 = vmatprep.subr.bf16.mxu0 0
        %2631 = vmatpush1.bf16.msra.mxu0 0
        %2632 = vmatprep.subr.bf16.mxu0 0
        %2633 = vmatpush1.bf16.msra.mxu0 0
        %2634 = vmatprep.subr.bf16.mxu0 0
        %2635 = vmatpush1.bf16.msra.mxu0 0
        %2636 = vmatprep.subr.bf16.mxu0 0
        %2637 = vmatpush1.bf16.msra.mxu0 0
        %2638 = vmatprep.subr.bf16.mxu0 0
        %2639 = vmatpush1.bf16.msra.mxu0 0
        %2640 = vmatprep.subr.bf16.mxu0 0
        %2641 = vmatpush1.bf16.msra.mxu0 0
        %2642 = vmatprep.subr.bf16.mxu0 0
        %2643 = vmatpush1.bf16.msra.mxu0 0
        %2644 = vmatprep.subr.bf16.mxu0 0
        %2645 = vmatpush1.bf16.msra.mxu0 0
        %2646 = vmatprep.mubr.bf16.mxu0 0
        %2647 = vmatmul.mubr.bf16.gmra.mrb[0].mxu0 %v2612
        %v2648 = vpop.f32.mrb[0].mxu0
        %v2649 = vadd.f32 0.0, %v2648
        %v2650 = vpop.f32.mrb[0].mxu0
        %v2651 = vpop.f32.mrb[0].mxu0
        %v2652 = vadd.f32 0.0, %v2651
        %v2653 = vpop.f32.mrb[0].mxu0
        %2654 = vdwg.mxu0
        %v2656 = vsel %vm1778, %v2080, 0
        %2658 = vmatprep.subr.bf16.mxu0 0
        %2659 = vmatpush1.bf16.msra.mxu0 %v1019
        %2660 = vmatprep.subr.bf16.mxu0 0
        %2661 = vmatpush1.bf16.msra.mxu0 0
        %2662 = vmatprep.subr.bf16.mxu0 0
        %2663 = vmatpush1.bf16.msra.mxu0 0
        %2664 = vmatprep.subr.bf16.mxu0 0
        %2665 = vmatpush1.bf16.msra.mxu0 0
        %2666 = vmatprep.subr.bf16.mxu0 0
        %2667 = vmatpush1.bf16.msra.mxu0 0
        %2668 = vmatprep.subr.bf16.mxu0 0
        %2669 = vmatpush1.bf16.msra.mxu0 0
        %2670 = vmatprep.subr.bf16.mxu0 0
        %2671 = vmatpush1.bf16.msra.mxu0 0
        %2672 = vmatprep.subr.bf16.mxu0 0
        %2673 = vmatpush1.bf16.msra.mxu0 0
        %2674 = vmatprep.subr.bf16.mxu0 0
        %2675 = vmatpush1.bf16.msra.mxu0 0
        %2676 = vmatprep.subr.bf16.mxu0 0
        %2677 = vmatpush1.bf16.msra.mxu0 0
        %2678 = vmatprep.subr.bf16.mxu0 0
        %2679 = vmatpush1.bf16.msra.mxu0 0
        %2680 = vmatprep.subr.bf16.mxu0 0
        %2681 = vmatpush1.bf16.msra.mxu0 0
        %2682 = vmatprep.subr.bf16.mxu0 0
        %2683 = vmatpush1.bf16.msra.mxu0 0
        %2684 = vmatprep.subr.bf16.mxu0 0
        %2685 = vmatpush1.bf16.msra.mxu0 0
        %2686 = vmatprep.subr.bf16.mxu0 0
        %2687 = vmatpush1.bf16.msra.mxu0 0
        %2688 = vmatprep.subr.bf16.mxu0 0
        %2689 = vmatpush1.bf16.msra.mxu0 0
        %2690 = vmatprep.mubr.bf16.mxu0 0
        %2691 = vmatmul.mubr.bf16.gmra.mrb[0].mxu0 %v2656
        %v2692 = vpop.f32.mrb[0].mxu0
        %v2693 = vadd.f32 0.0, %v2692
        %v2694 = vpop.f32.mrb[0].mxu0
        %v2695 = vpop.f32.mrb[0].mxu0
        %v2696 = vadd.f32 0.0, %v2695
        %v2697 = vpop.f32.mrb[0].mxu0
        %2698 = vdwg.mxu0
        %v2700 = vsel %vm1778, %v2081, 0
        %2702 = vmatprep.subr.bf16.mxu0 0
        %2703 = vmatpush1.bf16.msra.mxu0 %v1020
        %2704 = vmatprep.subr.bf16.mxu0 0
        %2705 = vmatpush1.bf16.msra.mxu0 0
        %2706 = vmatprep.subr.bf16.mxu0 0
        %2707 = vmatpush1.bf16.msra.mxu0 0
        %2708 = vmatprep.subr.bf16.mxu0 0
        %2709 = vmatpush1.bf16.msra.mxu0 0
        %2710 = vmatprep.subr.bf16.mxu0 0
        %2711 = vmatpush1.bf16.msra.mxu0 0
        %2712 = vmatprep.subr.bf16.mxu0 0
        %2713 = vmatpush1.bf16.msra.mxu0 0
        %2714 = vmatprep.subr.bf16.mxu0 0
        %2715 = vmatpush1.bf16.msra.mxu0 0
        %2716 = vmatprep.subr.bf16.mxu0 0
        %2717 = vmatpush1.bf16.msra.mxu0 0
        %2718 = vmatprep.subr.bf16.mxu0 0
        %2719 = vmatpush1.bf16.msra.mxu0 0
        %2720 = vmatprep.subr.bf16.mxu0 0
        %2721 = vmatpush1.bf16.msra.mxu0 0
        %2722 = vmatprep.subr.bf16.mxu0 0
        %2723 = vmatpush1.bf16.msra.mxu0 0
        %2724 = vmatprep.subr.bf16.mxu0 0
        %2725 = vmatpush1.bf16.msra.mxu0 0
        %2726 = vmatprep.subr.bf16.mxu0 0
        %2727 = vmatpush1.bf16.msra.mxu0 0
        %2728 = vmatprep.subr.bf16.mxu0 0
        %2729 = vmatpush1.bf16.msra.mxu0 0
        %2730 = vmatprep.subr.bf16.mxu0 0
        %2731 = vmatpush1.bf16.msra.mxu0 0
        %2732 = vmatprep.subr.bf16.mxu0 0
        %2733 = vmatpush1.bf16.msra.mxu0 0
        %2734 = vmatprep.mubr.bf16.mxu0 0
        %2735 = vmatmul.mubr.bf16.gmra.mrb[0].mxu0 %v2700
        %v2736 = vpop.f32.mrb[0].mxu0
        %v2737 = vadd.f32 0.0, %v2736
        %v2738 = vpop.f32.mrb[0].mxu0
        %v2739 = vpop.f32.mrb[0].mxu0
        %v2740 = vadd.f32 0.0, %v2739
        %v2741 = vpop.f32.mrb[0].mxu0
        %2742 = vdwg.mxu0
        %v2744 = vsel %vm1778, %v2082, 0
        %2746 = vmatprep.subr.bf16.mxu0 0
        %2747 = vmatpush1.bf16.msra.mxu0 %v1021
        %2748 = vmatprep.subr.bf16.mxu0 0
        %2749 = vmatpush1.bf16.msra.mxu0 0
        %2750 = vmatprep.subr.bf16.mxu0 0
        %2751 = vmatpush1.bf16.msra.mxu0 0
        %2752 = vmatprep.subr.bf16.mxu0 0
        %2753 = vmatpush1.bf16.msra.mxu0 0
        %2754 = vmatprep.subr.bf16.mxu0 0
        %2755 = vmatpush1.bf16.msra.mxu0 0
        %2756 = vmatprep.subr.bf16.mxu0 0
        %2757 = vmatpush1.bf16.msra.mxu0 0
        %2758 = vmatprep.subr.bf16.mxu0 0
        %2759 = vmatpush1.bf16.msra.mxu0 0
        %2760 = vmatprep.subr.bf16.mxu0 0
        %2761 = vmatpush1.bf16.msra.mxu0 0
        %2762 = vmatprep.subr.bf16.mxu0 0
        %2763 = vmatpush1.bf16.msra.mxu0 0
        %2764 = vmatprep.subr.bf16.mxu0 0
        %2765 = vmatpush1.bf16.msra.mxu0 0
        %2766 = vmatprep.subr.bf16.mxu0 0
        %2767 = vmatpush1.bf16.msra.mxu0 0
        %2768 = vmatprep.subr.bf16.mxu0 0
        %2769 = vmatpush1.bf16.msra.mxu0 0
        %2770 = vmatprep.subr.bf16.mxu0 0
        %2771 = vmatpush1.bf16.msra.mxu0 0
        %2772 = vmatprep.subr.bf16.mxu0 0
        %2773 = vmatpush1.bf16.msra.mxu0 0
        %2774 = vmatprep.subr.bf16.mxu0 0
        %2775 = vmatpush1.bf16.msra.mxu0 0
        %2776 = vmatprep.subr.bf16.mxu0 0
        %2777 = vmatpush1.bf16.msra.mxu0 0
        %2778 = vmatprep.mubr.bf16.mxu0 0
        %2779 = vmatmul.mubr.bf16.gmra.mrb[0].mxu0 %v2744
        %v2780 = vpop.f32.mrb[0].mxu0
        %v2781 = vadd.f32 0.0, %v2780
        %v2782 = vpop.f32.mrb[0].mxu0
        %v2783 = vpop.f32.mrb[0].mxu0
        %v2784 = vadd.f32 0.0, %v2783
        %v2785 = vpop.f32.mrb[0].mxu0
        %2786 = vdwg.mxu0
        %v2787 = vrcp.pop %v1973
        %v2788 = vrcp.pop %v1976
        %v2789 = vrcp.pop %v1979
        %v2790 = vrcp.pop %v1982
        %v2791 = vrcp.pop %v1985
        %v2792 = vrcp.pop %v1988
        %v2793 = vrcp.pop %v1991
        %v2794 = vrcp.pop %v1994
        %v2795 = vrcp.pop %v1997
        %v2796 = vrcp.pop %v2000
        %v2797 = vrcp.pop %v2003
        %v2798 = vrcp.pop %v2006
        %v2799 = vrcp.pop %v2009
        %v2800 = vrcp.pop %v2012
        %v2801 = vrcp.pop %v2015
        %v2802 = vrcp.pop %v2018
        %v2803 = vrcp.pop %v2021
        %v2804 = vrcp.pop %v2024
        %v2805 = vrcp.pop %v2027
        %v2806 = vrcp.pop %v2030
        %v2807 = vrcp.pop %v2033
        %v2808 = vrcp.pop %v2036
        %v2809 = vrcp.pop %v2039
        %v2810 = vrcp.pop %v2042
        %v2811 = vrcp.pop %v2045
        %v2812 = vrcp.pop %v2048
        %v2813 = vrcp.pop %v2051
        %v2814 = vrcp.pop %v2054
        %v2815 = vrcp.pop %v2057
        %v2816 = vrcp.pop %v2060
        %v2817 = vrcp.pop %v2063
        %v2818 = vrcp.pop %v2066
        %v2819 = vmul.f32 %v2121, %v2787
        %v2820 = vmul.f32 %v2124, %v2788
        %v2821 = vmul.f32 %v2165, %v2789
        %v2822 = vmul.f32 %v2168, %v2790
        %v2823 = vmul.f32 %v2209, %v2791
        %v2824 = vmul.f32 %v2212, %v2792
        %v2825 = vmul.f32 %v2253, %v2793
        %v2826 = vmul.f32 %v2256, %v2794
        %v2827 = vmul.f32 %v2297, %v2795
        %v2828 = vmul.f32 %v2300, %v2796
        %v2829 = vmul.f32 %v2341, %v2797
        %v2830 = vmul.f32 %v2344, %v2798
        %v2831 = vmul.f32 %v2385, %v2799
        %v2832 = vmul.f32 %v2388, %v2800
        %v2833 = vmul.f32 %v2429, %v2801
        %v2834 = vmul.f32 %v2432, %v2802
        %v2835 = vmul.f32 %v2473, %v2803
        %v2836 = vmul.f32 %v2476, %v2804
        %v2837 = vmul.f32 %v2517, %v2805
        %v2838 = vmul.f32 %v2520, %v2806
        %v2839 = vmul.f32 %v2561, %v2807
        %v2840 = vmul.f32 %v2564, %v2808
        %v2841 = vmul.f32 %v2605, %v2809
        %v2842 = vmul.f32 %v2608, %v2810
        %v2843 = vmul.f32 %v2649, %v2811
        %v2844 = vmul.f32 %v2652, %v2812
        %v2845 = vmul.f32 %v2693, %v2813
        %v2846 = vmul.f32 %v2696, %v2814
        %v2847 = vmul.f32 %v2737, %v2815
        %v2848 = vmul.f32 %v2740, %v2816
        %v2849 = vmul.f32 %v2781, %v2817
        %v2850 = vmul.f32 %v2784, %v2818
        %v2851 = vmul.f32 %v911, %v2819
        %v2852 = vmul.f32 %v913, %v2820
        %v2853 = vmul.f32 %v915, %v2821
        %v2854 = vmul.f32 %v917, %v2822
        %v2855 = vmul.f32 %v919, %v2823
        %v2856 = vmul.f32 %v921, %v2824
        %v2857 = vmul.f32 %v923, %v2825
        %v2858 = vmul.f32 %v925, %v2826
        %v2859 = vmul.f32 %v927, %v2827
        %v2860 = vmul.f32 %v929, %v2828
        %v2861 = vmul.f32 %v931, %v2829
        %v2862 = vmul.f32 %v933, %v2830
        %v2863 = vmul.f32 %v935, %v2831
        %v2864 = vmul.f32 %v937, %v2832
        %v2865 = vmul.f32 %v939, %v2833
        %v2866 = vmul.f32 %v941, %v2834
        %v2867 = vmul.f32 %v943, %v2835
        %v2868 = vmul.f32 %v945, %v2836
        %v2869 = vmul.f32 %v947, %v2837
        %v2870 = vmul.f32 %v949, %v2838
        %v2871 = vmul.f32 %v951, %v2839
        %v2872 = vmul.f32 %v953, %v2840
        %v2873 = vmul.f32 %v955, %v2841
        %v2874 = vmul.f32 %v957, %v2842
        %v2875 = vmul.f32 %v959, %v2843
        %v2876 = vmul.f32 %v961, %v2844
        %v2877 = vmul.f32 %v963, %v2845
        %v2878 = vmul.f32 %v965, %v2846
        %v2879 = vmul.f32 %v967, %v2847
        %v2880 = vmul.f32 %v969, %v2848
        %v2881 = vmul.f32 %v971, %v2849
        %v2882 = vmul.f32 %v973, %v2850
        %v2883 = vpack.c.bf16 %v2852, %v2851
        %v2884 = vpack.c.bf16 %v2854, %v2853
        %v2885 = vpack.c.bf16 %v2856, %v2855
        %v2886 = vpack.c.bf16 %v2858, %v2857
        %v2887 = vpack.c.bf16 %v2860, %v2859
        %v2888 = vpack.c.bf16 %v2862, %v2861
        %v2889 = vpack.c.bf16 %v2864, %v2863
        %v2890 = vpack.c.bf16 %v2866, %v2865
        %v2891 = vpack.c.bf16 %v2868, %v2867
        %v2892 = vpack.c.bf16 %v2870, %v2869
        %v2893 = vpack.c.bf16 %v2872, %v2871
        %v2894 = vpack.c.bf16 %v2874, %v2873
        %v2895 = vpack.c.bf16 %v2876, %v2875
        %v2896 = vpack.c.bf16 %v2878, %v2877
        %v2897 = vpack.c.bf16 %v2880, %v2879
        %v2898 = vpack.c.bf16 %v2882, %v2881
        %v2899 = vld [vmem:[%s3] sm:$0xf]
        %v2900 = vld [vmem:[%s3 + $0x4] sm:$0xf]
        %v2901 = vld [vmem:[%s3 + $0x8] sm:$0xf]
        %v2902 = vld [vmem:[%s3 + $0xc] sm:$0xf]
        %s2903 = scalar_lea.vmem %s248, 8
        %v2904 = vld [vmem:[%s2903] sm:$0xf]
        %v2905 = vld [vmem:[%s2903 + $0x4] sm:$0xf]
        %v2906 = vunpack.c.l.bf16 %v2904
        %v2907 = vunpack.c.l.bf16 %v2905
        %2909 = vrot.lane.b32.xlu0 %v974, 96
        %v2910 = vpop.permute.xlu0 %2909
        %2912 = vrot.lane.b32.xlu0 %v990, 96
        %v2913 = vpop.permute.xlu0 %2912
        %v2915 = vsel %vm347, %v2910, 0
        %v2918 = vsel %vm347, %v2913, 0
        %2920 = vmatprep.subr.bf16.mxu0 0
        %2921 = vmatpush1.bf16.xpose.msra.mxu0 %v2918
        %2922 = vmatprep.subr.bf16.mxu0 0
        %2923 = vmatpush1.bf16.xpose.msra.mxu0 0
        %2924 = vmatprep.subr.bf16.mxu0 0
        %2925 = vmatpush1.bf16.xpose.msra.mxu0 0
        %2926 = vmatprep.subr.bf16.mxu0 0
        %2927 = vmatpush1.bf16.xpose.msra.mxu0 0
        %2928 = vmatprep.subr.bf16.mxu0 0
        %2929 = vmatpush1.bf16.xpose.msra.mxu0 0
        %2930 = vmatprep.subr.bf16.mxu0 0
        %2931 = vmatpush1.bf16.xpose.msra.mxu0 0
        %2932 = vmatprep.subr.bf16.mxu0 0
        %2933 = vmatpush1.bf16.xpose.msra.mxu0 0
        %2934 = vmatprep.subr.bf16.mxu0 0
        %2935 = vmatpush1.bf16.xpose.msra.mxu0 0
        %2936 = vmatprep.subr.bf16.mxu0 0
        %2937 = vmatpush1.bf16.xpose.msra.mxu0 0
        %2938 = vmatprep.subr.bf16.mxu0 0
        %2939 = vmatpush1.bf16.xpose.msra.mxu0 0
        %2940 = vmatprep.subr.bf16.mxu0 0
        %2941 = vmatpush1.bf16.xpose.msra.mxu0 0
        %2942 = vmatprep.subr.bf16.mxu0 0
        %2943 = vmatpush1.bf16.xpose.msra.mxu0 0
        %2944 = vmatprep.subr.bf16.mxu0 0
        %2945 = vmatpush1.bf16.xpose.msra.mxu0 0
        %2946 = vmatprep.subr.bf16.mxu0 0
        %2947 = vmatpush1.bf16.xpose.msra.mxu0 0
        %2948 = vmatprep.subr.bf16.mxu0 0
        %2949 = vmatpush1.bf16.xpose.msra.mxu0 0
        %2950 = vmatprep.subr.bf16.mxu0 0
        %2951 = vmatpush1.bf16.xpose.msra.mxu0 0
        %2952 = vmatprep.mubr.bf16.mxu0 0
        %2953 = vmatmul.mubr.bf16.gmra.mrb[0].mxu0 %v2915
        %v2954 = vpop.f32.mrb[0].mxu0
        %v2955 = vadd.f32 %v2906, %v2954
        %v2956 = vpop.f32.mrb[0].mxu0
        %v2957 = vpop.f32.mrb[0].mxu0
        %v2958 = vadd.f32 %v2907, %v2957
        %v2959 = vpop.f32.mrb[0].mxu0
        %2960 = vdwg.mxu0
        %2962 = vrot.lane.b32.xlu0 %v975, 96
        %v2963 = vpop.permute.xlu0 %2962
        %2965 = vrot.lane.b32.xlu0 %v991, 96
        %v2966 = vpop.permute.xlu0 %2965
        %v2968 = vsel %vm347, %v2963, 0
        %v2971 = vsel %vm347, %v2966, 0
        %2973 = vmatprep.subr.bf16.mxu0 0
        %2974 = vmatpush1.bf16.xpose.msra.mxu0 %v2971
        %2975 = vmatprep.subr.bf16.mxu0 0
        %2976 = vmatpush1.bf16.xpose.msra.mxu0 0
        %2977 = vmatprep.subr.bf16.mxu0 0
        %2978 = vmatpush1.bf16.xpose.msra.mxu0 0
        %2979 = vmatprep.subr.bf16.mxu0 0
        %2980 = vmatpush1.bf16.xpose.msra.mxu0 0
        %2981 = vmatprep.subr.bf16.mxu0 0
        %2982 = vmatpush1.bf16.xpose.msra.mxu0 0
        %2983 = vmatprep.subr.bf16.mxu0 0
        %2984 = vmatpush1.bf16.xpose.msra.mxu0 0
        %2985 = vmatprep.subr.bf16.mxu0 0
        %2986 = vmatpush1.bf16.xpose.msra.mxu0 0
        %2987 = vmatprep.subr.bf16.mxu0 0
        %2988 = vmatpush1.bf16.xpose.msra.mxu0 0
        %2989 = vmatprep.subr.bf16.mxu0 0
        %2990 = vmatpush1.bf16.xpose.msra.mxu0 0
        %2991 = vmatprep.subr.bf16.mxu0 0
        %2992 = vmatpush1.bf16.xpose.msra.mxu0 0
        %2993 = vmatprep.subr.bf16.mxu0 0
        %2994 = vmatpush1.bf16.xpose.msra.mxu0 0
        %2995 = vmatprep.subr.bf16.mxu0 0
        %2996 = vmatpush1.bf16.xpose.msra.mxu0 0
        %2997 = vmatprep.subr.bf16.mxu0 0
        %2998 = vmatpush1.bf16.xpose.msra.mxu0 0
        %2999 = vmatprep.subr.bf16.mxu0 0
        %3000 = vmatpush1.bf16.xpose.msra.mxu0 0
        %3001 = vmatprep.subr.bf16.mxu0 0
        %3002 = vmatpush1.bf16.xpose.msra.mxu0 0
        %3003 = vmatprep.subr.bf16.mxu0 0
        %3004 = vmatpush1.bf16.xpose.msra.mxu0 0
        %3005 = vmatprep.mubr.bf16.mxu0 0
        %3006 = vmatmul.mubr.bf16.gmra.mrb[0].mxu0 %v2968
        %v3007 = vpop.f32.mrb[0].mxu0
        %v3008 = vadd.f32 %v2906, %v3007
        %v3009 = vpop.f32.mrb[0].mxu0
        %v3010 = vpop.f32.mrb[0].mxu0
        %v3011 = vadd.f32 %v2907, %v3010
        %v3012 = vpop.f32.mrb[0].mxu0
        %3013 = vdwg.mxu0
        %3015 = vrot.lane.b32.xlu0 %v976, 96
        %v3016 = vpop.permute.xlu0 %3015
        %3018 = vrot.lane.b32.xlu0 %v992, 96
        %v3019 = vpop.permute.xlu0 %3018
        %v3021 = vsel %vm347, %v3016, 0
        %v3024 = vsel %vm347, %v3019, 0
        %3026 = vmatprep.subr.bf16.mxu0 0
        %3027 = vmatpush1.bf16.xpose.msra.mxu0 %v3024
        %3028 = vmatprep.subr.bf16.mxu0 0
        %3029 = vmatpush1.bf16.xpose.msra.mxu0 0
        %3030 = vmatprep.subr.bf16.mxu0 0
        %3031 = vmatpush1.bf16.xpose.msra.mxu0 0
        %3032 = vmatprep.subr.bf16.mxu0 0
        %3033 = vmatpush1.bf16.xpose.msra.mxu0 0
        %3034 = vmatprep.subr.bf16.mxu0 0
        %3035 = vmatpush1.bf16.xpose.msra.mxu0 0
        %3036 = vmatprep.subr.bf16.mxu0 0
        %3037 = vmatpush1.bf16.xpose.msra.mxu0 0
        %3038 = vmatprep.subr.bf16.mxu0 0
        %3039 = vmatpush1.bf16.xpose.msra.mxu0 0
        %3040 = vmatprep.subr.bf16.mxu0 0
        %3041 = vmatpush1.bf16.xpose.msra.mxu0 0
        %3042 = vmatprep.subr.bf16.mxu0 0
        %3043 = vmatpush1.bf16.xpose.msra.mxu0 0
        %3044 = vmatprep.subr.bf16.mxu0 0
        %3045 = vmatpush1.bf16.xpose.msra.mxu0 0
        %3046 = vmatprep.subr.bf16.mxu0 0
        %3047 = vmatpush1.bf16.xpose.msra.mxu0 0
        %3048 = vmatprep.subr.bf16.mxu0 0
        %3049 = vmatpush1.bf16.xpose.msra.mxu0 0
        %3050 = vmatprep.subr.bf16.mxu0 0
        %3051 = vmatpush1.bf16.xpose.msra.mxu0 0
        %3052 = vmatprep.subr.bf16.mxu0 0
        %3053 = vmatpush1.bf16.xpose.msra.mxu0 0
        %3054 = vmatprep.subr.bf16.mxu0 0
        %3055 = vmatpush1.bf16.xpose.msra.mxu0 0
        %3056 = vmatprep.subr.bf16.mxu0 0
        %3057 = vmatpush1.bf16.xpose.msra.mxu0 0
        %3058 = vmatprep.mubr.bf16.mxu0 0
        %3059 = vmatmul.mubr.bf16.gmra.mrb[0].mxu0 %v3021
        %v3060 = vpop.f32.mrb[0].mxu0
        %v3061 = vadd.f32 %v2906, %v3060
        %v3062 = vpop.f32.mrb[0].mxu0
        %v3063 = vpop.f32.mrb[0].mxu0
        %v3064 = vadd.f32 %v2907, %v3063
        %v3065 = vpop.f32.mrb[0].mxu0
        %3066 = vdwg.mxu0
        %3068 = vrot.lane.b32.xlu0 %v977, 96
        %v3069 = vpop.permute.xlu0 %3068
        %3071 = vrot.lane.b32.xlu0 %v993, 96
        %v3072 = vpop.permute.xlu0 %3071
        %v3074 = vsel %vm347, %v3069, 0
        %v3077 = vsel %vm347, %v3072, 0
        %3079 = vmatprep.subr.bf16.mxu0 0
        %3080 = vmatpush1.bf16.xpose.msra.mxu0 %v3077
        %3081 = vmatprep.subr.bf16.mxu0 0
        %3082 = vmatpush1.bf16.xpose.msra.mxu0 0
        %3083 = vmatprep.subr.bf16.mxu0 0
        %3084 = vmatpush1.bf16.xpose.msra.mxu0 0
        %3085 = vmatprep.subr.bf16.mxu0 0
        %3086 = vmatpush1.bf16.xpose.msra.mxu0 0
        %3087 = vmatprep.subr.bf16.mxu0 0
        %3088 = vmatpush1.bf16.xpose.msra.mxu0 0
        %3089 = vmatprep.subr.bf16.mxu0 0
        %3090 = vmatpush1.bf16.xpose.msra.mxu0 0
        %3091 = vmatprep.subr.bf16.mxu0 0
        %3092 = vmatpush1.bf16.xpose.msra.mxu0 0
        %3093 = vmatprep.subr.bf16.mxu0 0
        %3094 = vmatpush1.bf16.xpose.msra.mxu0 0
        %3095 = vmatprep.subr.bf16.mxu0 0
        %3096 = vmatpush1.bf16.xpose.msra.mxu0 0
        %3097 = vmatprep.subr.bf16.mxu0 0
        %3098 = vmatpush1.bf16.xpose.msra.mxu0 0
        %3099 = vmatprep.subr.bf16.mxu0 0
        %3100 = vmatpush1.bf16.xpose.msra.mxu0 0
        %3101 = vmatprep.subr.bf16.mxu0 0
        %3102 = vmatpush1.bf16.xpose.msra.mxu0 0
        %3103 = vmatprep.subr.bf16.mxu0 0
        %3104 = vmatpush1.bf16.xpose.msra.mxu0 0
        %3105 = vmatprep.subr.bf16.mxu0 0
        %3106 = vmatpush1.bf16.xpose.msra.mxu0 0
        %3107 = vmatprep.subr.bf16.mxu0 0
        %3108 = vmatpush1.bf16.xpose.msra.mxu0 0
        %3109 = vmatprep.subr.bf16.mxu0 0
        %3110 = vmatpush1.bf16.xpose.msra.mxu0 0
        %3111 = vmatprep.mubr.bf16.mxu0 0
        %3112 = vmatmul.mubr.bf16.gmra.mrb[0].mxu0 %v3074
        %v3113 = vpop.f32.mrb[0].mxu0
        %v3114 = vadd.f32 %v2906, %v3113
        %v3115 = vpop.f32.mrb[0].mxu0
        %v3116 = vpop.f32.mrb[0].mxu0
        %v3117 = vadd.f32 %v2907, %v3116
        %v3118 = vpop.f32.mrb[0].mxu0
        %3119 = vdwg.mxu0
        %3121 = vrot.lane.b32.xlu0 %v978, 96
        %v3122 = vpop.permute.xlu0 %3121
        %3124 = vrot.lane.b32.xlu0 %v994, 96
        %v3125 = vpop.permute.xlu0 %3124
        %v3127 = vsel %vm347, %v3122, 0
        %v3130 = vsel %vm347, %v3125, 0
        %3132 = vmatprep.subr.bf16.mxu0 0
        %3133 = vmatpush1.bf16.xpose.msra.mxu0 %v3130
        %3134 = vmatprep.subr.bf16.mxu0 0
        %3135 = vmatpush1.bf16.xpose.msra.mxu0 0
        %3136 = vmatprep.subr.bf16.mxu0 0
        %3137 = vmatpush1.bf16.xpose.msra.mxu0 0
        %3138 = vmatprep.subr.bf16.mxu0 0
        %3139 = vmatpush1.bf16.xpose.msra.mxu0 0
        %3140 = vmatprep.subr.bf16.mxu0 0
        %3141 = vmatpush1.bf16.xpose.msra.mxu0 0
        %3142 = vmatprep.subr.bf16.mxu0 0
        %3143 = vmatpush1.bf16.xpose.msra.mxu0 0
        %3144 = vmatprep.subr.bf16.mxu0 0
        %3145 = vmatpush1.bf16.xpose.msra.mxu0 0
        %3146 = vmatprep.subr.bf16.mxu0 0
        %3147 = vmatpush1.bf16.xpose.msra.mxu0 0
        %3148 = vmatprep.subr.bf16.mxu0 0
        %3149 = vmatpush1.bf16.xpose.msra.mxu0 0
        %3150 = vmatprep.subr.bf16.mxu0 0
        %3151 = vmatpush1.bf16.xpose.msra.mxu0 0
        %3152 = vmatprep.subr.bf16.mxu0 0
        %3153 = vmatpush1.bf16.xpose.msra.mxu0 0
        %3154 = vmatprep.subr.bf16.mxu0 0
        %3155 = vmatpush1.bf16.xpose.msra.mxu0 0
        %3156 = vmatprep.subr.bf16.mxu0 0
        %3157 = vmatpush1.bf16.xpose.msra.mxu0 0
        %3158 = vmatprep.subr.bf16.mxu0 0
        %3159 = vmatpush1.bf16.xpose.msra.mxu0 0
        %3160 = vmatprep.subr.bf16.mxu0 0
        %3161 = vmatpush1.bf16.xpose.msra.mxu0 0
        %3162 = vmatprep.subr.bf16.mxu0 0
        %3163 = vmatpush1.bf16.xpose.msra.mxu0 0
        %3164 = vmatprep.mubr.bf16.mxu0 0
        %3165 = vmatmul.mubr.bf16.gmra.mrb[0].mxu0 %v3127
        %v3166 = vpop.f32.mrb[0].mxu0
        %v3167 = vadd.f32 %v2906, %v3166
        %v3168 = vpop.f32.mrb[0].mxu0
        %v3169 = vpop.f32.mrb[0].mxu0
        %v3170 = vadd.f32 %v2907, %v3169
        %v3171 = vpop.f32.mrb[0].mxu0
        %3172 = vdwg.mxu0
        %3174 = vrot.lane.b32.xlu0 %v979, 96
        %v3175 = vpop.permute.xlu0 %3174
        %3177 = vrot.lane.b32.xlu0 %v995, 96
        %v3178 = vpop.permute.xlu0 %3177
        %v3180 = vsel %vm347, %v3175, 0
        %v3183 = vsel %vm347, %v3178, 0
        %3185 = vmatprep.subr.bf16.mxu0 0
        %3186 = vmatpush1.bf16.xpose.msra.mxu0 %v3183
        %3187 = vmatprep.subr.bf16.mxu0 0
        %3188 = vmatpush1.bf16.xpose.msra.mxu0 0
        %3189 = vmatprep.subr.bf16.mxu0 0
        %3190 = vmatpush1.bf16.xpose.msra.mxu0 0
        %3191 = vmatprep.subr.bf16.mxu0 0
        %3192 = vmatpush1.bf16.xpose.msra.mxu0 0
        %3193 = vmatprep.subr.bf16.mxu0 0
        %3194 = vmatpush1.bf16.xpose.msra.mxu0 0
        %3195 = vmatprep.subr.bf16.mxu0 0
        %3196 = vmatpush1.bf16.xpose.msra.mxu0 0
        %3197 = vmatprep.subr.bf16.mxu0 0
        %3198 = vmatpush1.bf16.xpose.msra.mxu0 0
        %3199 = vmatprep.subr.bf16.mxu0 0
        %3200 = vmatpush1.bf16.xpose.msra.mxu0 0
        %3201 = vmatprep.subr.bf16.mxu0 0
        %3202 = vmatpush1.bf16.xpose.msra.mxu0 0
        %3203 = vmatprep.subr.bf16.mxu0 0
        %3204 = vmatpush1.bf16.xpose.msra.mxu0 0
        %3205 = vmatprep.subr.bf16.mxu0 0
        %3206 = vmatpush1.bf16.xpose.msra.mxu0 0
        %3207 = vmatprep.subr.bf16.mxu0 0
        %3208 = vmatpush1.bf16.xpose.msra.mxu0 0
        %3209 = vmatprep.subr.bf16.mxu0 0
        %3210 = vmatpush1.bf16.xpose.msra.mxu0 0
        %3211 = vmatprep.subr.bf16.mxu0 0
        %3212 = vmatpush1.bf16.xpose.msra.mxu0 0
        %3213 = vmatprep.subr.bf16.mxu0 0
        %3214 = vmatpush1.bf16.xpose.msra.mxu0 0
        %3215 = vmatprep.subr.bf16.mxu0 0
        %3216 = vmatpush1.bf16.xpose.msra.mxu0 0
        %3217 = vmatprep.mubr.bf16.mxu0 0
        %3218 = vmatmul.mubr.bf16.gmra.mrb[0].mxu0 %v3180
        %v3219 = vpop.f32.mrb[0].mxu0
        %v3220 = vadd.f32 %v2906, %v3219
        %v3221 = vpop.f32.mrb[0].mxu0
        %v3222 = vpop.f32.mrb[0].mxu0
        %v3223 = vadd.f32 %v2907, %v3222
        %v3224 = vpop.f32.mrb[0].mxu0
        %3225 = vdwg.mxu0
        %3227 = vrot.lane.b32.xlu0 %v980, 96
        %v3228 = vpop.permute.xlu0 %3227
        %3230 = vrot.lane.b32.xlu0 %v996, 96
        %v3231 = vpop.permute.xlu0 %3230
        %v3233 = vsel %vm347, %v3228, 0
        %v3236 = vsel %vm347, %v3231, 0
        %3238 = vmatprep.subr.bf16.mxu0 0
        %3239 = vmatpush1.bf16.xpose.msra.mxu0 %v3236
        %3240 = vmatprep.subr.bf16.mxu0 0
        %3241 = vmatpush1.bf16.xpose.msra.mxu0 0
        %3242 = vmatprep.subr.bf16.mxu0 0
        %3243 = vmatpush1.bf16.xpose.msra.mxu0 0
        %3244 = vmatprep.subr.bf16.mxu0 0
        %3245 = vmatpush1.bf16.xpose.msra.mxu0 0
        %3246 = vmatprep.subr.bf16.mxu0 0
        %3247 = vmatpush1.bf16.xpose.msra.mxu0 0
        %3248 = vmatprep.subr.bf16.mxu0 0
        %3249 = vmatpush1.bf16.xpose.msra.mxu0 0
        %3250 = vmatprep.subr.bf16.mxu0 0
        %3251 = vmatpush1.bf16.xpose.msra.mxu0 0
        %3252 = vmatprep.subr.bf16.mxu0 0
        %3253 = vmatpush1.bf16.xpose.msra.mxu0 0
        %3254 = vmatprep.subr.bf16.mxu0 0
        %3255 = vmatpush1.bf16.xpose.msra.mxu0 0
        %3256 = vmatprep.subr.bf16.mxu0 0
        %3257 = vmatpush1.bf16.xpose.msra.mxu0 0
        %3258 = vmatprep.subr.bf16.mxu0 0
        %3259 = vmatpush1.bf16.xpose.msra.mxu0 0
        %3260 = vmatprep.subr.bf16.mxu0 0
        %3261 = vmatpush1.bf16.xpose.msra.mxu0 0
        %3262 = vmatprep.subr.bf16.mxu0 0
        %3263 = vmatpush1.bf16.xpose.msra.mxu0 0
        %3264 = vmatprep.subr.bf16.mxu0 0
        %3265 = vmatpush1.bf16.xpose.msra.mxu0 0
        %3266 = vmatprep.subr.bf16.mxu0 0
        %3267 = vmatpush1.bf16.xpose.msra.mxu0 0
        %3268 = vmatprep.subr.bf16.mxu0 0
        %3269 = vmatpush1.bf16.xpose.msra.mxu0 0
        %3270 = vmatprep.mubr.bf16.mxu0 0
        %3271 = vmatmul.mubr.bf16.gmra.mrb[0].mxu0 %v3233
        %v3272 = vpop.f32.mrb[0].mxu0
        %v3273 = vadd.f32 %v2906, %v3272
        %v3274 = vpop.f32.mrb[0].mxu0
        %v3275 = vpop.f32.mrb[0].mxu0
        %v3276 = vadd.f32 %v2907, %v3275
        %v3277 = vpop.f32.mrb[0].mxu0
        %3278 = vdwg.mxu0
        %3280 = vrot.lane.b32.xlu0 %v981, 96
        %v3281 = vpop.permute.xlu0 %3280
        %3283 = vrot.lane.b32.xlu0 %v997, 96
        %v3284 = vpop.permute.xlu0 %3283
        %v3286 = vsel %vm347, %v3281, 0
        %v3289 = vsel %vm347, %v3284, 0
        %3291 = vmatprep.subr.bf16.mxu0 0
        %3292 = vmatpush1.bf16.xpose.msra.mxu0 %v3289
        %3293 = vmatprep.subr.bf16.mxu0 0
        %3294 = vmatpush1.bf16.xpose.msra.mxu0 0
        %3295 = vmatprep.subr.bf16.mxu0 0
        %3296 = vmatpush1.bf16.xpose.msra.mxu0 0
        %3297 = vmatprep.subr.bf16.mxu0 0
        %3298 = vmatpush1.bf16.xpose.msra.mxu0 0
        %3299 = vmatprep.subr.bf16.mxu0 0
        %3300 = vmatpush1.bf16.xpose.msra.mxu0 0
        %3301 = vmatprep.subr.bf16.mxu0 0
        %3302 = vmatpush1.bf16.xpose.msra.mxu0 0
        %3303 = vmatprep.subr.bf16.mxu0 0
        %3304 = vmatpush1.bf16.xpose.msra.mxu0 0
        %3305 = vmatprep.subr.bf16.mxu0 0
        %3306 = vmatpush1.bf16.xpose.msra.mxu0 0
        %3307 = vmatprep.subr.bf16.mxu0 0
        %3308 = vmatpush1.bf16.xpose.msra.mxu0 0
        %3309 = vmatprep.subr.bf16.mxu0 0
        %3310 = vmatpush1.bf16.xpose.msra.mxu0 0
        %3311 = vmatprep.subr.bf16.mxu0 0
        %3312 = vmatpush1.bf16.xpose.msra.mxu0 0
        %3313 = vmatprep.subr.bf16.mxu0 0
        %3314 = vmatpush1.bf16.xpose.msra.mxu0 0
        %3315 = vmatprep.subr.bf16.mxu0 0
        %3316 = vmatpush1.bf16.xpose.msra.mxu0 0
        %3317 = vmatprep.subr.bf16.mxu0 0
        %3318 = vmatpush1.bf16.xpose.msra.mxu0 0
        %3319 = vmatprep.subr.bf16.mxu0 0
        %3320 = vmatpush1.bf16.xpose.msra.mxu0 0
        %3321 = vmatprep.subr.bf16.mxu0 0
        %3322 = vmatpush1.bf16.xpose.msra.mxu0 0
        %3323 = vmatprep.mubr.bf16.mxu0 0
        %3324 = vmatmul.mubr.bf16.gmra.mrb[0].mxu0 %v3286
        %v3325 = vpop.f32.mrb[0].mxu0
        %v3326 = vadd.f32 %v2906, %v3325
        %v3327 = vpop.f32.mrb[0].mxu0
        %v3328 = vpop.f32.mrb[0].mxu0
        %v3329 = vadd.f32 %v2907, %v3328
        %v3330 = vpop.f32.mrb[0].mxu0
        %3331 = vdwg.mxu0
        %3333 = vrot.lane.b32.xlu0 %v982, 96
        %v3334 = vpop.permute.xlu0 %3333
        %3336 = vrot.lane.b32.xlu0 %v998, 96
        %v3337 = vpop.permute.xlu0 %3336
        %v3339 = vsel %vm347, %v3334, 0
        %v3342 = vsel %vm347, %v3337, 0
        %3344 = vmatprep.subr.bf16.mxu0 0
        %3345 = vmatpush1.bf16.xpose.msra.mxu0 %v3342
        %3346 = vmatprep.subr.bf16.mxu0 0
        %3347 = vmatpush1.bf16.xpose.msra.mxu0 0
        %3348 = vmatprep.subr.bf16.mxu0 0
        %3349 = vmatpush1.bf16.xpose.msra.mxu0 0
        %3350 = vmatprep.subr.bf16.mxu0 0
        %3351 = vmatpush1.bf16.xpose.msra.mxu0 0
        %3352 = vmatprep.subr.bf16.mxu0 0
        %3353 = vmatpush1.bf16.xpose.msra.mxu0 0
        %3354 = vmatprep.subr.bf16.mxu0 0
        %3355 = vmatpush1.bf16.xpose.msra.mxu0 0
        %3356 = vmatprep.subr.bf16.mxu0 0
        %3357 = vmatpush1.bf16.xpose.msra.mxu0 0
        %3358 = vmatprep.subr.bf16.mxu0 0
        %3359 = vmatpush1.bf16.xpose.msra.mxu0 0
        %3360 = vmatprep.subr.bf16.mxu0 0
        %3361 = vmatpush1.bf16.xpose.msra.mxu0 0
        %3362 = vmatprep.subr.bf16.mxu0 0
        %3363 = vmatpush1.bf16.xpose.msra.mxu0 0
        %3364 = vmatprep.subr.bf16.mxu0 0
        %3365 = vmatpush1.bf16.xpose.msra.mxu0 0
        %3366 = vmatprep.subr.bf16.mxu0 0
        %3367 = vmatpush1.bf16.xpose.msra.mxu0 0
        %3368 = vmatprep.subr.bf16.mxu0 0
        %3369 = vmatpush1.bf16.xpose.msra.mxu0 0
        %3370 = vmatprep.subr.bf16.mxu0 0
        %3371 = vmatpush1.bf16.xpose.msra.mxu0 0
        %3372 = vmatprep.subr.bf16.mxu0 0
        %3373 = vmatpush1.bf16.xpose.msra.mxu0 0
        %3374 = vmatprep.subr.bf16.mxu0 0
        %3375 = vmatpush1.bf16.xpose.msra.mxu0 0
        %3376 = vmatprep.mubr.bf16.mxu0 0
        %3377 = vmatmul.mubr.bf16.gmra.mrb[0].mxu0 %v3339
        %v3378 = vpop.f32.mrb[0].mxu0
        %v3379 = vadd.f32 %v2906, %v3378
        %v3380 = vpop.f32.mrb[0].mxu0
        %v3381 = vpop.f32.mrb[0].mxu0
        %v3382 = vadd.f32 %v2907, %v3381
        %v3383 = vpop.f32.mrb[0].mxu0
        %3384 = vdwg.mxu0
        %3386 = vrot.lane.b32.xlu0 %v983, 96
        %v3387 = vpop.permute.xlu0 %3386
        %3389 = vrot.lane.b32.xlu0 %v999, 96
        %v3390 = vpop.permute.xlu0 %3389
        %v3392 = vsel %vm347, %v3387, 0
        %v3395 = vsel %vm347, %v3390, 0
        %3397 = vmatprep.subr.bf16.mxu0 0
        %3398 = vmatpush1.bf16.xpose.msra.mxu0 %v3395
        %3399 = vmatprep.subr.bf16.mxu0 0
        %3400 = vmatpush1.bf16.xpose.msra.mxu0 0
        %3401 = vmatprep.subr.bf16.mxu0 0
        %3402 = vmatpush1.bf16.xpose.msra.mxu0 0
        %3403 = vmatprep.subr.bf16.mxu0 0
        %3404 = vmatpush1.bf16.xpose.msra.mxu0 0
        %3405 = vmatprep.subr.bf16.mxu0 0
        %3406 = vmatpush1.bf16.xpose.msra.mxu0 0
        %3407 = vmatprep.subr.bf16.mxu0 0
        %3408 = vmatpush1.bf16.xpose.msra.mxu0 0
        %3409 = vmatprep.subr.bf16.mxu0 0
        %3410 = vmatpush1.bf16.xpose.msra.mxu0 0
        %3411 = vmatprep.subr.bf16.mxu0 0
        %3412 = vmatpush1.bf16.xpose.msra.mxu0 0
        %3413 = vmatprep.subr.bf16.mxu0 0
        %3414 = vmatpush1.bf16.xpose.msra.mxu0 0
        %3415 = vmatprep.subr.bf16.mxu0 0
        %3416 = vmatpush1.bf16.xpose.msra.mxu0 0
        %3417 = vmatprep.subr.bf16.mxu0 0
        %3418 = vmatpush1.bf16.xpose.msra.mxu0 0
        %3419 = vmatprep.subr.bf16.mxu0 0
        %3420 = vmatpush1.bf16.xpose.msra.mxu0 0
        %3421 = vmatprep.subr.bf16.mxu0 0
        %3422 = vmatpush1.bf16.xpose.msra.mxu0 0
        %3423 = vmatprep.subr.bf16.mxu0 0
        %3424 = vmatpush1.bf16.xpose.msra.mxu0 0
        %3425 = vmatprep.subr.bf16.mxu0 0
        %3426 = vmatpush1.bf16.xpose.msra.mxu0 0
        %3427 = vmatprep.subr.bf16.mxu0 0
        %3428 = vmatpush1.bf16.xpose.msra.mxu0 0
        %3429 = vmatprep.mubr.bf16.mxu0 0
        %3430 = vmatmul.mubr.bf16.gmra.mrb[0].mxu0 %v3392
        %v3431 = vpop.f32.mrb[0].mxu0
        %v3432 = vadd.f32 %v2906, %v3431
        %v3433 = vpop.f32.mrb[0].mxu0
        %v3434 = vpop.f32.mrb[0].mxu0
        %v3435 = vadd.f32 %v2907, %v3434
        %v3436 = vpop.f32.mrb[0].mxu0
        %3437 = vdwg.mxu0
        %3439 = vrot.lane.b32.xlu0 %v984, 96
        %v3440 = vpop.permute.xlu0 %3439
        %3442 = vrot.lane.b32.xlu0 %v1000, 96
        %v3443 = vpop.permute.xlu0 %3442
        %v3445 = vsel %vm347, %v3440, 0
        %v3448 = vsel %vm347, %v3443, 0
        %3450 = vmatprep.subr.bf16.mxu0 0
        %3451 = vmatpush1.bf16.xpose.msra.mxu0 %v3448
        %3452 = vmatprep.subr.bf16.mxu0 0
        %3453 = vmatpush1.bf16.xpose.msra.mxu0 0
        %3454 = vmatprep.subr.bf16.mxu0 0
        %3455 = vmatpush1.bf16.xpose.msra.mxu0 0
        %3456 = vmatprep.subr.bf16.mxu0 0
        %3457 = vmatpush1.bf16.xpose.msra.mxu0 0
        %3458 = vmatprep.subr.bf16.mxu0 0
        %3459 = vmatpush1.bf16.xpose.msra.mxu0 0
        %3460 = vmatprep.subr.bf16.mxu0 0
        %3461 = vmatpush1.bf16.xpose.msra.mxu0 0
        %3462 = vmatprep.subr.bf16.mxu0 0
        %3463 = vmatpush1.bf16.xpose.msra.mxu0 0
        %3464 = vmatprep.subr.bf16.mxu0 0
        %3465 = vmatpush1.bf16.xpose.msra.mxu0 0
        %3466 = vmatprep.subr.bf16.mxu0 0
        %3467 = vmatpush1.bf16.xpose.msra.mxu0 0
        %3468 = vmatprep.subr.bf16.mxu0 0
        %3469 = vmatpush1.bf16.xpose.msra.mxu0 0
        %3470 = vmatprep.subr.bf16.mxu0 0
        %3471 = vmatpush1.bf16.xpose.msra.mxu0 0
        %3472 = vmatprep.subr.bf16.mxu0 0
        %3473 = vmatpush1.bf16.xpose.msra.mxu0 0
        %3474 = vmatprep.subr.bf16.mxu0 0
        %3475 = vmatpush1.bf16.xpose.msra.mxu0 0
        %3476 = vmatprep.subr.bf16.mxu0 0
        %3477 = vmatpush1.bf16.xpose.msra.mxu0 0
        %3478 = vmatprep.subr.bf16.mxu0 0
        %3479 = vmatpush1.bf16.xpose.msra.mxu0 0
        %3480 = vmatprep.subr.bf16.mxu0 0
        %3481 = vmatpush1.bf16.xpose.msra.mxu0 0
        %3482 = vmatprep.mubr.bf16.mxu0 0
        %3483 = vmatmul.mubr.bf16.gmra.mrb[0].mxu0 %v3445
        %v3484 = vpop.f32.mrb[0].mxu0
        %v3485 = vadd.f32 %v2906, %v3484
        %v3486 = vpop.f32.mrb[0].mxu0
        %v3487 = vpop.f32.mrb[0].mxu0
        %v3488 = vadd.f32 %v2907, %v3487
        %v3489 = vpop.f32.mrb[0].mxu0
        %3490 = vdwg.mxu0
        %3492 = vrot.lane.b32.xlu0 %v985, 96
        %v3493 = vpop.permute.xlu0 %3492
        %3495 = vrot.lane.b32.xlu0 %v1001, 96
        %v3496 = vpop.permute.xlu0 %3495
        %v3498 = vsel %vm347, %v3493, 0
        %v3501 = vsel %vm347, %v3496, 0
        %3503 = vmatprep.subr.bf16.mxu0 0
        %3504 = vmatpush1.bf16.xpose.msra.mxu0 %v3501
        %3505 = vmatprep.subr.bf16.mxu0 0
        %3506 = vmatpush1.bf16.xpose.msra.mxu0 0
        %3507 = vmatprep.subr.bf16.mxu0 0
        %3508 = vmatpush1.bf16.xpose.msra.mxu0 0
        %3509 = vmatprep.subr.bf16.mxu0 0
        %3510 = vmatpush1.bf16.xpose.msra.mxu0 0
        %3511 = vmatprep.subr.bf16.mxu0 0
        %3512 = vmatpush1.bf16.xpose.msra.mxu0 0
        %3513 = vmatprep.subr.bf16.mxu0 0
        %3514 = vmatpush1.bf16.xpose.msra.mxu0 0
        %3515 = vmatprep.subr.bf16.mxu0 0
        %3516 = vmatpush1.bf16.xpose.msra.mxu0 0
        %3517 = vmatprep.subr.bf16.mxu0 0
        %3518 = vmatpush1.bf16.xpose.msra.mxu0 0
        %3519 = vmatprep.subr.bf16.mxu0 0
        %3520 = vmatpush1.bf16.xpose.msra.mxu0 0
        %3521 = vmatprep.subr.bf16.mxu0 0
        %3522 = vmatpush1.bf16.xpose.msra.mxu0 0
        %3523 = vmatprep.subr.bf16.mxu0 0
        %3524 = vmatpush1.bf16.xpose.msra.mxu0 0
        %3525 = vmatprep.subr.bf16.mxu0 0
        %3526 = vmatpush1.bf16.xpose.msra.mxu0 0
        %3527 = vmatprep.subr.bf16.mxu0 0
        %3528 = vmatpush1.bf16.xpose.msra.mxu0 0
        %3529 = vmatprep.subr.bf16.mxu0 0
        %3530 = vmatpush1.bf16.xpose.msra.mxu0 0
        %3531 = vmatprep.subr.bf16.mxu0 0
        %3532 = vmatpush1.bf16.xpose.msra.mxu0 0
        %3533 = vmatprep.subr.bf16.mxu0 0
        %3534 = vmatpush1.bf16.xpose.msra.mxu0 0
        %3535 = vmatprep.mubr.bf16.mxu0 0
        %3536 = vmatmul.mubr.bf16.gmra.mrb[0].mxu0 %v3498
        %v3537 = vpop.f32.mrb[0].mxu0
        %v3538 = vadd.f32 %v2906, %v3537
        %v3539 = vpop.f32.mrb[0].mxu0
        %v3540 = vpop.f32.mrb[0].mxu0
        %v3541 = vadd.f32 %v2907, %v3540
        %v3542 = vpop.f32.mrb[0].mxu0
        %3543 = vdwg.mxu0
        %3545 = vrot.lane.b32.xlu0 %v986, 96
        %v3546 = vpop.permute.xlu0 %3545
        %3548 = vrot.lane.b32.xlu0 %v1002, 96
        %v3549 = vpop.permute.xlu0 %3548
        %v3551 = vsel %vm347, %v3546, 0
        %v3554 = vsel %vm347, %v3549, 0
        %3556 = vmatprep.subr.bf16.mxu0 0
        %3557 = vmatpush1.bf16.xpose.msra.mxu0 %v3554
        %3558 = vmatprep.subr.bf16.mxu0 0
        %3559 = vmatpush1.bf16.xpose.msra.mxu0 0
        %3560 = vmatprep.subr.bf16.mxu0 0
        %3561 = vmatpush1.bf16.xpose.msra.mxu0 0
        %3562 = vmatprep.subr.bf16.mxu0 0
        %3563 = vmatpush1.bf16.xpose.msra.mxu0 0
        %3564 = vmatprep.subr.bf16.mxu0 0
        %3565 = vmatpush1.bf16.xpose.msra.mxu0 0
        %3566 = vmatprep.subr.bf16.mxu0 0
        %3567 = vmatpush1.bf16.xpose.msra.mxu0 0
        %3568 = vmatprep.subr.bf16.mxu0 0
        %3569 = vmatpush1.bf16.xpose.msra.mxu0 0
        %3570 = vmatprep.subr.bf16.mxu0 0
        %3571 = vmatpush1.bf16.xpose.msra.mxu0 0
        %3572 = vmatprep.subr.bf16.mxu0 0
        %3573 = vmatpush1.bf16.xpose.msra.mxu0 0
        %3574 = vmatprep.subr.bf16.mxu0 0
        %3575 = vmatpush1.bf16.xpose.msra.mxu0 0
        %3576 = vmatprep.subr.bf16.mxu0 0
        %3577 = vmatpush1.bf16.xpose.msra.mxu0 0
        %3578 = vmatprep.subr.bf16.mxu0 0
        %3579 = vmatpush1.bf16.xpose.msra.mxu0 0
        %3580 = vmatprep.subr.bf16.mxu0 0
        %3581 = vmatpush1.bf16.xpose.msra.mxu0 0
        %3582 = vmatprep.subr.bf16.mxu0 0
        %3583 = vmatpush1.bf16.xpose.msra.mxu0 0
        %3584 = vmatprep.subr.bf16.mxu0 0
        %3585 = vmatpush1.bf16.xpose.msra.mxu0 0
        %3586 = vmatprep.subr.bf16.mxu0 0
        %3587 = vmatpush1.bf16.xpose.msra.mxu0 0
        %3588 = vmatprep.mubr.bf16.mxu0 0
        %3589 = vmatmul.mubr.bf16.gmra.mrb[0].mxu0 %v3551
        %v3590 = vpop.f32.mrb[0].mxu0
        %v3591 = vadd.f32 %v2906, %v3590
        %v3592 = vpop.f32.mrb[0].mxu0
        %v3593 = vpop.f32.mrb[0].mxu0
        %v3594 = vadd.f32 %v2907, %v3593
        %v3595 = vpop.f32.mrb[0].mxu0
        %3596 = vdwg.mxu0
        %3598 = vrot.lane.b32.xlu0 %v987, 96
        %v3599 = vpop.permute.xlu0 %3598
        %3601 = vrot.lane.b32.xlu0 %v1003, 96
        %v3602 = vpop.permute.xlu0 %3601
        %v3604 = vsel %vm347, %v3599, 0
        %v3607 = vsel %vm347, %v3602, 0
        %3609 = vmatprep.subr.bf16.mxu0 0
        %3610 = vmatpush1.bf16.xpose.msra.mxu0 %v3607
        %3611 = vmatprep.subr.bf16.mxu0 0
        %3612 = vmatpush1.bf16.xpose.msra.mxu0 0
        %3613 = vmatprep.subr.bf16.mxu0 0
        %3614 = vmatpush1.bf16.xpose.msra.mxu0 0
        %3615 = vmatprep.subr.bf16.mxu0 0
        %3616 = vmatpush1.bf16.xpose.msra.mxu0 0
        %3617 = vmatprep.subr.bf16.mxu0 0
        %3618 = vmatpush1.bf16.xpose.msra.mxu0 0
        %3619 = vmatprep.subr.bf16.mxu0 0
        %3620 = vmatpush1.bf16.xpose.msra.mxu0 0
        %3621 = vmatprep.subr.bf16.mxu0 0
        %3622 = vmatpush1.bf16.xpose.msra.mxu0 0
        %3623 = vmatprep.subr.bf16.mxu0 0
        %3624 = vmatpush1.bf16.xpose.msra.mxu0 0
        %3625 = vmatprep.subr.bf16.mxu0 0
        %3626 = vmatpush1.bf16.xpose.msra.mxu0 0
        %3627 = vmatprep.subr.bf16.mxu0 0
        %3628 = vmatpush1.bf16.xpose.msra.mxu0 0
        %3629 = vmatprep.subr.bf16.mxu0 0
        %3630 = vmatpush1.bf16.xpose.msra.mxu0 0
        %3631 = vmatprep.subr.bf16.mxu0 0
        %3632 = vmatpush1.bf16.xpose.msra.mxu0 0
        %3633 = vmatprep.subr.bf16.mxu0 0
        %3634 = vmatpush1.bf16.xpose.msra.mxu0 0
        %3635 = vmatprep.subr.bf16.mxu0 0
        %3636 = vmatpush1.bf16.xpose.msra.mxu0 0
        %3637 = vmatprep.subr.bf16.mxu0 0
        %3638 = vmatpush1.bf16.xpose.msra.mxu0 0
        %3639 = vmatprep.subr.bf16.mxu0 0
        %3640 = vmatpush1.bf16.xpose.msra.mxu0 0
        %3641 = vmatprep.mubr.bf16.mxu0 0
        %3642 = vmatmul.mubr.bf16.gmra.mrb[0].mxu0 %v3604
        %v3643 = vpop.f32.mrb[0].mxu0
        %v3644 = vadd.f32 %v2906, %v3643
        %v3645 = vpop.f32.mrb[0].mxu0
        %v3646 = vpop.f32.mrb[0].mxu0
        %v3647 = vadd.f32 %v2907, %v3646
        %v3648 = vpop.f32.mrb[0].mxu0
        %3649 = vdwg.mxu0
        %3651 = vrot.lane.b32.xlu0 %v988, 96
        %v3652 = vpop.permute.xlu0 %3651
        %3654 = vrot.lane.b32.xlu0 %v1004, 96
        %v3655 = vpop.permute.xlu0 %3654
        %v3657 = vsel %vm347, %v3652, 0
        %v3660 = vsel %vm347, %v3655, 0
        %3662 = vmatprep.subr.bf16.mxu0 0
        %3663 = vmatpush1.bf16.xpose.msra.mxu0 %v3660
        %3664 = vmatprep.subr.bf16.mxu0 0
        %3665 = vmatpush1.bf16.xpose.msra.mxu0 0
        %3666 = vmatprep.subr.bf16.mxu0 0
        %3667 = vmatpush1.bf16.xpose.msra.mxu0 0
        %3668 = vmatprep.subr.bf16.mxu0 0
        %3669 = vmatpush1.bf16.xpose.msra.mxu0 0
        %3670 = vmatprep.subr.bf16.mxu0 0
        %3671 = vmatpush1.bf16.xpose.msra.mxu0 0
        %3672 = vmatprep.subr.bf16.mxu0 0
        %3673 = vmatpush1.bf16.xpose.msra.mxu0 0
        %3674 = vmatprep.subr.bf16.mxu0 0
        %3675 = vmatpush1.bf16.xpose.msra.mxu0 0
        %3676 = vmatprep.subr.bf16.mxu0 0
        %3677 = vmatpush1.bf16.xpose.msra.mxu0 0
        %3678 = vmatprep.subr.bf16.mxu0 0
        %3679 = vmatpush1.bf16.xpose.msra.mxu0 0
        %3680 = vmatprep.subr.bf16.mxu0 0
        %3681 = vmatpush1.bf16.xpose.msra.mxu0 0
        %3682 = vmatprep.subr.bf16.mxu0 0
        %3683 = vmatpush1.bf16.xpose.msra.mxu0 0
        %3684 = vmatprep.subr.bf16.mxu0 0
        %3685 = vmatpush1.bf16.xpose.msra.mxu0 0
        %3686 = vmatprep.subr.bf16.mxu0 0
        %3687 = vmatpush1.bf16.xpose.msra.mxu0 0
        %3688 = vmatprep.subr.bf16.mxu0 0
        %3689 = vmatpush1.bf16.xpose.msra.mxu0 0
        %3690 = vmatprep.subr.bf16.mxu0 0
        %3691 = vmatpush1.bf16.xpose.msra.mxu0 0
        %3692 = vmatprep.subr.bf16.mxu0 0
        %3693 = vmatpush1.bf16.xpose.msra.mxu0 0
        %3694 = vmatprep.mubr.bf16.mxu0 0
        %3695 = vmatmul.mubr.bf16.gmra.mrb[0].mxu0 %v3657
        %v3696 = vpop.f32.mrb[0].mxu0
        %v3697 = vadd.f32 %v2906, %v3696
        %v3698 = vpop.f32.mrb[0].mxu0
        %v3699 = vpop.f32.mrb[0].mxu0
        %v3700 = vadd.f32 %v2907, %v3699
        %v3701 = vpop.f32.mrb[0].mxu0
        %3702 = vdwg.mxu0
        %3704 = vrot.lane.b32.xlu0 %v989, 96
        %v3705 = vpop.permute.xlu0 %3704
        %3707 = vrot.lane.b32.xlu0 %v1005, 96
        %v3708 = vpop.permute.xlu0 %3707
        %v3710 = vsel %vm347, %v3705, 0
        %v3713 = vsel %vm347, %v3708, 0
        %3715 = vmatprep.subr.bf16.mxu0 0
        %3716 = vmatpush1.bf16.xpose.msra.mxu0 %v3713
        %3717 = vmatprep.subr.bf16.mxu0 0
        %3718 = vmatpush1.bf16.xpose.msra.mxu0 0
        %3719 = vmatprep.subr.bf16.mxu0 0
        %3720 = vmatpush1.bf16.xpose.msra.mxu0 0
        %3721 = vmatprep.subr.bf16.mxu0 0
        %3722 = vmatpush1.bf16.xpose.msra.mxu0 0
        %3723 = vmatprep.subr.bf16.mxu0 0
        %3724 = vmatpush1.bf16.xpose.msra.mxu0 0
        %3725 = vmatprep.subr.bf16.mxu0 0
        %3726 = vmatpush1.bf16.xpose.msra.mxu0 0
        %3727 = vmatprep.subr.bf16.mxu0 0
        %3728 = vmatpush1.bf16.xpose.msra.mxu0 0
        %3729 = vmatprep.subr.bf16.mxu0 0
        %3730 = vmatpush1.bf16.xpose.msra.mxu0 0
        %3731 = vmatprep.subr.bf16.mxu0 0
        %3732 = vmatpush1.bf16.xpose.msra.mxu0 0
        %3733 = vmatprep.subr.bf16.mxu0 0
        %3734 = vmatpush1.bf16.xpose.msra.mxu0 0
        %3735 = vmatprep.subr.bf16.mxu0 0
        %3736 = vmatpush1.bf16.xpose.msra.mxu0 0
        %3737 = vmatprep.subr.bf16.mxu0 0
        %3738 = vmatpush1.bf16.xpose.msra.mxu0 0
        %3739 = vmatprep.subr.bf16.mxu0 0
        %3740 = vmatpush1.bf16.xpose.msra.mxu0 0
        %3741 = vmatprep.subr.bf16.mxu0 0
        %3742 = vmatpush1.bf16.xpose.msra.mxu0 0
        %3743 = vmatprep.subr.bf16.mxu0 0
        %3744 = vmatpush1.bf16.xpose.msra.mxu0 0
        %3745 = vmatprep.subr.bf16.mxu0 0
        %3746 = vmatpush1.bf16.xpose.msra.mxu0 0
        %3747 = vmatprep.mubr.bf16.mxu0 0
        %3748 = vmatmul.mubr.bf16.gmra.mrb[0].mxu0 %v3710
        %v3749 = vpop.f32.mrb[0].mxu0
        %v3750 = vadd.f32 %v2906, %v3749
        %v3751 = vpop.f32.mrb[0].mxu0
        %v3752 = vpop.f32.mrb[0].mxu0
        %v3753 = vadd.f32 %v2907, %v3752
        %v3754 = vpop.f32.mrb[0].mxu0
        %3755 = vdwg.mxu0
        %v3756 = vsel %vm1778, %v2955, -inf
        %3757 = vmax.xlane.f32.xlu0 %v3756
        %v3758 = vpop.xlane.xlu0 %3757
        %v3759 = vsel %vm1778, %v2958, -inf
        %3760 = vmax.xlane.f32.xlu0 %v3759
        %v3761 = vpop.xlane.xlu0 %3760
        %v3762 = vsel %vm1778, %v3008, -inf
        %3763 = vmax.xlane.f32.xlu0 %v3762
        %v3764 = vpop.xlane.xlu0 %3763
        %v3765 = vsel %vm1778, %v3011, -inf
        %3766 = vmax.xlane.f32.xlu0 %v3765
        %v3767 = vpop.xlane.xlu0 %3766
        %v3768 = vsel %vm1778, %v3061, -inf
        %3769 = vmax.xlane.f32.xlu0 %v3768
        %v3770 = vpop.xlane.xlu0 %3769
        %v3771 = vsel %vm1778, %v3064, -inf
        %3772 = vmax.xlane.f32.xlu0 %v3771
        %v3773 = vpop.xlane.xlu0 %3772
        %v3774 = vsel %vm1778, %v3114, -inf
        %3775 = vmax.xlane.f32.xlu0 %v3774
        %v3776 = vpop.xlane.xlu0 %3775
        %v3777 = vsel %vm1778, %v3117, -inf
        %3778 = vmax.xlane.f32.xlu0 %v3777
        %v3779 = vpop.xlane.xlu0 %3778
        %v3780 = vsel %vm1778, %v3167, -inf
        %3781 = vmax.xlane.f32.xlu0 %v3780
        %v3782 = vpop.xlane.xlu0 %3781
        %v3783 = vsel %vm1778, %v3170, -inf
        %3784 = vmax.xlane.f32.xlu0 %v3783
        %v3785 = vpop.xlane.xlu0 %3784
        %v3786 = vsel %vm1778, %v3220, -inf
        %3787 = vmax.xlane.f32.xlu0 %v3786
        %v3788 = vpop.xlane.xlu0 %3787
        %v3789 = vsel %vm1778, %v3223, -inf
        %3790 = vmax.xlane.f32.xlu0 %v3789
        %v3791 = vpop.xlane.xlu0 %3790
        %v3792 = vsel %vm1778, %v3273, -inf
        %3793 = vmax.xlane.f32.xlu0 %v3792
        %v3794 = vpop.xlane.xlu0 %3793
        %v3795 = vsel %vm1778, %v3276, -inf
        %3796 = vmax.xlane.f32.xlu0 %v3795
        %v3797 = vpop.xlane.xlu0 %3796
        %v3798 = vsel %vm1778, %v3326, -inf
        %3799 = vmax.xlane.f32.xlu0 %v3798
        %v3800 = vpop.xlane.xlu0 %3799
        %v3801 = vsel %vm1778, %v3329, -inf
        %3802 = vmax.xlane.f32.xlu0 %v3801
        %v3803 = vpop.xlane.xlu0 %3802
        %v3804 = vsel %vm1778, %v3379, -inf
        %3805 = vmax.xlane.f32.xlu0 %v3804
        %v3806 = vpop.xlane.xlu0 %3805
        %v3807 = vsel %vm1778, %v3382, -inf
        %3808 = vmax.xlane.f32.xlu0 %v3807
        %v3809 = vpop.xlane.xlu0 %3808
        %v3810 = vsel %vm1778, %v3432, -inf
        %3811 = vmax.xlane.f32.xlu0 %v3810
        %v3812 = vpop.xlane.xlu0 %3811
        %v3813 = vsel %vm1778, %v3435, -inf
        %3814 = vmax.xlane.f32.xlu0 %v3813
        %v3815 = vpop.xlane.xlu0 %3814
        %v3816 = vsel %vm1778, %v3485, -inf
        %3817 = vmax.xlane.f32.xlu0 %v3816
        %v3818 = vpop.xlane.xlu0 %3817
        %v3819 = vsel %vm1778, %v3488, -inf
        %3820 = vmax.xlane.f32.xlu0 %v3819
        %v3821 = vpop.xlane.xlu0 %3820
        %v3822 = vsel %vm1778, %v3538, -inf
        %3823 = vmax.xlane.f32.xlu0 %v3822
        %v3824 = vpop.xlane.xlu0 %3823
        %v3825 = vsel %vm1778, %v3541, -inf
        %3826 = vmax.xlane.f32.xlu0 %v3825
        %v3827 = vpop.xlane.xlu0 %3826
        %v3828 = vsel %vm1778, %v3591, -inf
        %3829 = vmax.xlane.f32.xlu0 %v3828
        %v3830 = vpop.xlane.xlu0 %3829
        %v3831 = vsel %vm1778, %v3594, -inf
        %3832 = vmax.xlane.f32.xlu0 %v3831
        %v3833 = vpop.xlane.xlu0 %3832
        %v3834 = vsel %vm1778, %v3644, -inf
        %3835 = vmax.xlane.f32.xlu0 %v3834
        %v3836 = vpop.xlane.xlu0 %3835
        %v3837 = vsel %vm1778, %v3647, -inf
        %3838 = vmax.xlane.f32.xlu0 %v3837
        %v3839 = vpop.xlane.xlu0 %3838
        %v3840 = vsel %vm1778, %v3697, -inf
        %3841 = vmax.xlane.f32.xlu0 %v3840
        %v3842 = vpop.xlane.xlu0 %3841
        %v3843 = vsel %vm1778, %v3700, -inf
        %3844 = vmax.xlane.f32.xlu0 %v3843
        %v3845 = vpop.xlane.xlu0 %3844
        %v3846 = vsel %vm1778, %v3750, -inf
        %3847 = vmax.xlane.f32.xlu0 %v3846
        %v3848 = vpop.xlane.xlu0 %3847
        %v3849 = vsel %vm1778, %v3753, -inf
        %3850 = vmax.xlane.f32.xlu0 %v3849
        %v3851 = vpop.xlane.xlu0 %3850
        %v3852 = vsub.f32 %v2955, %v3758
        %v3853 = vsub.f32 %v2958, %v3761
        %v3854 = vsub.f32 %v3008, %v3764
        %v3855 = vsub.f32 %v3011, %v3767
        %v3856 = vsub.f32 %v3061, %v3770
        %v3857 = vsub.f32 %v3064, %v3773
        %v3858 = vsub.f32 %v3114, %v3776
        %v3859 = vsub.f32 %v3117, %v3779
        %v3860 = vsub.f32 %v3167, %v3782
        %v3861 = vsub.f32 %v3170, %v3785
        %v3862 = vsub.f32 %v3220, %v3788
        %v3863 = vsub.f32 %v3223, %v3791
        %v3864 = vsub.f32 %v3273, %v3794
        %v3865 = vsub.f32 %v3276, %v3797
        %v3866 = vsub.f32 %v3326, %v3800
        %v3867 = vsub.f32 %v3329, %v3803
        %v3868 = vsub.f32 %v3379, %v3806
        %v3869 = vsub.f32 %v3382, %v3809
        %v3870 = vsub.f32 %v3432, %v3812
        %v3871 = vsub.f32 %v3435, %v3815
        %v3872 = vsub.f32 %v3485, %v3818
        %v3873 = vsub.f32 %v3488, %v3821
        %v3874 = vsub.f32 %v3538, %v3824
        %v3875 = vsub.f32 %v3541, %v3827
        %v3876 = vsub.f32 %v3591, %v3830
        %v3877 = vsub.f32 %v3594, %v3833
        %v3878 = vsub.f32 %v3644, %v3836
        %v3879 = vsub.f32 %v3647, %v3839
        %v3880 = vsub.f32 %v3697, %v3842
        %v3881 = vsub.f32 %v3700, %v3845
        %v3882 = vsub.f32 %v3750, %v3848
        %v3883 = vsub.f32 %v3753, %v3851
        %v3884 = vmul.f32 %v3852, 1.442695
        %v3885 = vpow.pop %v3884
        %v3886 = vmul.f32 %v3853, 1.442695
        %v3887 = vpow.pop %v3886
        %v3888 = vmul.f32 %v3854, 1.442695
        %v3889 = vpow.pop %v3888
        %v3890 = vmul.f32 %v3855, 1.442695
        %v3891 = vpow.pop %v3890
        %v3892 = vmul.f32 %v3856, 1.442695
        %v3893 = vpow.pop %v3892
        %v3894 = vmul.f32 %v3857, 1.442695
        %v3895 = vpow.pop %v3894
        %v3896 = vmul.f32 %v3858, 1.442695
        %v3897 = vpow.pop %v3896
        %v3898 = vmul.f32 %v3859, 1.442695
        %v3899 = vpow.pop %v3898
        %v3900 = vmul.f32 %v3860, 1.442695
        %v3901 = vpow.pop %v3900
        %v3902 = vmul.f32 %v3861, 1.442695
        %v3903 = vpow.pop %v3902
        %v3904 = vmul.f32 %v3862, 1.442695
        %v3905 = vpow.pop %v3904
        %v3906 = vmul.f32 %v3863, 1.442695
        %v3907 = vpow.pop %v3906
        %v3908 = vmul.f32 %v3864, 1.442695
        %v3909 = vpow.pop %v3908
        %v3910 = vmul.f32 %v3865, 1.442695
        %v3911 = vpow.pop %v3910
        %v3912 = vmul.f32 %v3866, 1.442695
        %v3913 = vpow.pop %v3912
        %v3914 = vmul.f32 %v3867, 1.442695
        %v3915 = vpow.pop %v3914
        %v3916 = vmul.f32 %v3868, 1.442695
        %v3917 = vpow.pop %v3916
        %v3918 = vmul.f32 %v3869, 1.442695
        %v3919 = vpow.pop %v3918
        %v3920 = vmul.f32 %v3870, 1.442695
        %v3921 = vpow.pop %v3920
        %v3922 = vmul.f32 %v3871, 1.442695
        %v3923 = vpow.pop %v3922
        %v3924 = vmul.f32 %v3872, 1.442695
        %v3925 = vpow.pop %v3924
        %v3926 = vmul.f32 %v3873, 1.442695
        %v3927 = vpow.pop %v3926
        %v3928 = vmul.f32 %v3874, 1.442695
        %v3929 = vpow.pop %v3928
        %v3930 = vmul.f32 %v3875, 1.442695
        %v3931 = vpow.pop %v3930
        %v3932 = vmul.f32 %v3876, 1.442695
        %v3933 = vpow.pop %v3932
        %v3934 = vmul.f32 %v3877, 1.442695
        %v3935 = vpow.pop %v3934
        %v3936 = vmul.f32 %v3878, 1.442695
        %v3937 = vpow.pop %v3936
        %v3938 = vmul.f32 %v3879, 1.442695
        %v3939 = vpow.pop %v3938
        %v3940 = vmul.f32 %v3880, 1.442695
        %v3941 = vpow.pop %v3940
        %v3942 = vmul.f32 %v3881, 1.442695
        %v3943 = vpow.pop %v3942
        %v3944 = vmul.f32 %v3882, 1.442695
        %v3945 = vpow.pop %v3944
        %v3946 = vmul.f32 %v3883, 1.442695
        %v3947 = vpow.pop %v3946
        %v3948 = vsel %vm1778, %v3885, 0.0
        %3949 = vadd.xlane.f32.xlu0 %v3948
        %v3950 = vpop.xlane.xlu0 %3949
        %v3951 = vsel %vm1778, %v3887, 0.0
        %3952 = vadd.xlane.f32.xlu0 %v3951
        %v3953 = vpop.xlane.xlu0 %3952
        %v3954 = vsel %vm1778, %v3889, 0.0
        %3955 = vadd.xlane.f32.xlu0 %v3954
        %v3956 = vpop.xlane.xlu0 %3955
        %v3957 = vsel %vm1778, %v3891, 0.0
        %3958 = vadd.xlane.f32.xlu0 %v3957
        %v3959 = vpop.xlane.xlu0 %3958
        %v3960 = vsel %vm1778, %v3893, 0.0
        %3961 = vadd.xlane.f32.xlu0 %v3960
        %v3962 = vpop.xlane.xlu0 %3961
        %v3963 = vsel %vm1778, %v3895, 0.0
        %3964 = vadd.xlane.f32.xlu0 %v3963
        %v3965 = vpop.xlane.xlu0 %3964
        %v3966 = vsel %vm1778, %v3897, 0.0
        %3967 = vadd.xlane.f32.xlu0 %v3966
        %v3968 = vpop.xlane.xlu0 %3967
        %v3969 = vsel %vm1778, %v3899, 0.0
        %3970 = vadd.xlane.f32.xlu0 %v3969
        %v3971 = vpop.xlane.xlu0 %3970
        %v3972 = vsel %vm1778, %v3901, 0.0
        %3973 = vadd.xlane.f32.xlu0 %v3972
        %v3974 = vpop.xlane.xlu0 %3973
        %v3975 = vsel %vm1778, %v3903, 0.0
        %3976 = vadd.xlane.f32.xlu0 %v3975
        %v3977 = vpop.xlane.xlu0 %3976
        %v3978 = vsel %vm1778, %v3905, 0.0
        %3979 = vadd.xlane.f32.xlu0 %v3978
        %v3980 = vpop.xlane.xlu0 %3979
        %v3981 = vsel %vm1778, %v3907, 0.0
        %3982 = vadd.xlane.f32.xlu0 %v3981
        %v3983 = vpop.xlane.xlu0 %3982
        %v3984 = vsel %vm1778, %v3909, 0.0
        %3985 = vadd.xlane.f32.xlu0 %v3984
        %v3986 = vpop.xlane.xlu0 %3985
        %v3987 = vsel %vm1778, %v3911, 0.0
        %3988 = vadd.xlane.f32.xlu0 %v3987
        %v3989 = vpop.xlane.xlu0 %3988
        %v3990 = vsel %vm1778, %v3913, 0.0
        %3991 = vadd.xlane.f32.xlu0 %v3990
        %v3992 = vpop.xlane.xlu0 %3991
        %v3993 = vsel %vm1778, %v3915, 0.0
        %3994 = vadd.xlane.f32.xlu0 %v3993
        %v3995 = vpop.xlane.xlu0 %3994
        %v3996 = vsel %vm1778, %v3917, 0.0
        %3997 = vadd.xlane.f32.xlu0 %v3996
        %v3998 = vpop.xlane.xlu0 %3997
        %v3999 = vsel %vm1778, %v3919, 0.0
        %4000 = vadd.xlane.f32.xlu0 %v3999
        %v4001 = vpop.xlane.xlu0 %4000
        %v4002 = vsel %vm1778, %v3921, 0.0
        %4003 = vadd.xlane.f32.xlu0 %v4002
        %v4004 = vpop.xlane.xlu0 %4003
        %v4005 = vsel %vm1778, %v3923, 0.0
        %4006 = vadd.xlane.f32.xlu0 %v4005
        %v4007 = vpop.xlane.xlu0 %4006
        %v4008 = vsel %vm1778, %v3925, 0.0
        %4009 = vadd.xlane.f32.xlu0 %v4008
        %v4010 = vpop.xlane.xlu0 %4009
        %v4011 = vsel %vm1778, %v3927, 0.0
        %4012 = vadd.xlane.f32.xlu0 %v4011
        %v4013 = vpop.xlane.xlu0 %4012
        %v4014 = vsel %vm1778, %v3929, 0.0
        %4015 = vadd.xlane.f32.xlu0 %v4014
        %v4016 = vpop.xlane.xlu0 %4015
        %v4017 = vsel %vm1778, %v3931, 0.0
        %4018 = vadd.xlane.f32.xlu0 %v4017
        %v4019 = vpop.xlane.xlu0 %4018
        %v4020 = vsel %vm1778, %v3933, 0.0
        %4021 = vadd.xlane.f32.xlu0 %v4020
        %v4022 = vpop.xlane.xlu0 %4021
        %v4023 = vsel %vm1778, %v3935, 0.0
        %4024 = vadd.xlane.f32.xlu0 %v4023
        %v4025 = vpop.xlane.xlu0 %4024
        %v4026 = vsel %vm1778, %v3937, 0.0
        %4027 = vadd.xlane.f32.xlu0 %v4026
        %v4028 = vpop.xlane.xlu0 %4027
        %v4029 = vsel %vm1778, %v3939, 0.0
        %4030 = vadd.xlane.f32.xlu0 %v4029
        %v4031 = vpop.xlane.xlu0 %4030
        %v4032 = vsel %vm1778, %v3941, 0.0
        %4033 = vadd.xlane.f32.xlu0 %v4032
        %v4034 = vpop.xlane.xlu0 %4033
        %v4035 = vsel %vm1778, %v3943, 0.0
        %4036 = vadd.xlane.f32.xlu0 %v4035
        %v4037 = vpop.xlane.xlu0 %4036
        %v4038 = vsel %vm1778, %v3945, 0.0
        %4039 = vadd.xlane.f32.xlu0 %v4038
        %v4040 = vpop.xlane.xlu0 %4039
        %v4041 = vsel %vm1778, %v3947, 0.0
        %4042 = vadd.xlane.f32.xlu0 %v4041
        %v4043 = vpop.xlane.xlu0 %4042
        %v4044 = vpack.c.bf16 %v3887, %v3885
        %v4045 = vpack.c.bf16 %v3891, %v3889
        %v4046 = vpack.c.bf16 %v3895, %v3893
        %v4047 = vpack.c.bf16 %v3899, %v3897
        %v4048 = vpack.c.bf16 %v3903, %v3901
        %v4049 = vpack.c.bf16 %v3907, %v3905
        %v4050 = vpack.c.bf16 %v3911, %v3909
        %v4051 = vpack.c.bf16 %v3915, %v3913
        %v4052 = vpack.c.bf16 %v3919, %v3917
        %v4053 = vpack.c.bf16 %v3923, %v3921
        %v4054 = vpack.c.bf16 %v3927, %v3925
        %v4055 = vpack.c.bf16 %v3931, %v3929
        %v4056 = vpack.c.bf16 %v3935, %v3933
        %v4057 = vpack.c.bf16 %v3939, %v3937
        %v4058 = vpack.c.bf16 %v3943, %v3941
        %v4059 = vpack.c.bf16 %v3947, %v3945
        %4061 = vrot.lane.b32.xlu0 %v1006, 96
        %v4062 = vpop.permute.xlu0 %4061
        %v4065 = vsel %vm1778, %v4044, 0
        %4067 = vmatprep.subr.bf16.mxu0 0
        %4068 = vmatpush1.bf16.msra.mxu0 %v4062
        %4069 = vmatprep.subr.bf16.mxu0 0
        %4070 = vmatpush1.bf16.msra.mxu0 0
        %4071 = vmatprep.subr.bf16.mxu0 0
        %4072 = vmatpush1.bf16.msra.mxu0 0
        %4073 = vmatprep.subr.bf16.mxu0 0
        %4074 = vmatpush1.bf16.msra.mxu0 0
        %4075 = vmatprep.subr.bf16.mxu0 0
        %4076 = vmatpush1.bf16.msra.mxu0 0
        %4077 = vmatprep.subr.bf16.mxu0 0
        %4078 = vmatpush1.bf16.msra.mxu0 0
        %4079 = vmatprep.subr.bf16.mxu0 0
        %4080 = vmatpush1.bf16.msra.mxu0 0
        %4081 = vmatprep.subr.bf16.mxu0 0
        %4082 = vmatpush1.bf16.msra.mxu0 0
        %4083 = vmatprep.subr.bf16.mxu0 0
        %4084 = vmatpush1.bf16.msra.mxu0 0
        %4085 = vmatprep.subr.bf16.mxu0 0
        %4086 = vmatpush1.bf16.msra.mxu0 0
        %4087 = vmatprep.subr.bf16.mxu0 0
        %4088 = vmatpush1.bf16.msra.mxu0 0
        %4089 = vmatprep.subr.bf16.mxu0 0
        %4090 = vmatpush1.bf16.msra.mxu0 0
        %4091 = vmatprep.subr.bf16.mxu0 0
        %4092 = vmatpush1.bf16.msra.mxu0 0
        %4093 = vmatprep.subr.bf16.mxu0 0
        %4094 = vmatpush1.bf16.msra.mxu0 0
        %4095 = vmatprep.subr.bf16.mxu0 0
        %4096 = vmatpush1.bf16.msra.mxu0 0
        %4097 = vmatprep.subr.bf16.mxu0 0
        %4098 = vmatpush1.bf16.msra.mxu0 0
        %4099 = vmatprep.mubr.bf16.mxu0 0
        %4100 = vmatmul.mubr.bf16.gmra.mrb[0].mxu0 %v4065
        %v4101 = vpop.f32.mrb[0].mxu0
        %v4102 = vadd.f32 0.0, %v4101
        %v4103 = vpop.f32.mrb[0].mxu0
        %v4104 = vpop.f32.mrb[0].mxu0
        %v4105 = vadd.f32 0.0, %v4104
        %v4106 = vpop.f32.mrb[0].mxu0
        %4107 = vdwg.mxu0
        %4109 = vrot.lane.b32.xlu0 %v1007, 96
        %v4110 = vpop.permute.xlu0 %4109
        %v4113 = vsel %vm1778, %v4045, 0
        %4115 = vmatprep.subr.bf16.mxu0 0
        %4116 = vmatpush1.bf16.msra.mxu0 %v4110
        %4117 = vmatprep.subr.bf16.mxu0 0
        %4118 = vmatpush1.bf16.msra.mxu0 0
        %4119 = vmatprep.subr.bf16.mxu0 0
        %4120 = vmatpush1.bf16.msra.mxu0 0
        %4121 = vmatprep.subr.bf16.mxu0 0
        %4122 = vmatpush1.bf16.msra.mxu0 0
        %4123 = vmatprep.subr.bf16.mxu0 0
        %4124 = vmatpush1.bf16.msra.mxu0 0
        %4125 = vmatprep.subr.bf16.mxu0 0
        %4126 = vmatpush1.bf16.msra.mxu0 0
        %4127 = vmatprep.subr.bf16.mxu0 0
        %4128 = vmatpush1.bf16.msra.mxu0 0
        %4129 = vmatprep.subr.bf16.mxu0 0
        %4130 = vmatpush1.bf16.msra.mxu0 0
        %4131 = vmatprep.subr.bf16.mxu0 0
        %4132 = vmatpush1.bf16.msra.mxu0 0
        %4133 = vmatprep.subr.bf16.mxu0 0
        %4134 = vmatpush1.bf16.msra.mxu0 0
        %4135 = vmatprep.subr.bf16.mxu0 0
        %4136 = vmatpush1.bf16.msra.mxu0 0
        %4137 = vmatprep.subr.bf16.mxu0 0
        %4138 = vmatpush1.bf16.msra.mxu0 0
        %4139 = vmatprep.subr.bf16.mxu0 0
        %4140 = vmatpush1.bf16.msra.mxu0 0
        %4141 = vmatprep.subr.bf16.mxu0 0
        %4142 = vmatpush1.bf16.msra.mxu0 0
        %4143 = vmatprep.subr.bf16.mxu0 0
        %4144 = vmatpush1.bf16.msra.mxu0 0
        %4145 = vmatprep.subr.bf16.mxu0 0
        %4146 = vmatpush1.bf16.msra.mxu0 0
        %4147 = vmatprep.mubr.bf16.mxu0 0
        %4148 = vmatmul.mubr.bf16.gmra.mrb[0].mxu0 %v4113
        %v4149 = vpop.f32.mrb[0].mxu0
        %v4150 = vadd.f32 0.0, %v4149
        %v4151 = vpop.f32.mrb[0].mxu0
        %v4152 = vpop.f32.mrb[0].mxu0
        %v4153 = vadd.f32 0.0, %v4152
        %v4154 = vpop.f32.mrb[0].mxu0
        %4155 = vdwg.mxu0
        %4157 = vrot.lane.b32.xlu0 %v1008, 96
        %v4158 = vpop.permute.xlu0 %4157
        %v4161 = vsel %vm1778, %v4046, 0
        %4163 = vmatprep.subr.bf16.mxu0 0
        %4164 = vmatpush1.bf16.msra.mxu0 %v4158
        %4165 = vmatprep.subr.bf16.mxu0 0
        %4166 = vmatpush1.bf16.msra.mxu0 0
        %4167 = vmatprep.subr.bf16.mxu0 0
        %4168 = vmatpush1.bf16.msra.mxu0 0
        %4169 = vmatprep.subr.bf16.mxu0 0
        %4170 = vmatpush1.bf16.msra.mxu0 0
        %4171 = vmatprep.subr.bf16.mxu0 0
        %4172 = vmatpush1.bf16.msra.mxu0 0
        %4173 = vmatprep.subr.bf16.mxu0 0
        %4174 = vmatpush1.bf16.msra.mxu0 0
        %4175 = vmatprep.subr.bf16.mxu0 0
        %4176 = vmatpush1.bf16.msra.mxu0 0
        %4177 = vmatprep.subr.bf16.mxu0 0
        %4178 = vmatpush1.bf16.msra.mxu0 0
        %4179 = vmatprep.subr.bf16.mxu0 0
        %4180 = vmatpush1.bf16.msra.mxu0 0
        %4181 = vmatprep.subr.bf16.mxu0 0
        %4182 = vmatpush1.bf16.msra.mxu0 0
        %4183 = vmatprep.subr.bf16.mxu0 0
        %4184 = vmatpush1.bf16.msra.mxu0 0
        %4185 = vmatprep.subr.bf16.mxu0 0
        %4186 = vmatpush1.bf16.msra.mxu0 0
        %4187 = vmatprep.subr.bf16.mxu0 0
        %4188 = vmatpush1.bf16.msra.mxu0 0
        %4189 = vmatprep.subr.bf16.mxu0 0
        %4190 = vmatpush1.bf16.msra.mxu0 0
        %4191 = vmatprep.subr.bf16.mxu0 0
        %4192 = vmatpush1.bf16.msra.mxu0 0
        %4193 = vmatprep.subr.bf16.mxu0 0
        %4194 = vmatpush1.bf16.msra.mxu0 0
        %4195 = vmatprep.mubr.bf16.mxu0 0
        %4196 = vmatmul.mubr.bf16.gmra.mrb[0].mxu0 %v4161
        %v4197 = vpop.f32.mrb[0].mxu0
        %v4198 = vadd.f32 0.0, %v4197
        %v4199 = vpop.f32.mrb[0].mxu0
        %v4200 = vpop.f32.mrb[0].mxu0
        %v4201 = vadd.f32 0.0, %v4200
        %v4202 = vpop.f32.mrb[0].mxu0
        %4203 = vdwg.mxu0
        %4205 = vrot.lane.b32.xlu0 %v1009, 96
        %v4206 = vpop.permute.xlu0 %4205
        %v4209 = vsel %vm1778, %v4047, 0
        %4211 = vmatprep.subr.bf16.mxu0 0
        %4212 = vmatpush1.bf16.msra.mxu0 %v4206
        %4213 = vmatprep.subr.bf16.mxu0 0
        %4214 = vmatpush1.bf16.msra.mxu0 0
        %4215 = vmatprep.subr.bf16.mxu0 0
        %4216 = vmatpush1.bf16.msra.mxu0 0
        %4217 = vmatprep.subr.bf16.mxu0 0
        %4218 = vmatpush1.bf16.msra.mxu0 0
        %4219 = vmatprep.subr.bf16.mxu0 0
        %4220 = vmatpush1.bf16.msra.mxu0 0
        %4221 = vmatprep.subr.bf16.mxu0 0
        %4222 = vmatpush1.bf16.msra.mxu0 0
        %4223 = vmatprep.subr.bf16.mxu0 0
        %4224 = vmatpush1.bf16.msra.mxu0 0
        %4225 = vmatprep.subr.bf16.mxu0 0
        %4226 = vmatpush1.bf16.msra.mxu0 0
        %4227 = vmatprep.subr.bf16.mxu0 0
        %4228 = vmatpush1.bf16.msra.mxu0 0
        %4229 = vmatprep.subr.bf16.mxu0 0
        %4230 = vmatpush1.bf16.msra.mxu0 0
        %4231 = vmatprep.subr.bf16.mxu0 0
        %4232 = vmatpush1.bf16.msra.mxu0 0
        %4233 = vmatprep.subr.bf16.mxu0 0
        %4234 = vmatpush1.bf16.msra.mxu0 0
        %4235 = vmatprep.subr.bf16.mxu0 0
        %4236 = vmatpush1.bf16.msra.mxu0 0
        %4237 = vmatprep.subr.bf16.mxu0 0
        %4238 = vmatpush1.bf16.msra.mxu0 0
        %4239 = vmatprep.subr.bf16.mxu0 0
        %4240 = vmatpush1.bf16.msra.mxu0 0
        %4241 = vmatprep.subr.bf16.mxu0 0
        %4242 = vmatpush1.bf16.msra.mxu0 0
        %4243 = vmatprep.mubr.bf16.mxu0 0
        %4244 = vmatmul.mubr.bf16.gmra.mrb[0].mxu0 %v4209
        %v4245 = vpop.f32.mrb[0].mxu0
        %v4246 = vadd.f32 0.0, %v4245
        %v4247 = vpop.f32.mrb[0].mxu0
        %v4248 = vpop.f32.mrb[0].mxu0
        %v4249 = vadd.f32 0.0, %v4248
        %v4250 = vpop.f32.mrb[0].mxu0
        %4251 = vdwg.mxu0
        %4253 = vrot.lane.b32.xlu0 %v1010, 96
        %v4254 = vpop.permute.xlu0 %4253
        %v4257 = vsel %vm1778, %v4048, 0
        %4259 = vmatprep.subr.bf16.mxu0 0
        %4260 = vmatpush1.bf16.msra.mxu0 %v4254
        %4261 = vmatprep.subr.bf16.mxu0 0
        %4262 = vmatpush1.bf16.msra.mxu0 0
        %4263 = vmatprep.subr.bf16.mxu0 0
        %4264 = vmatpush1.bf16.msra.mxu0 0
        %4265 = vmatprep.subr.bf16.mxu0 0
        %4266 = vmatpush1.bf16.msra.mxu0 0
        %4267 = vmatprep.subr.bf16.mxu0 0
        %4268 = vmatpush1.bf16.msra.mxu0 0
        %4269 = vmatprep.subr.bf16.mxu0 0
        %4270 = vmatpush1.bf16.msra.mxu0 0
        %4271 = vmatprep.subr.bf16.mxu0 0
        %4272 = vmatpush1.bf16.msra.mxu0 0
        %4273 = vmatprep.subr.bf16.mxu0 0
        %4274 = vmatpush1.bf16.msra.mxu0 0
        %4275 = vmatprep.subr.bf16.mxu0 0
        %4276 = vmatpush1.bf16.msra.mxu0 0
        %4277 = vmatprep.subr.bf16.mxu0 0
        %4278 = vmatpush1.bf16.msra.mxu0 0
        %4279 = vmatprep.subr.bf16.mxu0 0
        %4280 = vmatpush1.bf16.msra.mxu0 0
        %4281 = vmatprep.subr.bf16.mxu0 0
        %4282 = vmatpush1.bf16.msra.mxu0 0
        %4283 = vmatprep.subr.bf16.mxu0 0
        %4284 = vmatpush1.bf16.msra.mxu0 0
        %4285 = vmatprep.subr.bf16.mxu0 0
        %4286 = vmatpush1.bf16.msra.mxu0 0
        %4287 = vmatprep.subr.bf16.mxu0 0
        %4288 = vmatpush1.bf16.msra.mxu0 0
        %4289 = vmatprep.subr.bf16.mxu0 0
        %4290 = vmatpush1.bf16.msra.mxu0 0
        %4291 = vmatprep.mubr.bf16.mxu0 0
        %4292 = vmatmul.mubr.bf16.gmra.mrb[0].mxu0 %v4257
        %v4293 = vpop.f32.mrb[0].mxu0
        %v4294 = vadd.f32 0.0, %v4293
        %v4295 = vpop.f32.mrb[0].mxu0
        %v4296 = vpop.f32.mrb[0].mxu0
        %v4297 = vadd.f32 0.0, %v4296
        %v4298 = vpop.f32.mrb[0].mxu0
        %4299 = vdwg.mxu0
        %4301 = vrot.lane.b32.xlu0 %v1011, 96
        %v4302 = vpop.permute.xlu0 %4301
        %v4305 = vsel %vm1778, %v4049, 0
        %4307 = vmatprep.subr.bf16.mxu0 0
        %4308 = vmatpush1.bf16.msra.mxu0 %v4302
        %4309 = vmatprep.subr.bf16.mxu0 0
        %4310 = vmatpush1.bf16.msra.mxu0 0
        %4311 = vmatprep.subr.bf16.mxu0 0
        %4312 = vmatpush1.bf16.msra.mxu0 0
        %4313 = vmatprep.subr.bf16.mxu0 0
        %4314 = vmatpush1.bf16.msra.mxu0 0
        %4315 = vmatprep.subr.bf16.mxu0 0
        %4316 = vmatpush1.bf16.msra.mxu0 0
        %4317 = vmatprep.subr.bf16.mxu0 0
        %4318 = vmatpush1.bf16.msra.mxu0 0
        %4319 = vmatprep.subr.bf16.mxu0 0
        %4320 = vmatpush1.bf16.msra.mxu0 0
        %4321 = vmatprep.subr.bf16.mxu0 0
        %4322 = vmatpush1.bf16.msra.mxu0 0
        %4323 = vmatprep.subr.bf16.mxu0 0
        %4324 = vmatpush1.bf16.msra.mxu0 0
        %4325 = vmatprep.subr.bf16.mxu0 0
        %4326 = vmatpush1.bf16.msra.mxu0 0
        %4327 = vmatprep.subr.bf16.mxu0 0
        %4328 = vmatpush1.bf16.msra.mxu0 0
        %4329 = vmatprep.subr.bf16.mxu0 0
        %4330 = vmatpush1.bf16.msra.mxu0 0
        %4331 = vmatprep.subr.bf16.mxu0 0
        %4332 = vmatpush1.bf16.msra.mxu0 0
        %4333 = vmatprep.subr.bf16.mxu0 0
        %4334 = vmatpush1.bf16.msra.mxu0 0
        %4335 = vmatprep.subr.bf16.mxu0 0
        %4336 = vmatpush1.bf16.msra.mxu0 0
        %4337 = vmatprep.subr.bf16.mxu0 0
        %4338 = vmatpush1.bf16.msra.mxu0 0
        %4339 = vmatprep.mubr.bf16.mxu0 0
        %4340 = vmatmul.mubr.bf16.gmra.mrb[0].mxu0 %v4305
        %v4341 = vpop.f32.mrb[0].mxu0
        %v4342 = vadd.f32 0.0, %v4341
        %v4343 = vpop.f32.mrb[0].mxu0
        %v4344 = vpop.f32.mrb[0].mxu0
        %v4345 = vadd.f32 0.0, %v4344
        %v4346 = vpop.f32.mrb[0].mxu0
        %4347 = vdwg.mxu0
        %4349 = vrot.lane.b32.xlu0 %v1012, 96
        %v4350 = vpop.permute.xlu0 %4349
        %v4353 = vsel %vm1778, %v4050, 0
        %4355 = vmatprep.subr.bf16.mxu0 0
        %4356 = vmatpush1.bf16.msra.mxu0 %v4350
        %4357 = vmatprep.subr.bf16.mxu0 0
        %4358 = vmatpush1.bf16.msra.mxu0 0
        %4359 = vmatprep.subr.bf16.mxu0 0
        %4360 = vmatpush1.bf16.msra.mxu0 0
        %4361 = vmatprep.subr.bf16.mxu0 0
        %4362 = vmatpush1.bf16.msra.mxu0 0
        %4363 = vmatprep.subr.bf16.mxu0 0
        %4364 = vmatpush1.bf16.msra.mxu0 0
        %4365 = vmatprep.subr.bf16.mxu0 0
        %4366 = vmatpush1.bf16.msra.mxu0 0
        %4367 = vmatprep.subr.bf16.mxu0 0
        %4368 = vmatpush1.bf16.msra.mxu0 0
        %4369 = vmatprep.subr.bf16.mxu0 0
        %4370 = vmatpush1.bf16.msra.mxu0 0
        %4371 = vmatprep.subr.bf16.mxu0 0
        %4372 = vmatpush1.bf16.msra.mxu0 0
        %4373 = vmatprep.subr.bf16.mxu0 0
        %4374 = vmatpush1.bf16.msra.mxu0 0
        %4375 = vmatprep.subr.bf16.mxu0 0
        %4376 = vmatpush1.bf16.msra.mxu0 0
        %4377 = vmatprep.subr.bf16.mxu0 0
        %4378 = vmatpush1.bf16.msra.mxu0 0
        %4379 = vmatprep.subr.bf16.mxu0 0
        %4380 = vmatpush1.bf16.msra.mxu0 0
        %4381 = vmatprep.subr.bf16.mxu0 0
        %4382 = vmatpush1.bf16.msra.mxu0 0
        %4383 = vmatprep.subr.bf16.mxu0 0
        %4384 = vmatpush1.bf16.msra.mxu0 0
        %4385 = vmatprep.subr.bf16.mxu0 0
        %4386 = vmatpush1.bf16.msra.mxu0 0
        %4387 = vmatprep.mubr.bf16.mxu0 0
        %4388 = vmatmul.mubr.bf16.gmra.mrb[0].mxu0 %v4353
        %v4389 = vpop.f32.mrb[0].mxu0
        %v4390 = vadd.f32 0.0, %v4389
        %v4391 = vpop.f32.mrb[0].mxu0
        %v4392 = vpop.f32.mrb[0].mxu0
        %v4393 = vadd.f32 0.0, %v4392
        %v4394 = vpop.f32.mrb[0].mxu0
        %4395 = vdwg.mxu0
        %4397 = vrot.lane.b32.xlu0 %v1013, 96
        %v4398 = vpop.permute.xlu0 %4397
        %v4401 = vsel %vm1778, %v4051, 0
        %4403 = vmatprep.subr.bf16.mxu0 0
        %4404 = vmatpush1.bf16.msra.mxu0 %v4398
        %4405 = vmatprep.subr.bf16.mxu0 0
        %4406 = vmatpush1.bf16.msra.mxu0 0
        %4407 = vmatprep.subr.bf16.mxu0 0
        %4408 = vmatpush1.bf16.msra.mxu0 0
        %4409 = vmatprep.subr.bf16.mxu0 0
        %4410 = vmatpush1.bf16.msra.mxu0 0
        %4411 = vmatprep.subr.bf16.mxu0 0
        %4412 = vmatpush1.bf16.msra.mxu0 0
        %4413 = vmatprep.subr.bf16.mxu0 0
        %4414 = vmatpush1.bf16.msra.mxu0 0
        %4415 = vmatprep.subr.bf16.mxu0 0
        %4416 = vmatpush1.bf16.msra.mxu0 0
        %4417 = vmatprep.subr.bf16.mxu0 0
        %4418 = vmatpush1.bf16.msra.mxu0 0
        %4419 = vmatprep.subr.bf16.mxu0 0
        %4420 = vmatpush1.bf16.msra.mxu0 0
        %4421 = vmatprep.subr.bf16.mxu0 0
        %4422 = vmatpush1.bf16.msra.mxu0 0
        %4423 = vmatprep.subr.bf16.mxu0 0
        %4424 = vmatpush1.bf16.msra.mxu0 0
        %4425 = vmatprep.subr.bf16.mxu0 0
        %4426 = vmatpush1.bf16.msra.mxu0 0
        %4427 = vmatprep.subr.bf16.mxu0 0
        %4428 = vmatpush1.bf16.msra.mxu0 0
        %4429 = vmatprep.subr.bf16.mxu0 0
        %4430 = vmatpush1.bf16.msra.mxu0 0
        %4431 = vmatprep.subr.bf16.mxu0 0
        %4432 = vmatpush1.bf16.msra.mxu0 0
        %4433 = vmatprep.subr.bf16.mxu0 0
        %4434 = vmatpush1.bf16.msra.mxu0 0
        %4435 = vmatprep.mubr.bf16.mxu0 0
        %4436 = vmatmul.mubr.bf16.gmra.mrb[0].mxu0 %v4401
        %v4437 = vpop.f32.mrb[0].mxu0
        %v4438 = vadd.f32 0.0, %v4437
        %v4439 = vpop.f32.mrb[0].mxu0
        %v4440 = vpop.f32.mrb[0].mxu0
        %v4441 = vadd.f32 0.0, %v4440
        %v4442 = vpop.f32.mrb[0].mxu0
        %4443 = vdwg.mxu0
        %4445 = vrot.lane.b32.xlu0 %v1014, 96
        %v4446 = vpop.permute.xlu0 %4445
        %v4449 = vsel %vm1778, %v4052, 0
        %4451 = vmatprep.subr.bf16.mxu0 0
        %4452 = vmatpush1.bf16.msra.mxu0 %v4446
        %4453 = vmatprep.subr.bf16.mxu0 0
        %4454 = vmatpush1.bf16.msra.mxu0 0
        %4455 = vmatprep.subr.bf16.mxu0 0
        %4456 = vmatpush1.bf16.msra.mxu0 0
        %4457 = vmatprep.subr.bf16.mxu0 0
        %4458 = vmatpush1.bf16.msra.mxu0 0
        %4459 = vmatprep.subr.bf16.mxu0 0
        %4460 = vmatpush1.bf16.msra.mxu0 0
        %4461 = vmatprep.subr.bf16.mxu0 0
        %4462 = vmatpush1.bf16.msra.mxu0 0
        %4463 = vmatprep.subr.bf16.mxu0 0
        %4464 = vmatpush1.bf16.msra.mxu0 0
        %4465 = vmatprep.subr.bf16.mxu0 0
        %4466 = vmatpush1.bf16.msra.mxu0 0
        %4467 = vmatprep.subr.bf16.mxu0 0
        %4468 = vmatpush1.bf16.msra.mxu0 0
        %4469 = vmatprep.subr.bf16.mxu0 0
        %4470 = vmatpush1.bf16.msra.mxu0 0
        %4471 = vmatprep.subr.bf16.mxu0 0
        %4472 = vmatpush1.bf16.msra.mxu0 0
        %4473 = vmatprep.subr.bf16.mxu0 0
        %4474 = vmatpush1.bf16.msra.mxu0 0
        %4475 = vmatprep.subr.bf16.mxu0 0
        %4476 = vmatpush1.bf16.msra.mxu0 0
        %4477 = vmatprep.subr.bf16.mxu0 0
        %4478 = vmatpush1.bf16.msra.mxu0 0
        %4479 = vmatprep.subr.bf16.mxu0 0
        %4480 = vmatpush1.bf16.msra.mxu0 0
        %4481 = vmatprep.subr.bf16.mxu0 0
        %4482 = vmatpush1.bf16.msra.mxu0 0
        %4483 = vmatprep.mubr.bf16.mxu0 0
        %4484 = vmatmul.mubr.bf16.gmra.mrb[0].mxu0 %v4449
        %v4485 = vpop.f32.mrb[0].mxu0
        %v4486 = vadd.f32 0.0, %v4485
        %v4487 = vpop.f32.mrb[0].mxu0
        %v4488 = vpop.f32.mrb[0].mxu0
        %v4489 = vadd.f32 0.0, %v4488
        %v4490 = vpop.f32.mrb[0].mxu0
        %4491 = vdwg.mxu0
        %4493 = vrot.lane.b32.xlu0 %v1015, 96
        %v4494 = vpop.permute.xlu0 %4493
        %v4497 = vsel %vm1778, %v4053, 0
        %4499 = vmatprep.subr.bf16.mxu0 0
        %4500 = vmatpush1.bf16.msra.mxu0 %v4494
        %4501 = vmatprep.subr.bf16.mxu0 0
        %4502 = vmatpush1.bf16.msra.mxu0 0
        %4503 = vmatprep.subr.bf16.mxu0 0
        %4504 = vmatpush1.bf16.msra.mxu0 0
        %4505 = vmatprep.subr.bf16.mxu0 0
        %4506 = vmatpush1.bf16.msra.mxu0 0
        %4507 = vmatprep.subr.bf16.mxu0 0
        %4508 = vmatpush1.bf16.msra.mxu0 0
        %4509 = vmatprep.subr.bf16.mxu0 0
        %4510 = vmatpush1.bf16.msra.mxu0 0
        %4511 = vmatprep.subr.bf16.mxu0 0
        %4512 = vmatpush1.bf16.msra.mxu0 0
        %4513 = vmatprep.subr.bf16.mxu0 0
        %4514 = vmatpush1.bf16.msra.mxu0 0
        %4515 = vmatprep.subr.bf16.mxu0 0
        %4516 = vmatpush1.bf16.msra.mxu0 0
        %4517 = vmatprep.subr.bf16.mxu0 0
        %4518 = vmatpush1.bf16.msra.mxu0 0
        %4519 = vmatprep.subr.bf16.mxu0 0
        %4520 = vmatpush1.bf16.msra.mxu0 0
        %4521 = vmatprep.subr.bf16.mxu0 0
        %4522 = vmatpush1.bf16.msra.mxu0 0
        %4523 = vmatprep.subr.bf16.mxu0 0
        %4524 = vmatpush1.bf16.msra.mxu0 0
        %4525 = vmatprep.subr.bf16.mxu0 0
        %4526 = vmatpush1.bf16.msra.mxu0 0
        %4527 = vmatprep.subr.bf16.mxu0 0
        %4528 = vmatpush1.bf16.msra.mxu0 0
        %4529 = vmatprep.subr.bf16.mxu0 0
        %4530 = vmatpush1.bf16.msra.mxu0 0
        %4531 = vmatprep.mubr.bf16.mxu0 0
        %4532 = vmatmul.mubr.bf16.gmra.mrb[0].mxu0 %v4497
        %v4533 = vpop.f32.mrb[0].mxu0
        %v4534 = vadd.f32 0.0, %v4533
        %v4535 = vpop.f32.mrb[0].mxu0
        %v4536 = vpop.f32.mrb[0].mxu0
        %v4537 = vadd.f32 0.0, %v4536
        %v4538 = vpop.f32.mrb[0].mxu0
        %4539 = vdwg.mxu0
        %4541 = vrot.lane.b32.xlu0 %v1016, 96
        %v4542 = vpop.permute.xlu0 %4541
        %v4545 = vsel %vm1778, %v4054, 0
        %4547 = vmatprep.subr.bf16.mxu0 0
        %4548 = vmatpush1.bf16.msra.mxu0 %v4542
        %4549 = vmatprep.subr.bf16.mxu0 0
        %4550 = vmatpush1.bf16.msra.mxu0 0
        %4551 = vmatprep.subr.bf16.mxu0 0
        %4552 = vmatpush1.bf16.msra.mxu0 0
        %4553 = vmatprep.subr.bf16.mxu0 0
        %4554 = vmatpush1.bf16.msra.mxu0 0
        %4555 = vmatprep.subr.bf16.mxu0 0
        %4556 = vmatpush1.bf16.msra.mxu0 0
        %4557 = vmatprep.subr.bf16.mxu0 0
        %4558 = vmatpush1.bf16.msra.mxu0 0
        %4559 = vmatprep.subr.bf16.mxu0 0
        %4560 = vmatpush1.bf16.msra.mxu0 0
        %4561 = vmatprep.subr.bf16.mxu0 0
        %4562 = vmatpush1.bf16.msra.mxu0 0
        %4563 = vmatprep.subr.bf16.mxu0 0
        %4564 = vmatpush1.bf16.msra.mxu0 0
        %4565 = vmatprep.subr.bf16.mxu0 0
        %4566 = vmatpush1.bf16.msra.mxu0 0
        %4567 = vmatprep.subr.bf16.mxu0 0
        %4568 = vmatpush1.bf16.msra.mxu0 0
        %4569 = vmatprep.subr.bf16.mxu0 0
        %4570 = vmatpush1.bf16.msra.mxu0 0
        %4571 = vmatprep.subr.bf16.mxu0 0
        %4572 = vmatpush1.bf16.msra.mxu0 0
        %4573 = vmatprep.subr.bf16.mxu0 0
        %4574 = vmatpush1.bf16.msra.mxu0 0
        %4575 = vmatprep.subr.bf16.mxu0 0
        %4576 = vmatpush1.bf16.msra.mxu0 0
        %4577 = vmatprep.subr.bf16.mxu0 0
        %4578 = vmatpush1.bf16.msra.mxu0 0
        %4579 = vmatprep.mubr.bf16.mxu0 0
        %4580 = vmatmul.mubr.bf16.gmra.mrb[0].mxu0 %v4545
        %v4581 = vpop.f32.mrb[0].mxu0
        %v4582 = vadd.f32 0.0, %v4581
        %v4583 = vpop.f32.mrb[0].mxu0
        %v4584 = vpop.f32.mrb[0].mxu0
        %v4585 = vadd.f32 0.0, %v4584
        %v4586 = vpop.f32.mrb[0].mxu0
        %4587 = vdwg.mxu0
        %4589 = vrot.lane.b32.xlu0 %v1017, 96
        %v4590 = vpop.permute.xlu0 %4589
        %v4593 = vsel %vm1778, %v4055, 0
        %4595 = vmatprep.subr.bf16.mxu0 0
        %4596 = vmatpush1.bf16.msra.mxu0 %v4590
        %4597 = vmatprep.subr.bf16.mxu0 0
        %4598 = vmatpush1.bf16.msra.mxu0 0
        %4599 = vmatprep.subr.bf16.mxu0 0
        %4600 = vmatpush1.bf16.msra.mxu0 0
        %4601 = vmatprep.subr.bf16.mxu0 0
        %4602 = vmatpush1.bf16.msra.mxu0 0
        %4603 = vmatprep.subr.bf16.mxu0 0
        %4604 = vmatpush1.bf16.msra.mxu0 0
        %4605 = vmatprep.subr.bf16.mxu0 0
        %4606 = vmatpush1.bf16.msra.mxu0 0
        %4607 = vmatprep.subr.bf16.mxu0 0
        %4608 = vmatpush1.bf16.msra.mxu0 0
        %4609 = vmatprep.subr.bf16.mxu0 0
        %4610 = vmatpush1.bf16.msra.mxu0 0
        %4611 = vmatprep.subr.bf16.mxu0 0
        %4612 = vmatpush1.bf16.msra.mxu0 0
        %4613 = vmatprep.subr.bf16.mxu0 0
        %4614 = vmatpush1.bf16.msra.mxu0 0
        %4615 = vmatprep.subr.bf16.mxu0 0
        %4616 = vmatpush1.bf16.msra.mxu0 0
        %4617 = vmatprep.subr.bf16.mxu0 0
        %4618 = vmatpush1.bf16.msra.mxu0 0
        %4619 = vmatprep.subr.bf16.mxu0 0
        %4620 = vmatpush1.bf16.msra.mxu0 0
        %4621 = vmatprep.subr.bf16.mxu0 0
        %4622 = vmatpush1.bf16.msra.mxu0 0
        %4623 = vmatprep.subr.bf16.mxu0 0
        %4624 = vmatpush1.bf16.msra.mxu0 0
        %4625 = vmatprep.subr.bf16.mxu0 0
        %4626 = vmatpush1.bf16.msra.mxu0 0
        %4627 = vmatprep.mubr.bf16.mxu0 0
        %4628 = vmatmul.mubr.bf16.gmra.mrb[0].mxu0 %v4593
        %v4629 = vpop.f32.mrb[0].mxu0
        %v4630 = vadd.f32 0.0, %v4629
        %v4631 = vpop.f32.mrb[0].mxu0
        %v4632 = vpop.f32.mrb[0].mxu0
        %v4633 = vadd.f32 0.0, %v4632
        %v4634 = vpop.f32.mrb[0].mxu0
        %4635 = vdwg.mxu0
        %4637 = vrot.lane.b32.xlu0 %v1018, 96
        %v4638 = vpop.permute.xlu0 %4637
        %v4641 = vsel %vm1778, %v4056, 0
        %4643 = vmatprep.subr.bf16.mxu0 0
        %4644 = vmatpush1.bf16.msra.mxu0 %v4638
        %4645 = vmatprep.subr.bf16.mxu0 0
        %4646 = vmatpush1.bf16.msra.mxu0 0
        %4647 = vmatprep.subr.bf16.mxu0 0
        %4648 = vmatpush1.bf16.msra.mxu0 0
        %4649 = vmatprep.subr.bf16.mxu0 0
        %4650 = vmatpush1.bf16.msra.mxu0 0
        %4651 = vmatprep.subr.bf16.mxu0 0
        %4652 = vmatpush1.bf16.msra.mxu0 0
        %4653 = vmatprep.subr.bf16.mxu0 0
        %4654 = vmatpush1.bf16.msra.mxu0 0
        %4655 = vmatprep.subr.bf16.mxu0 0
        %4656 = vmatpush1.bf16.msra.mxu0 0
        %4657 = vmatprep.subr.bf16.mxu0 0
        %4658 = vmatpush1.bf16.msra.mxu0 0
        %4659 = vmatprep.subr.bf16.mxu0 0
        %4660 = vmatpush1.bf16.msra.mxu0 0
        %4661 = vmatprep.subr.bf16.mxu0 0
        %4662 = vmatpush1.bf16.msra.mxu0 0
        %4663 = vmatprep.subr.bf16.mxu0 0
        %4664 = vmatpush1.bf16.msra.mxu0 0
        %4665 = vmatprep.subr.bf16.mxu0 0
        %4666 = vmatpush1.bf16.msra.mxu0 0
        %4667 = vmatprep.subr.bf16.mxu0 0
        %4668 = vmatpush1.bf16.msra.mxu0 0
        %4669 = vmatprep.subr.bf16.mxu0 0
        %4670 = vmatpush1.bf16.msra.mxu0 0
        %4671 = vmatprep.subr.bf16.mxu0 0
        %4672 = vmatpush1.bf16.msra.mxu0 0
        %4673 = vmatprep.subr.bf16.mxu0 0
        %4674 = vmatpush1.bf16.msra.mxu0 0
        %4675 = vmatprep.mubr.bf16.mxu0 0
        %4676 = vmatmul.mubr.bf16.gmra.mrb[0].mxu0 %v4641
        %v4677 = vpop.f32.mrb[0].mxu0
        %v4678 = vadd.f32 0.0, %v4677
        %v4679 = vpop.f32.mrb[0].mxu0
        %v4680 = vpop.f32.mrb[0].mxu0
        %v4681 = vadd.f32 0.0, %v4680
        %v4682 = vpop.f32.mrb[0].mxu0
        %4683 = vdwg.mxu0
        %4685 = vrot.lane.b32.xlu0 %v1019, 96
        %v4686 = vpop.permute.xlu0 %4685
        %v4689 = vsel %vm1778, %v4057, 0
        %4691 = vmatprep.subr.bf16.mxu0 0
        %4692 = vmatpush1.bf16.msra.mxu0 %v4686
        %4693 = vmatprep.subr.bf16.mxu0 0
        %4694 = vmatpush1.bf16.msra.mxu0 0
        %4695 = vmatprep.subr.bf16.mxu0 0
        %4696 = vmatpush1.bf16.msra.mxu0 0
        %4697 = vmatprep.subr.bf16.mxu0 0
        %4698 = vmatpush1.bf16.msra.mxu0 0
        %4699 = vmatprep.subr.bf16.mxu0 0
        %4700 = vmatpush1.bf16.msra.mxu0 0
        %4701 = vmatprep.subr.bf16.mxu0 0
        %4702 = vmatpush1.bf16.msra.mxu0 0
        %4703 = vmatprep.subr.bf16.mxu0 0
        %4704 = vmatpush1.bf16.msra.mxu0 0
        %4705 = vmatprep.subr.bf16.mxu0 0
        %4706 = vmatpush1.bf16.msra.mxu0 0
        %4707 = vmatprep.subr.bf16.mxu0 0
        %4708 = vmatpush1.bf16.msra.mxu0 0
        %4709 = vmatprep.subr.bf16.mxu0 0
        %4710 = vmatpush1.bf16.msra.mxu0 0
        %4711 = vmatprep.subr.bf16.mxu0 0
        %4712 = vmatpush1.bf16.msra.mxu0 0
        %4713 = vmatprep.subr.bf16.mxu0 0
        %4714 = vmatpush1.bf16.msra.mxu0 0
        %4715 = vmatprep.subr.bf16.mxu0 0
        %4716 = vmatpush1.bf16.msra.mxu0 0
        %4717 = vmatprep.subr.bf16.mxu0 0
        %4718 = vmatpush1.bf16.msra.mxu0 0
        %4719 = vmatprep.subr.bf16.mxu0 0
        %4720 = vmatpush1.bf16.msra.mxu0 0
        %4721 = vmatprep.subr.bf16.mxu0 0
        %4722 = vmatpush1.bf16.msra.mxu0 0
        %4723 = vmatprep.mubr.bf16.mxu0 0
        %4724 = vmatmul.mubr.bf16.gmra.mrb[0].mxu0 %v4689
        %v4725 = vpop.f32.mrb[0].mxu0
        %v4726 = vadd.f32 0.0, %v4725
        %v4727 = vpop.f32.mrb[0].mxu0
        %v4728 = vpop.f32.mrb[0].mxu0
        %v4729 = vadd.f32 0.0, %v4728
        %v4730 = vpop.f32.mrb[0].mxu0
        %4731 = vdwg.mxu0
        %4733 = vrot.lane.b32.xlu0 %v1020, 96
        %v4734 = vpop.permute.xlu0 %4733
        %v4737 = vsel %vm1778, %v4058, 0
        %4739 = vmatprep.subr.bf16.mxu0 0
        %4740 = vmatpush1.bf16.msra.mxu0 %v4734
        %4741 = vmatprep.subr.bf16.mxu0 0
        %4742 = vmatpush1.bf16.msra.mxu0 0
        %4743 = vmatprep.subr.bf16.mxu0 0
        %4744 = vmatpush1.bf16.msra.mxu0 0
        %4745 = vmatprep.subr.bf16.mxu0 0
        %4746 = vmatpush1.bf16.msra.mxu0 0
        %4747 = vmatprep.subr.bf16.mxu0 0
        %4748 = vmatpush1.bf16.msra.mxu0 0
        %4749 = vmatprep.subr.bf16.mxu0 0
        %4750 = vmatpush1.bf16.msra.mxu0 0
        %4751 = vmatprep.subr.bf16.mxu0 0
        %4752 = vmatpush1.bf16.msra.mxu0 0
        %4753 = vmatprep.subr.bf16.mxu0 0
        %4754 = vmatpush1.bf16.msra.mxu0 0
        %4755 = vmatprep.subr.bf16.mxu0 0
        %4756 = vmatpush1.bf16.msra.mxu0 0
        %4757 = vmatprep.subr.bf16.mxu0 0
        %4758 = vmatpush1.bf16.msra.mxu0 0
        %4759 = vmatprep.subr.bf16.mxu0 0
        %4760 = vmatpush1.bf16.msra.mxu0 0
        %4761 = vmatprep.subr.bf16.mxu0 0
        %4762 = vmatpush1.bf16.msra.mxu0 0
        %4763 = vmatprep.subr.bf16.mxu0 0
        %4764 = vmatpush1.bf16.msra.mxu0 0
        %4765 = vmatprep.subr.bf16.mxu0 0
        %4766 = vmatpush1.bf16.msra.mxu0 0
        %4767 = vmatprep.subr.bf16.mxu0 0
        %4768 = vmatpush1.bf16.msra.mxu0 0
        %4769 = vmatprep.subr.bf16.mxu0 0
        %4770 = vmatpush1.bf16.msra.mxu0 0
        %4771 = vmatprep.mubr.bf16.mxu0 0
        %4772 = vmatmul.mubr.bf16.gmra.mrb[0].mxu0 %v4737
        %v4773 = vpop.f32.mrb[0].mxu0
        %v4774 = vadd.f32 0.0, %v4773
        %v4775 = vpop.f32.mrb[0].mxu0
        %v4776 = vpop.f32.mrb[0].mxu0
        %v4777 = vadd.f32 0.0, %v4776
        %v4778 = vpop.f32.mrb[0].mxu0
        %4779 = vdwg.mxu0
        %4781 = vrot.lane.b32.xlu0 %v1021, 96
        %v4782 = vpop.permute.xlu0 %4781
        %v4785 = vsel %vm1778, %v4059, 0
        %4787 = vmatprep.subr.bf16.mxu0 0
        %4788 = vmatpush1.bf16.msra.mxu0 %v4782
        %4789 = vmatprep.subr.bf16.mxu0 0
        %4790 = vmatpush1.bf16.msra.mxu0 0
        %4791 = vmatprep.subr.bf16.mxu0 0
        %4792 = vmatpush1.bf16.msra.mxu0 0
        %4793 = vmatprep.subr.bf16.mxu0 0
        %4794 = vmatpush1.bf16.msra.mxu0 0
        %4795 = vmatprep.subr.bf16.mxu0 0
        %4796 = vmatpush1.bf16.msra.mxu0 0
        %4797 = vmatprep.subr.bf16.mxu0 0
        %4798 = vmatpush1.bf16.msra.mxu0 0
        %4799 = vmatprep.subr.bf16.mxu0 0
        %4800 = vmatpush1.bf16.msra.mxu0 0
        %4801 = vmatprep.subr.bf16.mxu0 0
        %4802 = vmatpush1.bf16.msra.mxu0 0
        %4803 = vmatprep.subr.bf16.mxu0 0
        %4804 = vmatpush1.bf16.msra.mxu0 0
        %4805 = vmatprep.subr.bf16.mxu0 0
        %4806 = vmatpush1.bf16.msra.mxu0 0
        %4807 = vmatprep.subr.bf16.mxu0 0
        %4808 = vmatpush1.bf16.msra.mxu0 0
        %4809 = vmatprep.subr.bf16.mxu0 0
        %4810 = vmatpush1.bf16.msra.mxu0 0
        %4811 = vmatprep.subr.bf16.mxu0 0
        %4812 = vmatpush1.bf16.msra.mxu0 0
        %4813 = vmatprep.subr.bf16.mxu0 0
        %4814 = vmatpush1.bf16.msra.mxu0 0
        %4815 = vmatprep.subr.bf16.mxu0 0
        %4816 = vmatpush1.bf16.msra.mxu0 0
        %4817 = vmatprep.subr.bf16.mxu0 0
        %4818 = vmatpush1.bf16.msra.mxu0 0
        %4819 = vmatprep.mubr.bf16.mxu0 0
        %4820 = vmatmul.mubr.bf16.gmra.mrb[0].mxu0 %v4785
        %v4821 = vpop.f32.mrb[0].mxu0
        %v4822 = vadd.f32 0.0, %v4821
        %v4823 = vpop.f32.mrb[0].mxu0
        %v4824 = vpop.f32.mrb[0].mxu0
        %v4825 = vadd.f32 0.0, %v4824
        %v4826 = vpop.f32.mrb[0].mxu0
        %4827 = vdwg.mxu0
        %v4828 = vrcp.pop %v3950
        %v4829 = vrcp.pop %v3953
        %v4830 = vrcp.pop %v3956
        %v4831 = vrcp.pop %v3959
        %v4832 = vrcp.pop %v3962
        %v4833 = vrcp.pop %v3965
        %v4834 = vrcp.pop %v3968
        %v4835 = vrcp.pop %v3971
        %v4836 = vrcp.pop %v3974
        %v4837 = vrcp.pop %v3977
        %v4838 = vrcp.pop %v3980
        %v4839 = vrcp.pop %v3983
        %v4840 = vrcp.pop %v3986
        %v4841 = vrcp.pop %v3989
        %v4842 = vrcp.pop %v3992
        %v4843 = vrcp.pop %v3995
        %v4844 = vrcp.pop %v3998
        %v4845 = vrcp.pop %v4001
        %v4846 = vrcp.pop %v4004
        %v4847 = vrcp.pop %v4007
        %v4848 = vrcp.pop %v4010
        %v4849 = vrcp.pop %v4013
        %v4850 = vrcp.pop %v4016
        %v4851 = vrcp.pop %v4019
        %v4852 = vrcp.pop %v4022
        %v4853 = vrcp.pop %v4025
        %v4854 = vrcp.pop %v4028
        %v4855 = vrcp.pop %v4031
        %v4856 = vrcp.pop %v4034
        %v4857 = vrcp.pop %v4037
        %v4858 = vrcp.pop %v4040
        %v4859 = vrcp.pop %v4043
        %v4860 = vmul.f32 %v4102, %v4828
        %v4861 = vmul.f32 %v4105, %v4829
        %v4862 = vmul.f32 %v4150, %v4830
        %v4863 = vmul.f32 %v4153, %v4831
        %v4864 = vmul.f32 %v4198, %v4832
        %v4865 = vmul.f32 %v4201, %v4833
        %v4866 = vmul.f32 %v4246, %v4834
        %v4867 = vmul.f32 %v4249, %v4835
        %v4868 = vmul.f32 %v4294, %v4836
        %v4869 = vmul.f32 %v4297, %v4837
        %v4870 = vmul.f32 %v4342, %v4838
        %v4871 = vmul.f32 %v4345, %v4839
        %v4872 = vmul.f32 %v4390, %v4840
        %v4873 = vmul.f32 %v4393, %v4841
        %v4874 = vmul.f32 %v4438, %v4842
        %v4875 = vmul.f32 %v4441, %v4843
        %v4876 = vmul.f32 %v4486, %v4844
        %v4877 = vmul.f32 %v4489, %v4845
        %v4878 = vmul.f32 %v4534, %v4846
        %v4879 = vmul.f32 %v4537, %v4847
        %v4880 = vmul.f32 %v4582, %v4848
        %v4881 = vmul.f32 %v4585, %v4849
        %v4882 = vmul.f32 %v4630, %v4850
        %v4883 = vmul.f32 %v4633, %v4851
        %v4884 = vmul.f32 %v4678, %v4852
        %v4885 = vmul.f32 %v4681, %v4853
        %v4886 = vmul.f32 %v4726, %v4854
        %v4887 = vmul.f32 %v4729, %v4855
        %v4888 = vmul.f32 %v4774, %v4856
        %v4889 = vmul.f32 %v4777, %v4857
        %v4890 = vmul.f32 %v4822, %v4858
        %v4891 = vmul.f32 %v4825, %v4859
        %4924 = vrot.lane.b32.xlu0 %v4860, 32
        %v4925 = vpop.permute.xlu0 %4924
        %4926 = vrot.lane.b32.xlu0 %v4861, 32
        %v4927 = vpop.permute.xlu0 %4926
        %4928 = vrot.lane.b32.xlu0 %v4862, 32
        %v4929 = vpop.permute.xlu0 %4928
        %4930 = vrot.lane.b32.xlu0 %v4863, 32
        %v4931 = vpop.permute.xlu0 %4930
        %4932 = vrot.lane.b32.xlu0 %v4864, 32
        %v4933 = vpop.permute.xlu0 %4932
        %4934 = vrot.lane.b32.xlu0 %v4865, 32
        %v4935 = vpop.permute.xlu0 %4934
        %4936 = vrot.lane.b32.xlu0 %v4866, 32
        %v4937 = vpop.permute.xlu0 %4936
        %4938 = vrot.lane.b32.xlu0 %v4867, 32
        %v4939 = vpop.permute.xlu0 %4938
        %4940 = vrot.lane.b32.xlu0 %v4868, 32
        %v4941 = vpop.permute.xlu0 %4940
        %4942 = vrot.lane.b32.xlu0 %v4869, 32
        %v4943 = vpop.permute.xlu0 %4942
        %4944 = vrot.lane.b32.xlu0 %v4870, 32
        %v4945 = vpop.permute.xlu0 %4944
        %4946 = vrot.lane.b32.xlu0 %v4871, 32
        %v4947 = vpop.permute.xlu0 %4946
        %4948 = vrot.lane.b32.xlu0 %v4872, 32
        %v4949 = vpop.permute.xlu0 %4948
        %4950 = vrot.lane.b32.xlu0 %v4873, 32
        %v4951 = vpop.permute.xlu0 %4950
        %4952 = vrot.lane.b32.xlu0 %v4874, 32
        %v4953 = vpop.permute.xlu0 %4952
        %4954 = vrot.lane.b32.xlu0 %v4875, 32
        %v4955 = vpop.permute.xlu0 %4954
        %4956 = vrot.lane.b32.xlu0 %v4876, 32
        %v4957 = vpop.permute.xlu0 %4956
        %4958 = vrot.lane.b32.xlu0 %v4877, 32
        %v4959 = vpop.permute.xlu0 %4958
        %4960 = vrot.lane.b32.xlu0 %v4878, 32
        %v4961 = vpop.permute.xlu0 %4960
        %4962 = vrot.lane.b32.xlu0 %v4879, 32
        %v4963 = vpop.permute.xlu0 %4962
        %4964 = vrot.lane.b32.xlu0 %v4880, 32
        %v4965 = vpop.permute.xlu0 %4964
        %4966 = vrot.lane.b32.xlu0 %v4881, 32
        %v4967 = vpop.permute.xlu0 %4966
        %4968 = vrot.lane.b32.xlu0 %v4882, 32
        %v4969 = vpop.permute.xlu0 %4968
        %4970 = vrot.lane.b32.xlu0 %v4883, 32
        %v4971 = vpop.permute.xlu0 %4970
        %4972 = vrot.lane.b32.xlu0 %v4884, 32
        %v4973 = vpop.permute.xlu0 %4972
        %4974 = vrot.lane.b32.xlu0 %v4885, 32
        %v4975 = vpop.permute.xlu0 %4974
        %4976 = vrot.lane.b32.xlu0 %v4886, 32
        %v4977 = vpop.permute.xlu0 %4976
        %4978 = vrot.lane.b32.xlu0 %v4887, 32
        %v4979 = vpop.permute.xlu0 %4978
        %4980 = vrot.lane.b32.xlu0 %v4888, 32
        %v4981 = vpop.permute.xlu0 %4980
        %4982 = vrot.lane.b32.xlu0 %v4889, 32
        %v4983 = vpop.permute.xlu0 %4982
        %4984 = vrot.lane.b32.xlu0 %v4890, 32
        %v4985 = vpop.permute.xlu0 %4984
        %4986 = vrot.lane.b32.xlu0 %v4891, 32
        %v4987 = vpop.permute.xlu0 %4986
        %v5020 = vmul.f32 %v911, %v4925
        %v5021 = vmul.f32 %v913, %v4927
        %v5022 = vmul.f32 %v915, %v4929
        %v5023 = vmul.f32 %v917, %v4931
        %v5024 = vmul.f32 %v919, %v4933
        %v5025 = vmul.f32 %v921, %v4935
        %v5026 = vmul.f32 %v923, %v4937
        %v5027 = vmul.f32 %v925, %v4939
        %v5028 = vmul.f32 %v927, %v4941
        %v5029 = vmul.f32 %v929, %v4943
        %v5030 = vmul.f32 %v931, %v4945
        %v5031 = vmul.f32 %v933, %v4947
        %v5032 = vmul.f32 %v935, %v4949
        %v5033 = vmul.f32 %v937, %v4951
        %v5034 = vmul.f32 %v939, %v4953
        %v5035 = vmul.f32 %v941, %v4955
        %v5036 = vmul.f32 %v943, %v4957
        %v5037 = vmul.f32 %v945, %v4959
        %v5038 = vmul.f32 %v947, %v4961
        %v5039 = vmul.f32 %v949, %v4963
        %v5040 = vmul.f32 %v951, %v4965
        %v5041 = vmul.f32 %v953, %v4967
        %v5042 = vmul.f32 %v955, %v4969
        %v5043 = vmul.f32 %v957, %v4971
        %v5044 = vmul.f32 %v959, %v4973
        %v5045 = vmul.f32 %v961, %v4975
        %v5046 = vmul.f32 %v963, %v4977
        %v5047 = vmul.f32 %v965, %v4979
        %v5048 = vmul.f32 %v967, %v4981
        %v5049 = vmul.f32 %v969, %v4983
        %v5050 = vmul.f32 %v971, %v4985
        %v5051 = vmul.f32 %v973, %v4987
        %v5052 = vpack.c.bf16 %v5021, %v5020
        %v5053 = vpack.c.bf16 %v5023, %v5022
        %v5054 = vpack.c.bf16 %v5025, %v5024
        %v5055 = vpack.c.bf16 %v5027, %v5026
        %v5056 = vpack.c.bf16 %v5029, %v5028
        %v5057 = vpack.c.bf16 %v5031, %v5030
        %v5058 = vpack.c.bf16 %v5033, %v5032
        %v5059 = vpack.c.bf16 %v5035, %v5034
        %v5060 = vpack.c.bf16 %v5037, %v5036
        %v5061 = vpack.c.bf16 %v5039, %v5038
        %v5062 = vpack.c.bf16 %v5041, %v5040
        %v5063 = vpack.c.bf16 %v5043, %v5042
        %v5064 = vpack.c.bf16 %v5045, %v5044
        %v5065 = vpack.c.bf16 %v5047, %v5046
        %v5066 = vpack.c.bf16 %v5049, %v5048
        %v5067 = vpack.c.bf16 %v5051, %v5050
        %v5068 = vld [vmem:[%s3 + $0x10] sm:$0xf]
        %v5069 = vld [vmem:[%s3 + $0x14] sm:$0xf]
        %v5070 = vld [vmem:[%s3 + $0x18] sm:$0xf]
        %v5071 = vld [vmem:[%s3 + $0x1c] sm:$0xf]
        %5088 = vrot.lane.b32.xlu0 %v5052, 96
        %v5089 = vpop.permute.xlu0 %5088
        %5090 = vrot.lane.b32.xlu0 %v5053, 96
        %v5091 = vpop.permute.xlu0 %5090
        %5092 = vrot.lane.b32.xlu0 %v5054, 96
        %v5093 = vpop.permute.xlu0 %5092
        %5094 = vrot.lane.b32.xlu0 %v5055, 96
        %v5095 = vpop.permute.xlu0 %5094
        %5096 = vrot.lane.b32.xlu0 %v5056, 96
        %v5097 = vpop.permute.xlu0 %5096
        %5098 = vrot.lane.b32.xlu0 %v5057, 96
        %v5099 = vpop.permute.xlu0 %5098
        %5100 = vrot.lane.b32.xlu0 %v5058, 96
        %v5101 = vpop.permute.xlu0 %5100
        %5102 = vrot.lane.b32.xlu0 %v5059, 96
        %v5103 = vpop.permute.xlu0 %5102
        %5104 = vrot.lane.b32.xlu0 %v5060, 96
        %v5105 = vpop.permute.xlu0 %5104
        %5106 = vrot.lane.b32.xlu0 %v5061, 96
        %v5107 = vpop.permute.xlu0 %5106
        %5108 = vrot.lane.b32.xlu0 %v5062, 96
        %v5109 = vpop.permute.xlu0 %5108
        %5110 = vrot.lane.b32.xlu0 %v5063, 96
        %v5111 = vpop.permute.xlu0 %5110
        %5112 = vrot.lane.b32.xlu0 %v5064, 96
        %v5113 = vpop.permute.xlu0 %5112
        %5114 = vrot.lane.b32.xlu0 %v5065, 96
        %v5115 = vpop.permute.xlu0 %5114
        %5116 = vrot.lane.b32.xlu0 %v5066, 96
        %v5117 = vpop.permute.xlu0 %5116
        %5118 = vrot.lane.b32.xlu0 %v5067, 96
        %v5119 = vpop.permute.xlu0 %5118
        %v5124 = vunpack.c.l.b16 %v5068
        %v5125 = vunpack.c.l.b16 %v5069
        %v5126 = vunpack.c.l.b16 %v5070
        %v5127 = vunpack.c.l.b16 %v5071
        %v5128 = vpack.c.b16 %v5125, %v5124
        %v5129 = vpack.c.b16 %v5127, %v5126
        %v5133 = vsel %vm347, %v5089, 0
        %v5136 = vsel %vm347, %v5091, 0
        %v5139 = vsel %vm347, %v5093, 0
        %v5142 = vsel %vm347, %v5095, 0
        %v5145 = vsel %vm347, %v5097, 0
        %v5148 = vsel %vm347, %v5099, 0
        %v5151 = vsel %vm347, %v5101, 0
        %v5154 = vsel %vm347, %v5103, 0
        %v5157 = vsel %vm347, %v5105, 0
        %v5160 = vsel %vm347, %v5107, 0
        %v5163 = vsel %vm347, %v5109, 0
        %v5166 = vsel %vm347, %v5111, 0
        %v5169 = vsel %vm347, %v5113, 0
        %v5172 = vsel %vm347, %v5115, 0
        %v5175 = vsel %vm347, %v5117, 0
        %v5178 = vsel %vm347, %v5119, 0
        %5180 = vmatprep.subr.bf16.mxu0 0
        %5181 = vmatpush1.bf16.msra.mxu0 %v5128
        %5182 = vmatprep.subr.bf16.mxu0 0
        %5183 = vmatpush1.bf16.msra.mxu0 %v5129
        %5184 = vmatprep.subr.bf16.mxu0 0
        %5185 = vmatpush1.bf16.msra.mxu0 0
        %5186 = vmatprep.subr.bf16.mxu0 0
        %5187 = vmatpush1.bf16.msra.mxu0 0
        %5188 = vmatprep.subr.bf16.mxu0 0
        %5189 = vmatpush1.bf16.msra.mxu0 0
        %5190 = vmatprep.subr.bf16.mxu0 0
        %5191 = vmatpush1.bf16.msra.mxu0 0
        %5192 = vmatprep.subr.bf16.mxu0 0
        %5193 = vmatpush1.bf16.msra.mxu0 0
        %5194 = vmatprep.subr.bf16.mxu0 0
        %5195 = vmatpush1.bf16.msra.mxu0 0
        %5196 = vmatprep.subr.bf16.mxu0 0
        %5197 = vmatpush1.bf16.msra.mxu0 0
        %5198 = vmatprep.subr.bf16.mxu0 0
        %5199 = vmatpush1.bf16.msra.mxu0 0
        %5200 = vmatprep.subr.bf16.mxu0 0
        %5201 = vmatpush1.bf16.msra.mxu0 0
        %5202 = vmatprep.subr.bf16.mxu0 0
        %5203 = vmatpush1.bf16.msra.mxu0 0
        %5204 = vmatprep.subr.bf16.mxu0 0
        %5205 = vmatpush1.bf16.msra.mxu0 0
        %5206 = vmatprep.subr.bf16.mxu0 0
        %5207 = vmatpush1.bf16.msra.mxu0 0
        %5208 = vmatprep.subr.bf16.mxu0 0
        %5209 = vmatpush1.bf16.msra.mxu0 0
        %5210 = vmatprep.subr.bf16.mxu0 0
        %5211 = vmatpush1.bf16.msra.mxu0 0
        %5212 = vmatprep.mubr.bf16.mxu0 0
        %5213 = vmatmul.mubr.bf16.gmra.mrb[0].mxu0 %v5133
        %v5214 = vpop.f32.mrb[0].mxu0
        %v5215 = vadd.f32 0.0, %v5214
        %v5216 = vpop.f32.mrb[0].mxu0
        %v5217 = vpop.f32.mrb[0].mxu0
        %v5218 = vadd.f32 0.0, %v5217
        %v5219 = vpop.f32.mrb[0].mxu0
        %5220 = vmatprep.mubr.bf16.mxu0 0
        %5221 = vmatmul.mubr.bf16.gmra.mrb[0].mxu0 %v5136
        %v5222 = vpop.f32.mrb[0].mxu0
        %v5223 = vadd.f32 0.0, %v5222
        %v5224 = vpop.f32.mrb[0].mxu0
        %v5225 = vpop.f32.mrb[0].mxu0
        %v5226 = vadd.f32 0.0, %v5225
        %v5227 = vpop.f32.mrb[0].mxu0
        %5228 = vmatprep.mubr.bf16.mxu0 0
        %5229 = vmatmul.mubr.bf16.gmra.mrb[0].mxu0 %v5139
        %v5230 = vpop.f32.mrb[0].mxu0
        %v5231 = vadd.f32 0.0, %v5230
        %v5232 = vpop.f32.mrb[0].mxu0
        %v5233 = vpop.f32.mrb[0].mxu0
        %v5234 = vadd.f32 0.0, %v5233
        %v5235 = vpop.f32.mrb[0].mxu0
        %5236 = vmatprep.mubr.bf16.mxu0 0
        %5237 = vmatmul.mubr.bf16.gmra.mrb[0].mxu0 %v5142
        %v5238 = vpop.f32.mrb[0].mxu0
        %v5239 = vadd.f32 0.0, %v5238
        %v5240 = vpop.f32.mrb[0].mxu0
        %v5241 = vpop.f32.mrb[0].mxu0
        %v5242 = vadd.f32 0.0, %v5241
        %v5243 = vpop.f32.mrb[0].mxu0
        %5244 = vmatprep.mubr.bf16.mxu0 0
        %5245 = vmatmul.mubr.bf16.gmra.mrb[0].mxu0 %v5145
        %v5246 = vpop.f32.mrb[0].mxu0
        %v5247 = vadd.f32 0.0, %v5246
        %v5248 = vpop.f32.mrb[0].mxu0
        %v5249 = vpop.f32.mrb[0].mxu0
        %v5250 = vadd.f32 0.0, %v5249
        %v5251 = vpop.f32.mrb[0].mxu0
        %5252 = vmatprep.mubr.bf16.mxu0 0
        %5253 = vmatmul.mubr.bf16.gmra.mrb[0].mxu0 %v5148
        %v5254 = vpop.f32.mrb[0].mxu0
        %v5255 = vadd.f32 0.0, %v5254
        %v5256 = vpop.f32.mrb[0].mxu0
        %v5257 = vpop.f32.mrb[0].mxu0
        %v5258 = vadd.f32 0.0, %v5257
        %v5259 = vpop.f32.mrb[0].mxu0
        %5260 = vmatprep.mubr.bf16.mxu0 0
        %5261 = vmatmul.mubr.bf16.gmra.mrb[0].mxu0 %v5151
        %v5262 = vpop.f32.mrb[0].mxu0
        %v5263 = vadd.f32 0.0, %v5262
        %v5264 = vpop.f32.mrb[0].mxu0
        %v5265 = vpop.f32.mrb[0].mxu0
        %v5266 = vadd.f32 0.0, %v5265
        %v5267 = vpop.f32.mrb[0].mxu0
        %5268 = vmatprep.mubr.bf16.mxu0 0
        %5269 = vmatmul.mubr.bf16.gmra.mrb[0].mxu0 %v5154
        %v5270 = vpop.f32.mrb[0].mxu0
        %v5271 = vadd.f32 0.0, %v5270
        %v5272 = vpop.f32.mrb[0].mxu0
        %v5273 = vpop.f32.mrb[0].mxu0
        %v5274 = vadd.f32 0.0, %v5273
        %v5275 = vpop.f32.mrb[0].mxu0
        %5276 = vmatprep.mubr.bf16.mxu0 0
        %5277 = vmatmul.mubr.bf16.gmra.mrb[0].mxu0 %v5157
        %v5278 = vpop.f32.mrb[0].mxu0
        %v5279 = vadd.f32 0.0, %v5278
        %v5280 = vpop.f32.mrb[0].mxu0
        %v5281 = vpop.f32.mrb[0].mxu0
        %v5282 = vadd.f32 0.0, %v5281
        %v5283 = vpop.f32.mrb[0].mxu0
        %5284 = vmatprep.mubr.bf16.mxu0 0
        %5285 = vmatmul.mubr.bf16.gmra.mrb[0].mxu0 %v5160
        %v5286 = vpop.f32.mrb[0].mxu0
        %v5287 = vadd.f32 0.0, %v5286
        %v5288 = vpop.f32.mrb[0].mxu0
        %v5289 = vpop.f32.mrb[0].mxu0
        %v5290 = vadd.f32 0.0, %v5289
        %v5291 = vpop.f32.mrb[0].mxu0
        %5292 = vmatprep.mubr.bf16.mxu0 0
        %5293 = vmatmul.mubr.bf16.gmra.mrb[0].mxu0 %v5163
        %v5294 = vpop.f32.mrb[0].mxu0
        %v5295 = vadd.f32 0.0, %v5294
        %v5296 = vpop.f32.mrb[0].mxu0
        %v5297 = vpop.f32.mrb[0].mxu0
        %v5298 = vadd.f32 0.0, %v5297
        %v5299 = vpop.f32.mrb[0].mxu0
        %5300 = vmatprep.mubr.bf16.mxu0 0
        %5301 = vmatmul.mubr.bf16.gmra.mrb[0].mxu0 %v5166
        %v5302 = vpop.f32.mrb[0].mxu0
        %v5303 = vadd.f32 0.0, %v5302
        %v5304 = vpop.f32.mrb[0].mxu0
        %v5305 = vpop.f32.mrb[0].mxu0
        %v5306 = vadd.f32 0.0, %v5305
        %v5307 = vpop.f32.mrb[0].mxu0
        %5308 = vmatprep.mubr.bf16.mxu0 0
        %5309 = vmatmul.mubr.bf16.gmra.mrb[0].mxu0 %v5169
        %v5310 = vpop.f32.mrb[0].mxu0
        %v5311 = vadd.f32 0.0, %v5310
        %v5312 = vpop.f32.mrb[0].mxu0
        %v5313 = vpop.f32.mrb[0].mxu0
        %v5314 = vadd.f32 0.0, %v5313
        %v5315 = vpop.f32.mrb[0].mxu0
        %5316 = vmatprep.mubr.bf16.mxu0 0
        %5317 = vmatmul.mubr.bf16.gmra.mrb[0].mxu0 %v5172
        %v5318 = vpop.f32.mrb[0].mxu0
        %v5319 = vadd.f32 0.0, %v5318
        %v5320 = vpop.f32.mrb[0].mxu0
        %v5321 = vpop.f32.mrb[0].mxu0
        %v5322 = vadd.f32 0.0, %v5321
        %v5323 = vpop.f32.mrb[0].mxu0
        %5324 = vmatprep.mubr.bf16.mxu0 0
        %5325 = vmatmul.mubr.bf16.gmra.mrb[0].mxu0 %v5175
        %v5326 = vpop.f32.mrb[0].mxu0
        %v5327 = vadd.f32 0.0, %v5326
        %v5328 = vpop.f32.mrb[0].mxu0
        %v5329 = vpop.f32.mrb[0].mxu0
        %v5330 = vadd.f32 0.0, %v5329
        %v5331 = vpop.f32.mrb[0].mxu0
        %5332 = vmatprep.mubr.bf16.mxu0 0
        %5333 = vmatmul.mubr.bf16.gmra.mrb[0].mxu0 %v5178
        %v5334 = vpop.f32.mrb[0].mxu0
        %v5335 = vadd.f32 0.0, %v5334
        %v5336 = vpop.f32.mrb[0].mxu0
        %v5337 = vpop.f32.mrb[0].mxu0
        %v5338 = vadd.f32 0.0, %v5337
        %v5339 = vpop.f32.mrb[0].mxu0
        %5340 = vdwg.mxu0
        %v5345 = vunpack.c.l.b16 %v2899
        %v5346 = vunpack.c.l.b16 %v2900
        %v5347 = vunpack.c.l.b16 %v2901
        %v5348 = vunpack.c.l.b16 %v2902
        %v5349 = vpack.c.b16 %v5346, %v5345
        %v5350 = vpack.c.b16 %v5348, %v5347
        %v5354 = vsel %vm347, %v2883, 0
        %v5357 = vsel %vm347, %v2884, 0
        %v5360 = vsel %vm347, %v2885, 0
        %v5363 = vsel %vm347, %v2886, 0
        %v5366 = vsel %vm347, %v2887, 0
        %v5369 = vsel %vm347, %v2888, 0
        %v5372 = vsel %vm347, %v2889, 0
        %v5375 = vsel %vm347, %v2890, 0
        %v5378 = vsel %vm347, %v2891, 0
        %v5381 = vsel %vm347, %v2892, 0
        %v5384 = vsel %vm347, %v2893, 0
        %v5387 = vsel %vm347, %v2894, 0
        %v5390 = vsel %vm347, %v2895, 0
        %v5393 = vsel %vm347, %v2896, 0
        %v5396 = vsel %vm347, %v2897, 0
        %v5399 = vsel %vm347, %v2898, 0
        %5401 = vmatprep.subr.bf16.mxu0 0
        %5402 = vmatpush1.bf16.msra.mxu0 %v5349
        %5403 = vmatprep.subr.bf16.mxu0 0
        %5404 = vmatpush1.bf16.msra.mxu0 %v5350
        %5405 = vmatprep.subr.bf16.mxu0 0
        %5406 = vmatpush1.bf16.msra.mxu0 0
        %5407 = vmatprep.subr.bf16.mxu0 0
        %5408 = vmatpush1.bf16.msra.mxu0 0
        %5409 = vmatprep.subr.bf16.mxu0 0
        %5410 = vmatpush1.bf16.msra.mxu0 0
        %5411 = vmatprep.subr.bf16.mxu0 0
        %5412 = vmatpush1.bf16.msra.mxu0 0
        %5413 = vmatprep.subr.bf16.mxu0 0
        %5414 = vmatpush1.bf16.msra.mxu0 0
        %5415 = vmatprep.subr.bf16.mxu0 0
        %5416 = vmatpush1.bf16.msra.mxu0 0
        %5417 = vmatprep.subr.bf16.mxu0 0
        %5418 = vmatpush1.bf16.msra.mxu0 0
        %5419 = vmatprep.subr.bf16.mxu0 0
        %5420 = vmatpush1.bf16.msra.mxu0 0
        %5421 = vmatprep.subr.bf16.mxu0 0
        %5422 = vmatpush1.bf16.msra.mxu0 0
        %5423 = vmatprep.subr.bf16.mxu0 0
        %5424 = vmatpush1.bf16.msra.mxu0 0
        %5425 = vmatprep.subr.bf16.mxu0 0
        %5426 = vmatpush1.bf16.msra.mxu0 0
        %5427 = vmatprep.subr.bf16.mxu0 0
        %5428 = vmatpush1.bf16.msra.mxu0 0
        %5429 = vmatprep.subr.bf16.mxu0 0
        %5430 = vmatpush1.bf16.msra.mxu0 0
        %5431 = vmatprep.subr.bf16.mxu0 0
        %5432 = vmatpush1.bf16.msra.mxu0 0
        %5433 = vmatprep.mubr.bf16.mxu0 0
        %5434 = vmatmul.mubr.bf16.gmra.mrb[0].mxu0 %v5354
        %v5435 = vpop.f32.mrb[0].mxu0
        %v5436 = vadd.f32 %v5215, %v5435
        %v5437 = vpop.f32.mrb[0].mxu0
        %v5438 = vpop.f32.mrb[0].mxu0
        %v5439 = vadd.f32 %v5218, %v5438
        %v5440 = vpop.f32.mrb[0].mxu0
        %5441 = vmatprep.mubr.bf16.mxu0 0
        %5442 = vmatmul.mubr.bf16.gmra.mrb[0].mxu0 %v5357
        %v5443 = vpop.f32.mrb[0].mxu0
        %v5444 = vadd.f32 %v5223, %v5443
        %v5445 = vpop.f32.mrb[0].mxu0
        %v5446 = vpop.f32.mrb[0].mxu0
        %v5447 = vadd.f32 %v5226, %v5446
        %v5448 = vpop.f32.mrb[0].mxu0
        %5449 = vmatprep.mubr.bf16.mxu0 0
        %5450 = vmatmul.mubr.bf16.gmra.mrb[0].mxu0 %v5360
        %v5451 = vpop.f32.mrb[0].mxu0
        %v5452 = vadd.f32 %v5231, %v5451
        %v5453 = vpop.f32.mrb[0].mxu0
        %v5454 = vpop.f32.mrb[0].mxu0
        %v5455 = vadd.f32 %v5234, %v5454
        %v5456 = vpop.f32.mrb[0].mxu0
        %5457 = vmatprep.mubr.bf16.mxu0 0
        %5458 = vmatmul.mubr.bf16.gmra.mrb[0].mxu0 %v5363
        %v5459 = vpop.f32.mrb[0].mxu0
        %v5460 = vadd.f32 %v5239, %v5459
        %v5461 = vpop.f32.mrb[0].mxu0
        %v5462 = vpop.f32.mrb[0].mxu0
        %v5463 = vadd.f32 %v5242, %v5462
        %v5464 = vpop.f32.mrb[0].mxu0
        %5465 = vmatprep.mubr.bf16.mxu0 0
        %5466 = vmatmul.mubr.bf16.gmra.mrb[0].mxu0 %v5366
        %v5467 = vpop.f32.mrb[0].mxu0
        %v5468 = vadd.f32 %v5247, %v5467
        %v5469 = vpop.f32.mrb[0].mxu0
        %v5470 = vpop.f32.mrb[0].mxu0
        %v5471 = vadd.f32 %v5250, %v5470
        %v5472 = vpop.f32.mrb[0].mxu0
        %5473 = vmatprep.mubr.bf16.mxu0 0
        %5474 = vmatmul.mubr.bf16.gmra.mrb[0].mxu0 %v5369
        %v5475 = vpop.f32.mrb[0].mxu0
        %v5476 = vadd.f32 %v5255, %v5475
        %v5477 = vpop.f32.mrb[0].mxu0
        %v5478 = vpop.f32.mrb[0].mxu0
        %v5479 = vadd.f32 %v5258, %v5478
        %v5480 = vpop.f32.mrb[0].mxu0
        %5481 = vmatprep.mubr.bf16.mxu0 0
        %5482 = vmatmul.mubr.bf16.gmra.mrb[0].mxu0 %v5372
        %v5483 = vpop.f32.mrb[0].mxu0
        %v5484 = vadd.f32 %v5263, %v5483
        %v5485 = vpop.f32.mrb[0].mxu0
        %v5486 = vpop.f32.mrb[0].mxu0
        %v5487 = vadd.f32 %v5266, %v5486
        %v5488 = vpop.f32.mrb[0].mxu0
        %5489 = vmatprep.mubr.bf16.mxu0 0
        %5490 = vmatmul.mubr.bf16.gmra.mrb[0].mxu0 %v5375
        %v5491 = vpop.f32.mrb[0].mxu0
        %v5492 = vadd.f32 %v5271, %v5491
        %v5493 = vpop.f32.mrb[0].mxu0
        %v5494 = vpop.f32.mrb[0].mxu0
        %v5495 = vadd.f32 %v5274, %v5494
        %v5496 = vpop.f32.mrb[0].mxu0
        %5497 = vmatprep.mubr.bf16.mxu0 0
        %5498 = vmatmul.mubr.bf16.gmra.mrb[0].mxu0 %v5378
        %v5499 = vpop.f32.mrb[0].mxu0
        %v5500 = vadd.f32 %v5279, %v5499
        %v5501 = vpop.f32.mrb[0].mxu0
        %v5502 = vpop.f32.mrb[0].mxu0
        %v5503 = vadd.f32 %v5282, %v5502
        %v5504 = vpop.f32.mrb[0].mxu0
        %5505 = vmatprep.mubr.bf16.mxu0 0
        %5506 = vmatmul.mubr.bf16.gmra.mrb[0].mxu0 %v5381
        %v5507 = vpop.f32.mrb[0].mxu0
        %v5508 = vadd.f32 %v5287, %v5507
        %v5509 = vpop.f32.mrb[0].mxu0
        %v5510 = vpop.f32.mrb[0].mxu0
        %v5511 = vadd.f32 %v5290, %v5510
        %v5512 = vpop.f32.mrb[0].mxu0
        %5513 = vmatprep.mubr.bf16.mxu0 0
        %5514 = vmatmul.mubr.bf16.gmra.mrb[0].mxu0 %v5384
        %v5515 = vpop.f32.mrb[0].mxu0
        %v5516 = vadd.f32 %v5295, %v5515
        %v5517 = vpop.f32.mrb[0].mxu0
        %v5518 = vpop.f32.mrb[0].mxu0
        %v5519 = vadd.f32 %v5298, %v5518
        %v5520 = vpop.f32.mrb[0].mxu0
        %5521 = vmatprep.mubr.bf16.mxu0 0
        %5522 = vmatmul.mubr.bf16.gmra.mrb[0].mxu0 %v5387
        %v5523 = vpop.f32.mrb[0].mxu0
        %v5524 = vadd.f32 %v5303, %v5523
        %v5525 = vpop.f32.mrb[0].mxu0
        %v5526 = vpop.f32.mrb[0].mxu0
        %v5527 = vadd.f32 %v5306, %v5526
        %v5528 = vpop.f32.mrb[0].mxu0
        %5529 = vmatprep.mubr.bf16.mxu0 0
        %5530 = vmatmul.mubr.bf16.gmra.mrb[0].mxu0 %v5390
        %v5531 = vpop.f32.mrb[0].mxu0
        %v5532 = vadd.f32 %v5311, %v5531
        %v5533 = vpop.f32.mrb[0].mxu0
        %v5534 = vpop.f32.mrb[0].mxu0
        %v5535 = vadd.f32 %v5314, %v5534
        %v5536 = vpop.f32.mrb[0].mxu0
        %5537 = vmatprep.mubr.bf16.mxu0 0
        %5538 = vmatmul.mubr.bf16.gmra.mrb[0].mxu0 %v5393
        %v5539 = vpop.f32.mrb[0].mxu0
        %v5540 = vadd.f32 %v5319, %v5539
        %v5541 = vpop.f32.mrb[0].mxu0
        %v5542 = vpop.f32.mrb[0].mxu0
        %v5543 = vadd.f32 %v5322, %v5542
        %v5544 = vpop.f32.mrb[0].mxu0
        %5545 = vmatprep.mubr.bf16.mxu0 0
        %5546 = vmatmul.mubr.bf16.gmra.mrb[0].mxu0 %v5396
        %v5547 = vpop.f32.mrb[0].mxu0
        %v5548 = vadd.f32 %v5327, %v5547
        %v5549 = vpop.f32.mrb[0].mxu0
        %v5550 = vpop.f32.mrb[0].mxu0
        %v5551 = vadd.f32 %v5330, %v5550
        %v5552 = vpop.f32.mrb[0].mxu0
        %5553 = vmatprep.mubr.bf16.mxu0 0
        %5554 = vmatmul.mubr.bf16.gmra.mrb[0].mxu0 %v5399
        %v5555 = vpop.f32.mrb[0].mxu0
        %v5556 = vadd.f32 %v5335, %v5555
        %v5557 = vpop.f32.mrb[0].mxu0
        %v5558 = vpop.f32.mrb[0].mxu0
        %v5559 = vadd.f32 %v5338, %v5558
        %v5560 = vpop.f32.mrb[0].mxu0
        %5561 = vdwg.mxu0
        %s5562 = scalar_lea.vmem %s248, 16
        %v5563 = vld [vmem:[%s5562] sm:$0xf]
        %v5564 = vld [vmem:[%s5562 + $0x4] sm:$0xf]
        %v5565 = vunpack.c.l.bf16 %v5563
        %v5566 = vunpack.c.l.bf16 %v5564
        %5567 = vrot.lane.b32.xlu0 %v974, 64
        %v5568 = vpop.permute.xlu0 %5567
        %5569 = vrot.lane.b32.xlu0 %v990, 64
        %v5570 = vpop.permute.xlu0 %5569
        %v5572 = vsel %vm347, %v5568, 0
        %v5575 = vsel %vm347, %v5570, 0
        %5577 = vmatprep.subr.bf16.mxu0 0
        %5578 = vmatpush1.bf16.xpose.msra.mxu0 %v5575
        %5579 = vmatprep.subr.bf16.mxu0 0
        %5580 = vmatpush1.bf16.xpose.msra.mxu0 0
        %5581 = vmatprep.subr.bf16.mxu0 0
        %5582 = vmatpush1.bf16.xpose.msra.mxu0 0
        %5583 = vmatprep.subr.bf16.mxu0 0
        %5584 = vmatpush1.bf16.xpose.msra.mxu0 0
        %5585 = vmatprep.subr.bf16.mxu0 0
        %5586 = vmatpush1.bf16.xpose.msra.mxu0 0
        %5587 = vmatprep.subr.bf16.mxu0 0
        %5588 = vmatpush1.bf16.xpose.msra.mxu0 0
        %5589 = vmatprep.subr.bf16.mxu0 0
        %5590 = vmatpush1.bf16.xpose.msra.mxu0 0
        %5591 = vmatprep.subr.bf16.mxu0 0
        %5592 = vmatpush1.bf16.xpose.msra.mxu0 0
        %5593 = vmatprep.subr.bf16.mxu0 0
        %5594 = vmatpush1.bf16.xpose.msra.mxu0 0
        %5595 = vmatprep.subr.bf16.mxu0 0
        %5596 = vmatpush1.bf16.xpose.msra.mxu0 0
        %5597 = vmatprep.subr.bf16.mxu0 0
        %5598 = vmatpush1.bf16.xpose.msra.mxu0 0
        %5599 = vmatprep.subr.bf16.mxu0 0
        %5600 = vmatpush1.bf16.xpose.msra.mxu0 0
        %5601 = vmatprep.subr.bf16.mxu0 0
        %5602 = vmatpush1.bf16.xpose.msra.mxu0 0
        %5603 = vmatprep.subr.bf16.mxu0 0
        %5604 = vmatpush1.bf16.xpose.msra.mxu0 0
        %5605 = vmatprep.subr.bf16.mxu0 0
        %5606 = vmatpush1.bf16.xpose.msra.mxu0 0
        %5607 = vmatprep.subr.bf16.mxu0 0
        %5608 = vmatpush1.bf16.xpose.msra.mxu0 0
        %5609 = vmatprep.mubr.bf16.mxu0 0
        %5610 = vmatmul.mubr.bf16.gmra.mrb[0].mxu0 %v5572
        %v5611 = vpop.f32.mrb[0].mxu0
        %v5612 = vadd.f32 %v5565, %v5611
        %v5613 = vpop.f32.mrb[0].mxu0
        %v5614 = vpop.f32.mrb[0].mxu0
        %v5615 = vadd.f32 %v5566, %v5614
        %v5616 = vpop.f32.mrb[0].mxu0
        %5617 = vdwg.mxu0
        %5618 = vrot.lane.b32.xlu0 %v975, 64
        %v5619 = vpop.permute.xlu0 %5618
        %5620 = vrot.lane.b32.xlu0 %v991, 64
        %v5621 = vpop.permute.xlu0 %5620
        %v5623 = vsel %vm347, %v5619, 0
        %v5626 = vsel %vm347, %v5621, 0
        %5628 = vmatprep.subr.bf16.mxu0 0
        %5629 = vmatpush1.bf16.xpose.msra.mxu0 %v5626
        %5630 = vmatprep.subr.bf16.mxu0 0
        %5631 = vmatpush1.bf16.xpose.msra.mxu0 0
        %5632 = vmatprep.subr.bf16.mxu0 0
        %5633 = vmatpush1.bf16.xpose.msra.mxu0 0
        %5634 = vmatprep.subr.bf16.mxu0 0
        %5635 = vmatpush1.bf16.xpose.msra.mxu0 0
        %5636 = vmatprep.subr.bf16.mxu0 0
        %5637 = vmatpush1.bf16.xpose.msra.mxu0 0
        %5638 = vmatprep.subr.bf16.mxu0 0
        %5639 = vmatpush1.bf16.xpose.msra.mxu0 0
        %5640 = vmatprep.subr.bf16.mxu0 0
        %5641 = vmatpush1.bf16.xpose.msra.mxu0 0
        %5642 = vmatprep.subr.bf16.mxu0 0
        %5643 = vmatpush1.bf16.xpose.msra.mxu0 0
        %5644 = vmatprep.subr.bf16.mxu0 0
        %5645 = vmatpush1.bf16.xpose.msra.mxu0 0
        %5646 = vmatprep.subr.bf16.mxu0 0
        %5647 = vmatpush1.bf16.xpose.msra.mxu0 0
        %5648 = vmatprep.subr.bf16.mxu0 0
        %5649 = vmatpush1.bf16.xpose.msra.mxu0 0
        %5650 = vmatprep.subr.bf16.mxu0 0
        %5651 = vmatpush1.bf16.xpose.msra.mxu0 0
        %5652 = vmatprep.subr.bf16.mxu0 0
        %5653 = vmatpush1.bf16.xpose.msra.mxu0 0
        %5654 = vmatprep.subr.bf16.mxu0 0
        %5655 = vmatpush1.bf16.xpose.msra.mxu0 0
        %5656 = vmatprep.subr.bf16.mxu0 0
        %5657 = vmatpush1.bf16.xpose.msra.mxu0 0
        %5658 = vmatprep.subr.bf16.mxu0 0
        %5659 = vmatpush1.bf16.xpose.msra.mxu0 0
        %5660 = vmatprep.mubr.bf16.mxu0 0
        %5661 = vmatmul.mubr.bf16.gmra.mrb[0].mxu0 %v5623
        %v5662 = vpop.f32.mrb[0].mxu0
        %v5663 = vadd.f32 %v5565, %v5662
        %v5664 = vpop.f32.mrb[0].mxu0
        %v5665 = vpop.f32.mrb[0].mxu0
        %v5666 = vadd.f32 %v5566, %v5665
        %v5667 = vpop.f32.mrb[0].mxu0
        %5668 = vdwg.mxu0
        %5669 = vrot.lane.b32.xlu0 %v976, 64
        %v5670 = vpop.permute.xlu0 %5669
        %5671 = vrot.lane.b32.xlu0 %v992, 64
        %v5672 = vpop.permute.xlu0 %5671
        %v5674 = vsel %vm347, %v5670, 0
        %v5677 = vsel %vm347, %v5672, 0
        %5679 = vmatprep.subr.bf16.mxu0 0
        %5680 = vmatpush1.bf16.xpose.msra.mxu0 %v5677
        %5681 = vmatprep.subr.bf16.mxu0 0
        %5682 = vmatpush1.bf16.xpose.msra.mxu0 0
        %5683 = vmatprep.subr.bf16.mxu0 0
        %5684 = vmatpush1.bf16.xpose.msra.mxu0 0
        %5685 = vmatprep.subr.bf16.mxu0 0
        %5686 = vmatpush1.bf16.xpose.msra.mxu0 0
        %5687 = vmatprep.subr.bf16.mxu0 0
        %5688 = vmatpush1.bf16.xpose.msra.mxu0 0
        %5689 = vmatprep.subr.bf16.mxu0 0
        %5690 = vmatpush1.bf16.xpose.msra.mxu0 0
        %5691 = vmatprep.subr.bf16.mxu0 0
        %5692 = vmatpush1.bf16.xpose.msra.mxu0 0
        %5693 = vmatprep.subr.bf16.mxu0 0
        %5694 = vmatpush1.bf16.xpose.msra.mxu0 0
        %5695 = vmatprep.subr.bf16.mxu0 0
        %5696 = vmatpush1.bf16.xpose.msra.mxu0 0
        %5697 = vmatprep.subr.bf16.mxu0 0
        %5698 = vmatpush1.bf16.xpose.msra.mxu0 0
        %5699 = vmatprep.subr.bf16.mxu0 0
        %5700 = vmatpush1.bf16.xpose.msra.mxu0 0
        %5701 = vmatprep.subr.bf16.mxu0 0
        %5702 = vmatpush1.bf16.xpose.msra.mxu0 0
        %5703 = vmatprep.subr.bf16.mxu0 0
        %5704 = vmatpush1.bf16.xpose.msra.mxu0 0
        %5705 = vmatprep.subr.bf16.mxu0 0
        %5706 = vmatpush1.bf16.xpose.msra.mxu0 0
        %5707 = vmatprep.subr.bf16.mxu0 0
        %5708 = vmatpush1.bf16.xpose.msra.mxu0 0
        %5709 = vmatprep.subr.bf16.mxu0 0
        %5710 = vmatpush1.bf16.xpose.msra.mxu0 0
        %5711 = vmatprep.mubr.bf16.mxu0 0
        %5712 = vmatmul.mubr.bf16.gmra.mrb[0].mxu0 %v5674
        %v5713 = vpop.f32.mrb[0].mxu0
        %v5714 = vadd.f32 %v5565, %v5713
        %v5715 = vpop.f32.mrb[0].mxu0
        %v5716 = vpop.f32.mrb[0].mxu0
        %v5717 = vadd.f32 %v5566, %v5716
        %v5718 = vpop.f32.mrb[0].mxu0
        %5719 = vdwg.mxu0
        %5720 = vrot.lane.b32.xlu0 %v977, 64
        %v5721 = vpop.permute.xlu0 %5720
        %5722 = vrot.lane.b32.xlu0 %v993, 64
        %v5723 = vpop.permute.xlu0 %5722
        %v5725 = vsel %vm347, %v5721, 0
        %v5728 = vsel %vm347, %v5723, 0
        %5730 = vmatprep.subr.bf16.mxu0 0
        %5731 = vmatpush1.bf16.xpose.msra.mxu0 %v5728
        %5732 = vmatprep.subr.bf16.mxu0 0
        %5733 = vmatpush1.bf16.xpose.msra.mxu0 0
        %5734 = vmatprep.subr.bf16.mxu0 0
        %5735 = vmatpush1.bf16.xpose.msra.mxu0 0
        %5736 = vmatprep.subr.bf16.mxu0 0
        %5737 = vmatpush1.bf16.xpose.msra.mxu0 0
        %5738 = vmatprep.subr.bf16.mxu0 0
        %5739 = vmatpush1.bf16.xpose.msra.mxu0 0
        %5740 = vmatprep.subr.bf16.mxu0 0
        %5741 = vmatpush1.bf16.xpose.msra.mxu0 0
        %5742 = vmatprep.subr.bf16.mxu0 0
        %5743 = vmatpush1.bf16.xpose.msra.mxu0 0
        %5744 = vmatprep.subr.bf16.mxu0 0
        %5745 = vmatpush1.bf16.xpose.msra.mxu0 0
        %5746 = vmatprep.subr.bf16.mxu0 0
        %5747 = vmatpush1.bf16.xpose.msra.mxu0 0
        %5748 = vmatprep.subr.bf16.mxu0 0
        %5749 = vmatpush1.bf16.xpose.msra.mxu0 0
        %5750 = vmatprep.subr.bf16.mxu0 0
        %5751 = vmatpush1.bf16.xpose.msra.mxu0 0
        %5752 = vmatprep.subr.bf16.mxu0 0
        %5753 = vmatpush1.bf16.xpose.msra.mxu0 0
        %5754 = vmatprep.subr.bf16.mxu0 0
        %5755 = vmatpush1.bf16.xpose.msra.mxu0 0
        %5756 = vmatprep.subr.bf16.mxu0 0
        %5757 = vmatpush1.bf16.xpose.msra.mxu0 0
        %5758 = vmatprep.subr.bf16.mxu0 0
        %5759 = vmatpush1.bf16.xpose.msra.mxu0 0
        %5760 = vmatprep.subr.bf16.mxu0 0
        %5761 = vmatpush1.bf16.xpose.msra.mxu0 0
        %5762 = vmatprep.mubr.bf16.mxu0 0
        %5763 = vmatmul.mubr.bf16.gmra.mrb[0].mxu0 %v5725
        %v5764 = vpop.f32.mrb[0].mxu0
        %v5765 = vadd.f32 %v5565, %v5764
        %v5766 = vpop.f32.mrb[0].mxu0
        %v5767 = vpop.f32.mrb[0].mxu0
        %v5768 = vadd.f32 %v5566, %v5767
        %v5769 = vpop.f32.mrb[0].mxu0
        %5770 = vdwg.mxu0
        %5771 = vrot.lane.b32.xlu0 %v978, 64
        %v5772 = vpop.permute.xlu0 %5771
        %5773 = vrot.lane.b32.xlu0 %v994, 64
        %v5774 = vpop.permute.xlu0 %5773
        %v5776 = vsel %vm347, %v5772, 0
        %v5779 = vsel %vm347, %v5774, 0
        %5781 = vmatprep.subr.bf16.mxu0 0
        %5782 = vmatpush1.bf16.xpose.msra.mxu0 %v5779
        %5783 = vmatprep.subr.bf16.mxu0 0
        %5784 = vmatpush1.bf16.xpose.msra.mxu0 0
        %5785 = vmatprep.subr.bf16.mxu0 0
        %5786 = vmatpush1.bf16.xpose.msra.mxu0 0
        %5787 = vmatprep.subr.bf16.mxu0 0
        %5788 = vmatpush1.bf16.xpose.msra.mxu0 0
        %5789 = vmatprep.subr.bf16.mxu0 0
        %5790 = vmatpush1.bf16.xpose.msra.mxu0 0
        %5791 = vmatprep.subr.bf16.mxu0 0
        %5792 = vmatpush1.bf16.xpose.msra.mxu0 0
        %5793 = vmatprep.subr.bf16.mxu0 0
        %5794 = vmatpush1.bf16.xpose.msra.mxu0 0
        %5795 = vmatprep.subr.bf16.mxu0 0
        %5796 = vmatpush1.bf16.xpose.msra.mxu0 0
        %5797 = vmatprep.subr.bf16.mxu0 0
        %5798 = vmatpush1.bf16.xpose.msra.mxu0 0
        %5799 = vmatprep.subr.bf16.mxu0 0
        %5800 = vmatpush1.bf16.xpose.msra.mxu0 0
        %5801 = vmatprep.subr.bf16.mxu0 0
        %5802 = vmatpush1.bf16.xpose.msra.mxu0 0
        %5803 = vmatprep.subr.bf16.mxu0 0
        %5804 = vmatpush1.bf16.xpose.msra.mxu0 0
        %5805 = vmatprep.subr.bf16.mxu0 0
        %5806 = vmatpush1.bf16.xpose.msra.mxu0 0
        %5807 = vmatprep.subr.bf16.mxu0 0
        %5808 = vmatpush1.bf16.xpose.msra.mxu0 0
        %5809 = vmatprep.subr.bf16.mxu0 0
        %5810 = vmatpush1.bf16.xpose.msra.mxu0 0
        %5811 = vmatprep.subr.bf16.mxu0 0
        %5812 = vmatpush1.bf16.xpose.msra.mxu0 0
        %5813 = vmatprep.mubr.bf16.mxu0 0
        %5814 = vmatmul.mubr.bf16.gmra.mrb[0].mxu0 %v5776
        %v5815 = vpop.f32.mrb[0].mxu0
        %v5816 = vadd.f32 %v5565, %v5815
        %v5817 = vpop.f32.mrb[0].mxu0
        %v5818 = vpop.f32.mrb[0].mxu0
        %v5819 = vadd.f32 %v5566, %v5818
        %v5820 = vpop.f32.mrb[0].mxu0
        %5821 = vdwg.mxu0
        %5822 = vrot.lane.b32.xlu0 %v979, 64
        %v5823 = vpop.permute.xlu0 %5822
        %5824 = vrot.lane.b32.xlu0 %v995, 64
        %v5825 = vpop.permute.xlu0 %5824
        %v5827 = vsel %vm347, %v5823, 0
        %v5830 = vsel %vm347, %v5825, 0
        %5832 = vmatprep.subr.bf16.mxu0 0
        %5833 = vmatpush1.bf16.xpose.msra.mxu0 %v5830
        %5834 = vmatprep.subr.bf16.mxu0 0
        %5835 = vmatpush1.bf16.xpose.msra.mxu0 0
        %5836 = vmatprep.subr.bf16.mxu0 0
        %5837 = vmatpush1.bf16.xpose.msra.mxu0 0
        %5838 = vmatprep.subr.bf16.mxu0 0
        %5839 = vmatpush1.bf16.xpose.msra.mxu0 0
        %5840 = vmatprep.subr.bf16.mxu0 0
        %5841 = vmatpush1.bf16.xpose.msra.mxu0 0
        %5842 = vmatprep.subr.bf16.mxu0 0
        %5843 = vmatpush1.bf16.xpose.msra.mxu0 0
        %5844 = vmatprep.subr.bf16.mxu0 0
        %5845 = vmatpush1.bf16.xpose.msra.mxu0 0
        %5846 = vmatprep.subr.bf16.mxu0 0
        %5847 = vmatpush1.bf16.xpose.msra.mxu0 0
        %5848 = vmatprep.subr.bf16.mxu0 0
        %5849 = vmatpush1.bf16.xpose.msra.mxu0 0
        %5850 = vmatprep.subr.bf16.mxu0 0
        %5851 = vmatpush1.bf16.xpose.msra.mxu0 0
        %5852 = vmatprep.subr.bf16.mxu0 0
        %5853 = vmatpush1.bf16.xpose.msra.mxu0 0
        %5854 = vmatprep.subr.bf16.mxu0 0
        %5855 = vmatpush1.bf16.xpose.msra.mxu0 0
        %5856 = vmatprep.subr.bf16.mxu0 0
        %5857 = vmatpush1.bf16.xpose.msra.mxu0 0
        %5858 = vmatprep.subr.bf16.mxu0 0
        %5859 = vmatpush1.bf16.xpose.msra.mxu0 0
        %5860 = vmatprep.subr.bf16.mxu0 0
        %5861 = vmatpush1.bf16.xpose.msra.mxu0 0
        %5862 = vmatprep.subr.bf16.mxu0 0
        %5863 = vmatpush1.bf16.xpose.msra.mxu0 0
        %5864 = vmatprep.mubr.bf16.mxu0 0
        %5865 = vmatmul.mubr.bf16.gmra.mrb[0].mxu0 %v5827
        %v5866 = vpop.f32.mrb[0].mxu0
        %v5867 = vadd.f32 %v5565, %v5866
        %v5868 = vpop.f32.mrb[0].mxu0
        %v5869 = vpop.f32.mrb[0].mxu0
        %v5870 = vadd.f32 %v5566, %v5869
        %v5871 = vpop.f32.mrb[0].mxu0
        %5872 = vdwg.mxu0
        %5873 = vrot.lane.b32.xlu0 %v980, 64
        %v5874 = vpop.permute.xlu0 %5873
        %5875 = vrot.lane.b32.xlu0 %v996, 64
        %v5876 = vpop.permute.xlu0 %5875
        %v5878 = vsel %vm347, %v5874, 0
        %v5881 = vsel %vm347, %v5876, 0
        %5883 = vmatprep.subr.bf16.mxu0 0
        %5884 = vmatpush1.bf16.xpose.msra.mxu0 %v5881
        %5885 = vmatprep.subr.bf16.mxu0 0
        %5886 = vmatpush1.bf16.xpose.msra.mxu0 0
        %5887 = vmatprep.subr.bf16.mxu0 0
        %5888 = vmatpush1.bf16.xpose.msra.mxu0 0
        %5889 = vmatprep.subr.bf16.mxu0 0
        %5890 = vmatpush1.bf16.xpose.msra.mxu0 0
        %5891 = vmatprep.subr.bf16.mxu0 0
        %5892 = vmatpush1.bf16.xpose.msra.mxu0 0
        %5893 = vmatprep.subr.bf16.mxu0 0
        %5894 = vmatpush1.bf16.xpose.msra.mxu0 0
        %5895 = vmatprep.subr.bf16.mxu0 0
        %5896 = vmatpush1.bf16.xpose.msra.mxu0 0
        %5897 = vmatprep.subr.bf16.mxu0 0
        %5898 = vmatpush1.bf16.xpose.msra.mxu0 0
        %5899 = vmatprep.subr.bf16.mxu0 0
        %5900 = vmatpush1.bf16.xpose.msra.mxu0 0
        %5901 = vmatprep.subr.bf16.mxu0 0
        %5902 = vmatpush1.bf16.xpose.msra.mxu0 0
        %5903 = vmatprep.subr.bf16.mxu0 0
        %5904 = vmatpush1.bf16.xpose.msra.mxu0 0
        %5905 = vmatprep.subr.bf16.mxu0 0
        %5906 = vmatpush1.bf16.xpose.msra.mxu0 0
        %5907 = vmatprep.subr.bf16.mxu0 0
        %5908 = vmatpush1.bf16.xpose.msra.mxu0 0
        %5909 = vmatprep.subr.bf16.mxu0 0
        %5910 = vmatpush1.bf16.xpose.msra.mxu0 0
        %5911 = vmatprep.subr.bf16.mxu0 0
        %5912 = vmatpush1.bf16.xpose.msra.mxu0 0
        %5913 = vmatprep.subr.bf16.mxu0 0
        %5914 = vmatpush1.bf16.xpose.msra.mxu0 0
        %5915 = vmatprep.mubr.bf16.mxu0 0
        %5916 = vmatmul.mubr.bf16.gmra.mrb[0].mxu0 %v5878
        %v5917 = vpop.f32.mrb[0].mxu0
        %v5918 = vadd.f32 %v5565, %v5917
        %v5919 = vpop.f32.mrb[0].mxu0
        %v5920 = vpop.f32.mrb[0].mxu0
        %v5921 = vadd.f32 %v5566, %v5920
        %v5922 = vpop.f32.mrb[0].mxu0
        %5923 = vdwg.mxu0
        %5924 = vrot.lane.b32.xlu0 %v981, 64
        %v5925 = vpop.permute.xlu0 %5924
        %5926 = vrot.lane.b32.xlu0 %v997, 64
        %v5927 = vpop.permute.xlu0 %5926
        %v5929 = vsel %vm347, %v5925, 0
        %v5932 = vsel %vm347, %v5927, 0
        %5934 = vmatprep.subr.bf16.mxu0 0
        %5935 = vmatpush1.bf16.xpose.msra.mxu0 %v5932
        %5936 = vmatprep.subr.bf16.mxu0 0
        %5937 = vmatpush1.bf16.xpose.msra.mxu0 0
        %5938 = vmatprep.subr.bf16.mxu0 0
        %5939 = vmatpush1.bf16.xpose.msra.mxu0 0
        %5940 = vmatprep.subr.bf16.mxu0 0
        %5941 = vmatpush1.bf16.xpose.msra.mxu0 0
        %5942 = vmatprep.subr.bf16.mxu0 0
        %5943 = vmatpush1.bf16.xpose.msra.mxu0 0
        %5944 = vmatprep.subr.bf16.mxu0 0
        %5945 = vmatpush1.bf16.xpose.msra.mxu0 0
        %5946 = vmatprep.subr.bf16.mxu0 0
        %5947 = vmatpush1.bf16.xpose.msra.mxu0 0
        %5948 = vmatprep.subr.bf16.mxu0 0
        %5949 = vmatpush1.bf16.xpose.msra.mxu0 0
        %5950 = vmatprep.subr.bf16.mxu0 0
        %5951 = vmatpush1.bf16.xpose.msra.mxu0 0
        %5952 = vmatprep.subr.bf16.mxu0 0
        %5953 = vmatpush1.bf16.xpose.msra.mxu0 0
        %5954 = vmatprep.subr.bf16.mxu0 0
        %5955 = vmatpush1.bf16.xpose.msra.mxu0 0
        %5956 = vmatprep.subr.bf16.mxu0 0
        %5957 = vmatpush1.bf16.xpose.msra.mxu0 0
        %5958 = vmatprep.subr.bf16.mxu0 0
        %5959 = vmatpush1.bf16.xpose.msra.mxu0 0
        %5960 = vmatprep.subr.bf16.mxu0 0
        %5961 = vmatpush1.bf16.xpose.msra.mxu0 0
        %5962 = vmatprep.subr.bf16.mxu0 0
        %5963 = vmatpush1.bf16.xpose.msra.mxu0 0
        %5964 = vmatprep.subr.bf16.mxu0 0
        %5965 = vmatpush1.bf16.xpose.msra.mxu0 0
        %5966 = vmatprep.mubr.bf16.mxu0 0
        %5967 = vmatmul.mubr.bf16.gmra.mrb[0].mxu0 %v5929
        %v5968 = vpop.f32.mrb[0].mxu0
        %v5969 = vadd.f32 %v5565, %v5968
        %v5970 = vpop.f32.mrb[0].mxu0
        %v5971 = vpop.f32.mrb[0].mxu0
        %v5972 = vadd.f32 %v5566, %v5971
        %v5973 = vpop.f32.mrb[0].mxu0
        %5974 = vdwg.mxu0
        %5975 = vrot.lane.b32.xlu0 %v982, 64
        %v5976 = vpop.permute.xlu0 %5975
        %5977 = vrot.lane.b32.xlu0 %v998, 64
        %v5978 = vpop.permute.xlu0 %5977
        %v5980 = vsel %vm347, %v5976, 0
        %v5983 = vsel %vm347, %v5978, 0
        %5985 = vmatprep.subr.bf16.mxu0 0
        %5986 = vmatpush1.bf16.xpose.msra.mxu0 %v5983
        %5987 = vmatprep.subr.bf16.mxu0 0
        %5988 = vmatpush1.bf16.xpose.msra.mxu0 0
        %5989 = vmatprep.subr.bf16.mxu0 0
        %5990 = vmatpush1.bf16.xpose.msra.mxu0 0
        %5991 = vmatprep.subr.bf16.mxu0 0
        %5992 = vmatpush1.bf16.xpose.msra.mxu0 0
        %5993 = vmatprep.subr.bf16.mxu0 0
        %5994 = vmatpush1.bf16.xpose.msra.mxu0 0
        %5995 = vmatprep.subr.bf16.mxu0 0
        %5996 = vmatpush1.bf16.xpose.msra.mxu0 0
        %5997 = vmatprep.subr.bf16.mxu0 0
        %5998 = vmatpush1.bf16.xpose.msra.mxu0 0
        %5999 = vmatprep.subr.bf16.mxu0 0
        %6000 = vmatpush1.bf16.xpose.msra.mxu0 0
        %6001 = vmatprep.subr.bf16.mxu0 0
        %6002 = vmatpush1.bf16.xpose.msra.mxu0 0
        %6003 = vmatprep.subr.bf16.mxu0 0
        %6004 = vmatpush1.bf16.xpose.msra.mxu0 0
        %6005 = vmatprep.subr.bf16.mxu0 0
        %6006 = vmatpush1.bf16.xpose.msra.mxu0 0
        %6007 = vmatprep.subr.bf16.mxu0 0
        %6008 = vmatpush1.bf16.xpose.msra.mxu0 0
        %6009 = vmatprep.subr.bf16.mxu0 0
        %6010 = vmatpush1.bf16.xpose.msra.mxu0 0
        %6011 = vmatprep.subr.bf16.mxu0 0
        %6012 = vmatpush1.bf16.xpose.msra.mxu0 0
        %6013 = vmatprep.subr.bf16.mxu0 0
        %6014 = vmatpush1.bf16.xpose.msra.mxu0 0
        %6015 = vmatprep.subr.bf16.mxu0 0
        %6016 = vmatpush1.bf16.xpose.msra.mxu0 0
        %6017 = vmatprep.mubr.bf16.mxu0 0
        %6018 = vmatmul.mubr.bf16.gmra.mrb[0].mxu0 %v5980
        %v6019 = vpop.f32.mrb[0].mxu0
        %v6020 = vadd.f32 %v5565, %v6019
        %v6021 = vpop.f32.mrb[0].mxu0
        %v6022 = vpop.f32.mrb[0].mxu0
        %v6023 = vadd.f32 %v5566, %v6022
        %v6024 = vpop.f32.mrb[0].mxu0
        %6025 = vdwg.mxu0
        %6026 = vrot.lane.b32.xlu0 %v983, 64
        %v6027 = vpop.permute.xlu0 %6026
        %6028 = vrot.lane.b32.xlu0 %v999, 64
        %v6029 = vpop.permute.xlu0 %6028
        %v6031 = vsel %vm347, %v6027, 0
        %v6034 = vsel %vm347, %v6029, 0
        %6036 = vmatprep.subr.bf16.mxu0 0
        %6037 = vmatpush1.bf16.xpose.msra.mxu0 %v6034
        %6038 = vmatprep.subr.bf16.mxu0 0
        %6039 = vmatpush1.bf16.xpose.msra.mxu0 0
        %6040 = vmatprep.subr.bf16.mxu0 0
        %6041 = vmatpush1.bf16.xpose.msra.mxu0 0
        %6042 = vmatprep.subr.bf16.mxu0 0
        %6043 = vmatpush1.bf16.xpose.msra.mxu0 0
        %6044 = vmatprep.subr.bf16.mxu0 0
        %6045 = vmatpush1.bf16.xpose.msra.mxu0 0
        %6046 = vmatprep.subr.bf16.mxu0 0
        %6047 = vmatpush1.bf16.xpose.msra.mxu0 0
        %6048 = vmatprep.subr.bf16.mxu0 0
        %6049 = vmatpush1.bf16.xpose.msra.mxu0 0
        %6050 = vmatprep.subr.bf16.mxu0 0
        %6051 = vmatpush1.bf16.xpose.msra.mxu0 0
        %6052 = vmatprep.subr.bf16.mxu0 0
        %6053 = vmatpush1.bf16.xpose.msra.mxu0 0
        %6054 = vmatprep.subr.bf16.mxu0 0
        %6055 = vmatpush1.bf16.xpose.msra.mxu0 0
        %6056 = vmatprep.subr.bf16.mxu0 0
        %6057 = vmatpush1.bf16.xpose.msra.mxu0 0
        %6058 = vmatprep.subr.bf16.mxu0 0
        %6059 = vmatpush1.bf16.xpose.msra.mxu0 0
        %6060 = vmatprep.subr.bf16.mxu0 0
        %6061 = vmatpush1.bf16.xpose.msra.mxu0 0
        %6062 = vmatprep.subr.bf16.mxu0 0
        %6063 = vmatpush1.bf16.xpose.msra.mxu0 0
        %6064 = vmatprep.subr.bf16.mxu0 0
        %6065 = vmatpush1.bf16.xpose.msra.mxu0 0
        %6066 = vmatprep.subr.bf16.mxu0 0
        %6067 = vmatpush1.bf16.xpose.msra.mxu0 0
        %6068 = vmatprep.mubr.bf16.mxu0 0
        %6069 = vmatmul.mubr.bf16.gmra.mrb[0].mxu0 %v6031
        %v6070 = vpop.f32.mrb[0].mxu0
        %v6071 = vadd.f32 %v5565, %v6070
        %v6072 = vpop.f32.mrb[0].mxu0
        %v6073 = vpop.f32.mrb[0].mxu0
        %v6074 = vadd.f32 %v5566, %v6073
        %v6075 = vpop.f32.mrb[0].mxu0
        %6076 = vdwg.mxu0
        %6077 = vrot.lane.b32.xlu0 %v984, 64
        %v6078 = vpop.permute.xlu0 %6077
        %6079 = vrot.lane.b32.xlu0 %v1000, 64
        %v6080 = vpop.permute.xlu0 %6079
        %v6082 = vsel %vm347, %v6078, 0
        %v6085 = vsel %vm347, %v6080, 0
        %6087 = vmatprep.subr.bf16.mxu0 0
        %6088 = vmatpush1.bf16.xpose.msra.mxu0 %v6085
        %6089 = vmatprep.subr.bf16.mxu0 0
        %6090 = vmatpush1.bf16.xpose.msra.mxu0 0
        %6091 = vmatprep.subr.bf16.mxu0 0
        %6092 = vmatpush1.bf16.xpose.msra.mxu0 0
        %6093 = vmatprep.subr.bf16.mxu0 0
        %6094 = vmatpush1.bf16.xpose.msra.mxu0 0
        %6095 = vmatprep.subr.bf16.mxu0 0
        %6096 = vmatpush1.bf16.xpose.msra.mxu0 0
        %6097 = vmatprep.subr.bf16.mxu0 0
        %6098 = vmatpush1.bf16.xpose.msra.mxu0 0
        %6099 = vmatprep.subr.bf16.mxu0 0
        %6100 = vmatpush1.bf16.xpose.msra.mxu0 0
        %6101 = vmatprep.subr.bf16.mxu0 0
        %6102 = vmatpush1.bf16.xpose.msra.mxu0 0
        %6103 = vmatprep.subr.bf16.mxu0 0
        %6104 = vmatpush1.bf16.xpose.msra.mxu0 0
        %6105 = vmatprep.subr.bf16.mxu0 0
        %6106 = vmatpush1.bf16.xpose.msra.mxu0 0
        %6107 = vmatprep.subr.bf16.mxu0 0
        %6108 = vmatpush1.bf16.xpose.msra.mxu0 0
        %6109 = vmatprep.subr.bf16.mxu0 0
        %6110 = vmatpush1.bf16.xpose.msra.mxu0 0
        %6111 = vmatprep.subr.bf16.mxu0 0
        %6112 = vmatpush1.bf16.xpose.msra.mxu0 0
        %6113 = vmatprep.subr.bf16.mxu0 0
        %6114 = vmatpush1.bf16.xpose.msra.mxu0 0
        %6115 = vmatprep.subr.bf16.mxu0 0
        %6116 = vmatpush1.bf16.xpose.msra.mxu0 0
        %6117 = vmatprep.subr.bf16.mxu0 0
        %6118 = vmatpush1.bf16.xpose.msra.mxu0 0
        %6119 = vmatprep.mubr.bf16.mxu0 0
        %6120 = vmatmul.mubr.bf16.gmra.mrb[0].mxu0 %v6082
        %v6121 = vpop.f32.mrb[0].mxu0
        %v6122 = vadd.f32 %v5565, %v6121
        %v6123 = vpop.f32.mrb[0].mxu0
        %v6124 = vpop.f32.mrb[0].mxu0
        %v6125 = vadd.f32 %v5566, %v6124
        %v6126 = vpop.f32.mrb[0].mxu0
        %6127 = vdwg.mxu0
        %6128 = vrot.lane.b32.xlu0 %v985, 64
        %v6129 = vpop.permute.xlu0 %6128
        %6130 = vrot.lane.b32.xlu0 %v1001, 64
        %v6131 = vpop.permute.xlu0 %6130
        %v6133 = vsel %vm347, %v6129, 0
        %v6136 = vsel %vm347, %v6131, 0
        %6138 = vmatprep.subr.bf16.mxu0 0
        %6139 = vmatpush1.bf16.xpose.msra.mxu0 %v6136
        %6140 = vmatprep.subr.bf16.mxu0 0
        %6141 = vmatpush1.bf16.xpose.msra.mxu0 0
        %6142 = vmatprep.subr.bf16.mxu0 0
        %6143 = vmatpush1.bf16.xpose.msra.mxu0 0
        %6144 = vmatprep.subr.bf16.mxu0 0
        %6145 = vmatpush1.bf16.xpose.msra.mxu0 0
        %6146 = vmatprep.subr.bf16.mxu0 0
        %6147 = vmatpush1.bf16.xpose.msra.mxu0 0
        %6148 = vmatprep.subr.bf16.mxu0 0
        %6149 = vmatpush1.bf16.xpose.msra.mxu0 0
        %6150 = vmatprep.subr.bf16.mxu0 0
        %6151 = vmatpush1.bf16.xpose.msra.mxu0 0
        %6152 = vmatprep.subr.bf16.mxu0 0
        %6153 = vmatpush1.bf16.xpose.msra.mxu0 0
        %6154 = vmatprep.subr.bf16.mxu0 0
        %6155 = vmatpush1.bf16.xpose.msra.mxu0 0
        %6156 = vmatprep.subr.bf16.mxu0 0
        %6157 = vmatpush1.bf16.xpose.msra.mxu0 0
        %6158 = vmatprep.subr.bf16.mxu0 0
        %6159 = vmatpush1.bf16.xpose.msra.mxu0 0
        %6160 = vmatprep.subr.bf16.mxu0 0
        %6161 = vmatpush1.bf16.xpose.msra.mxu0 0
        %6162 = vmatprep.subr.bf16.mxu0 0
        %6163 = vmatpush1.bf16.xpose.msra.mxu0 0
        %6164 = vmatprep.subr.bf16.mxu0 0
        %6165 = vmatpush1.bf16.xpose.msra.mxu0 0
        %6166 = vmatprep.subr.bf16.mxu0 0
        %6167 = vmatpush1.bf16.xpose.msra.mxu0 0
        %6168 = vmatprep.subr.bf16.mxu0 0
        %6169 = vmatpush1.bf16.xpose.msra.mxu0 0
        %6170 = vmatprep.mubr.bf16.mxu0 0
        %6171 = vmatmul.mubr.bf16.gmra.mrb[0].mxu0 %v6133
        %v6172 = vpop.f32.mrb[0].mxu0
        %v6173 = vadd.f32 %v5565, %v6172
        %v6174 = vpop.f32.mrb[0].mxu0
        %v6175 = vpop.f32.mrb[0].mxu0
        %v6176 = vadd.f32 %v5566, %v6175
        %v6177 = vpop.f32.mrb[0].mxu0
        %6178 = vdwg.mxu0
        %6179 = vrot.lane.b32.xlu0 %v986, 64
        %v6180 = vpop.permute.xlu0 %6179
        %6181 = vrot.lane.b32.xlu0 %v1002, 64
        %v6182 = vpop.permute.xlu0 %6181
        %v6184 = vsel %vm347, %v6180, 0
        %v6187 = vsel %vm347, %v6182, 0
        %6189 = vmatprep.subr.bf16.mxu0 0
        %6190 = vmatpush1.bf16.xpose.msra.mxu0 %v6187
        %6191 = vmatprep.subr.bf16.mxu0 0
        %6192 = vmatpush1.bf16.xpose.msra.mxu0 0
        %6193 = vmatprep.subr.bf16.mxu0 0
        %6194 = vmatpush1.bf16.xpose.msra.mxu0 0
        %6195 = vmatprep.subr.bf16.mxu0 0
        %6196 = vmatpush1.bf16.xpose.msra.mxu0 0
        %6197 = vmatprep.subr.bf16.mxu0 0
        %6198 = vmatpush1.bf16.xpose.msra.mxu0 0
        %6199 = vmatprep.subr.bf16.mxu0 0
        %6200 = vmatpush1.bf16.xpose.msra.mxu0 0
        %6201 = vmatprep.subr.bf16.mxu0 0
        %6202 = vmatpush1.bf16.xpose.msra.mxu0 0
        %6203 = vmatprep.subr.bf16.mxu0 0
        %6204 = vmatpush1.bf16.xpose.msra.mxu0 0
        %6205 = vmatprep.subr.bf16.mxu0 0
        %6206 = vmatpush1.bf16.xpose.msra.mxu0 0
        %6207 = vmatprep.subr.bf16.mxu0 0
        %6208 = vmatpush1.bf16.xpose.msra.mxu0 0
        %6209 = vmatprep.subr.bf16.mxu0 0
        %6210 = vmatpush1.bf16.xpose.msra.mxu0 0
        %6211 = vmatprep.subr.bf16.mxu0 0
        %6212 = vmatpush1.bf16.xpose.msra.mxu0 0
        %6213 = vmatprep.subr.bf16.mxu0 0
        %6214 = vmatpush1.bf16.xpose.msra.mxu0 0
        %6215 = vmatprep.subr.bf16.mxu0 0
        %6216 = vmatpush1.bf16.xpose.msra.mxu0 0
        %6217 = vmatprep.subr.bf16.mxu0 0
        %6218 = vmatpush1.bf16.xpose.msra.mxu0 0
        %6219 = vmatprep.subr.bf16.mxu0 0
        %6220 = vmatpush1.bf16.xpose.msra.mxu0 0
        %6221 = vmatprep.mubr.bf16.mxu0 0
        %6222 = vmatmul.mubr.bf16.gmra.mrb[0].mxu0 %v6184
        %v6223 = vpop.f32.mrb[0].mxu0
        %v6224 = vadd.f32 %v5565, %v6223
        %v6225 = vpop.f32.mrb[0].mxu0
        %v6226 = vpop.f32.mrb[0].mxu0
        %v6227 = vadd.f32 %v5566, %v6226
        %v6228 = vpop.f32.mrb[0].mxu0
        %6229 = vdwg.mxu0
        %6230 = vrot.lane.b32.xlu0 %v987, 64
        %v6231 = vpop.permute.xlu0 %6230
        %6232 = vrot.lane.b32.xlu0 %v1003, 64
        %v6233 = vpop.permute.xlu0 %6232
        %v6235 = vsel %vm347, %v6231, 0
        %v6238 = vsel %vm347, %v6233, 0
        %6240 = vmatprep.subr.bf16.mxu0 0
        %6241 = vmatpush1.bf16.xpose.msra.mxu0 %v6238
        %6242 = vmatprep.subr.bf16.mxu0 0
        %6243 = vmatpush1.bf16.xpose.msra.mxu0 0
        %6244 = vmatprep.subr.bf16.mxu0 0
        %6245 = vmatpush1.bf16.xpose.msra.mxu0 0
        %6246 = vmatprep.subr.bf16.mxu0 0
        %6247 = vmatpush1.bf16.xpose.msra.mxu0 0
        %6248 = vmatprep.subr.bf16.mxu0 0
        %6249 = vmatpush1.bf16.xpose.msra.mxu0 0
        %6250 = vmatprep.subr.bf16.mxu0 0
        %6251 = vmatpush1.bf16.xpose.msra.mxu0 0
        %6252 = vmatprep.subr.bf16.mxu0 0
        %6253 = vmatpush1.bf16.xpose.msra.mxu0 0
        %6254 = vmatprep.subr.bf16.mxu0 0
        %6255 = vmatpush1.bf16.xpose.msra.mxu0 0
        %6256 = vmatprep.subr.bf16.mxu0 0
        %6257 = vmatpush1.bf16.xpose.msra.mxu0 0
        %6258 = vmatprep.subr.bf16.mxu0 0
        %6259 = vmatpush1.bf16.xpose.msra.mxu0 0
        %6260 = vmatprep.subr.bf16.mxu0 0
        %6261 = vmatpush1.bf16.xpose.msra.mxu0 0
        %6262 = vmatprep.subr.bf16.mxu0 0
        %6263 = vmatpush1.bf16.xpose.msra.mxu0 0
        %6264 = vmatprep.subr.bf16.mxu0 0
        %6265 = vmatpush1.bf16.xpose.msra.mxu0 0
        %6266 = vmatprep.subr.bf16.mxu0 0
        %6267 = vmatpush1.bf16.xpose.msra.mxu0 0
        %6268 = vmatprep.subr.bf16.mxu0 0
        %6269 = vmatpush1.bf16.xpose.msra.mxu0 0
        %6270 = vmatprep.subr.bf16.mxu0 0
        %6271 = vmatpush1.bf16.xpose.msra.mxu0 0
        %6272 = vmatprep.mubr.bf16.mxu0 0
        %6273 = vmatmul.mubr.bf16.gmra.mrb[0].mxu0 %v6235
        %v6274 = vpop.f32.mrb[0].mxu0
        %v6275 = vadd.f32 %v5565, %v6274
        %v6276 = vpop.f32.mrb[0].mxu0
        %v6277 = vpop.f32.mrb[0].mxu0
        %v6278 = vadd.f32 %v5566, %v6277
        %v6279 = vpop.f32.mrb[0].mxu0
        %6280 = vdwg.mxu0
        %6281 = vrot.lane.b32.xlu0 %v988, 64
        %v6282 = vpop.permute.xlu0 %6281
        %6283 = vrot.lane.b32.xlu0 %v1004, 64
        %v6284 = vpop.permute.xlu0 %6283
        %v6286 = vsel %vm347, %v6282, 0
        %v6289 = vsel %vm347, %v6284, 0
        %6291 = vmatprep.subr.bf16.mxu0 0
        %6292 = vmatpush1.bf16.xpose.msra.mxu0 %v6289
        %6293 = vmatprep.subr.bf16.mxu0 0
        %6294 = vmatpush1.bf16.xpose.msra.mxu0 0
        %6295 = vmatprep.subr.bf16.mxu0 0
        %6296 = vmatpush1.bf16.xpose.msra.mxu0 0
        %6297 = vmatprep.subr.bf16.mxu0 0
        %6298 = vmatpush1.bf16.xpose.msra.mxu0 0
        %6299 = vmatprep.subr.bf16.mxu0 0
        %6300 = vmatpush1.bf16.xpose.msra.mxu0 0
        %6301 = vmatprep.subr.bf16.mxu0 0
        %6302 = vmatpush1.bf16.xpose.msra.mxu0 0
        %6303 = vmatprep.subr.bf16.mxu0 0
        %6304 = vmatpush1.bf16.xpose.msra.mxu0 0
        %6305 = vmatprep.subr.bf16.mxu0 0
        %6306 = vmatpush1.bf16.xpose.msra.mxu0 0
        %6307 = vmatprep.subr.bf16.mxu0 0
        %6308 = vmatpush1.bf16.xpose.msra.mxu0 0
        %6309 = vmatprep.subr.bf16.mxu0 0
        %6310 = vmatpush1.bf16.xpose.msra.mxu0 0
        %6311 = vmatprep.subr.bf16.mxu0 0
        %6312 = vmatpush1.bf16.xpose.msra.mxu0 0
        %6313 = vmatprep.subr.bf16.mxu0 0
        %6314 = vmatpush1.bf16.xpose.msra.mxu0 0
        %6315 = vmatprep.subr.bf16.mxu0 0
        %6316 = vmatpush1.bf16.xpose.msra.mxu0 0
        %6317 = vmatprep.subr.bf16.mxu0 0
        %6318 = vmatpush1.bf16.xpose.msra.mxu0 0
        %6319 = vmatprep.subr.bf16.mxu0 0
        %6320 = vmatpush1.bf16.xpose.msra.mxu0 0
        %6321 = vmatprep.subr.bf16.mxu0 0
        %6322 = vmatpush1.bf16.xpose.msra.mxu0 0
        %6323 = vmatprep.mubr.bf16.mxu0 0
        %6324 = vmatmul.mubr.bf16.gmra.mrb[0].mxu0 %v6286
        %v6325 = vpop.f32.mrb[0].mxu0
        %v6326 = vadd.f32 %v5565, %v6325
        %v6327 = vpop.f32.mrb[0].mxu0
        %v6328 = vpop.f32.mrb[0].mxu0
        %v6329 = vadd.f32 %v5566, %v6328
        %v6330 = vpop.f32.mrb[0].mxu0
        %6331 = vdwg.mxu0
        %6332 = vrot.lane.b32.xlu0 %v989, 64
        %v6333 = vpop.permute.xlu0 %6332
        %6334 = vrot.lane.b32.xlu0 %v1005, 64
        %v6335 = vpop.permute.xlu0 %6334
        %v6337 = vsel %vm347, %v6333, 0
        %v6340 = vsel %vm347, %v6335, 0
        %6342 = vmatprep.subr.bf16.mxu0 0
        %6343 = vmatpush1.bf16.xpose.msra.mxu0 %v6340
        %6344 = vmatprep.subr.bf16.mxu0 0
        %6345 = vmatpush1.bf16.xpose.msra.mxu0 0
        %6346 = vmatprep.subr.bf16.mxu0 0
        %6347 = vmatpush1.bf16.xpose.msra.mxu0 0
        %6348 = vmatprep.subr.bf16.mxu0 0
        %6349 = vmatpush1.bf16.xpose.msra.mxu0 0
        %6350 = vmatprep.subr.bf16.mxu0 0
        %6351 = vmatpush1.bf16.xpose.msra.mxu0 0
        %6352 = vmatprep.subr.bf16.mxu0 0
        %6353 = vmatpush1.bf16.xpose.msra.mxu0 0
        %6354 = vmatprep.subr.bf16.mxu0 0
        %6355 = vmatpush1.bf16.xpose.msra.mxu0 0
        %6356 = vmatprep.subr.bf16.mxu0 0
        %6357 = vmatpush1.bf16.xpose.msra.mxu0 0
        %6358 = vmatprep.subr.bf16.mxu0 0
        %6359 = vmatpush1.bf16.xpose.msra.mxu0 0
        %6360 = vmatprep.subr.bf16.mxu0 0
        %6361 = vmatpush1.bf16.xpose.msra.mxu0 0
        %6362 = vmatprep.subr.bf16.mxu0 0
        %6363 = vmatpush1.bf16.xpose.msra.mxu0 0
        %6364 = vmatprep.subr.bf16.mxu0 0
        %6365 = vmatpush1.bf16.xpose.msra.mxu0 0
        %6366 = vmatprep.subr.bf16.mxu0 0
        %6367 = vmatpush1.bf16.xpose.msra.mxu0 0
        %6368 = vmatprep.subr.bf16.mxu0 0
        %6369 = vmatpush1.bf16.xpose.msra.mxu0 0
        %6370 = vmatprep.subr.bf16.mxu0 0
        %6371 = vmatpush1.bf16.xpose.msra.mxu0 0
        %6372 = vmatprep.subr.bf16.mxu0 0
        %6373 = vmatpush1.bf16.xpose.msra.mxu0 0
        %6374 = vmatprep.mubr.bf16.mxu0 0
        %6375 = vmatmul.mubr.bf16.gmra.mrb[0].mxu0 %v6337
        %v6376 = vpop.f32.mrb[0].mxu0
        %v6377 = vadd.f32 %v5565, %v6376
        %v6378 = vpop.f32.mrb[0].mxu0
        %v6379 = vpop.f32.mrb[0].mxu0
        %v6380 = vadd.f32 %v5566, %v6379
        %v6381 = vpop.f32.mrb[0].mxu0
        %6382 = vdwg.mxu0
        %v6383 = vsel %vm1778, %v5612, -inf
        %6384 = vmax.xlane.f32.xlu0 %v6383
        %v6385 = vpop.xlane.xlu0 %6384
        %v6386 = vsel %vm1778, %v5615, -inf
        %6387 = vmax.xlane.f32.xlu0 %v6386
        %v6388 = vpop.xlane.xlu0 %6387
        %v6389 = vsel %vm1778, %v5663, -inf
        %6390 = vmax.xlane.f32.xlu0 %v6389
        %v6391 = vpop.xlane.xlu0 %6390
        %v6392 = vsel %vm1778, %v5666, -inf
        %6393 = vmax.xlane.f32.xlu0 %v6392
        %v6394 = vpop.xlane.xlu0 %6393
        %v6395 = vsel %vm1778, %v5714, -inf
        %6396 = vmax.xlane.f32.xlu0 %v6395
        %v6397 = vpop.xlane.xlu0 %6396
        %v6398 = vsel %vm1778, %v5717, -inf
        %6399 = vmax.xlane.f32.xlu0 %v6398
        %v6400 = vpop.xlane.xlu0 %6399
        %v6401 = vsel %vm1778, %v5765, -inf
        %6402 = vmax.xlane.f32.xlu0 %v6401
        %v6403 = vpop.xlane.xlu0 %6402
        %v6404 = vsel %vm1778, %v5768, -inf
        %6405 = vmax.xlane.f32.xlu0 %v6404
        %v6406 = vpop.xlane.xlu0 %6405
        %v6407 = vsel %vm1778, %v5816, -inf
        %6408 = vmax.xlane.f32.xlu0 %v6407
        %v6409 = vpop.xlane.xlu0 %6408
        %v6410 = vsel %vm1778, %v5819, -inf
        %6411 = vmax.xlane.f32.xlu0 %v6410
        %v6412 = vpop.xlane.xlu0 %6411
        %v6413 = vsel %vm1778, %v5867, -inf
        %6414 = vmax.xlane.f32.xlu0 %v6413
        %v6415 = vpop.xlane.xlu0 %6414
        %v6416 = vsel %vm1778, %v5870, -inf
        %6417 = vmax.xlane.f32.xlu0 %v6416
        %v6418 = vpop.xlane.xlu0 %6417
        %v6419 = vsel %vm1778, %v5918, -inf
        %6420 = vmax.xlane.f32.xlu0 %v6419
        %v6421 = vpop.xlane.xlu0 %6420
        %v6422 = vsel %vm1778, %v5921, -inf
        %6423 = vmax.xlane.f32.xlu0 %v6422
        %v6424 = vpop.xlane.xlu0 %6423
        %v6425 = vsel %vm1778, %v5969, -inf
        %6426 = vmax.xlane.f32.xlu0 %v6425
        %v6427 = vpop.xlane.xlu0 %6426
        %v6428 = vsel %vm1778, %v5972, -inf
        %6429 = vmax.xlane.f32.xlu0 %v6428
        %v6430 = vpop.xlane.xlu0 %6429
        %v6431 = vsel %vm1778, %v6020, -inf
        %6432 = vmax.xlane.f32.xlu0 %v6431
        %v6433 = vpop.xlane.xlu0 %6432
        %v6434 = vsel %vm1778, %v6023, -inf
        %6435 = vmax.xlane.f32.xlu0 %v6434
        %v6436 = vpop.xlane.xlu0 %6435
        %v6437 = vsel %vm1778, %v6071, -inf
        %6438 = vmax.xlane.f32.xlu0 %v6437
        %v6439 = vpop.xlane.xlu0 %6438
        %v6440 = vsel %vm1778, %v6074, -inf
        %6441 = vmax.xlane.f32.xlu0 %v6440
        %v6442 = vpop.xlane.xlu0 %6441
        %v6443 = vsel %vm1778, %v6122, -inf
        %6444 = vmax.xlane.f32.xlu0 %v6443
        %v6445 = vpop.xlane.xlu0 %6444
        %v6446 = vsel %vm1778, %v6125, -inf
        %6447 = vmax.xlane.f32.xlu0 %v6446
        %v6448 = vpop.xlane.xlu0 %6447
        %v6449 = vsel %vm1778, %v6173, -inf
        %6450 = vmax.xlane.f32.xlu0 %v6449
        %v6451 = vpop.xlane.xlu0 %6450
        %v6452 = vsel %vm1778, %v6176, -inf
        %6453 = vmax.xlane.f32.xlu0 %v6452
        %v6454 = vpop.xlane.xlu0 %6453
        %v6455 = vsel %vm1778, %v6224, -inf
        %6456 = vmax.xlane.f32.xlu0 %v6455
        %v6457 = vpop.xlane.xlu0 %6456
        %v6458 = vsel %vm1778, %v6227, -inf
        %6459 = vmax.xlane.f32.xlu0 %v6458
        %v6460 = vpop.xlane.xlu0 %6459
        %v6461 = vsel %vm1778, %v6275, -inf
        %6462 = vmax.xlane.f32.xlu0 %v6461
        %v6463 = vpop.xlane.xlu0 %6462
        %v6464 = vsel %vm1778, %v6278, -inf
        %6465 = vmax.xlane.f32.xlu0 %v6464
        %v6466 = vpop.xlane.xlu0 %6465
        %v6467 = vsel %vm1778, %v6326, -inf
        %6468 = vmax.xlane.f32.xlu0 %v6467
        %v6469 = vpop.xlane.xlu0 %6468
        %v6470 = vsel %vm1778, %v6329, -inf
        %6471 = vmax.xlane.f32.xlu0 %v6470
        %v6472 = vpop.xlane.xlu0 %6471
        %v6473 = vsel %vm1778, %v6377, -inf
        %6474 = vmax.xlane.f32.xlu0 %v6473
        %v6475 = vpop.xlane.xlu0 %6474
        %v6476 = vsel %vm1778, %v6380, -inf
        %6477 = vmax.xlane.f32.xlu0 %v6476
        %v6478 = vpop.xlane.xlu0 %6477
        %v6479 = vsub.f32 %v5612, %v6385
        %v6480 = vsub.f32 %v5615, %v6388
        %v6481 = vsub.f32 %v5663, %v6391
        %v6482 = vsub.f32 %v5666, %v6394
        %v6483 = vsub.f32 %v5714, %v6397
        %v6484 = vsub.f32 %v5717, %v6400
        %v6485 = vsub.f32 %v5765, %v6403
        %v6486 = vsub.f32 %v5768, %v6406
        %v6487 = vsub.f32 %v5816, %v6409
        %v6488 = vsub.f32 %v5819, %v6412
        %v6489 = vsub.f32 %v5867, %v6415
        %v6490 = vsub.f32 %v5870, %v6418
        %v6491 = vsub.f32 %v5918, %v6421
        %v6492 = vsub.f32 %v5921, %v6424
        %v6493 = vsub.f32 %v5969, %v6427
        %v6494 = vsub.f32 %v5972, %v6430
        %v6495 = vsub.f32 %v6020, %v6433
        %v6496 = vsub.f32 %v6023, %v6436
        %v6497 = vsub.f32 %v6071, %v6439
        %v6498 = vsub.f32 %v6074, %v6442
        %v6499 = vsub.f32 %v6122, %v6445
        %v6500 = vsub.f32 %v6125, %v6448
        %v6501 = vsub.f32 %v6173, %v6451
        %v6502 = vsub.f32 %v6176, %v6454
        %v6503 = vsub.f32 %v6224, %v6457
        %v6504 = vsub.f32 %v6227, %v6460
        %v6505 = vsub.f32 %v6275, %v6463
        %v6506 = vsub.f32 %v6278, %v6466
        %v6507 = vsub.f32 %v6326, %v6469
        %v6508 = vsub.f32 %v6329, %v6472
        %v6509 = vsub.f32 %v6377, %v6475
        %v6510 = vsub.f32 %v6380, %v6478
        %v6511 = vmul.f32 %v6479, 1.442695
        %v6512 = vpow.pop %v6511
        %v6513 = vmul.f32 %v6480, 1.442695
        %v6514 = vpow.pop %v6513
        %v6515 = vmul.f32 %v6481, 1.442695
        %v6516 = vpow.pop %v6515
        %v6517 = vmul.f32 %v6482, 1.442695
        %v6518 = vpow.pop %v6517
        %v6519 = vmul.f32 %v6483, 1.442695
        %v6520 = vpow.pop %v6519
        %v6521 = vmul.f32 %v6484, 1.442695
        %v6522 = vpow.pop %v6521
        %v6523 = vmul.f32 %v6485, 1.442695
        %v6524 = vpow.pop %v6523
        %v6525 = vmul.f32 %v6486, 1.442695
        %v6526 = vpow.pop %v6525
        %v6527 = vmul.f32 %v6487, 1.442695
        %v6528 = vpow.pop %v6527
        %v6529 = vmul.f32 %v6488, 1.442695
        %v6530 = vpow.pop %v6529
        %v6531 = vmul.f32 %v6489, 1.442695
        %v6532 = vpow.pop %v6531
        %v6533 = vmul.f32 %v6490, 1.442695
        %v6534 = vpow.pop %v6533
        %v6535 = vmul.f32 %v6491, 1.442695
        %v6536 = vpow.pop %v6535
        %v6537 = vmul.f32 %v6492, 1.442695
        %v6538 = vpow.pop %v6537
        %v6539 = vmul.f32 %v6493, 1.442695
        %v6540 = vpow.pop %v6539
        %v6541 = vmul.f32 %v6494, 1.442695
        %v6542 = vpow.pop %v6541
        %v6543 = vmul.f32 %v6495, 1.442695
        %v6544 = vpow.pop %v6543
        %v6545 = vmul.f32 %v6496, 1.442695
        %v6546 = vpow.pop %v6545
        %v6547 = vmul.f32 %v6497, 1.442695
        %v6548 = vpow.pop %v6547
        %v6549 = vmul.f32 %v6498, 1.442695
        %v6550 = vpow.pop %v6549
        %v6551 = vmul.f32 %v6499, 1.442695
        %v6552 = vpow.pop %v6551
        %v6553 = vmul.f32 %v6500, 1.442695
        %v6554 = vpow.pop %v6553
        %v6555 = vmul.f32 %v6501, 1.442695
        %v6556 = vpow.pop %v6555
        %v6557 = vmul.f32 %v6502, 1.442695
        %v6558 = vpow.pop %v6557
        %v6559 = vmul.f32 %v6503, 1.442695
        %v6560 = vpow.pop %v6559
        %v6561 = vmul.f32 %v6504, 1.442695
        %v6562 = vpow.pop %v6561
        %v6563 = vmul.f32 %v6505, 1.442695
        %v6564 = vpow.pop %v6563
        %v6565 = vmul.f32 %v6506, 1.442695
        %v6566 = vpow.pop %v6565
        %v6567 = vmul.f32 %v6507, 1.442695
        %v6568 = vpow.pop %v6567
        %v6569 = vmul.f32 %v6508, 1.442695
        %v6570 = vpow.pop %v6569
        %v6571 = vmul.f32 %v6509, 1.442695
        %v6572 = vpow.pop %v6571
        %v6573 = vmul.f32 %v6510, 1.442695
        %v6574 = vpow.pop %v6573
        %v6575 = vsel %vm1778, %v6512, 0.0
        %6576 = vadd.xlane.f32.xlu0 %v6575
        %v6577 = vpop.xlane.xlu0 %6576
        %v6578 = vsel %vm1778, %v6514, 0.0
        %6579 = vadd.xlane.f32.xlu0 %v6578
        %v6580 = vpop.xlane.xlu0 %6579
        %v6581 = vsel %vm1778, %v6516, 0.0
        %6582 = vadd.xlane.f32.xlu0 %v6581
        %v6583 = vpop.xlane.xlu0 %6582
        %v6584 = vsel %vm1778, %v6518, 0.0
        %6585 = vadd.xlane.f32.xlu0 %v6584
        %v6586 = vpop.xlane.xlu0 %6585
        %v6587 = vsel %vm1778, %v6520, 0.0
        %6588 = vadd.xlane.f32.xlu0 %v6587
        %v6589 = vpop.xlane.xlu0 %6588
        %v6590 = vsel %vm1778, %v6522, 0.0
        %6591 = vadd.xlane.f32.xlu0 %v6590
        %v6592 = vpop.xlane.xlu0 %6591
        %v6593 = vsel %vm1778, %v6524, 0.0
        %6594 = vadd.xlane.f32.xlu0 %v6593
        %v6595 = vpop.xlane.xlu0 %6594
        %v6596 = vsel %vm1778, %v6526, 0.0
        %6597 = vadd.xlane.f32.xlu0 %v6596
        %v6598 = vpop.xlane.xlu0 %6597
        %v6599 = vsel %vm1778, %v6528, 0.0
        %6600 = vadd.xlane.f32.xlu0 %v6599
        %v6601 = vpop.xlane.xlu0 %6600
        %v6602 = vsel %vm1778, %v6530, 0.0
        %6603 = vadd.xlane.f32.xlu0 %v6602
        %v6604 = vpop.xlane.xlu0 %6603
        %v6605 = vsel %vm1778, %v6532, 0.0
        %6606 = vadd.xlane.f32.xlu0 %v6605
        %v6607 = vpop.xlane.xlu0 %6606
        %v6608 = vsel %vm1778, %v6534, 0.0
        %6609 = vadd.xlane.f32.xlu0 %v6608
        %v6610 = vpop.xlane.xlu0 %6609
        %v6611 = vsel %vm1778, %v6536, 0.0
        %6612 = vadd.xlane.f32.xlu0 %v6611
        %v6613 = vpop.xlane.xlu0 %6612
        %v6614 = vsel %vm1778, %v6538, 0.0
        %6615 = vadd.xlane.f32.xlu0 %v6614
        %v6616 = vpop.xlane.xlu0 %6615
        %v6617 = vsel %vm1778, %v6540, 0.0
        %6618 = vadd.xlane.f32.xlu0 %v6617
        %v6619 = vpop.xlane.xlu0 %6618
        %v6620 = vsel %vm1778, %v6542, 0.0
        %6621 = vadd.xlane.f32.xlu0 %v6620
        %v6622 = vpop.xlane.xlu0 %6621
        %v6623 = vsel %vm1778, %v6544, 0.0
        %6624 = vadd.xlane.f32.xlu0 %v6623
        %v6625 = vpop.xlane.xlu0 %6624
        %v6626 = vsel %vm1778, %v6546, 0.0
        %6627 = vadd.xlane.f32.xlu0 %v6626
        %v6628 = vpop.xlane.xlu0 %6627
        %v6629 = vsel %vm1778, %v6548, 0.0
        %6630 = vadd.xlane.f32.xlu0 %v6629
        %v6631 = vpop.xlane.xlu0 %6630
        %v6632 = vsel %vm1778, %v6550, 0.0
        %6633 = vadd.xlane.f32.xlu0 %v6632
        %v6634 = vpop.xlane.xlu0 %6633
        %v6635 = vsel %vm1778, %v6552, 0.0
        %6636 = vadd.xlane.f32.xlu0 %v6635
        %v6637 = vpop.xlane.xlu0 %6636
        %v6638 = vsel %vm1778, %v6554, 0.0
        %6639 = vadd.xlane.f32.xlu0 %v6638
        %v6640 = vpop.xlane.xlu0 %6639
        %v6641 = vsel %vm1778, %v6556, 0.0
        %6642 = vadd.xlane.f32.xlu0 %v6641
        %v6643 = vpop.xlane.xlu0 %6642
        %v6644 = vsel %vm1778, %v6558, 0.0
        %6645 = vadd.xlane.f32.xlu0 %v6644
        %v6646 = vpop.xlane.xlu0 %6645
        %v6647 = vsel %vm1778, %v6560, 0.0
        %6648 = vadd.xlane.f32.xlu0 %v6647
        %v6649 = vpop.xlane.xlu0 %6648
        %v6650 = vsel %vm1778, %v6562, 0.0
        %6651 = vadd.xlane.f32.xlu0 %v6650
        %v6652 = vpop.xlane.xlu0 %6651
        %v6653 = vsel %vm1778, %v6564, 0.0
        %6654 = vadd.xlane.f32.xlu0 %v6653
        %v6655 = vpop.xlane.xlu0 %6654
        %v6656 = vsel %vm1778, %v6566, 0.0
        %6657 = vadd.xlane.f32.xlu0 %v6656
        %v6658 = vpop.xlane.xlu0 %6657
        %v6659 = vsel %vm1778, %v6568, 0.0
        %6660 = vadd.xlane.f32.xlu0 %v6659
        %v6661 = vpop.xlane.xlu0 %6660
        %v6662 = vsel %vm1778, %v6570, 0.0
        %6663 = vadd.xlane.f32.xlu0 %v6662
        %v6664 = vpop.xlane.xlu0 %6663
        %v6665 = vsel %vm1778, %v6572, 0.0
        %6666 = vadd.xlane.f32.xlu0 %v6665
        %v6667 = vpop.xlane.xlu0 %6666
        %v6668 = vsel %vm1778, %v6574, 0.0
        %6669 = vadd.xlane.f32.xlu0 %v6668
        %v6670 = vpop.xlane.xlu0 %6669
        %v6671 = vpack.c.bf16 %v6514, %v6512
        %v6672 = vpack.c.bf16 %v6518, %v6516
        %v6673 = vpack.c.bf16 %v6522, %v6520
        %v6674 = vpack.c.bf16 %v6526, %v6524
        %v6675 = vpack.c.bf16 %v6530, %v6528
        %v6676 = vpack.c.bf16 %v6534, %v6532
        %v6677 = vpack.c.bf16 %v6538, %v6536
        %v6678 = vpack.c.bf16 %v6542, %v6540
        %v6679 = vpack.c.bf16 %v6546, %v6544
        %v6680 = vpack.c.bf16 %v6550, %v6548
        %v6681 = vpack.c.bf16 %v6554, %v6552
        %v6682 = vpack.c.bf16 %v6558, %v6556
        %v6683 = vpack.c.bf16 %v6562, %v6560
        %v6684 = vpack.c.bf16 %v6566, %v6564
        %v6685 = vpack.c.bf16 %v6570, %v6568
        %v6686 = vpack.c.bf16 %v6574, %v6572
        %6687 = vrot.lane.b32.xlu0 %v1006, 64
        %v6688 = vpop.permute.xlu0 %6687
        %v6691 = vsel %vm1778, %v6671, 0
        %6693 = vmatprep.subr.bf16.mxu0 0
        %6694 = vmatpush1.bf16.msra.mxu0 %v6688
        %6695 = vmatprep.subr.bf16.mxu0 0
        %6696 = vmatpush1.bf16.msra.mxu0 0
        %6697 = vmatprep.subr.bf16.mxu0 0
        %6698 = vmatpush1.bf16.msra.mxu0 0
        %6699 = vmatprep.subr.bf16.mxu0 0
        %6700 = vmatpush1.bf16.msra.mxu0 0
        %6701 = vmatprep.subr.bf16.mxu0 0
        %6702 = vmatpush1.bf16.msra.mxu0 0
        %6703 = vmatprep.subr.bf16.mxu0 0
        %6704 = vmatpush1.bf16.msra.mxu0 0
        %6705 = vmatprep.subr.bf16.mxu0 0
        %6706 = vmatpush1.bf16.msra.mxu0 0
        %6707 = vmatprep.subr.bf16.mxu0 0
        %6708 = vmatpush1.bf16.msra.mxu0 0
        %6709 = vmatprep.subr.bf16.mxu0 0
        %6710 = vmatpush1.bf16.msra.mxu0 0
        %6711 = vmatprep.subr.bf16.mxu0 0
        %6712 = vmatpush1.bf16.msra.mxu0 0
        %6713 = vmatprep.subr.bf16.mxu0 0
        %6714 = vmatpush1.bf16.msra.mxu0 0
        %6715 = vmatprep.subr.bf16.mxu0 0
        %6716 = vmatpush1.bf16.msra.mxu0 0
        %6717 = vmatprep.subr.bf16.mxu0 0
        %6718 = vmatpush1.bf16.msra.mxu0 0
        %6719 = vmatprep.subr.bf16.mxu0 0
        %6720 = vmatpush1.bf16.msra.mxu0 0
        %6721 = vmatprep.subr.bf16.mxu0 0
        %6722 = vmatpush1.bf16.msra.mxu0 0
        %6723 = vmatprep.subr.bf16.mxu0 0
        %6724 = vmatpush1.bf16.msra.mxu0 0
        %6725 = vmatprep.mubr.bf16.mxu0 0
        %6726 = vmatmul.mubr.bf16.gmra.mrb[0].mxu0 %v6691
        %v6727 = vpop.f32.mrb[0].mxu0
        %v6728 = vadd.f32 0.0, %v6727
        %v6729 = vpop.f32.mrb[0].mxu0
        %v6730 = vpop.f32.mrb[0].mxu0
        %v6731 = vadd.f32 0.0, %v6730
        %v6732 = vpop.f32.mrb[0].mxu0
        %6733 = vdwg.mxu0
        %6734 = vrot.lane.b32.xlu0 %v1007, 64
        %v6735 = vpop.permute.xlu0 %6734
        %v6738 = vsel %vm1778, %v6672, 0
        %6740 = vmatprep.subr.bf16.mxu0 0
        %6741 = vmatpush1.bf16.msra.mxu0 %v6735
        %6742 = vmatprep.subr.bf16.mxu0 0
        %6743 = vmatpush1.bf16.msra.mxu0 0
        %6744 = vmatprep.subr.bf16.mxu0 0
        %6745 = vmatpush1.bf16.msra.mxu0 0
        %6746 = vmatprep.subr.bf16.mxu0 0
        %6747 = vmatpush1.bf16.msra.mxu0 0
        %6748 = vmatprep.subr.bf16.mxu0 0
        %6749 = vmatpush1.bf16.msra.mxu0 0
        %6750 = vmatprep.subr.bf16.mxu0 0
        %6751 = vmatpush1.bf16.msra.mxu0 0
        %6752 = vmatprep.subr.bf16.mxu0 0
        %6753 = vmatpush1.bf16.msra.mxu0 0
        %6754 = vmatprep.subr.bf16.mxu0 0
        %6755 = vmatpush1.bf16.msra.mxu0 0
        %6756 = vmatprep.subr.bf16.mxu0 0
        %6757 = vmatpush1.bf16.msra.mxu0 0
        %6758 = vmatprep.subr.bf16.mxu0 0
        %6759 = vmatpush1.bf16.msra.mxu0 0
        %6760 = vmatprep.subr.bf16.mxu0 0
        %6761 = vmatpush1.bf16.msra.mxu0 0
        %6762 = vmatprep.subr.bf16.mxu0 0
        %6763 = vmatpush1.bf16.msra.mxu0 0
        %6764 = vmatprep.subr.bf16.mxu0 0
        %6765 = vmatpush1.bf16.msra.mxu0 0
        %6766 = vmatprep.subr.bf16.mxu0 0
        %6767 = vmatpush1.bf16.msra.mxu0 0
        %6768 = vmatprep.subr.bf16.mxu0 0
        %6769 = vmatpush1.bf16.msra.mxu0 0
        %6770 = vmatprep.subr.bf16.mxu0 0
        %6771 = vmatpush1.bf16.msra.mxu0 0
        %6772 = vmatprep.mubr.bf16.mxu0 0
        %6773 = vmatmul.mubr.bf16.gmra.mrb[0].mxu0 %v6738
        %v6774 = vpop.f32.mrb[0].mxu0
        %v6775 = vadd.f32 0.0, %v6774
        %v6776 = vpop.f32.mrb[0].mxu0
        %v6777 = vpop.f32.mrb[0].mxu0
        %v6778 = vadd.f32 0.0, %v6777
        %v6779 = vpop.f32.mrb[0].mxu0
        %6780 = vdwg.mxu0
        %6781 = vrot.lane.b32.xlu0 %v1008, 64
        %v6782 = vpop.permute.xlu0 %6781
        %v6785 = vsel %vm1778, %v6673, 0
        %6787 = vmatprep.subr.bf16.mxu0 0
        %6788 = vmatpush1.bf16.msra.mxu0 %v6782
        %6789 = vmatprep.subr.bf16.mxu0 0
        %6790 = vmatpush1.bf16.msra.mxu0 0
        %6791 = vmatprep.subr.bf16.mxu0 0
        %6792 = vmatpush1.bf16.msra.mxu0 0
        %6793 = vmatprep.subr.bf16.mxu0 0
        %6794 = vmatpush1.bf16.msra.mxu0 0
        %6795 = vmatprep.subr.bf16.mxu0 0
        %6796 = vmatpush1.bf16.msra.mxu0 0
        %6797 = vmatprep.subr.bf16.mxu0 0
        %6798 = vmatpush1.bf16.msra.mxu0 0
        %6799 = vmatprep.subr.bf16.mxu0 0
        %6800 = vmatpush1.bf16.msra.mxu0 0
        %6801 = vmatprep.subr.bf16.mxu0 0
        %6802 = vmatpush1.bf16.msra.mxu0 0
        %6803 = vmatprep.subr.bf16.mxu0 0
        %6804 = vmatpush1.bf16.msra.mxu0 0
        %6805 = vmatprep.subr.bf16.mxu0 0
        %6806 = vmatpush1.bf16.msra.mxu0 0
        %6807 = vmatprep.subr.bf16.mxu0 0
        %6808 = vmatpush1.bf16.msra.mxu0 0
        %6809 = vmatprep.subr.bf16.mxu0 0
        %6810 = vmatpush1.bf16.msra.mxu0 0
        %6811 = vmatprep.subr.bf16.mxu0 0
        %6812 = vmatpush1.bf16.msra.mxu0 0
        %6813 = vmatprep.subr.bf16.mxu0 0
        %6814 = vmatpush1.bf16.msra.mxu0 0
        %6815 = vmatprep.subr.bf16.mxu0 0
        %6816 = vmatpush1.bf16.msra.mxu0 0
        %6817 = vmatprep.subr.bf16.mxu0 0
        %6818 = vmatpush1.bf16.msra.mxu0 0
        %6819 = vmatprep.mubr.bf16.mxu0 0
        %6820 = vmatmul.mubr.bf16.gmra.mrb[0].mxu0 %v6785
        %v6821 = vpop.f32.mrb[0].mxu0
        %v6822 = vadd.f32 0.0, %v6821
        %v6823 = vpop.f32.mrb[0].mxu0
        %v6824 = vpop.f32.mrb[0].mxu0
        %v6825 = vadd.f32 0.0, %v6824
        %v6826 = vpop.f32.mrb[0].mxu0
        %6827 = vdwg.mxu0
        %6828 = vrot.lane.b32.xlu0 %v1009, 64
        %v6829 = vpop.permute.xlu0 %6828
        %v6832 = vsel %vm1778, %v6674, 0
        %6834 = vmatprep.subr.bf16.mxu0 0
        %6835 = vmatpush1.bf16.msra.mxu0 %v6829
        %6836 = vmatprep.subr.bf16.mxu0 0
        %6837 = vmatpush1.bf16.msra.mxu0 0
        %6838 = vmatprep.subr.bf16.mxu0 0
        %6839 = vmatpush1.bf16.msra.mxu0 0
        %6840 = vmatprep.subr.bf16.mxu0 0
        %6841 = vmatpush1.bf16.msra.mxu0 0
        %6842 = vmatprep.subr.bf16.mxu0 0
        %6843 = vmatpush1.bf16.msra.mxu0 0
        %6844 = vmatprep.subr.bf16.mxu0 0
        %6845 = vmatpush1.bf16.msra.mxu0 0
        %6846 = vmatprep.subr.bf16.mxu0 0
        %6847 = vmatpush1.bf16.msra.mxu0 0
        %6848 = vmatprep.subr.bf16.mxu0 0
        %6849 = vmatpush1.bf16.msra.mxu0 0
        %6850 = vmatprep.subr.bf16.mxu0 0
        %6851 = vmatpush1.bf16.msra.mxu0 0
        %6852 = vmatprep.subr.bf16.mxu0 0
        %6853 = vmatpush1.bf16.msra.mxu0 0
        %6854 = vmatprep.subr.bf16.mxu0 0
        %6855 = vmatpush1.bf16.msra.mxu0 0
        %6856 = vmatprep.subr.bf16.mxu0 0
        %6857 = vmatpush1.bf16.msra.mxu0 0
        %6858 = vmatprep.subr.bf16.mxu0 0
        %6859 = vmatpush1.bf16.msra.mxu0 0
        %6860 = vmatprep.subr.bf16.mxu0 0
        %6861 = vmatpush1.bf16.msra.mxu0 0
        %6862 = vmatprep.subr.bf16.mxu0 0
        %6863 = vmatpush1.bf16.msra.mxu0 0
        %6864 = vmatprep.subr.bf16.mxu0 0
        %6865 = vmatpush1.bf16.msra.mxu0 0
        %6866 = vmatprep.mubr.bf16.mxu0 0
        %6867 = vmatmul.mubr.bf16.gmra.mrb[0].mxu0 %v6832
        %v6868 = vpop.f32.mrb[0].mxu0
        %v6869 = vadd.f32 0.0, %v6868
        %v6870 = vpop.f32.mrb[0].mxu0
        %v6871 = vpop.f32.mrb[0].mxu0
        %v6872 = vadd.f32 0.0, %v6871
        %v6873 = vpop.f32.mrb[0].mxu0
        %6874 = vdwg.mxu0
        %6875 = vrot.lane.b32.xlu0 %v1010, 64
        %v6876 = vpop.permute.xlu0 %6875
        %v6879 = vsel %vm1778, %v6675, 0
        %6881 = vmatprep.subr.bf16.mxu0 0
        %6882 = vmatpush1.bf16.msra.mxu0 %v6876
        %6883 = vmatprep.subr.bf16.mxu0 0
        %6884 = vmatpush1.bf16.msra.mxu0 0
        %6885 = vmatprep.subr.bf16.mxu0 0
        %6886 = vmatpush1.bf16.msra.mxu0 0
        %6887 = vmatprep.subr.bf16.mxu0 0
        %6888 = vmatpush1.bf16.msra.mxu0 0
        %6889 = vmatprep.subr.bf16.mxu0 0
        %6890 = vmatpush1.bf16.msra.mxu0 0
        %6891 = vmatprep.subr.bf16.mxu0 0
        %6892 = vmatpush1.bf16.msra.mxu0 0
        %6893 = vmatprep.subr.bf16.mxu0 0
        %6894 = vmatpush1.bf16.msra.mxu0 0
        %6895 = vmatprep.subr.bf16.mxu0 0
        %6896 = vmatpush1.bf16.msra.mxu0 0
        %6897 = vmatprep.subr.bf16.mxu0 0
        %6898 = vmatpush1.bf16.msra.mxu0 0
        %6899 = vmatprep.subr.bf16.mxu0 0
        %6900 = vmatpush1.bf16.msra.mxu0 0
        %6901 = vmatprep.subr.bf16.mxu0 0
        %6902 = vmatpush1.bf16.msra.mxu0 0
        %6903 = vmatprep.subr.bf16.mxu0 0
        %6904 = vmatpush1.bf16.msra.mxu0 0
        %6905 = vmatprep.subr.bf16.mxu0 0
        %6906 = vmatpush1.bf16.msra.mxu0 0
        %6907 = vmatprep.subr.bf16.mxu0 0
        %6908 = vmatpush1.bf16.msra.mxu0 0
        %6909 = vmatprep.subr.bf16.mxu0 0
        %6910 = vmatpush1.bf16.msra.mxu0 0
        %6911 = vmatprep.subr.bf16.mxu0 0
        %6912 = vmatpush1.bf16.msra.mxu0 0
        %6913 = vmatprep.mubr.bf16.mxu0 0
        %6914 = vmatmul.mubr.bf16.gmra.mrb[0].mxu0 %v6879
        %v6915 = vpop.f32.mrb[0].mxu0
        %v6916 = vadd.f32 0.0, %v6915
        %v6917 = vpop.f32.mrb[0].mxu0
        %v6918 = vpop.f32.mrb[0].mxu0
        %v6919 = vadd.f32 0.0, %v6918
        %v6920 = vpop.f32.mrb[0].mxu0
        %6921 = vdwg.mxu0
        %6922 = vrot.lane.b32.xlu0 %v1011, 64
        %v6923 = vpop.permute.xlu0 %6922
        %v6926 = vsel %vm1778, %v6676, 0
        %6928 = vmatprep.subr.bf16.mxu0 0
        %6929 = vmatpush1.bf16.msra.mxu0 %v6923
        %6930 = vmatprep.subr.bf16.mxu0 0
        %6931 = vmatpush1.bf16.msra.mxu0 0
        %6932 = vmatprep.subr.bf16.mxu0 0
        %6933 = vmatpush1.bf16.msra.mxu0 0
        %6934 = vmatprep.subr.bf16.mxu0 0
        %6935 = vmatpush1.bf16.msra.mxu0 0
        %6936 = vmatprep.subr.bf16.mxu0 0
        %6937 = vmatpush1.bf16.msra.mxu0 0
        %6938 = vmatprep.subr.bf16.mxu0 0
        %6939 = vmatpush1.bf16.msra.mxu0 0
        %6940 = vmatprep.subr.bf16.mxu0 0
        %6941 = vmatpush1.bf16.msra.mxu0 0
        %6942 = vmatprep.subr.bf16.mxu0 0
        %6943 = vmatpush1.bf16.msra.mxu0 0
        %6944 = vmatprep.subr.bf16.mxu0 0
        %6945 = vmatpush1.bf16.msra.mxu0 0
        %6946 = vmatprep.subr.bf16.mxu0 0
        %6947 = vmatpush1.bf16.msra.mxu0 0
        %6948 = vmatprep.subr.bf16.mxu0 0
        %6949 = vmatpush1.bf16.msra.mxu0 0
        %6950 = vmatprep.subr.bf16.mxu0 0
        %6951 = vmatpush1.bf16.msra.mxu0 0
        %6952 = vmatprep.subr.bf16.mxu0 0
        %6953 = vmatpush1.bf16.msra.mxu0 0
        %6954 = vmatprep.subr.bf16.mxu0 0
        %6955 = vmatpush1.bf16.msra.mxu0 0
        %6956 = vmatprep.subr.bf16.mxu0 0
        %6957 = vmatpush1.bf16.msra.mxu0 0
        %6958 = vmatprep.subr.bf16.mxu0 0
        %6959 = vmatpush1.bf16.msra.mxu0 0
        %6960 = vmatprep.mubr.bf16.mxu0 0
        %6961 = vmatmul.mubr.bf16.gmra.mrb[0].mxu0 %v6926
        %v6962 = vpop.f32.mrb[0].mxu0
        %v6963 = vadd.f32 0.0, %v6962
        %v6964 = vpop.f32.mrb[0].mxu0
        %v6965 = vpop.f32.mrb[0].mxu0
        %v6966 = vadd.f32 0.0, %v6965
        %v6967 = vpop.f32.mrb[0].mxu0
        %6968 = vdwg.mxu0
        %6969 = vrot.lane.b32.xlu0 %v1012, 64
        %v6970 = vpop.permute.xlu0 %6969
        %v6973 = vsel %vm1778, %v6677, 0
        %6975 = vmatprep.subr.bf16.mxu0 0
        %6976 = vmatpush1.bf16.msra.mxu0 %v6970
        %6977 = vmatprep.subr.bf16.mxu0 0
        %6978 = vmatpush1.bf16.msra.mxu0 0
        %6979 = vmatprep.subr.bf16.mxu0 0
        %6980 = vmatpush1.bf16.msra.mxu0 0
        %6981 = vmatprep.subr.bf16.mxu0 0
        %6982 = vmatpush1.bf16.msra.mxu0 0
        %6983 = vmatprep.subr.bf16.mxu0 0
        %6984 = vmatpush1.bf16.msra.mxu0 0
        %6985 = vmatprep.subr.bf16.mxu0 0
        %6986 = vmatpush1.bf16.msra.mxu0 0
        %6987 = vmatprep.subr.bf16.mxu0 0
        %6988 = vmatpush1.bf16.msra.mxu0 0
        %6989 = vmatprep.subr.bf16.mxu0 0
        %6990 = vmatpush1.bf16.msra.mxu0 0
        %6991 = vmatprep.subr.bf16.mxu0 0
        %6992 = vmatpush1.bf16.msra.mxu0 0
        %6993 = vmatprep.subr.bf16.mxu0 0
        %6994 = vmatpush1.bf16.msra.mxu0 0
        %6995 = vmatprep.subr.bf16.mxu0 0
        %6996 = vmatpush1.bf16.msra.mxu0 0
        %6997 = vmatprep.subr.bf16.mxu0 0
        %6998 = vmatpush1.bf16.msra.mxu0 0
        %6999 = vmatprep.subr.bf16.mxu0 0
        %7000 = vmatpush1.bf16.msra.mxu0 0
        %7001 = vmatprep.subr.bf16.mxu0 0
        %7002 = vmatpush1.bf16.msra.mxu0 0
        %7003 = vmatprep.subr.bf16.mxu0 0
        %7004 = vmatpush1.bf16.msra.mxu0 0
        %7005 = vmatprep.subr.bf16.mxu0 0
        %7006 = vmatpush1.bf16.msra.mxu0 0
        %7007 = vmatprep.mubr.bf16.mxu0 0
        %7008 = vmatmul.mubr.bf16.gmra.mrb[0].mxu0 %v6973
        %v7009 = vpop.f32.mrb[0].mxu0
        %v7010 = vadd.f32 0.0, %v7009
        %v7011 = vpop.f32.mrb[0].mxu0
        %v7012 = vpop.f32.mrb[0].mxu0
        %v7013 = vadd.f32 0.0, %v7012
        %v7014 = vpop.f32.mrb[0].mxu0
        %7015 = vdwg.mxu0
        %7016 = vrot.lane.b32.xlu0 %v1013, 64
        %v7017 = vpop.permute.xlu0 %7016
        %v7020 = vsel %vm1778, %v6678, 0
        %7022 = vmatprep.subr.bf16.mxu0 0
        %7023 = vmatpush1.bf16.msra.mxu0 %v7017
        %7024 = vmatprep.subr.bf16.mxu0 0
        %7025 = vmatpush1.bf16.msra.mxu0 0
        %7026 = vmatprep.subr.bf16.mxu0 0
        %7027 = vmatpush1.bf16.msra.mxu0 0
        %7028 = vmatprep.subr.bf16.mxu0 0
        %7029 = vmatpush1.bf16.msra.mxu0 0
        %7030 = vmatprep.subr.bf16.mxu0 0
        %7031 = vmatpush1.bf16.msra.mxu0 0
        %7032 = vmatprep.subr.bf16.mxu0 0
        %7033 = vmatpush1.bf16.msra.mxu0 0
        %7034 = vmatprep.subr.bf16.mxu0 0
        %7035 = vmatpush1.bf16.msra.mxu0 0
        %7036 = vmatprep.subr.bf16.mxu0 0
        %7037 = vmatpush1.bf16.msra.mxu0 0
        %7038 = vmatprep.subr.bf16.mxu0 0
        %7039 = vmatpush1.bf16.msra.mxu0 0
        %7040 = vmatprep.subr.bf16.mxu0 0
        %7041 = vmatpush1.bf16.msra.mxu0 0
        %7042 = vmatprep.subr.bf16.mxu0 0
        %7043 = vmatpush1.bf16.msra.mxu0 0
        %7044 = vmatprep.subr.bf16.mxu0 0
        %7045 = vmatpush1.bf16.msra.mxu0 0
        %7046 = vmatprep.subr.bf16.mxu0 0
        %7047 = vmatpush1.bf16.msra.mxu0 0
        %7048 = vmatprep.subr.bf16.mxu0 0
        %7049 = vmatpush1.bf16.msra.mxu0 0
        %7050 = vmatprep.subr.bf16.mxu0 0
        %7051 = vmatpush1.bf16.msra.mxu0 0
        %7052 = vmatprep.subr.bf16.mxu0 0
        %7053 = vmatpush1.bf16.msra.mxu0 0
        %7054 = vmatprep.mubr.bf16.mxu0 0
        %7055 = vmatmul.mubr.bf16.gmra.mrb[0].mxu0 %v7020
        %v7056 = vpop.f32.mrb[0].mxu0
        %v7057 = vadd.f32 0.0, %v7056
        %v7058 = vpop.f32.mrb[0].mxu0
        %v7059 = vpop.f32.mrb[0].mxu0
        %v7060 = vadd.f32 0.0, %v7059
        %v7061 = vpop.f32.mrb[0].mxu0
        %7062 = vdwg.mxu0
        %7063 = vrot.lane.b32.xlu0 %v1014, 64
        %v7064 = vpop.permute.xlu0 %7063
        %v7067 = vsel %vm1778, %v6679, 0
        %7069 = vmatprep.subr.bf16.mxu0 0
        %7070 = vmatpush1.bf16.msra.mxu0 %v7064
        %7071 = vmatprep.subr.bf16.mxu0 0
        %7072 = vmatpush1.bf16.msra.mxu0 0
        %7073 = vmatprep.subr.bf16.mxu0 0
        %7074 = vmatpush1.bf16.msra.mxu0 0
        %7075 = vmatprep.subr.bf16.mxu0 0
        %7076 = vmatpush1.bf16.msra.mxu0 0
        %7077 = vmatprep.subr.bf16.mxu0 0
        %7078 = vmatpush1.bf16.msra.mxu0 0
        %7079 = vmatprep.subr.bf16.mxu0 0
        %7080 = vmatpush1.bf16.msra.mxu0 0
        %7081 = vmatprep.subr.bf16.mxu0 0
        %7082 = vmatpush1.bf16.msra.mxu0 0
        %7083 = vmatprep.subr.bf16.mxu0 0
        %7084 = vmatpush1.bf16.msra.mxu0 0
        %7085 = vmatprep.subr.bf16.mxu0 0
        %7086 = vmatpush1.bf16.msra.mxu0 0
        %7087 = vmatprep.subr.bf16.mxu0 0
        %7088 = vmatpush1.bf16.msra.mxu0 0
        %7089 = vmatprep.subr.bf16.mxu0 0
        %7090 = vmatpush1.bf16.msra.mxu0 0
        %7091 = vmatprep.subr.bf16.mxu0 0
        %7092 = vmatpush1.bf16.msra.mxu0 0
        %7093 = vmatprep.subr.bf16.mxu0 0
        %7094 = vmatpush1.bf16.msra.mxu0 0
        %7095 = vmatprep.subr.bf16.mxu0 0
        %7096 = vmatpush1.bf16.msra.mxu0 0
        %7097 = vmatprep.subr.bf16.mxu0 0
        %7098 = vmatpush1.bf16.msra.mxu0 0
        %7099 = vmatprep.subr.bf16.mxu0 0
        %7100 = vmatpush1.bf16.msra.mxu0 0
        %7101 = vmatprep.mubr.bf16.mxu0 0
        %7102 = vmatmul.mubr.bf16.gmra.mrb[0].mxu0 %v7067
        %v7103 = vpop.f32.mrb[0].mxu0
        %v7104 = vadd.f32 0.0, %v7103
        %v7105 = vpop.f32.mrb[0].mxu0
        %v7106 = vpop.f32.mrb[0].mxu0
        %v7107 = vadd.f32 0.0, %v7106
        %v7108 = vpop.f32.mrb[0].mxu0
        %7109 = vdwg.mxu0
        %7110 = vrot.lane.b32.xlu0 %v1015, 64
        %v7111 = vpop.permute.xlu0 %7110
        %v7114 = vsel %vm1778, %v6680, 0
        %7116 = vmatprep.subr.bf16.mxu0 0
        %7117 = vmatpush1.bf16.msra.mxu0 %v7111
        %7118 = vmatprep.subr.bf16.mxu0 0
        %7119 = vmatpush1.bf16.msra.mxu0 0
        %7120 = vmatprep.subr.bf16.mxu0 0
        %7121 = vmatpush1.bf16.msra.mxu0 0
        %7122 = vmatprep.subr.bf16.mxu0 0
        %7123 = vmatpush1.bf16.msra.mxu0 0
        %7124 = vmatprep.subr.bf16.mxu0 0
        %7125 = vmatpush1.bf16.msra.mxu0 0
        %7126 = vmatprep.subr.bf16.mxu0 0
        %7127 = vmatpush1.bf16.msra.mxu0 0
        %7128 = vmatprep.subr.bf16.mxu0 0
        %7129 = vmatpush1.bf16.msra.mxu0 0
        %7130 = vmatprep.subr.bf16.mxu0 0
        %7131 = vmatpush1.bf16.msra.mxu0 0
        %7132 = vmatprep.subr.bf16.mxu0 0
        %7133 = vmatpush1.bf16.msra.mxu0 0
        %7134 = vmatprep.subr.bf16.mxu0 0
        %7135 = vmatpush1.bf16.msra.mxu0 0
        %7136 = vmatprep.subr.bf16.mxu0 0
        %7137 = vmatpush1.bf16.msra.mxu0 0
        %7138 = vmatprep.subr.bf16.mxu0 0
        %7139 = vmatpush1.bf16.msra.mxu0 0
        %7140 = vmatprep.subr.bf16.mxu0 0
        %7141 = vmatpush1.bf16.msra.mxu0 0
        %7142 = vmatprep.subr.bf16.mxu0 0
        %7143 = vmatpush1.bf16.msra.mxu0 0
        %7144 = vmatprep.subr.bf16.mxu0 0
        %7145 = vmatpush1.bf16.msra.mxu0 0
        %7146 = vmatprep.subr.bf16.mxu0 0
        %7147 = vmatpush1.bf16.msra.mxu0 0
        %7148 = vmatprep.mubr.bf16.mxu0 0
        %7149 = vmatmul.mubr.bf16.gmra.mrb[0].mxu0 %v7114
        %v7150 = vpop.f32.mrb[0].mxu0
        %v7151 = vadd.f32 0.0, %v7150
        %v7152 = vpop.f32.mrb[0].mxu0
        %v7153 = vpop.f32.mrb[0].mxu0
        %v7154 = vadd.f32 0.0, %v7153
        %v7155 = vpop.f32.mrb[0].mxu0
        %7156 = vdwg.mxu0
        %7157 = vrot.lane.b32.xlu0 %v1016, 64
        %v7158 = vpop.permute.xlu0 %7157
        %v7161 = vsel %vm1778, %v6681, 0
        %7163 = vmatprep.subr.bf16.mxu0 0
        %7164 = vmatpush1.bf16.msra.mxu0 %v7158
        %7165 = vmatprep.subr.bf16.mxu0 0
        %7166 = vmatpush1.bf16.msra.mxu0 0
        %7167 = vmatprep.subr.bf16.mxu0 0
        %7168 = vmatpush1.bf16.msra.mxu0 0
        %7169 = vmatprep.subr.bf16.mxu0 0
        %7170 = vmatpush1.bf16.msra.mxu0 0
        %7171 = vmatprep.subr.bf16.mxu0 0
        %7172 = vmatpush1.bf16.msra.mxu0 0
        %7173 = vmatprep.subr.bf16.mxu0 0
        %7174 = vmatpush1.bf16.msra.mxu0 0
        %7175 = vmatprep.subr.bf16.mxu0 0
        %7176 = vmatpush1.bf16.msra.mxu0 0
        %7177 = vmatprep.subr.bf16.mxu0 0
        %7178 = vmatpush1.bf16.msra.mxu0 0
        %7179 = vmatprep.subr.bf16.mxu0 0
        %7180 = vmatpush1.bf16.msra.mxu0 0
        %7181 = vmatprep.subr.bf16.mxu0 0
        %7182 = vmatpush1.bf16.msra.mxu0 0
        %7183 = vmatprep.subr.bf16.mxu0 0
        %7184 = vmatpush1.bf16.msra.mxu0 0
        %7185 = vmatprep.subr.bf16.mxu0 0
        %7186 = vmatpush1.bf16.msra.mxu0 0
        %7187 = vmatprep.subr.bf16.mxu0 0
        %7188 = vmatpush1.bf16.msra.mxu0 0
        %7189 = vmatprep.subr.bf16.mxu0 0
        %7190 = vmatpush1.bf16.msra.mxu0 0
        %7191 = vmatprep.subr.bf16.mxu0 0
        %7192 = vmatpush1.bf16.msra.mxu0 0
        %7193 = vmatprep.subr.bf16.mxu0 0
        %7194 = vmatpush1.bf16.msra.mxu0 0
        %7195 = vmatprep.mubr.bf16.mxu0 0
        %7196 = vmatmul.mubr.bf16.gmra.mrb[0].mxu0 %v7161
        %v7197 = vpop.f32.mrb[0].mxu0
        %v7198 = vadd.f32 0.0, %v7197
        %v7199 = vpop.f32.mrb[0].mxu0
        %v7200 = vpop.f32.mrb[0].mxu0
        %v7201 = vadd.f32 0.0, %v7200
        %v7202 = vpop.f32.mrb[0].mxu0
        %7203 = vdwg.mxu0
        %7204 = vrot.lane.b32.xlu0 %v1017, 64
        %v7205 = vpop.permute.xlu0 %7204
        %v7208 = vsel %vm1778, %v6682, 0
        %7210 = vmatprep.subr.bf16.mxu0 0
        %7211 = vmatpush1.bf16.msra.mxu0 %v7205
        %7212 = vmatprep.subr.bf16.mxu0 0
        %7213 = vmatpush1.bf16.msra.mxu0 0
        %7214 = vmatprep.subr.bf16.mxu0 0
        %7215 = vmatpush1.bf16.msra.mxu0 0
        %7216 = vmatprep.subr.bf16.mxu0 0
        %7217 = vmatpush1.bf16.msra.mxu0 0
        %7218 = vmatprep.subr.bf16.mxu0 0
        %7219 = vmatpush1.bf16.msra.mxu0 0
        %7220 = vmatprep.subr.bf16.mxu0 0
        %7221 = vmatpush1.bf16.msra.mxu0 0
        %7222 = vmatprep.subr.bf16.mxu0 0
        %7223 = vmatpush1.bf16.msra.mxu0 0
        %7224 = vmatprep.subr.bf16.mxu0 0
        %7225 = vmatpush1.bf16.msra.mxu0 0
        %7226 = vmatprep.subr.bf16.mxu0 0
        %7227 = vmatpush1.bf16.msra.mxu0 0
        %7228 = vmatprep.subr.bf16.mxu0 0
        %7229 = vmatpush1.bf16.msra.mxu0 0
        %7230 = vmatprep.subr.bf16.mxu0 0
        %7231 = vmatpush1.bf16.msra.mxu0 0
        %7232 = vmatprep.subr.bf16.mxu0 0
        %7233 = vmatpush1.bf16.msra.mxu0 0
        %7234 = vmatprep.subr.bf16.mxu0 0
        %7235 = vmatpush1.bf16.msra.mxu0 0
        %7236 = vmatprep.subr.bf16.mxu0 0
        %7237 = vmatpush1.bf16.msra.mxu0 0
        %7238 = vmatprep.subr.bf16.mxu0 0
        %7239 = vmatpush1.bf16.msra.mxu0 0
        %7240 = vmatprep.subr.bf16.mxu0 0
        %7241 = vmatpush1.bf16.msra.mxu0 0
        %7242 = vmatprep.mubr.bf16.mxu0 0
        %7243 = vmatmul.mubr.bf16.gmra.mrb[0].mxu0 %v7208
        %v7244 = vpop.f32.mrb[0].mxu0
        %v7245 = vadd.f32 0.0, %v7244
        %v7246 = vpop.f32.mrb[0].mxu0
        %v7247 = vpop.f32.mrb[0].mxu0
        %v7248 = vadd.f32 0.0, %v7247
        %v7249 = vpop.f32.mrb[0].mxu0
        %7250 = vdwg.mxu0
        %7251 = vrot.lane.b32.xlu0 %v1018, 64
        %v7252 = vpop.permute.xlu0 %7251
        %v7255 = vsel %vm1778, %v6683, 0
        %7257 = vmatprep.subr.bf16.mxu0 0
        %7258 = vmatpush1.bf16.msra.mxu0 %v7252
        %7259 = vmatprep.subr.bf16.mxu0 0
        %7260 = vmatpush1.bf16.msra.mxu0 0
        %7261 = vmatprep.subr.bf16.mxu0 0
        %7262 = vmatpush1.bf16.msra.mxu0 0
        %7263 = vmatprep.subr.bf16.mxu0 0
        %7264 = vmatpush1.bf16.msra.mxu0 0
        %7265 = vmatprep.subr.bf16.mxu0 0
        %7266 = vmatpush1.bf16.msra.mxu0 0
        %7267 = vmatprep.subr.bf16.mxu0 0
        %7268 = vmatpush1.bf16.msra.mxu0 0
        %7269 = vmatprep.subr.bf16.mxu0 0
        %7270 = vmatpush1.bf16.msra.mxu0 0
        %7271 = vmatprep.subr.bf16.mxu0 0
        %7272 = vmatpush1.bf16.msra.mxu0 0
        %7273 = vmatprep.subr.bf16.mxu0 0
        %7274 = vmatpush1.bf16.msra.mxu0 0
        %7275 = vmatprep.subr.bf16.mxu0 0
        %7276 = vmatpush1.bf16.msra.mxu0 0
        %7277 = vmatprep.subr.bf16.mxu0 0
        %7278 = vmatpush1.bf16.msra.mxu0 0
        %7279 = vmatprep.subr.bf16.mxu0 0
        %7280 = vmatpush1.bf16.msra.mxu0 0
        %7281 = vmatprep.subr.bf16.mxu0 0
        %7282 = vmatpush1.bf16.msra.mxu0 0
        %7283 = vmatprep.subr.bf16.mxu0 0
        %7284 = vmatpush1.bf16.msra.mxu0 0
        %7285 = vmatprep.subr.bf16.mxu0 0
        %7286 = vmatpush1.bf16.msra.mxu0 0
        %7287 = vmatprep.subr.bf16.mxu0 0
        %7288 = vmatpush1.bf16.msra.mxu0 0
        %7289 = vmatprep.mubr.bf16.mxu0 0
        %7290 = vmatmul.mubr.bf16.gmra.mrb[0].mxu0 %v7255
        %v7291 = vpop.f32.mrb[0].mxu0
        %v7292 = vadd.f32 0.0, %v7291
        %v7293 = vpop.f32.mrb[0].mxu0
        %v7294 = vpop.f32.mrb[0].mxu0
        %v7295 = vadd.f32 0.0, %v7294
        %v7296 = vpop.f32.mrb[0].mxu0
        %7297 = vdwg.mxu0
        %7298 = vrot.lane.b32.xlu0 %v1019, 64
        %v7299 = vpop.permute.xlu0 %7298
        %v7302 = vsel %vm1778, %v6684, 0
        %7304 = vmatprep.subr.bf16.mxu0 0
        %7305 = vmatpush1.bf16.msra.mxu0 %v7299
        %7306 = vmatprep.subr.bf16.mxu0 0
        %7307 = vmatpush1.bf16.msra.mxu0 0
        %7308 = vmatprep.subr.bf16.mxu0 0
        %7309 = vmatpush1.bf16.msra.mxu0 0
        %7310 = vmatprep.subr.bf16.mxu0 0
        %7311 = vmatpush1.bf16.msra.mxu0 0
        %7312 = vmatprep.subr.bf16.mxu0 0
        %7313 = vmatpush1.bf16.msra.mxu0 0
        %7314 = vmatprep.subr.bf16.mxu0 0
        %7315 = vmatpush1.bf16.msra.mxu0 0
        %7316 = vmatprep.subr.bf16.mxu0 0
        %7317 = vmatpush1.bf16.msra.mxu0 0
        %7318 = vmatprep.subr.bf16.mxu0 0
        %7319 = vmatpush1.bf16.msra.mxu0 0
        %7320 = vmatprep.subr.bf16.mxu0 0
        %7321 = vmatpush1.bf16.msra.mxu0 0
        %7322 = vmatprep.subr.bf16.mxu0 0
        %7323 = vmatpush1.bf16.msra.mxu0 0
        %7324 = vmatprep.subr.bf16.mxu0 0
        %7325 = vmatpush1.bf16.msra.mxu0 0
        %7326 = vmatprep.subr.bf16.mxu0 0
        %7327 = vmatpush1.bf16.msra.mxu0 0
        %7328 = vmatprep.subr.bf16.mxu0 0
        %7329 = vmatpush1.bf16.msra.mxu0 0
        %7330 = vmatprep.subr.bf16.mxu0 0
        %7331 = vmatpush1.bf16.msra.mxu0 0
        %7332 = vmatprep.subr.bf16.mxu0 0
        %7333 = vmatpush1.bf16.msra.mxu0 0
        %7334 = vmatprep.subr.bf16.mxu0 0
        %7335 = vmatpush1.bf16.msra.mxu0 0
        %7336 = vmatprep.mubr.bf16.mxu0 0
        %7337 = vmatmul.mubr.bf16.gmra.mrb[0].mxu0 %v7302
        %v7338 = vpop.f32.mrb[0].mxu0
        %v7339 = vadd.f32 0.0, %v7338
        %v7340 = vpop.f32.mrb[0].mxu0
        %v7341 = vpop.f32.mrb[0].mxu0
        %v7342 = vadd.f32 0.0, %v7341
        %v7343 = vpop.f32.mrb[0].mxu0
        %7344 = vdwg.mxu0
        %7345 = vrot.lane.b32.xlu0 %v1020, 64
        %v7346 = vpop.permute.xlu0 %7345
        %v7349 = vsel %vm1778, %v6685, 0
        %7351 = vmatprep.subr.bf16.mxu0 0
        %7352 = vmatpush1.bf16.msra.mxu0 %v7346
        %7353 = vmatprep.subr.bf16.mxu0 0
        %7354 = vmatpush1.bf16.msra.mxu0 0
        %7355 = vmatprep.subr.bf16.mxu0 0
        %7356 = vmatpush1.bf16.msra.mxu0 0
        %7357 = vmatprep.subr.bf16.mxu0 0
        %7358 = vmatpush1.bf16.msra.mxu0 0
        %7359 = vmatprep.subr.bf16.mxu0 0
        %7360 = vmatpush1.bf16.msra.mxu0 0
        %7361 = vmatprep.subr.bf16.mxu0 0
        %7362 = vmatpush1.bf16.msra.mxu0 0
        %7363 = vmatprep.subr.bf16.mxu0 0
        %7364 = vmatpush1.bf16.msra.mxu0 0
        %7365 = vmatprep.subr.bf16.mxu0 0
        %7366 = vmatpush1.bf16.msra.mxu0 0
        %7367 = vmatprep.subr.bf16.mxu0 0
        %7368 = vmatpush1.bf16.msra.mxu0 0
        %7369 = vmatprep.subr.bf16.mxu0 0
        %7370 = vmatpush1.bf16.msra.mxu0 0
        %7371 = vmatprep.subr.bf16.mxu0 0
        %7372 = vmatpush1.bf16.msra.mxu0 0
        %7373 = vmatprep.subr.bf16.mxu0 0
        %7374 = vmatpush1.bf16.msra.mxu0 0
        %7375 = vmatprep.subr.bf16.mxu0 0
        %7376 = vmatpush1.bf16.msra.mxu0 0
        %7377 = vmatprep.subr.bf16.mxu0 0
        %7378 = vmatpush1.bf16.msra.mxu0 0
        %7379 = vmatprep.subr.bf16.mxu0 0
        %7380 = vmatpush1.bf16.msra.mxu0 0
        %7381 = vmatprep.subr.bf16.mxu0 0
        %7382 = vmatpush1.bf16.msra.mxu0 0
        %7383 = vmatprep.mubr.bf16.mxu0 0
        %7384 = vmatmul.mubr.bf16.gmra.mrb[0].mxu0 %v7349
        %v7385 = vpop.f32.mrb[0].mxu0
        %v7386 = vadd.f32 0.0, %v7385
        %v7387 = vpop.f32.mrb[0].mxu0
        %v7388 = vpop.f32.mrb[0].mxu0
        %v7389 = vadd.f32 0.0, %v7388
        %v7390 = vpop.f32.mrb[0].mxu0
        %7391 = vdwg.mxu0
        %7392 = vrot.lane.b32.xlu0 %v1021, 64
        %v7393 = vpop.permute.xlu0 %7392
        %v7396 = vsel %vm1778, %v6686, 0
        %7398 = vmatprep.subr.bf16.mxu0 0
        %7399 = vmatpush1.bf16.msra.mxu0 %v7393
        %7400 = vmatprep.subr.bf16.mxu0 0
        %7401 = vmatpush1.bf16.msra.mxu0 0
        %7402 = vmatprep.subr.bf16.mxu0 0
        %7403 = vmatpush1.bf16.msra.mxu0 0
        %7404 = vmatprep.subr.bf16.mxu0 0
        %7405 = vmatpush1.bf16.msra.mxu0 0
        %7406 = vmatprep.subr.bf16.mxu0 0
        %7407 = vmatpush1.bf16.msra.mxu0 0
        %7408 = vmatprep.subr.bf16.mxu0 0
        %7409 = vmatpush1.bf16.msra.mxu0 0
        %7410 = vmatprep.subr.bf16.mxu0 0
        %7411 = vmatpush1.bf16.msra.mxu0 0
        %7412 = vmatprep.subr.bf16.mxu0 0
        %7413 = vmatpush1.bf16.msra.mxu0 0
        %7414 = vmatprep.subr.bf16.mxu0 0
        %7415 = vmatpush1.bf16.msra.mxu0 0
        %7416 = vmatprep.subr.bf16.mxu0 0
        %7417 = vmatpush1.bf16.msra.mxu0 0
        %7418 = vmatprep.subr.bf16.mxu0 0
        %7419 = vmatpush1.bf16.msra.mxu0 0
        %7420 = vmatprep.subr.bf16.mxu0 0
        %7421 = vmatpush1.bf16.msra.mxu0 0
        %7422 = vmatprep.subr.bf16.mxu0 0
        %7423 = vmatpush1.bf16.msra.mxu0 0
        %7424 = vmatprep.subr.bf16.mxu0 0
        %7425 = vmatpush1.bf16.msra.mxu0 0
        %7426 = vmatprep.subr.bf16.mxu0 0
        %7427 = vmatpush1.bf16.msra.mxu0 0
        %7428 = vmatprep.subr.bf16.mxu0 0
        %7429 = vmatpush1.bf16.msra.mxu0 0
        %7430 = vmatprep.mubr.bf16.mxu0 0
        %7431 = vmatmul.mubr.bf16.gmra.mrb[0].mxu0 %v7396
        %v7432 = vpop.f32.mrb[0].mxu0
        %v7433 = vadd.f32 0.0, %v7432
        %v7434 = vpop.f32.mrb[0].mxu0
        %v7435 = vpop.f32.mrb[0].mxu0
        %v7436 = vadd.f32 0.0, %v7435
        %v7437 = vpop.f32.mrb[0].mxu0
        %7438 = vdwg.mxu0
        %v7439 = vrcp.pop %v6577
        %v7440 = vrcp.pop %v6580
        %v7441 = vrcp.pop %v6583
        %v7442 = vrcp.pop %v6586
        %v7443 = vrcp.pop %v6589
        %v7444 = vrcp.pop %v6592
        %v7445 = vrcp.pop %v6595
        %v7446 = vrcp.pop %v6598
        %v7447 = vrcp.pop %v6601
        %v7448 = vrcp.pop %v6604
        %v7449 = vrcp.pop %v6607
        %v7450 = vrcp.pop %v6610
        %v7451 = vrcp.pop %v6613
        %v7452 = vrcp.pop %v6616
        %v7453 = vrcp.pop %v6619
        %v7454 = vrcp.pop %v6622
        %v7455 = vrcp.pop %v6625
        %v7456 = vrcp.pop %v6628
        %v7457 = vrcp.pop %v6631
        %v7458 = vrcp.pop %v6634
        %v7459 = vrcp.pop %v6637
        %v7460 = vrcp.pop %v6640
        %v7461 = vrcp.pop %v6643
        %v7462 = vrcp.pop %v6646
        %v7463 = vrcp.pop %v6649
        %v7464 = vrcp.pop %v6652
        %v7465 = vrcp.pop %v6655
        %v7466 = vrcp.pop %v6658
        %v7467 = vrcp.pop %v6661
        %v7468 = vrcp.pop %v6664
        %v7469 = vrcp.pop %v6667
        %v7470 = vrcp.pop %v6670
        %v7471 = vmul.f32 %v6728, %v7439
        %v7472 = vmul.f32 %v6731, %v7440
        %v7473 = vmul.f32 %v6775, %v7441
        %v7474 = vmul.f32 %v6778, %v7442
        %v7475 = vmul.f32 %v6822, %v7443
        %v7476 = vmul.f32 %v6825, %v7444
        %v7477 = vmul.f32 %v6869, %v7445
        %v7478 = vmul.f32 %v6872, %v7446
        %v7479 = vmul.f32 %v6916, %v7447
        %v7480 = vmul.f32 %v6919, %v7448
        %v7481 = vmul.f32 %v6963, %v7449
        %v7482 = vmul.f32 %v6966, %v7450
        %v7483 = vmul.f32 %v7010, %v7451
        %v7484 = vmul.f32 %v7013, %v7452
        %v7485 = vmul.f32 %v7057, %v7453
        %v7486 = vmul.f32 %v7060, %v7454
        %v7487 = vmul.f32 %v7104, %v7455
        %v7488 = vmul.f32 %v7107, %v7456
        %v7489 = vmul.f32 %v7151, %v7457
        %v7490 = vmul.f32 %v7154, %v7458
        %v7491 = vmul.f32 %v7198, %v7459
        %v7492 = vmul.f32 %v7201, %v7460
        %v7493 = vmul.f32 %v7245, %v7461
        %v7494 = vmul.f32 %v7248, %v7462
        %v7495 = vmul.f32 %v7292, %v7463
        %v7496 = vmul.f32 %v7295, %v7464
        %v7497 = vmul.f32 %v7339, %v7465
        %v7498 = vmul.f32 %v7342, %v7466
        %v7499 = vmul.f32 %v7386, %v7467
        %v7500 = vmul.f32 %v7389, %v7468
        %v7501 = vmul.f32 %v7433, %v7469
        %v7502 = vmul.f32 %v7436, %v7470
        %7535 = vrot.lane.b32.xlu0 %v7471, 64
        %v7536 = vpop.permute.xlu0 %7535
        %7537 = vrot.lane.b32.xlu0 %v7472, 64
        %v7538 = vpop.permute.xlu0 %7537
        %7539 = vrot.lane.b32.xlu0 %v7473, 64
        %v7540 = vpop.permute.xlu0 %7539
        %7541 = vrot.lane.b32.xlu0 %v7474, 64
        %v7542 = vpop.permute.xlu0 %7541
        %7543 = vrot.lane.b32.xlu0 %v7475, 64
        %v7544 = vpop.permute.xlu0 %7543
        %7545 = vrot.lane.b32.xlu0 %v7476, 64
        %v7546 = vpop.permute.xlu0 %7545
        %7547 = vrot.lane.b32.xlu0 %v7477, 64
        %v7548 = vpop.permute.xlu0 %7547
        %7549 = vrot.lane.b32.xlu0 %v7478, 64
        %v7550 = vpop.permute.xlu0 %7549
        %7551 = vrot.lane.b32.xlu0 %v7479, 64
        %v7552 = vpop.permute.xlu0 %7551
        %7553 = vrot.lane.b32.xlu0 %v7480, 64
        %v7554 = vpop.permute.xlu0 %7553
        %7555 = vrot.lane.b32.xlu0 %v7481, 64
        %v7556 = vpop.permute.xlu0 %7555
        %7557 = vrot.lane.b32.xlu0 %v7482, 64
        %v7558 = vpop.permute.xlu0 %7557
        %7559 = vrot.lane.b32.xlu0 %v7483, 64
        %v7560 = vpop.permute.xlu0 %7559
        %7561 = vrot.lane.b32.xlu0 %v7484, 64
        %v7562 = vpop.permute.xlu0 %7561
        %7563 = vrot.lane.b32.xlu0 %v7485, 64
        %v7564 = vpop.permute.xlu0 %7563
        %7565 = vrot.lane.b32.xlu0 %v7486, 64
        %v7566 = vpop.permute.xlu0 %7565
        %7567 = vrot.lane.b32.xlu0 %v7487, 64
        %v7568 = vpop.permute.xlu0 %7567
        %7569 = vrot.lane.b32.xlu0 %v7488, 64
        %v7570 = vpop.permute.xlu0 %7569
        %7571 = vrot.lane.b32.xlu0 %v7489, 64
        %v7572 = vpop.permute.xlu0 %7571
        %7573 = vrot.lane.b32.xlu0 %v7490, 64
        %v7574 = vpop.permute.xlu0 %7573
        %7575 = vrot.lane.b32.xlu0 %v7491, 64
        %v7576 = vpop.permute.xlu0 %7575
        %7577 = vrot.lane.b32.xlu0 %v7492, 64
        %v7578 = vpop.permute.xlu0 %7577
        %7579 = vrot.lane.b32.xlu0 %v7493, 64
        %v7580 = vpop.permute.xlu0 %7579
        %7581 = vrot.lane.b32.xlu0 %v7494, 64
        %v7582 = vpop.permute.xlu0 %7581
        %7583 = vrot.lane.b32.xlu0 %v7495, 64
        %v7584 = vpop.permute.xlu0 %7583
        %7585 = vrot.lane.b32.xlu0 %v7496, 64
        %v7586 = vpop.permute.xlu0 %7585
        %7587 = vrot.lane.b32.xlu0 %v7497, 64
        %v7588 = vpop.permute.xlu0 %7587
        %7589 = vrot.lane.b32.xlu0 %v7498, 64
        %v7590 = vpop.permute.xlu0 %7589
        %7591 = vrot.lane.b32.xlu0 %v7499, 64
        %v7592 = vpop.permute.xlu0 %7591
        %7593 = vrot.lane.b32.xlu0 %v7500, 64
        %v7594 = vpop.permute.xlu0 %7593
        %7595 = vrot.lane.b32.xlu0 %v7501, 64
        %v7596 = vpop.permute.xlu0 %7595
        %7597 = vrot.lane.b32.xlu0 %v7502, 64
        %v7598 = vpop.permute.xlu0 %7597
        %v7631 = vmul.f32 %v911, %v7536
        %v7632 = vmul.f32 %v913, %v7538
        %v7633 = vmul.f32 %v915, %v7540
        %v7634 = vmul.f32 %v917, %v7542
        %v7635 = vmul.f32 %v919, %v7544
        %v7636 = vmul.f32 %v921, %v7546
        %v7637 = vmul.f32 %v923, %v7548
        %v7638 = vmul.f32 %v925, %v7550
        %v7639 = vmul.f32 %v927, %v7552
        %v7640 = vmul.f32 %v929, %v7554
        %v7641 = vmul.f32 %v931, %v7556
        %v7642 = vmul.f32 %v933, %v7558
        %v7643 = vmul.f32 %v935, %v7560
        %v7644 = vmul.f32 %v937, %v7562
        %v7645 = vmul.f32 %v939, %v7564
        %v7646 = vmul.f32 %v941, %v7566
        %v7647 = vmul.f32 %v943, %v7568
        %v7648 = vmul.f32 %v945, %v7570
        %v7649 = vmul.f32 %v947, %v7572
        %v7650 = vmul.f32 %v949, %v7574
        %v7651 = vmul.f32 %v951, %v7576
        %v7652 = vmul.f32 %v953, %v7578
        %v7653 = vmul.f32 %v955, %v7580
        %v7654 = vmul.f32 %v957, %v7582
        %v7655 = vmul.f32 %v959, %v7584
        %v7656 = vmul.f32 %v961, %v7586
        %v7657 = vmul.f32 %v963, %v7588
        %v7658 = vmul.f32 %v965, %v7590
        %v7659 = vmul.f32 %v967, %v7592
        %v7660 = vmul.f32 %v969, %v7594
        %v7661 = vmul.f32 %v971, %v7596
        %v7662 = vmul.f32 %v973, %v7598
        %v7663 = vpack.c.bf16 %v7632, %v7631
        %v7664 = vpack.c.bf16 %v7634, %v7633
        %v7665 = vpack.c.bf16 %v7636, %v7635
        %v7666 = vpack.c.bf16 %v7638, %v7637
        %v7667 = vpack.c.bf16 %v7640, %v7639
        %v7668 = vpack.c.bf16 %v7642, %v7641
        %v7669 = vpack.c.bf16 %v7644, %v7643
        %v7670 = vpack.c.bf16 %v7646, %v7645
        %v7671 = vpack.c.bf16 %v7648, %v7647
        %v7672 = vpack.c.bf16 %v7650, %v7649
        %v7673 = vpack.c.bf16 %v7652, %v7651
        %v7674 = vpack.c.bf16 %v7654, %v7653
        %v7675 = vpack.c.bf16 %v7656, %v7655
        %v7676 = vpack.c.bf16 %v7658, %v7657
        %v7677 = vpack.c.bf16 %v7660, %v7659
        %v7678 = vpack.c.bf16 %v7662, %v7661
        %v7679 = vld [vmem:[%s3 + $0x20] sm:$0xf]
        %v7680 = vld [vmem:[%s3 + $0x24] sm:$0xf]
        %v7681 = vld [vmem:[%s3 + $0x28] sm:$0xf]
        %v7682 = vld [vmem:[%s3 + $0x2c] sm:$0xf]
        %7699 = vrot.lane.b32.xlu0 %v7663, 64
        %v7700 = vpop.permute.xlu0 %7699
        %7701 = vrot.lane.b32.xlu0 %v7664, 64
        %v7702 = vpop.permute.xlu0 %7701
        %7703 = vrot.lane.b32.xlu0 %v7665, 64
        %v7704 = vpop.permute.xlu0 %7703
        %7705 = vrot.lane.b32.xlu0 %v7666, 64
        %v7706 = vpop.permute.xlu0 %7705
        %7707 = vrot.lane.b32.xlu0 %v7667, 64
        %v7708 = vpop.permute.xlu0 %7707
        %7709 = vrot.lane.b32.xlu0 %v7668, 64
        %v7710 = vpop.permute.xlu0 %7709
        %7711 = vrot.lane.b32.xlu0 %v7669, 64
        %v7712 = vpop.permute.xlu0 %7711
        %7713 = vrot.lane.b32.xlu0 %v7670, 64
        %v7714 = vpop.permute.xlu0 %7713
        %7715 = vrot.lane.b32.xlu0 %v7671, 64
        %v7716 = vpop.permute.xlu0 %7715
        %7717 = vrot.lane.b32.xlu0 %v7672, 64
        %v7718 = vpop.permute.xlu0 %7717
        %7719 = vrot.lane.b32.xlu0 %v7673, 64
        %v7720 = vpop.permute.xlu0 %7719
        %7721 = vrot.lane.b32.xlu0 %v7674, 64
        %v7722 = vpop.permute.xlu0 %7721
        %7723 = vrot.lane.b32.xlu0 %v7675, 64
        %v7724 = vpop.permute.xlu0 %7723
        %7725 = vrot.lane.b32.xlu0 %v7676, 64
        %v7726 = vpop.permute.xlu0 %7725
        %7727 = vrot.lane.b32.xlu0 %v7677, 64
        %v7728 = vpop.permute.xlu0 %7727
        %7729 = vrot.lane.b32.xlu0 %v7678, 64
        %v7730 = vpop.permute.xlu0 %7729
        %v7735 = vunpack.c.l.b16 %v7679
        %v7736 = vunpack.c.l.b16 %v7680
        %v7737 = vunpack.c.l.b16 %v7681
        %v7738 = vunpack.c.l.b16 %v7682
        %v7739 = vpack.c.b16 %v7736, %v7735
        %v7740 = vpack.c.b16 %v7738, %v7737
        %v7744 = vsel %vm347, %v7700, 0
        %v7747 = vsel %vm347, %v7702, 0
        %v7750 = vsel %vm347, %v7704, 0
        %v7753 = vsel %vm347, %v7706, 0
        %v7756 = vsel %vm347, %v7708, 0
        %v7759 = vsel %vm347, %v7710, 0
        %v7762 = vsel %vm347, %v7712, 0
        %v7765 = vsel %vm347, %v7714, 0
        %v7768 = vsel %vm347, %v7716, 0
        %v7771 = vsel %vm347, %v7718, 0
        %v7774 = vsel %vm347, %v7720, 0
        %v7777 = vsel %vm347, %v7722, 0
        %v7780 = vsel %vm347, %v7724, 0
        %v7783 = vsel %vm347, %v7726, 0
        %v7786 = vsel %vm347, %v7728, 0
        %v7789 = vsel %vm347, %v7730, 0
        %7791 = vmatprep.subr.bf16.mxu0 0
        %7792 = vmatpush1.bf16.msra.mxu0 %v7739
        %7793 = vmatprep.subr.bf16.mxu0 0
        %7794 = vmatpush1.bf16.msra.mxu0 %v7740
        %7795 = vmatprep.subr.bf16.mxu0 0
        %7796 = vmatpush1.bf16.msra.mxu0 0
        %7797 = vmatprep.subr.bf16.mxu0 0
        %7798 = vmatpush1.bf16.msra.mxu0 0
        %7799 = vmatprep.subr.bf16.mxu0 0
        %7800 = vmatpush1.bf16.msra.mxu0 0
        %7801 = vmatprep.subr.bf16.mxu0 0
        %7802 = vmatpush1.bf16.msra.mxu0 0
        %7803 = vmatprep.subr.bf16.mxu0 0
        %7804 = vmatpush1.bf16.msra.mxu0 0
        %7805 = vmatprep.subr.bf16.mxu0 0
        %7806 = vmatpush1.bf16.msra.mxu0 0
        %7807 = vmatprep.subr.bf16.mxu0 0
        %7808 = vmatpush1.bf16.msra.mxu0 0
        %7809 = vmatprep.subr.bf16.mxu0 0
        %7810 = vmatpush1.bf16.msra.mxu0 0
        %7811 = vmatprep.subr.bf16.mxu0 0
        %7812 = vmatpush1.bf16.msra.mxu0 0
        %7813 = vmatprep.subr.bf16.mxu0 0
        %7814 = vmatpush1.bf16.msra.mxu0 0
        %7815 = vmatprep.subr.bf16.mxu0 0
        %7816 = vmatpush1.bf16.msra.mxu0 0
        %7817 = vmatprep.subr.bf16.mxu0 0
        %7818 = vmatpush1.bf16.msra.mxu0 0
        %7819 = vmatprep.subr.bf16.mxu0 0
        %7820 = vmatpush1.bf16.msra.mxu0 0
        %7821 = vmatprep.subr.bf16.mxu0 0
        %7822 = vmatpush1.bf16.msra.mxu0 0
        %7823 = vmatprep.mubr.bf16.mxu0 0
        %7824 = vmatmul.mubr.bf16.gmra.mrb[0].mxu0 %v7744
        %v7825 = vpop.f32.mrb[0].mxu0
        %v7826 = vadd.f32 0.0, %v7825
        %v7827 = vpop.f32.mrb[0].mxu0
        %v7828 = vpop.f32.mrb[0].mxu0
        %v7829 = vadd.f32 0.0, %v7828
        %v7830 = vpop.f32.mrb[0].mxu0
        %7831 = vmatprep.mubr.bf16.mxu0 0
        %7832 = vmatmul.mubr.bf16.gmra.mrb[0].mxu0 %v7747
        %v7833 = vpop.f32.mrb[0].mxu0
        %v7834 = vadd.f32 0.0, %v7833
        %v7835 = vpop.f32.mrb[0].mxu0
        %v7836 = vpop.f32.mrb[0].mxu0
        %v7837 = vadd.f32 0.0, %v7836
        %v7838 = vpop.f32.mrb[0].mxu0
        %7839 = vmatprep.mubr.bf16.mxu0 0
        %7840 = vmatmul.mubr.bf16.gmra.mrb[0].mxu0 %v7750
        %v7841 = vpop.f32.mrb[0].mxu0
        %v7842 = vadd.f32 0.0, %v7841
        %v7843 = vpop.f32.mrb[0].mxu0
        %v7844 = vpop.f32.mrb[0].mxu0
        %v7845 = vadd.f32 0.0, %v7844
        %v7846 = vpop.f32.mrb[0].mxu0
        %7847 = vmatprep.mubr.bf16.mxu0 0
        %7848 = vmatmul.mubr.bf16.gmra.mrb[0].mxu0 %v7753
        %v7849 = vpop.f32.mrb[0].mxu0
        %v7850 = vadd.f32 0.0, %v7849
        %v7851 = vpop.f32.mrb[0].mxu0
        %v7852 = vpop.f32.mrb[0].mxu0
        %v7853 = vadd.f32 0.0, %v7852
        %v7854 = vpop.f32.mrb[0].mxu0
        %7855 = vmatprep.mubr.bf16.mxu0 0
        %7856 = vmatmul.mubr.bf16.gmra.mrb[0].mxu0 %v7756
        %v7857 = vpop.f32.mrb[0].mxu0
        %v7858 = vadd.f32 0.0, %v7857
        %v7859 = vpop.f32.mrb[0].mxu0
        %v7860 = vpop.f32.mrb[0].mxu0
        %v7861 = vadd.f32 0.0, %v7860
        %v7862 = vpop.f32.mrb[0].mxu0
        %7863 = vmatprep.mubr.bf16.mxu0 0
        %7864 = vmatmul.mubr.bf16.gmra.mrb[0].mxu0 %v7759
        %v7865 = vpop.f32.mrb[0].mxu0
        %v7866 = vadd.f32 0.0, %v7865
        %v7867 = vpop.f32.mrb[0].mxu0
        %v7868 = vpop.f32.mrb[0].mxu0
        %v7869 = vadd.f32 0.0, %v7868
        %v7870 = vpop.f32.mrb[0].mxu0
        %7871 = vmatprep.mubr.bf16.mxu0 0
        %7872 = vmatmul.mubr.bf16.gmra.mrb[0].mxu0 %v7762
        %v7873 = vpop.f32.mrb[0].mxu0
        %v7874 = vadd.f32 0.0, %v7873
        %v7875 = vpop.f32.mrb[0].mxu0
        %v7876 = vpop.f32.mrb[0].mxu0
        %v7877 = vadd.f32 0.0, %v7876
        %v7878 = vpop.f32.mrb[0].mxu0
        %7879 = vmatprep.mubr.bf16.mxu0 0
        %7880 = vmatmul.mubr.bf16.gmra.mrb[0].mxu0 %v7765
        %v7881 = vpop.f32.mrb[0].mxu0
        %v7882 = vadd.f32 0.0, %v7881
        %v7883 = vpop.f32.mrb[0].mxu0
        %v7884 = vpop.f32.mrb[0].mxu0
        %v7885 = vadd.f32 0.0, %v7884
        %v7886 = vpop.f32.mrb[0].mxu0
        %7887 = vmatprep.mubr.bf16.mxu0 0
        %7888 = vmatmul.mubr.bf16.gmra.mrb[0].mxu0 %v7768
        %v7889 = vpop.f32.mrb[0].mxu0
        %v7890 = vadd.f32 0.0, %v7889
        %v7891 = vpop.f32.mrb[0].mxu0
        %v7892 = vpop.f32.mrb[0].mxu0
        %v7893 = vadd.f32 0.0, %v7892
        %v7894 = vpop.f32.mrb[0].mxu0
        %7895 = vmatprep.mubr.bf16.mxu0 0
        %7896 = vmatmul.mubr.bf16.gmra.mrb[0].mxu0 %v7771
        %v7897 = vpop.f32.mrb[0].mxu0
        %v7898 = vadd.f32 0.0, %v7897
        %v7899 = vpop.f32.mrb[0].mxu0
        %v7900 = vpop.f32.mrb[0].mxu0
        %v7901 = vadd.f32 0.0, %v7900
        %v7902 = vpop.f32.mrb[0].mxu0
        %7903 = vmatprep.mubr.bf16.mxu0 0
        %7904 = vmatmul.mubr.bf16.gmra.mrb[0].mxu0 %v7774
        %v7905 = vpop.f32.mrb[0].mxu0
        %v7906 = vadd.f32 0.0, %v7905
        %v7907 = vpop.f32.mrb[0].mxu0
        %v7908 = vpop.f32.mrb[0].mxu0
        %v7909 = vadd.f32 0.0, %v7908
        %v7910 = vpop.f32.mrb[0].mxu0
        %7911 = vmatprep.mubr.bf16.mxu0 0
        %7912 = vmatmul.mubr.bf16.gmra.mrb[0].mxu0 %v7777
        %v7913 = vpop.f32.mrb[0].mxu0
        %v7914 = vadd.f32 0.0, %v7913
        %v7915 = vpop.f32.mrb[0].mxu0
        %v7916 = vpop.f32.mrb[0].mxu0
        %v7917 = vadd.f32 0.0, %v7916
        %v7918 = vpop.f32.mrb[0].mxu0
        %7919 = vmatprep.mubr.bf16.mxu0 0
        %7920 = vmatmul.mubr.bf16.gmra.mrb[0].mxu0 %v7780
        %v7921 = vpop.f32.mrb[0].mxu0
        %v7922 = vadd.f32 0.0, %v7921
        %v7923 = vpop.f32.mrb[0].mxu0
        %v7924 = vpop.f32.mrb[0].mxu0
        %v7925 = vadd.f32 0.0, %v7924
        %v7926 = vpop.f32.mrb[0].mxu0
        %7927 = vmatprep.mubr.bf16.mxu0 0
        %7928 = vmatmul.mubr.bf16.gmra.mrb[0].mxu0 %v7783
        %v7929 = vpop.f32.mrb[0].mxu0
        %v7930 = vadd.f32 0.0, %v7929
        %v7931 = vpop.f32.mrb[0].mxu0
        %v7932 = vpop.f32.mrb[0].mxu0
        %v7933 = vadd.f32 0.0, %v7932
        %v7934 = vpop.f32.mrb[0].mxu0
        %7935 = vmatprep.mubr.bf16.mxu0 0
        %7936 = vmatmul.mubr.bf16.gmra.mrb[0].mxu0 %v7786
        %v7937 = vpop.f32.mrb[0].mxu0
        %v7938 = vadd.f32 0.0, %v7937
        %v7939 = vpop.f32.mrb[0].mxu0
        %v7940 = vpop.f32.mrb[0].mxu0
        %v7941 = vadd.f32 0.0, %v7940
        %v7942 = vpop.f32.mrb[0].mxu0
        %7943 = vmatprep.mubr.bf16.mxu0 0
        %7944 = vmatmul.mubr.bf16.gmra.mrb[0].mxu0 %v7789
        %v7945 = vpop.f32.mrb[0].mxu0
        %v7946 = vadd.f32 0.0, %v7945
        %v7947 = vpop.f32.mrb[0].mxu0
        %v7948 = vpop.f32.mrb[0].mxu0
        %v7949 = vadd.f32 0.0, %v7948
        %v7950 = vpop.f32.mrb[0].mxu0
        %7951 = vdwg.mxu0
        %v7952 = vadd.f32 %v5436, %v7826
        %v7953 = vadd.f32 %v5439, %v7829
        %v7954 = vadd.f32 %v5444, %v7834
        %v7955 = vadd.f32 %v5447, %v7837
        %v7956 = vadd.f32 %v5452, %v7842
        %v7957 = vadd.f32 %v5455, %v7845
        %v7958 = vadd.f32 %v5460, %v7850
        %v7959 = vadd.f32 %v5463, %v7853
        %v7960 = vadd.f32 %v5468, %v7858
        %v7961 = vadd.f32 %v5471, %v7861
        %v7962 = vadd.f32 %v5476, %v7866
        %v7963 = vadd.f32 %v5479, %v7869
        %v7964 = vadd.f32 %v5484, %v7874
        %v7965 = vadd.f32 %v5487, %v7877
        %v7966 = vadd.f32 %v5492, %v7882
        %v7967 = vadd.f32 %v5495, %v7885
        %v7968 = vadd.f32 %v5500, %v7890
        %v7969 = vadd.f32 %v5503, %v7893
        %v7970 = vadd.f32 %v5508, %v7898
        %v7971 = vadd.f32 %v5511, %v7901
        %v7972 = vadd.f32 %v5516, %v7906
        %v7973 = vadd.f32 %v5519, %v7909
        %v7974 = vadd.f32 %v5524, %v7914
        %v7975 = vadd.f32 %v5527, %v7917
        %v7976 = vadd.f32 %v5532, %v7922
        %v7977 = vadd.f32 %v5535, %v7925
        %v7978 = vadd.f32 %v5540, %v7930
        %v7979 = vadd.f32 %v5543, %v7933
        %v7980 = vadd.f32 %v5548, %v7938
        %v7981 = vadd.f32 %v5551, %v7941
        %v7982 = vadd.f32 %v5556, %v7946
        %v7983 = vadd.f32 %v5559, %v7949
        %s7984 = scalar_lea.vmem %s248, 24
        %v7985 = vld [vmem:[%s7984] sm:$0xf]
        %v7986 = vld [vmem:[%s7984 + $0x4] sm:$0xf]
        %v7987 = vunpack.c.l.bf16 %v7985
        %v7988 = vunpack.c.l.bf16 %v7986
        %7989 = vrot.lane.b32.xlu0 %v974, 32
        %v7990 = vpop.permute.xlu0 %7989
        %7991 = vrot.lane.b32.xlu0 %v990, 32
        %v7992 = vpop.permute.xlu0 %7991
        %v7994 = vsel %vm347, %v7990, 0
        %v7997 = vsel %vm347, %v7992, 0
        %7999 = vmatprep.subr.bf16.mxu0 0
        %8000 = vmatpush1.bf16.xpose.msra.mxu0 %v7997
        %8001 = vmatprep.subr.bf16.mxu0 0
        %8002 = vmatpush1.bf16.xpose.msra.mxu0 0
        %8003 = vmatprep.subr.bf16.mxu0 0
        %8004 = vmatpush1.bf16.xpose.msra.mxu0 0
        %8005 = vmatprep.subr.bf16.mxu0 0
        %8006 = vmatpush1.bf16.xpose.msra.mxu0 0
        %8007 = vmatprep.subr.bf16.mxu0 0
        %8008 = vmatpush1.bf16.xpose.msra.mxu0 0
        %8009 = vmatprep.subr.bf16.mxu0 0
        %8010 = vmatpush1.bf16.xpose.msra.mxu0 0
        %8011 = vmatprep.subr.bf16.mxu0 0
        %8012 = vmatpush1.bf16.xpose.msra.mxu0 0
        %8013 = vmatprep.subr.bf16.mxu0 0
        %8014 = vmatpush1.bf16.xpose.msra.mxu0 0
        %8015 = vmatprep.subr.bf16.mxu0 0
        %8016 = vmatpush1.bf16.xpose.msra.mxu0 0
        %8017 = vmatprep.subr.bf16.mxu0 0
        %8018 = vmatpush1.bf16.xpose.msra.mxu0 0
        %8019 = vmatprep.subr.bf16.mxu0 0
        %8020 = vmatpush1.bf16.xpose.msra.mxu0 0
        %8021 = vmatprep.subr.bf16.mxu0 0
        %8022 = vmatpush1.bf16.xpose.msra.mxu0 0
        %8023 = vmatprep.subr.bf16.mxu0 0
        %8024 = vmatpush1.bf16.xpose.msra.mxu0 0
        %8025 = vmatprep.subr.bf16.mxu0 0
        %8026 = vmatpush1.bf16.xpose.msra.mxu0 0
        %8027 = vmatprep.subr.bf16.mxu0 0
        %8028 = vmatpush1.bf16.xpose.msra.mxu0 0
        %8029 = vmatprep.subr.bf16.mxu0 0
        %8030 = vmatpush1.bf16.xpose.msra.mxu0 0
        %8031 = vmatprep.mubr.bf16.mxu0 0
        %8032 = vmatmul.mubr.bf16.gmra.mrb[0].mxu0 %v7994
        %v8033 = vpop.f32.mrb[0].mxu0
        %v8034 = vadd.f32 %v7987, %v8033
        %v8035 = vpop.f32.mrb[0].mxu0
        %v8036 = vpop.f32.mrb[0].mxu0
        %v8037 = vadd.f32 %v7988, %v8036
        %v8038 = vpop.f32.mrb[0].mxu0
        %8039 = vdwg.mxu0
        %8040 = vrot.lane.b32.xlu0 %v975, 32
        %v8041 = vpop.permute.xlu0 %8040
        %8042 = vrot.lane.b32.xlu0 %v991, 32
        %v8043 = vpop.permute.xlu0 %8042
        %v8045 = vsel %vm347, %v8041, 0
        %v8048 = vsel %vm347, %v8043, 0
        %8050 = vmatprep.subr.bf16.mxu0 0
        %8051 = vmatpush1.bf16.xpose.msra.mxu0 %v8048
        %8052 = vmatprep.subr.bf16.mxu0 0
        %8053 = vmatpush1.bf16.xpose.msra.mxu0 0
        %8054 = vmatprep.subr.bf16.mxu0 0
        %8055 = vmatpush1.bf16.xpose.msra.mxu0 0
        %8056 = vmatprep.subr.bf16.mxu0 0
        %8057 = vmatpush1.bf16.xpose.msra.mxu0 0
        %8058 = vmatprep.subr.bf16.mxu0 0
        %8059 = vmatpush1.bf16.xpose.msra.mxu0 0
        %8060 = vmatprep.subr.bf16.mxu0 0
        %8061 = vmatpush1.bf16.xpose.msra.mxu0 0
        %8062 = vmatprep.subr.bf16.mxu0 0
        %8063 = vmatpush1.bf16.xpose.msra.mxu0 0
        %8064 = vmatprep.subr.bf16.mxu0 0
        %8065 = vmatpush1.bf16.xpose.msra.mxu0 0
        %8066 = vmatprep.subr.bf16.mxu0 0
        %8067 = vmatpush1.bf16.xpose.msra.mxu0 0
        %8068 = vmatprep.subr.bf16.mxu0 0
        %8069 = vmatpush1.bf16.xpose.msra.mxu0 0
        %8070 = vmatprep.subr.bf16.mxu0 0
        %8071 = vmatpush1.bf16.xpose.msra.mxu0 0
        %8072 = vmatprep.subr.bf16.mxu0 0
        %8073 = vmatpush1.bf16.xpose.msra.mxu0 0
        %8074 = vmatprep.subr.bf16.mxu0 0
        %8075 = vmatpush1.bf16.xpose.msra.mxu0 0
        %8076 = vmatprep.subr.bf16.mxu0 0
        %8077 = vmatpush1.bf16.xpose.msra.mxu0 0
        %8078 = vmatprep.subr.bf16.mxu0 0
        %8079 = vmatpush1.bf16.xpose.msra.mxu0 0
        %8080 = vmatprep.subr.bf16.mxu0 0
        %8081 = vmatpush1.bf16.xpose.msra.mxu0 0
        %8082 = vmatprep.mubr.bf16.mxu0 0
        %8083 = vmatmul.mubr.bf16.gmra.mrb[0].mxu0 %v8045
        %v8084 = vpop.f32.mrb[0].mxu0
        %v8085 = vadd.f32 %v7987, %v8084
        %v8086 = vpop.f32.mrb[0].mxu0
        %v8087 = vpop.f32.mrb[0].mxu0
        %v8088 = vadd.f32 %v7988, %v8087
        %v8089 = vpop.f32.mrb[0].mxu0
        %8090 = vdwg.mxu0
        %8091 = vrot.lane.b32.xlu0 %v976, 32
        %v8092 = vpop.permute.xlu0 %8091
        %8093 = vrot.lane.b32.xlu0 %v992, 32
        %v8094 = vpop.permute.xlu0 %8093
        %v8096 = vsel %vm347, %v8092, 0
        %v8099 = vsel %vm347, %v8094, 0
        %8101 = vmatprep.subr.bf16.mxu0 0
        %8102 = vmatpush1.bf16.xpose.msra.mxu0 %v8099
        %8103 = vmatprep.subr.bf16.mxu0 0
        %8104 = vmatpush1.bf16.xpose.msra.mxu0 0
        %8105 = vmatprep.subr.bf16.mxu0 0
        %8106 = vmatpush1.bf16.xpose.msra.mxu0 0
        %8107 = vmatprep.subr.bf16.mxu0 0
        %8108 = vmatpush1.bf16.xpose.msra.mxu0 0
        %8109 = vmatprep.subr.bf16.mxu0 0
        %8110 = vmatpush1.bf16.xpose.msra.mxu0 0
        %8111 = vmatprep.subr.bf16.mxu0 0
        %8112 = vmatpush1.bf16.xpose.msra.mxu0 0
        %8113 = vmatprep.subr.bf16.mxu0 0
        %8114 = vmatpush1.bf16.xpose.msra.mxu0 0
        %8115 = vmatprep.subr.bf16.mxu0 0
        %8116 = vmatpush1.bf16.xpose.msra.mxu0 0
        %8117 = vmatprep.subr.bf16.mxu0 0
        %8118 = vmatpush1.bf16.xpose.msra.mxu0 0
        %8119 = vmatprep.subr.bf16.mxu0 0
        %8120 = vmatpush1.bf16.xpose.msra.mxu0 0
        %8121 = vmatprep.subr.bf16.mxu0 0
        %8122 = vmatpush1.bf16.xpose.msra.mxu0 0
        %8123 = vmatprep.subr.bf16.mxu0 0
        %8124 = vmatpush1.bf16.xpose.msra.mxu0 0
        %8125 = vmatprep.subr.bf16.mxu0 0
        %8126 = vmatpush1.bf16.xpose.msra.mxu0 0
        %8127 = vmatprep.subr.bf16.mxu0 0
        %8128 = vmatpush1.bf16.xpose.msra.mxu0 0
        %8129 = vmatprep.subr.bf16.mxu0 0
        %8130 = vmatpush1.bf16.xpose.msra.mxu0 0
        %8131 = vmatprep.subr.bf16.mxu0 0
        %8132 = vmatpush1.bf16.xpose.msra.mxu0 0
        %8133 = vmatprep.mubr.bf16.mxu0 0
        %8134 = vmatmul.mubr.bf16.gmra.mrb[0].mxu0 %v8096
        %v8135 = vpop.f32.mrb[0].mxu0
        %v8136 = vadd.f32 %v7987, %v8135
        %v8137 = vpop.f32.mrb[0].mxu0
        %v8138 = vpop.f32.mrb[0].mxu0
        %v8139 = vadd.f32 %v7988, %v8138
        %v8140 = vpop.f32.mrb[0].mxu0
        %8141 = vdwg.mxu0
        %8142 = vrot.lane.b32.xlu0 %v977, 32
        %v8143 = vpop.permute.xlu0 %8142
        %8144 = vrot.lane.b32.xlu0 %v993, 32
        %v8145 = vpop.permute.xlu0 %8144
        %v8147 = vsel %vm347, %v8143, 0
        %v8150 = vsel %vm347, %v8145, 0
        %8152 = vmatprep.subr.bf16.mxu0 0
        %8153 = vmatpush1.bf16.xpose.msra.mxu0 %v8150
        %8154 = vmatprep.subr.bf16.mxu0 0
        %8155 = vmatpush1.bf16.xpose.msra.mxu0 0
        %8156 = vmatprep.subr.bf16.mxu0 0
        %8157 = vmatpush1.bf16.xpose.msra.mxu0 0
        %8158 = vmatprep.subr.bf16.mxu0 0
        %8159 = vmatpush1.bf16.xpose.msra.mxu0 0
        %8160 = vmatprep.subr.bf16.mxu0 0
        %8161 = vmatpush1.bf16.xpose.msra.mxu0 0
        %8162 = vmatprep.subr.bf16.mxu0 0
        %8163 = vmatpush1.bf16.xpose.msra.mxu0 0
        %8164 = vmatprep.subr.bf16.mxu0 0
        %8165 = vmatpush1.bf16.xpose.msra.mxu0 0
        %8166 = vmatprep.subr.bf16.mxu0 0
        %8167 = vmatpush1.bf16.xpose.msra.mxu0 0
        %8168 = vmatprep.subr.bf16.mxu0 0
        %8169 = vmatpush1.bf16.xpose.msra.mxu0 0
        %8170 = vmatprep.subr.bf16.mxu0 0
        %8171 = vmatpush1.bf16.xpose.msra.mxu0 0
        %8172 = vmatprep.subr.bf16.mxu0 0
        %8173 = vmatpush1.bf16.xpose.msra.mxu0 0
        %8174 = vmatprep.subr.bf16.mxu0 0
        %8175 = vmatpush1.bf16.xpose.msra.mxu0 0
        %8176 = vmatprep.subr.bf16.mxu0 0
        %8177 = vmatpush1.bf16.xpose.msra.mxu0 0
        %8178 = vmatprep.subr.bf16.mxu0 0
        %8179 = vmatpush1.bf16.xpose.msra.mxu0 0
        %8180 = vmatprep.subr.bf16.mxu0 0
        %8181 = vmatpush1.bf16.xpose.msra.mxu0 0
        %8182 = vmatprep.subr.bf16.mxu0 0
        %8183 = vmatpush1.bf16.xpose.msra.mxu0 0
        %8184 = vmatprep.mubr.bf16.mxu0 0
        %8185 = vmatmul.mubr.bf16.gmra.mrb[0].mxu0 %v8147
        %v8186 = vpop.f32.mrb[0].mxu0
        %v8187 = vadd.f32 %v7987, %v8186
        %v8188 = vpop.f32.mrb[0].mxu0
        %v8189 = vpop.f32.mrb[0].mxu0
        %v8190 = vadd.f32 %v7988, %v8189
        %v8191 = vpop.f32.mrb[0].mxu0
        %8192 = vdwg.mxu0
        %8193 = vrot.lane.b32.xlu0 %v978, 32
        %v8194 = vpop.permute.xlu0 %8193
        %8195 = vrot.lane.b32.xlu0 %v994, 32
        %v8196 = vpop.permute.xlu0 %8195
        %v8198 = vsel %vm347, %v8194, 0
        %v8201 = vsel %vm347, %v8196, 0
        %8203 = vmatprep.subr.bf16.mxu0 0
        %8204 = vmatpush1.bf16.xpose.msra.mxu0 %v8201
        %8205 = vmatprep.subr.bf16.mxu0 0
        %8206 = vmatpush1.bf16.xpose.msra.mxu0 0
        %8207 = vmatprep.subr.bf16.mxu0 0
        %8208 = vmatpush1.bf16.xpose.msra.mxu0 0
        %8209 = vmatprep.subr.bf16.mxu0 0
        %8210 = vmatpush1.bf16.xpose.msra.mxu0 0
        %8211 = vmatprep.subr.bf16.mxu0 0
        %8212 = vmatpush1.bf16.xpose.msra.mxu0 0
        %8213 = vmatprep.subr.bf16.mxu0 0
        %8214 = vmatpush1.bf16.xpose.msra.mxu0 0
        %8215 = vmatprep.subr.bf16.mxu0 0
        %8216 = vmatpush1.bf16.xpose.msra.mxu0 0
        %8217 = vmatprep.subr.bf16.mxu0 0
        %8218 = vmatpush1.bf16.xpose.msra.mxu0 0
        %8219 = vmatprep.subr.bf16.mxu0 0
        %8220 = vmatpush1.bf16.xpose.msra.mxu0 0
        %8221 = vmatprep.subr.bf16.mxu0 0
        %8222 = vmatpush1.bf16.xpose.msra.mxu0 0
        %8223 = vmatprep.subr.bf16.mxu0 0
        %8224 = vmatpush1.bf16.xpose.msra.mxu0 0
        %8225 = vmatprep.subr.bf16.mxu0 0
        %8226 = vmatpush1.bf16.xpose.msra.mxu0 0
        %8227 = vmatprep.subr.bf16.mxu0 0
        %8228 = vmatpush1.bf16.xpose.msra.mxu0 0
        %8229 = vmatprep.subr.bf16.mxu0 0
        %8230 = vmatpush1.bf16.xpose.msra.mxu0 0
        %8231 = vmatprep.subr.bf16.mxu0 0
        %8232 = vmatpush1.bf16.xpose.msra.mxu0 0
        %8233 = vmatprep.subr.bf16.mxu0 0
        %8234 = vmatpush1.bf16.xpose.msra.mxu0 0
        %8235 = vmatprep.mubr.bf16.mxu0 0
        %8236 = vmatmul.mubr.bf16.gmra.mrb[0].mxu0 %v8198
        %v8237 = vpop.f32.mrb[0].mxu0
        %v8238 = vadd.f32 %v7987, %v8237
        %v8239 = vpop.f32.mrb[0].mxu0
        %v8240 = vpop.f32.mrb[0].mxu0
        %v8241 = vadd.f32 %v7988, %v8240
        %v8242 = vpop.f32.mrb[0].mxu0
        %8243 = vdwg.mxu0
        %8244 = vrot.lane.b32.xlu0 %v979, 32
        %v8245 = vpop.permute.xlu0 %8244
        %8246 = vrot.lane.b32.xlu0 %v995, 32
        %v8247 = vpop.permute.xlu0 %8246
        %v8249 = vsel %vm347, %v8245, 0
        %v8252 = vsel %vm347, %v8247, 0
        %8254 = vmatprep.subr.bf16.mxu0 0
        %8255 = vmatpush1.bf16.xpose.msra.mxu0 %v8252
        %8256 = vmatprep.subr.bf16.mxu0 0
        %8257 = vmatpush1.bf16.xpose.msra.mxu0 0
        %8258 = vmatprep.subr.bf16.mxu0 0
        %8259 = vmatpush1.bf16.xpose.msra.mxu0 0
        %8260 = vmatprep.subr.bf16.mxu0 0
        %8261 = vmatpush1.bf16.xpose.msra.mxu0 0
        %8262 = vmatprep.subr.bf16.mxu0 0
        %8263 = vmatpush1.bf16.xpose.msra.mxu0 0
        %8264 = vmatprep.subr.bf16.mxu0 0
        %8265 = vmatpush1.bf16.xpose.msra.mxu0 0
        %8266 = vmatprep.subr.bf16.mxu0 0
        %8267 = vmatpush1.bf16.xpose.msra.mxu0 0
        %8268 = vmatprep.subr.bf16.mxu0 0
        %8269 = vmatpush1.bf16.xpose.msra.mxu0 0
        %8270 = vmatprep.subr.bf16.mxu0 0
        %8271 = vmatpush1.bf16.xpose.msra.mxu0 0
        %8272 = vmatprep.subr.bf16.mxu0 0
        %8273 = vmatpush1.bf16.xpose.msra.mxu0 0
        %8274 = vmatprep.subr.bf16.mxu0 0
        %8275 = vmatpush1.bf16.xpose.msra.mxu0 0
        %8276 = vmatprep.subr.bf16.mxu0 0
        %8277 = vmatpush1.bf16.xpose.msra.mxu0 0
        %8278 = vmatprep.subr.bf16.mxu0 0
        %8279 = vmatpush1.bf16.xpose.msra.mxu0 0
        %8280 = vmatprep.subr.bf16.mxu0 0
        %8281 = vmatpush1.bf16.xpose.msra.mxu0 0
        %8282 = vmatprep.subr.bf16.mxu0 0
        %8283 = vmatpush1.bf16.xpose.msra.mxu0 0
        %8284 = vmatprep.subr.bf16.mxu0 0
        %8285 = vmatpush1.bf16.xpose.msra.mxu0 0
        %8286 = vmatprep.mubr.bf16.mxu0 0
        %8287 = vmatmul.mubr.bf16.gmra.mrb[0].mxu0 %v8249
        %v8288 = vpop.f32.mrb[0].mxu0
        %v8289 = vadd.f32 %v7987, %v8288
        %v8290 = vpop.f32.mrb[0].mxu0
        %v8291 = vpop.f32.mrb[0].mxu0
        %v8292 = vadd.f32 %v7988, %v8291
        %v8293 = vpop.f32.mrb[0].mxu0
        %8294 = vdwg.mxu0
        %8295 = vrot.lane.b32.xlu0 %v980, 32
        %v8296 = vpop.permute.xlu0 %8295
        %8297 = vrot.lane.b32.xlu0 %v996, 32
        %v8298 = vpop.permute.xlu0 %8297
        %v8300 = vsel %vm347, %v8296, 0
        %v8303 = vsel %vm347, %v8298, 0
        %8305 = vmatprep.subr.bf16.mxu0 0
        %8306 = vmatpush1.bf16.xpose.msra.mxu0 %v8303
        %8307 = vmatprep.subr.bf16.mxu0 0
        %8308 = vmatpush1.bf16.xpose.msra.mxu0 0
        %8309 = vmatprep.subr.bf16.mxu0 0
        %8310 = vmatpush1.bf16.xpose.msra.mxu0 0
        %8311 = vmatprep.subr.bf16.mxu0 0
        %8312 = vmatpush1.bf16.xpose.msra.mxu0 0
        %8313 = vmatprep.subr.bf16.mxu0 0
        %8314 = vmatpush1.bf16.xpose.msra.mxu0 0
        %8315 = vmatprep.subr.bf16.mxu0 0
        %8316 = vmatpush1.bf16.xpose.msra.mxu0 0
        %8317 = vmatprep.subr.bf16.mxu0 0
        %8318 = vmatpush1.bf16.xpose.msra.mxu0 0
        %8319 = vmatprep.subr.bf16.mxu0 0
        %8320 = vmatpush1.bf16.xpose.msra.mxu0 0
        %8321 = vmatprep.subr.bf16.mxu0 0
        %8322 = vmatpush1.bf16.xpose.msra.mxu0 0
        %8323 = vmatprep.subr.bf16.mxu0 0
        %8324 = vmatpush1.bf16.xpose.msra.mxu0 0
        %8325 = vmatprep.subr.bf16.mxu0 0
        %8326 = vmatpush1.bf16.xpose.msra.mxu0 0
        %8327 = vmatprep.subr.bf16.mxu0 0
        %8328 = vmatpush1.bf16.xpose.msra.mxu0 0
        %8329 = vmatprep.subr.bf16.mxu0 0
        %8330 = vmatpush1.bf16.xpose.msra.mxu0 0
        %8331 = vmatprep.subr.bf16.mxu0 0
        %8332 = vmatpush1.bf16.xpose.msra.mxu0 0
        %8333 = vmatprep.subr.bf16.mxu0 0
        %8334 = vmatpush1.bf16.xpose.msra.mxu0 0
        %8335 = vmatprep.subr.bf16.mxu0 0
        %8336 = vmatpush1.bf16.xpose.msra.mxu0 0
        %8337 = vmatprep.mubr.bf16.mxu0 0
        %8338 = vmatmul.mubr.bf16.gmra.mrb[0].mxu0 %v8300
        %v8339 = vpop.f32.mrb[0].mxu0
        %v8340 = vadd.f32 %v7987, %v8339
        %v8341 = vpop.f32.mrb[0].mxu0
        %v8342 = vpop.f32.mrb[0].mxu0
        %v8343 = vadd.f32 %v7988, %v8342
        %v8344 = vpop.f32.mrb[0].mxu0
        %8345 = vdwg.mxu0
        %8346 = vrot.lane.b32.xlu0 %v981, 32
        %v8347 = vpop.permute.xlu0 %8346
        %8348 = vrot.lane.b32.xlu0 %v997, 32
        %v8349 = vpop.permute.xlu0 %8348
        %v8351 = vsel %vm347, %v8347, 0
        %v8354 = vsel %vm347, %v8349, 0
        %8356 = vmatprep.subr.bf16.mxu0 0
        %8357 = vmatpush1.bf16.xpose.msra.mxu0 %v8354
        %8358 = vmatprep.subr.bf16.mxu0 0
        %8359 = vmatpush1.bf16.xpose.msra.mxu0 0
        %8360 = vmatprep.subr.bf16.mxu0 0
        %8361 = vmatpush1.bf16.xpose.msra.mxu0 0
        %8362 = vmatprep.subr.bf16.mxu0 0
        %8363 = vmatpush1.bf16.xpose.msra.mxu0 0
        %8364 = vmatprep.subr.bf16.mxu0 0
        %8365 = vmatpush1.bf16.xpose.msra.mxu0 0
        %8366 = vmatprep.subr.bf16.mxu0 0
        %8367 = vmatpush1.bf16.xpose.msra.mxu0 0
        %8368 = vmatprep.subr.bf16.mxu0 0
        %8369 = vmatpush1.bf16.xpose.msra.mxu0 0
        %8370 = vmatprep.subr.bf16.mxu0 0
        %8371 = vmatpush1.bf16.xpose.msra.mxu0 0
        %8372 = vmatprep.subr.bf16.mxu0 0
        %8373 = vmatpush1.bf16.xpose.msra.mxu0 0
        %8374 = vmatprep.subr.bf16.mxu0 0
        %8375 = vmatpush1.bf16.xpose.msra.mxu0 0
        %8376 = vmatprep.subr.bf16.mxu0 0
        %8377 = vmatpush1.bf16.xpose.msra.mxu0 0
        %8378 = vmatprep.subr.bf16.mxu0 0
        %8379 = vmatpush1.bf16.xpose.msra.mxu0 0
        %8380 = vmatprep.subr.bf16.mxu0 0
        %8381 = vmatpush1.bf16.xpose.msra.mxu0 0
        %8382 = vmatprep.subr.bf16.mxu0 0
        %8383 = vmatpush1.bf16.xpose.msra.mxu0 0
        %8384 = vmatprep.subr.bf16.mxu0 0
        %8385 = vmatpush1.bf16.xpose.msra.mxu0 0
        %8386 = vmatprep.subr.bf16.mxu0 0
        %8387 = vmatpush1.bf16.xpose.msra.mxu0 0
        %8388 = vmatprep.mubr.bf16.mxu0 0
        %8389 = vmatmul.mubr.bf16.gmra.mrb[0].mxu0 %v8351
        %v8390 = vpop.f32.mrb[0].mxu0
        %v8391 = vadd.f32 %v7987, %v8390
        %v8392 = vpop.f32.mrb[0].mxu0
        %v8393 = vpop.f32.mrb[0].mxu0
        %v8394 = vadd.f32 %v7988, %v8393
        %v8395 = vpop.f32.mrb[0].mxu0
        %8396 = vdwg.mxu0
        %8397 = vrot.lane.b32.xlu0 %v982, 32
        %v8398 = vpop.permute.xlu0 %8397
        %8399 = vrot.lane.b32.xlu0 %v998, 32
        %v8400 = vpop.permute.xlu0 %8399
        %v8402 = vsel %vm347, %v8398, 0
        %v8405 = vsel %vm347, %v8400, 0
        %8407 = vmatprep.subr.bf16.mxu0 0
        %8408 = vmatpush1.bf16.xpose.msra.mxu0 %v8405
        %8409 = vmatprep.subr.bf16.mxu0 0
        %8410 = vmatpush1.bf16.xpose.msra.mxu0 0
        %8411 = vmatprep.subr.bf16.mxu0 0
        %8412 = vmatpush1.bf16.xpose.msra.mxu0 0
        %8413 = vmatprep.subr.bf16.mxu0 0
        %8414 = vmatpush1.bf16.xpose.msra.mxu0 0
        %8415 = vmatprep.subr.bf16.mxu0 0
        %8416 = vmatpush1.bf16.xpose.msra.mxu0 0
        %8417 = vmatprep.subr.bf16.mxu0 0
        %8418 = vmatpush1.bf16.xpose.msra.mxu0 0
        %8419 = vmatprep.subr.bf16.mxu0 0
        %8420 = vmatpush1.bf16.xpose.msra.mxu0 0
        %8421 = vmatprep.subr.bf16.mxu0 0
        %8422 = vmatpush1.bf16.xpose.msra.mxu0 0
        %8423 = vmatprep.subr.bf16.mxu0 0
        %8424 = vmatpush1.bf16.xpose.msra.mxu0 0
        %8425 = vmatprep.subr.bf16.mxu0 0
        %8426 = vmatpush1.bf16.xpose.msra.mxu0 0
        %8427 = vmatprep.subr.bf16.mxu0 0
        %8428 = vmatpush1.bf16.xpose.msra.mxu0 0
        %8429 = vmatprep.subr.bf16.mxu0 0
        %8430 = vmatpush1.bf16.xpose.msra.mxu0 0
        %8431 = vmatprep.subr.bf16.mxu0 0
        %8432 = vmatpush1.bf16.xpose.msra.mxu0 0
        %8433 = vmatprep.subr.bf16.mxu0 0
        %8434 = vmatpush1.bf16.xpose.msra.mxu0 0
        %8435 = vmatprep.subr.bf16.mxu0 0
        %8436 = vmatpush1.bf16.xpose.msra.mxu0 0
        %8437 = vmatprep.subr.bf16.mxu0 0
        %8438 = vmatpush1.bf16.xpose.msra.mxu0 0
        %8439 = vmatprep.mubr.bf16.mxu0 0
        %8440 = vmatmul.mubr.bf16.gmra.mrb[0].mxu0 %v8402
        %v8441 = vpop.f32.mrb[0].mxu0
        %v8442 = vadd.f32 %v7987, %v8441
        %v8443 = vpop.f32.mrb[0].mxu0
        %v8444 = vpop.f32.mrb[0].mxu0
        %v8445 = vadd.f32 %v7988, %v8444
        %v8446 = vpop.f32.mrb[0].mxu0
        %8447 = vdwg.mxu0
        %8448 = vrot.lane.b32.xlu0 %v983, 32
        %v8449 = vpop.permute.xlu0 %8448
        %8450 = vrot.lane.b32.xlu0 %v999, 32
        %v8451 = vpop.permute.xlu0 %8450
        %v8453 = vsel %vm347, %v8449, 0
        %v8456 = vsel %vm347, %v8451, 0
        %8458 = vmatprep.subr.bf16.mxu0 0
        %8459 = vmatpush1.bf16.xpose.msra.mxu0 %v8456
        %8460 = vmatprep.subr.bf16.mxu0 0
        %8461 = vmatpush1.bf16.xpose.msra.mxu0 0
        %8462 = vmatprep.subr.bf16.mxu0 0
        %8463 = vmatpush1.bf16.xpose.msra.mxu0 0
        %8464 = vmatprep.subr.bf16.mxu0 0
        %8465 = vmatpush1.bf16.xpose.msra.mxu0 0
        %8466 = vmatprep.subr.bf16.mxu0 0
        %8467 = vmatpush1.bf16.xpose.msra.mxu0 0
        %8468 = vmatprep.subr.bf16.mxu0 0
        %8469 = vmatpush1.bf16.xpose.msra.mxu0 0
        %8470 = vmatprep.subr.bf16.mxu0 0
        %8471 = vmatpush1.bf16.xpose.msra.mxu0 0
        %8472 = vmatprep.subr.bf16.mxu0 0
        %8473 = vmatpush1.bf16.xpose.msra.mxu0 0
        %8474 = vmatprep.subr.bf16.mxu0 0
        %8475 = vmatpush1.bf16.xpose.msra.mxu0 0
        %8476 = vmatprep.subr.bf16.mxu0 0
        %8477 = vmatpush1.bf16.xpose.msra.mxu0 0
        %8478 = vmatprep.subr.bf16.mxu0 0
        %8479 = vmatpush1.bf16.xpose.msra.mxu0 0
        %8480 = vmatprep.subr.bf16.mxu0 0
        %8481 = vmatpush1.bf16.xpose.msra.mxu0 0
        %8482 = vmatprep.subr.bf16.mxu0 0
        %8483 = vmatpush1.bf16.xpose.msra.mxu0 0
        %8484 = vmatprep.subr.bf16.mxu0 0
        %8485 = vmatpush1.bf16.xpose.msra.mxu0 0
        %8486 = vmatprep.subr.bf16.mxu0 0
        %8487 = vmatpush1.bf16.xpose.msra.mxu0 0
        %8488 = vmatprep.subr.bf16.mxu0 0
        %8489 = vmatpush1.bf16.xpose.msra.mxu0 0
        %8490 = vmatprep.mubr.bf16.mxu0 0
        %8491 = vmatmul.mubr.bf16.gmra.mrb[0].mxu0 %v8453
        %v8492 = vpop.f32.mrb[0].mxu0
        %v8493 = vadd.f32 %v7987, %v8492
        %v8494 = vpop.f32.mrb[0].mxu0
        %v8495 = vpop.f32.mrb[0].mxu0
        %v8496 = vadd.f32 %v7988, %v8495
        %v8497 = vpop.f32.mrb[0].mxu0
        %8498 = vdwg.mxu0
        %8499 = vrot.lane.b32.xlu0 %v984, 32
        %v8500 = vpop.permute.xlu0 %8499
        %8501 = vrot.lane.b32.xlu0 %v1000, 32
        %v8502 = vpop.permute.xlu0 %8501
        %v8504 = vsel %vm347, %v8500, 0
        %v8507 = vsel %vm347, %v8502, 0
        %8509 = vmatprep.subr.bf16.mxu0 0
        %8510 = vmatpush1.bf16.xpose.msra.mxu0 %v8507
        %8511 = vmatprep.subr.bf16.mxu0 0
        %8512 = vmatpush1.bf16.xpose.msra.mxu0 0
        %8513 = vmatprep.subr.bf16.mxu0 0
        %8514 = vmatpush1.bf16.xpose.msra.mxu0 0
        %8515 = vmatprep.subr.bf16.mxu0 0
        %8516 = vmatpush1.bf16.xpose.msra.mxu0 0
        %8517 = vmatprep.subr.bf16.mxu0 0
        %8518 = vmatpush1.bf16.xpose.msra.mxu0 0
        %8519 = vmatprep.subr.bf16.mxu0 0
        %8520 = vmatpush1.bf16.xpose.msra.mxu0 0
        %8521 = vmatprep.subr.bf16.mxu0 0
        %8522 = vmatpush1.bf16.xpose.msra.mxu0 0
        %8523 = vmatprep.subr.bf16.mxu0 0
        %8524 = vmatpush1.bf16.xpose.msra.mxu0 0
        %8525 = vmatprep.subr.bf16.mxu0 0
        %8526 = vmatpush1.bf16.xpose.msra.mxu0 0
        %8527 = vmatprep.subr.bf16.mxu0 0
        %8528 = vmatpush1.bf16.xpose.msra.mxu0 0
        %8529 = vmatprep.subr.bf16.mxu0 0
        %8530 = vmatpush1.bf16.xpose.msra.mxu0 0
        %8531 = vmatprep.subr.bf16.mxu0 0
        %8532 = vmatpush1.bf16.xpose.msra.mxu0 0
        %8533 = vmatprep.subr.bf16.mxu0 0
        %8534 = vmatpush1.bf16.xpose.msra.mxu0 0
        %8535 = vmatprep.subr.bf16.mxu0 0
        %8536 = vmatpush1.bf16.xpose.msra.mxu0 0
        %8537 = vmatprep.subr.bf16.mxu0 0
        %8538 = vmatpush1.bf16.xpose.msra.mxu0 0
        %8539 = vmatprep.subr.bf16.mxu0 0
        %8540 = vmatpush1.bf16.xpose.msra.mxu0 0
        %8541 = vmatprep.mubr.bf16.mxu0 0
        %8542 = vmatmul.mubr.bf16.gmra.mrb[0].mxu0 %v8504
        %v8543 = vpop.f32.mrb[0].mxu0
        %v8544 = vadd.f32 %v7987, %v8543
        %v8545 = vpop.f32.mrb[0].mxu0
        %v8546 = vpop.f32.mrb[0].mxu0
        %v8547 = vadd.f32 %v7988, %v8546
        %v8548 = vpop.f32.mrb[0].mxu0
        %8549 = vdwg.mxu0
        %8550 = vrot.lane.b32.xlu0 %v985, 32
        %v8551 = vpop.permute.xlu0 %8550
        %8552 = vrot.lane.b32.xlu0 %v1001, 32
        %v8553 = vpop.permute.xlu0 %8552
        %v8555 = vsel %vm347, %v8551, 0
        %v8558 = vsel %vm347, %v8553, 0
        %8560 = vmatprep.subr.bf16.mxu0 0
        %8561 = vmatpush1.bf16.xpose.msra.mxu0 %v8558
        %8562 = vmatprep.subr.bf16.mxu0 0
        %8563 = vmatpush1.bf16.xpose.msra.mxu0 0
        %8564 = vmatprep.subr.bf16.mxu0 0
        %8565 = vmatpush1.bf16.xpose.msra.mxu0 0
        %8566 = vmatprep.subr.bf16.mxu0 0
        %8567 = vmatpush1.bf16.xpose.msra.mxu0 0
        %8568 = vmatprep.subr.bf16.mxu0 0
        %8569 = vmatpush1.bf16.xpose.msra.mxu0 0
        %8570 = vmatprep.subr.bf16.mxu0 0
        %8571 = vmatpush1.bf16.xpose.msra.mxu0 0
        %8572 = vmatprep.subr.bf16.mxu0 0
        %8573 = vmatpush1.bf16.xpose.msra.mxu0 0
        %8574 = vmatprep.subr.bf16.mxu0 0
        %8575 = vmatpush1.bf16.xpose.msra.mxu0 0
        %8576 = vmatprep.subr.bf16.mxu0 0
        %8577 = vmatpush1.bf16.xpose.msra.mxu0 0
        %8578 = vmatprep.subr.bf16.mxu0 0
        %8579 = vmatpush1.bf16.xpose.msra.mxu0 0
        %8580 = vmatprep.subr.bf16.mxu0 0
        %8581 = vmatpush1.bf16.xpose.msra.mxu0 0
        %8582 = vmatprep.subr.bf16.mxu0 0
        %8583 = vmatpush1.bf16.xpose.msra.mxu0 0
        %8584 = vmatprep.subr.bf16.mxu0 0
        %8585 = vmatpush1.bf16.xpose.msra.mxu0 0
        %8586 = vmatprep.subr.bf16.mxu0 0
        %8587 = vmatpush1.bf16.xpose.msra.mxu0 0
        %8588 = vmatprep.subr.bf16.mxu0 0
        %8589 = vmatpush1.bf16.xpose.msra.mxu0 0
        %8590 = vmatprep.subr.bf16.mxu0 0
        %8591 = vmatpush1.bf16.xpose.msra.mxu0 0
        %8592 = vmatprep.mubr.bf16.mxu0 0
        %8593 = vmatmul.mubr.bf16.gmra.mrb[0].mxu0 %v8555
        %v8594 = vpop.f32.mrb[0].mxu0
        %v8595 = vadd.f32 %v7987, %v8594
        %v8596 = vpop.f32.mrb[0].mxu0
        %v8597 = vpop.f32.mrb[0].mxu0
        %v8598 = vadd.f32 %v7988, %v8597
        %v8599 = vpop.f32.mrb[0].mxu0
        %8600 = vdwg.mxu0
        %8601 = vrot.lane.b32.xlu0 %v986, 32
        %v8602 = vpop.permute.xlu0 %8601
        %8603 = vrot.lane.b32.xlu0 %v1002, 32
        %v8604 = vpop.permute.xlu0 %8603
        %v8606 = vsel %vm347, %v8602, 0
        %v8609 = vsel %vm347, %v8604, 0
        %8611 = vmatprep.subr.bf16.mxu0 0
        %8612 = vmatpush1.bf16.xpose.msra.mxu0 %v8609
        %8613 = vmatprep.subr.bf16.mxu0 0
        %8614 = vmatpush1.bf16.xpose.msra.mxu0 0
        %8615 = vmatprep.subr.bf16.mxu0 0
        %8616 = vmatpush1.bf16.xpose.msra.mxu0 0
        %8617 = vmatprep.subr.bf16.mxu0 0
        %8618 = vmatpush1.bf16.xpose.msra.mxu0 0
        %8619 = vmatprep.subr.bf16.mxu0 0
        %8620 = vmatpush1.bf16.xpose.msra.mxu0 0
        %8621 = vmatprep.subr.bf16.mxu0 0
        %8622 = vmatpush1.bf16.xpose.msra.mxu0 0
        %8623 = vmatprep.subr.bf16.mxu0 0
        %8624 = vmatpush1.bf16.xpose.msra.mxu0 0
        %8625 = vmatprep.subr.bf16.mxu0 0
        %8626 = vmatpush1.bf16.xpose.msra.mxu0 0
        %8627 = vmatprep.subr.bf16.mxu0 0
        %8628 = vmatpush1.bf16.xpose.msra.mxu0 0
        %8629 = vmatprep.subr.bf16.mxu0 0
        %8630 = vmatpush1.bf16.xpose.msra.mxu0 0
        %8631 = vmatprep.subr.bf16.mxu0 0
        %8632 = vmatpush1.bf16.xpose.msra.mxu0 0
        %8633 = vmatprep.subr.bf16.mxu0 0
        %8634 = vmatpush1.bf16.xpose.msra.mxu0 0
        %8635 = vmatprep.subr.bf16.mxu0 0
        %8636 = vmatpush1.bf16.xpose.msra.mxu0 0
        %8637 = vmatprep.subr.bf16.mxu0 0
        %8638 = vmatpush1.bf16.xpose.msra.mxu0 0
        %8639 = vmatprep.subr.bf16.mxu0 0
        %8640 = vmatpush1.bf16.xpose.msra.mxu0 0
        %8641 = vmatprep.subr.bf16.mxu0 0
        %8642 = vmatpush1.bf16.xpose.msra.mxu0 0
        %8643 = vmatprep.mubr.bf16.mxu0 0
        %8644 = vmatmul.mubr.bf16.gmra.mrb[0].mxu0 %v8606
        %v8645 = vpop.f32.mrb[0].mxu0
        %v8646 = vadd.f32 %v7987, %v8645
        %v8647 = vpop.f32.mrb[0].mxu0
        %v8648 = vpop.f32.mrb[0].mxu0
        %v8649 = vadd.f32 %v7988, %v8648
        %v8650 = vpop.f32.mrb[0].mxu0
        %8651 = vdwg.mxu0
        %8652 = vrot.lane.b32.xlu0 %v987, 32
        %v8653 = vpop.permute.xlu0 %8652
        %8654 = vrot.lane.b32.xlu0 %v1003, 32
        %v8655 = vpop.permute.xlu0 %8654
        %v8657 = vsel %vm347, %v8653, 0
        %v8660 = vsel %vm347, %v8655, 0
        %8662 = vmatprep.subr.bf16.mxu0 0
        %8663 = vmatpush1.bf16.xpose.msra.mxu0 %v8660
        %8664 = vmatprep.subr.bf16.mxu0 0
        %8665 = vmatpush1.bf16.xpose.msra.mxu0 0
        %8666 = vmatprep.subr.bf16.mxu0 0
        %8667 = vmatpush1.bf16.xpose.msra.mxu0 0
        %8668 = vmatprep.subr.bf16.mxu0 0
        %8669 = vmatpush1.bf16.xpose.msra.mxu0 0
        %8670 = vmatprep.subr.bf16.mxu0 0
        %8671 = vmatpush1.bf16.xpose.msra.mxu0 0
        %8672 = vmatprep.subr.bf16.mxu0 0
        %8673 = vmatpush1.bf16.xpose.msra.mxu0 0
        %8674 = vmatprep.subr.bf16.mxu0 0
        %8675 = vmatpush1.bf16.xpose.msra.mxu0 0
        %8676 = vmatprep.subr.bf16.mxu0 0
        %8677 = vmatpush1.bf16.xpose.msra.mxu0 0
        %8678 = vmatprep.subr.bf16.mxu0 0
        %8679 = vmatpush1.bf16.xpose.msra.mxu0 0
        %8680 = vmatprep.subr.bf16.mxu0 0
        %8681 = vmatpush1.bf16.xpose.msra.mxu0 0
        %8682 = vmatprep.subr.bf16.mxu0 0
        %8683 = vmatpush1.bf16.xpose.msra.mxu0 0
        %8684 = vmatprep.subr.bf16.mxu0 0
        %8685 = vmatpush1.bf16.xpose.msra.mxu0 0
        %8686 = vmatprep.subr.bf16.mxu0 0
        %8687 = vmatpush1.bf16.xpose.msra.mxu0 0
        %8688 = vmatprep.subr.bf16.mxu0 0
        %8689 = vmatpush1.bf16.xpose.msra.mxu0 0
        %8690 = vmatprep.subr.bf16.mxu0 0
        %8691 = vmatpush1.bf16.xpose.msra.mxu0 0
        %8692 = vmatprep.subr.bf16.mxu0 0
        %8693 = vmatpush1.bf16.xpose.msra.mxu0 0
        %8694 = vmatprep.mubr.bf16.mxu0 0
        %8695 = vmatmul.mubr.bf16.gmra.mrb[0].mxu0 %v8657
        %v8696 = vpop.f32.mrb[0].mxu0
        %v8697 = vadd.f32 %v7987, %v8696
        %v8698 = vpop.f32.mrb[0].mxu0
        %v8699 = vpop.f32.mrb[0].mxu0
        %v8700 = vadd.f32 %v7988, %v8699
        %v8701 = vpop.f32.mrb[0].mxu0
        %8702 = vdwg.mxu0
        %8703 = vrot.lane.b32.xlu0 %v988, 32
        %v8704 = vpop.permute.xlu0 %8703
        %8705 = vrot.lane.b32.xlu0 %v1004, 32
        %v8706 = vpop.permute.xlu0 %8705
        %v8708 = vsel %vm347, %v8704, 0
        %v8711 = vsel %vm347, %v8706, 0
        %8713 = vmatprep.subr.bf16.mxu0 0
        %8714 = vmatpush1.bf16.xpose.msra.mxu0 %v8711
        %8715 = vmatprep.subr.bf16.mxu0 0
        %8716 = vmatpush1.bf16.xpose.msra.mxu0 0
        %8717 = vmatprep.subr.bf16.mxu0 0
        %8718 = vmatpush1.bf16.xpose.msra.mxu0 0
        %8719 = vmatprep.subr.bf16.mxu0 0
        %8720 = vmatpush1.bf16.xpose.msra.mxu0 0
        %8721 = vmatprep.subr.bf16.mxu0 0
        %8722 = vmatpush1.bf16.xpose.msra.mxu0 0
        %8723 = vmatprep.subr.bf16.mxu0 0
        %8724 = vmatpush1.bf16.xpose.msra.mxu0 0
        %8725 = vmatprep.subr.bf16.mxu0 0
        %8726 = vmatpush1.bf16.xpose.msra.mxu0 0
        %8727 = vmatprep.subr.bf16.mxu0 0
        %8728 = vmatpush1.bf16.xpose.msra.mxu0 0
        %8729 = vmatprep.subr.bf16.mxu0 0
        %8730 = vmatpush1.bf16.xpose.msra.mxu0 0
        %8731 = vmatprep.subr.bf16.mxu0 0
        %8732 = vmatpush1.bf16.xpose.msra.mxu0 0
        %8733 = vmatprep.subr.bf16.mxu0 0
        %8734 = vmatpush1.bf16.xpose.msra.mxu0 0
        %8735 = vmatprep.subr.bf16.mxu0 0
        %8736 = vmatpush1.bf16.xpose.msra.mxu0 0
        %8737 = vmatprep.subr.bf16.mxu0 0
        %8738 = vmatpush1.bf16.xpose.msra.mxu0 0
        %8739 = vmatprep.subr.bf16.mxu0 0
        %8740 = vmatpush1.bf16.xpose.msra.mxu0 0
        %8741 = vmatprep.subr.bf16.mxu0 0
        %8742 = vmatpush1.bf16.xpose.msra.mxu0 0
        %8743 = vmatprep.subr.bf16.mxu0 0
        %8744 = vmatpush1.bf16.xpose.msra.mxu0 0
        %8745 = vmatprep.mubr.bf16.mxu0 0
        %8746 = vmatmul.mubr.bf16.gmra.mrb[0].mxu0 %v8708
        %v8747 = vpop.f32.mrb[0].mxu0
        %v8748 = vadd.f32 %v7987, %v8747
        %v8749 = vpop.f32.mrb[0].mxu0
        %v8750 = vpop.f32.mrb[0].mxu0
        %v8751 = vadd.f32 %v7988, %v8750
        %v8752 = vpop.f32.mrb[0].mxu0
        %8753 = vdwg.mxu0
        %8754 = vrot.lane.b32.xlu0 %v989, 32
        %v8755 = vpop.permute.xlu0 %8754
        %8756 = vrot.lane.b32.xlu0 %v1005, 32
        %v8757 = vpop.permute.xlu0 %8756
        %v8759 = vsel %vm347, %v8755, 0
        %v8762 = vsel %vm347, %v8757, 0
        %8764 = vmatprep.subr.bf16.mxu0 0
        %8765 = vmatpush1.bf16.xpose.msra.mxu0 %v8762
        %8766 = vmatprep.subr.bf16.mxu0 0
        %8767 = vmatpush1.bf16.xpose.msra.mxu0 0
        %8768 = vmatprep.subr.bf16.mxu0 0
        %8769 = vmatpush1.bf16.xpose.msra.mxu0 0
        %8770 = vmatprep.subr.bf16.mxu0 0
        %8771 = vmatpush1.bf16.xpose.msra.mxu0 0
        %8772 = vmatprep.subr.bf16.mxu0 0
        %8773 = vmatpush1.bf16.xpose.msra.mxu0 0
        %8774 = vmatprep.subr.bf16.mxu0 0
        %8775 = vmatpush1.bf16.xpose.msra.mxu0 0
        %8776 = vmatprep.subr.bf16.mxu0 0
        %8777 = vmatpush1.bf16.xpose.msra.mxu0 0
        %8778 = vmatprep.subr.bf16.mxu0 0
        %8779 = vmatpush1.bf16.xpose.msra.mxu0 0
        %8780 = vmatprep.subr.bf16.mxu0 0
        %8781 = vmatpush1.bf16.xpose.msra.mxu0 0
        %8782 = vmatprep.subr.bf16.mxu0 0
        %8783 = vmatpush1.bf16.xpose.msra.mxu0 0
        %8784 = vmatprep.subr.bf16.mxu0 0
        %8785 = vmatpush1.bf16.xpose.msra.mxu0 0
        %8786 = vmatprep.subr.bf16.mxu0 0
        %8787 = vmatpush1.bf16.xpose.msra.mxu0 0
        %8788 = vmatprep.subr.bf16.mxu0 0
        %8789 = vmatpush1.bf16.xpose.msra.mxu0 0
        %8790 = vmatprep.subr.bf16.mxu0 0
        %8791 = vmatpush1.bf16.xpose.msra.mxu0 0
        %8792 = vmatprep.subr.bf16.mxu0 0
        %8793 = vmatpush1.bf16.xpose.msra.mxu0 0
        %8794 = vmatprep.subr.bf16.mxu0 0
        %8795 = vmatpush1.bf16.xpose.msra.mxu0 0
        %8796 = vmatprep.mubr.bf16.mxu0 0
        %8797 = vmatmul.mubr.bf16.gmra.mrb[0].mxu0 %v8759
        %v8798 = vpop.f32.mrb[0].mxu0
        %v8799 = vadd.f32 %v7987, %v8798
        %v8800 = vpop.f32.mrb[0].mxu0
        %v8801 = vpop.f32.mrb[0].mxu0
        %v8802 = vadd.f32 %v7988, %v8801
        %v8803 = vpop.f32.mrb[0].mxu0
        %8804 = vdwg.mxu0
        %v8805 = vsel %vm1778, %v8034, -inf
        %8806 = vmax.xlane.f32.xlu0 %v8805
        %v8807 = vpop.xlane.xlu0 %8806
        %v8808 = vsel %vm1778, %v8037, -inf
        %8809 = vmax.xlane.f32.xlu0 %v8808
        %v8810 = vpop.xlane.xlu0 %8809
        %v8811 = vsel %vm1778, %v8085, -inf
        %8812 = vmax.xlane.f32.xlu0 %v8811
        %v8813 = vpop.xlane.xlu0 %8812
        %v8814 = vsel %vm1778, %v8088, -inf
        %8815 = vmax.xlane.f32.xlu0 %v8814
        %v8816 = vpop.xlane.xlu0 %8815
        %v8817 = vsel %vm1778, %v8136, -inf
        %8818 = vmax.xlane.f32.xlu0 %v8817
        %v8819 = vpop.xlane.xlu0 %8818
        %v8820 = vsel %vm1778, %v8139, -inf
        %8821 = vmax.xlane.f32.xlu0 %v8820
        %v8822 = vpop.xlane.xlu0 %8821
        %v8823 = vsel %vm1778, %v8187, -inf
        %8824 = vmax.xlane.f32.xlu0 %v8823
        %v8825 = vpop.xlane.xlu0 %8824
        %v8826 = vsel %vm1778, %v8190, -inf
        %8827 = vmax.xlane.f32.xlu0 %v8826
        %v8828 = vpop.xlane.xlu0 %8827
        %v8829 = vsel %vm1778, %v8238, -inf
        %8830 = vmax.xlane.f32.xlu0 %v8829
        %v8831 = vpop.xlane.xlu0 %8830
        %v8832 = vsel %vm1778, %v8241, -inf
        %8833 = vmax.xlane.f32.xlu0 %v8832
        %v8834 = vpop.xlane.xlu0 %8833
        %v8835 = vsel %vm1778, %v8289, -inf
        %8836 = vmax.xlane.f32.xlu0 %v8835
        %v8837 = vpop.xlane.xlu0 %8836
        %v8838 = vsel %vm1778, %v8292, -inf
        %8839 = vmax.xlane.f32.xlu0 %v8838
        %v8840 = vpop.xlane.xlu0 %8839
        %v8841 = vsel %vm1778, %v8340, -inf
        %8842 = vmax.xlane.f32.xlu0 %v8841
        %v8843 = vpop.xlane.xlu0 %8842
        %v8844 = vsel %vm1778, %v8343, -inf
        %8845 = vmax.xlane.f32.xlu0 %v8844
        %v8846 = vpop.xlane.xlu0 %8845
        %v8847 = vsel %vm1778, %v8391, -inf
        %8848 = vmax.xlane.f32.xlu0 %v8847
        %v8849 = vpop.xlane.xlu0 %8848
        %v8850 = vsel %vm1778, %v8394, -inf
        %8851 = vmax.xlane.f32.xlu0 %v8850
        %v8852 = vpop.xlane.xlu0 %8851
        %v8853 = vsel %vm1778, %v8442, -inf
        %8854 = vmax.xlane.f32.xlu0 %v8853
        %v8855 = vpop.xlane.xlu0 %8854
        %v8856 = vsel %vm1778, %v8445, -inf
        %8857 = vmax.xlane.f32.xlu0 %v8856
        %v8858 = vpop.xlane.xlu0 %8857
        %v8859 = vsel %vm1778, %v8493, -inf
        %8860 = vmax.xlane.f32.xlu0 %v8859
        %v8861 = vpop.xlane.xlu0 %8860
        %v8862 = vsel %vm1778, %v8496, -inf
        %8863 = vmax.xlane.f32.xlu0 %v8862
        %v8864 = vpop.xlane.xlu0 %8863
        %v8865 = vsel %vm1778, %v8544, -inf
        %8866 = vmax.xlane.f32.xlu0 %v8865
        %v8867 = vpop.xlane.xlu0 %8866
        %v8868 = vsel %vm1778, %v8547, -inf
        %8869 = vmax.xlane.f32.xlu0 %v8868
        %v8870 = vpop.xlane.xlu0 %8869
        %v8871 = vsel %vm1778, %v8595, -inf
        %8872 = vmax.xlane.f32.xlu0 %v8871
        %v8873 = vpop.xlane.xlu0 %8872
        %v8874 = vsel %vm1778, %v8598, -inf
        %8875 = vmax.xlane.f32.xlu0 %v8874
        %v8876 = vpop.xlane.xlu0 %8875
        %v8877 = vsel %vm1778, %v8646, -inf
        %8878 = vmax.xlane.f32.xlu0 %v8877
        %v8879 = vpop.xlane.xlu0 %8878
        %v8880 = vsel %vm1778, %v8649, -inf
        %8881 = vmax.xlane.f32.xlu0 %v8880
        %v8882 = vpop.xlane.xlu0 %8881
        %v8883 = vsel %vm1778, %v8697, -inf
        %8884 = vmax.xlane.f32.xlu0 %v8883
        %v8885 = vpop.xlane.xlu0 %8884
        %v8886 = vsel %vm1778, %v8700, -inf
        %8887 = vmax.xlane.f32.xlu0 %v8886
        %v8888 = vpop.xlane.xlu0 %8887
        %v8889 = vsel %vm1778, %v8748, -inf
        %8890 = vmax.xlane.f32.xlu0 %v8889
        %v8891 = vpop.xlane.xlu0 %8890
        %v8892 = vsel %vm1778, %v8751, -inf
        %8893 = vmax.xlane.f32.xlu0 %v8892
        %v8894 = vpop.xlane.xlu0 %8893
        %v8895 = vsel %vm1778, %v8799, -inf
        %8896 = vmax.xlane.f32.xlu0 %v8895
        %v8897 = vpop.xlane.xlu0 %8896
        %v8898 = vsel %vm1778, %v8802, -inf
        %8899 = vmax.xlane.f32.xlu0 %v8898
        %v8900 = vpop.xlane.xlu0 %8899
        %v8901 = vsub.f32 %v8034, %v8807
        %v8902 = vsub.f32 %v8037, %v8810
        %v8903 = vsub.f32 %v8085, %v8813
        %v8904 = vsub.f32 %v8088, %v8816
        %v8905 = vsub.f32 %v8136, %v8819
        %v8906 = vsub.f32 %v8139, %v8822
        %v8907 = vsub.f32 %v8187, %v8825
        %v8908 = vsub.f32 %v8190, %v8828
        %v8909 = vsub.f32 %v8238, %v8831
        %v8910 = vsub.f32 %v8241, %v8834
        %v8911 = vsub.f32 %v8289, %v8837
        %v8912 = vsub.f32 %v8292, %v8840
        %v8913 = vsub.f32 %v8340, %v8843
        %v8914 = vsub.f32 %v8343, %v8846
        %v8915 = vsub.f32 %v8391, %v8849
        %v8916 = vsub.f32 %v8394, %v8852
        %v8917 = vsub.f32 %v8442, %v8855
        %v8918 = vsub.f32 %v8445, %v8858
        %v8919 = vsub.f32 %v8493, %v8861
        %v8920 = vsub.f32 %v8496, %v8864
        %v8921 = vsub.f32 %v8544, %v8867
        %v8922 = vsub.f32 %v8547, %v8870
        %v8923 = vsub.f32 %v8595, %v8873
        %v8924 = vsub.f32 %v8598, %v8876
        %v8925 = vsub.f32 %v8646, %v8879
        %v8926 = vsub.f32 %v8649, %v8882
        %v8927 = vsub.f32 %v8697, %v8885
        %v8928 = vsub.f32 %v8700, %v8888
        %v8929 = vsub.f32 %v8748, %v8891
        %v8930 = vsub.f32 %v8751, %v8894
        %v8931 = vsub.f32 %v8799, %v8897
        %v8932 = vsub.f32 %v8802, %v8900
        %v8933 = vmul.f32 %v8901, 1.442695
        %v8934 = vpow.pop %v8933
        %v8935 = vmul.f32 %v8902, 1.442695
        %v8936 = vpow.pop %v8935
        %v8937 = vmul.f32 %v8903, 1.442695
        %v8938 = vpow.pop %v8937
        %v8939 = vmul.f32 %v8904, 1.442695
        %v8940 = vpow.pop %v8939
        %v8941 = vmul.f32 %v8905, 1.442695
        %v8942 = vpow.pop %v8941
        %v8943 = vmul.f32 %v8906, 1.442695
        %v8944 = vpow.pop %v8943
        %v8945 = vmul.f32 %v8907, 1.442695
        %v8946 = vpow.pop %v8945
        %v8947 = vmul.f32 %v8908, 1.442695
        %v8948 = vpow.pop %v8947
        %v8949 = vmul.f32 %v8909, 1.442695
        %v8950 = vpow.pop %v8949
        %v8951 = vmul.f32 %v8910, 1.442695
        %v8952 = vpow.pop %v8951
        %v8953 = vmul.f32 %v8911, 1.442695
        %v8954 = vpow.pop %v8953
        %v8955 = vmul.f32 %v8912, 1.442695
        %v8956 = vpow.pop %v8955
        %v8957 = vmul.f32 %v8913, 1.442695
        %v8958 = vpow.pop %v8957
        %v8959 = vmul.f32 %v8914, 1.442695
        %v8960 = vpow.pop %v8959
        %v8961 = vmul.f32 %v8915, 1.442695
        %v8962 = vpow.pop %v8961
        %v8963 = vmul.f32 %v8916, 1.442695
        %v8964 = vpow.pop %v8963
        %v8965 = vmul.f32 %v8917, 1.442695
        %v8966 = vpow.pop %v8965
        %v8967 = vmul.f32 %v8918, 1.442695
        %v8968 = vpow.pop %v8967
        %v8969 = vmul.f32 %v8919, 1.442695
        %v8970 = vpow.pop %v8969
        %v8971 = vmul.f32 %v8920, 1.442695
        %v8972 = vpow.pop %v8971
        %v8973 = vmul.f32 %v8921, 1.442695
        %v8974 = vpow.pop %v8973
        %v8975 = vmul.f32 %v8922, 1.442695
        %v8976 = vpow.pop %v8975
        %v8977 = vmul.f32 %v8923, 1.442695
        %v8978 = vpow.pop %v8977
        %v8979 = vmul.f32 %v8924, 1.442695
        %v8980 = vpow.pop %v8979
        %v8981 = vmul.f32 %v8925, 1.442695
        %v8982 = vpow.pop %v8981
        %v8983 = vmul.f32 %v8926, 1.442695
        %v8984 = vpow.pop %v8983
        %v8985 = vmul.f32 %v8927, 1.442695
        %v8986 = vpow.pop %v8985
        %v8987 = vmul.f32 %v8928, 1.442695
        %v8988 = vpow.pop %v8987
        %v8989 = vmul.f32 %v8929, 1.442695
        %v8990 = vpow.pop %v8989
        %v8991 = vmul.f32 %v8930, 1.442695
        %v8992 = vpow.pop %v8991
        %v8993 = vmul.f32 %v8931, 1.442695
        %v8994 = vpow.pop %v8993
        %v8995 = vmul.f32 %v8932, 1.442695
        %v8996 = vpow.pop %v8995
        %v8997 = vsel %vm1778, %v8934, 0.0
        %8998 = vadd.xlane.f32.xlu0 %v8997
        %v8999 = vpop.xlane.xlu0 %8998
        %v9000 = vsel %vm1778, %v8936, 0.0
        %9001 = vadd.xlane.f32.xlu0 %v9000
        %v9002 = vpop.xlane.xlu0 %9001
        %v9003 = vsel %vm1778, %v8938, 0.0
        %9004 = vadd.xlane.f32.xlu0 %v9003
        %v9005 = vpop.xlane.xlu0 %9004
        %v9006 = vsel %vm1778, %v8940, 0.0
        %9007 = vadd.xlane.f32.xlu0 %v9006
        %v9008 = vpop.xlane.xlu0 %9007
        %v9009 = vsel %vm1778, %v8942, 0.0
        %9010 = vadd.xlane.f32.xlu0 %v9009
        %v9011 = vpop.xlane.xlu0 %9010
        %v9012 = vsel %vm1778, %v8944, 0.0
        %9013 = vadd.xlane.f32.xlu0 %v9012
        %v9014 = vpop.xlane.xlu0 %9013
        %v9015 = vsel %vm1778, %v8946, 0.0
        %9016 = vadd.xlane.f32.xlu0 %v9015
        %v9017 = vpop.xlane.xlu0 %9016
        %v9018 = vsel %vm1778, %v8948, 0.0
        %9019 = vadd.xlane.f32.xlu0 %v9018
        %v9020 = vpop.xlane.xlu0 %9019
        %v9021 = vsel %vm1778, %v8950, 0.0
        %9022 = vadd.xlane.f32.xlu0 %v9021
        %v9023 = vpop.xlane.xlu0 %9022
        %v9024 = vsel %vm1778, %v8952, 0.0
        %9025 = vadd.xlane.f32.xlu0 %v9024
        %v9026 = vpop.xlane.xlu0 %9025
        %v9027 = vsel %vm1778, %v8954, 0.0
        %9028 = vadd.xlane.f32.xlu0 %v9027
        %v9029 = vpop.xlane.xlu0 %9028
        %v9030 = vsel %vm1778, %v8956, 0.0
        %9031 = vadd.xlane.f32.xlu0 %v9030
        %v9032 = vpop.xlane.xlu0 %9031
        %v9033 = vsel %vm1778, %v8958, 0.0
        %9034 = vadd.xlane.f32.xlu0 %v9033
        %v9035 = vpop.xlane.xlu0 %9034
        %v9036 = vsel %vm1778, %v8960, 0.0
        %9037 = vadd.xlane.f32.xlu0 %v9036
        %v9038 = vpop.xlane.xlu0 %9037
        %v9039 = vsel %vm1778, %v8962, 0.0
        %9040 = vadd.xlane.f32.xlu0 %v9039
        %v9041 = vpop.xlane.xlu0 %9040
        %v9042 = vsel %vm1778, %v8964, 0.0
        %9043 = vadd.xlane.f32.xlu0 %v9042
        %v9044 = vpop.xlane.xlu0 %9043
        %v9045 = vsel %vm1778, %v8966, 0.0
        %9046 = vadd.xlane.f32.xlu0 %v9045
        %v9047 = vpop.xlane.xlu0 %9046
        %v9048 = vsel %vm1778, %v8968, 0.0
        %9049 = vadd.xlane.f32.xlu0 %v9048
        %v9050 = vpop.xlane.xlu0 %9049
        %v9051 = vsel %vm1778, %v8970, 0.0
        %9052 = vadd.xlane.f32.xlu0 %v9051
        %v9053 = vpop.xlane.xlu0 %9052
        %v9054 = vsel %vm1778, %v8972, 0.0
        %9055 = vadd.xlane.f32.xlu0 %v9054
        %v9056 = vpop.xlane.xlu0 %9055
        %v9057 = vsel %vm1778, %v8974, 0.0
        %9058 = vadd.xlane.f32.xlu0 %v9057
        %v9059 = vpop.xlane.xlu0 %9058
        %v9060 = vsel %vm1778, %v8976, 0.0
        %9061 = vadd.xlane.f32.xlu0 %v9060
        %v9062 = vpop.xlane.xlu0 %9061
        %v9063 = vsel %vm1778, %v8978, 0.0
        %9064 = vadd.xlane.f32.xlu0 %v9063
        %v9065 = vpop.xlane.xlu0 %9064
        %v9066 = vsel %vm1778, %v8980, 0.0
        %9067 = vadd.xlane.f32.xlu0 %v9066
        %v9068 = vpop.xlane.xlu0 %9067
        %v9069 = vsel %vm1778, %v8982, 0.0
        %9070 = vadd.xlane.f32.xlu0 %v9069
        %v9071 = vpop.xlane.xlu0 %9070
        %v9072 = vsel %vm1778, %v8984, 0.0
        %9073 = vadd.xlane.f32.xlu0 %v9072
        %v9074 = vpop.xlane.xlu0 %9073
        %v9075 = vsel %vm1778, %v8986, 0.0
        %9076 = vadd.xlane.f32.xlu0 %v9075
        %v9077 = vpop.xlane.xlu0 %9076
        %v9078 = vsel %vm1778, %v8988, 0.0
        %9079 = vadd.xlane.f32.xlu0 %v9078
        %v9080 = vpop.xlane.xlu0 %9079
        %v9081 = vsel %vm1778, %v8990, 0.0
        %9082 = vadd.xlane.f32.xlu0 %v9081
        %v9083 = vpop.xlane.xlu0 %9082
        %v9084 = vsel %vm1778, %v8992, 0.0
        %9085 = vadd.xlane.f32.xlu0 %v9084
        %v9086 = vpop.xlane.xlu0 %9085
        %v9087 = vsel %vm1778, %v8994, 0.0
        %9088 = vadd.xlane.f32.xlu0 %v9087
        %v9089 = vpop.xlane.xlu0 %9088
        %v9090 = vsel %vm1778, %v8996, 0.0
        %9091 = vadd.xlane.f32.xlu0 %v9090
        %v9092 = vpop.xlane.xlu0 %9091
        %v9093 = vpack.c.bf16 %v8936, %v8934
        %v9094 = vpack.c.bf16 %v8940, %v8938
        %v9095 = vpack.c.bf16 %v8944, %v8942
        %v9096 = vpack.c.bf16 %v8948, %v8946
        %v9097 = vpack.c.bf16 %v8952, %v8950
        %v9098 = vpack.c.bf16 %v8956, %v8954
        %v9099 = vpack.c.bf16 %v8960, %v8958
        %v9100 = vpack.c.bf16 %v8964, %v8962
        %v9101 = vpack.c.bf16 %v8968, %v8966
        %v9102 = vpack.c.bf16 %v8972, %v8970
        %v9103 = vpack.c.bf16 %v8976, %v8974
        %v9104 = vpack.c.bf16 %v8980, %v8978
        %v9105 = vpack.c.bf16 %v8984, %v8982
        %v9106 = vpack.c.bf16 %v8988, %v8986
        %v9107 = vpack.c.bf16 %v8992, %v8990
        %v9108 = vpack.c.bf16 %v8996, %v8994
        %9109 = vrot.lane.b32.xlu0 %v1006, 32
        %v9110 = vpop.permute.xlu0 %9109
        %v9113 = vsel %vm1778, %v9093, 0
        %9115 = vmatprep.subr.bf16.mxu0 0
        %9116 = vmatpush1.bf16.msra.mxu0 %v9110
        %9117 = vmatprep.subr.bf16.mxu0 0
        %9118 = vmatpush1.bf16.msra.mxu0 0
        %9119 = vmatprep.subr.bf16.mxu0 0
        %9120 = vmatpush1.bf16.msra.mxu0 0
        %9121 = vmatprep.subr.bf16.mxu0 0
        %9122 = vmatpush1.bf16.msra.mxu0 0
        %9123 = vmatprep.subr.bf16.mxu0 0
        %9124 = vmatpush1.bf16.msra.mxu0 0
        %9125 = vmatprep.subr.bf16.mxu0 0
        %9126 = vmatpush1.bf16.msra.mxu0 0
        %9127 = vmatprep.subr.bf16.mxu0 0
        %9128 = vmatpush1.bf16.msra.mxu0 0
        %9129 = vmatprep.subr.bf16.mxu0 0
        %9130 = vmatpush1.bf16.msra.mxu0 0
        %9131 = vmatprep.subr.bf16.mxu0 0
        %9132 = vmatpush1.bf16.msra.mxu0 0
        %9133 = vmatprep.subr.bf16.mxu0 0
        %9134 = vmatpush1.bf16.msra.mxu0 0
        %9135 = vmatprep.subr.bf16.mxu0 0
        %9136 = vmatpush1.bf16.msra.mxu0 0
        %9137 = vmatprep.subr.bf16.mxu0 0
        %9138 = vmatpush1.bf16.msra.mxu0 0
        %9139 = vmatprep.subr.bf16.mxu0 0
        %9140 = vmatpush1.bf16.msra.mxu0 0
        %9141 = vmatprep.subr.bf16.mxu0 0
        %9142 = vmatpush1.bf16.msra.mxu0 0
        %9143 = vmatprep.subr.bf16.mxu0 0
        %9144 = vmatpush1.bf16.msra.mxu0 0
        %9145 = vmatprep.subr.bf16.mxu0 0
        %9146 = vmatpush1.bf16.msra.mxu0 0
        %9147 = vmatprep.mubr.bf16.mxu0 0
        %9148 = vmatmul.mubr.bf16.gmra.mrb[0].mxu0 %v9113
        %v9149 = vpop.f32.mrb[0].mxu0
        %v9150 = vadd.f32 0.0, %v9149
        %v9151 = vpop.f32.mrb[0].mxu0
        %v9152 = vpop.f32.mrb[0].mxu0
        %v9153 = vadd.f32 0.0, %v9152
        %v9154 = vpop.f32.mrb[0].mxu0
        %9155 = vdwg.mxu0
        %9156 = vrot.lane.b32.xlu0 %v1007, 32
        %v9157 = vpop.permute.xlu0 %9156
        %v9160 = vsel %vm1778, %v9094, 0
        %9162 = vmatprep.subr.bf16.mxu0 0
        %9163 = vmatpush1.bf16.msra.mxu0 %v9157
        %9164 = vmatprep.subr.bf16.mxu0 0
        %9165 = vmatpush1.bf16.msra.mxu0 0
        %9166 = vmatprep.subr.bf16.mxu0 0
        %9167 = vmatpush1.bf16.msra.mxu0 0
        %9168 = vmatprep.subr.bf16.mxu0 0
        %9169 = vmatpush1.bf16.msra.mxu0 0
        %9170 = vmatprep.subr.bf16.mxu0 0
        %9171 = vmatpush1.bf16.msra.mxu0 0
        %9172 = vmatprep.subr.bf16.mxu0 0
        %9173 = vmatpush1.bf16.msra.mxu0 0
        %9174 = vmatprep.subr.bf16.mxu0 0
        %9175 = vmatpush1.bf16.msra.mxu0 0
        %9176 = vmatprep.subr.bf16.mxu0 0
        %9177 = vmatpush1.bf16.msra.mxu0 0
        %9178 = vmatprep.subr.bf16.mxu0 0
        %9179 = vmatpush1.bf16.msra.mxu0 0
        %9180 = vmatprep.subr.bf16.mxu0 0
        %9181 = vmatpush1.bf16.msra.mxu0 0
        %9182 = vmatprep.subr.bf16.mxu0 0
        %9183 = vmatpush1.bf16.msra.mxu0 0
        %9184 = vmatprep.subr.bf16.mxu0 0
        %9185 = vmatpush1.bf16.msra.mxu0 0
        %9186 = vmatprep.subr.bf16.mxu0 0
        %9187 = vmatpush1.bf16.msra.mxu0 0
        %9188 = vmatprep.subr.bf16.mxu0 0
        %9189 = vmatpush1.bf16.msra.mxu0 0
        %9190 = vmatprep.subr.bf16.mxu0 0
        %9191 = vmatpush1.bf16.msra.mxu0 0
        %9192 = vmatprep.subr.bf16.mxu0 0
        %9193 = vmatpush1.bf16.msra.mxu0 0
        %9194 = vmatprep.mubr.bf16.mxu0 0
        %9195 = vmatmul.mubr.bf16.gmra.mrb[0].mxu0 %v9160
        %v9196 = vpop.f32.mrb[0].mxu0
        %v9197 = vadd.f32 0.0, %v9196
        %v9198 = vpop.f32.mrb[0].mxu0
        %v9199 = vpop.f32.mrb[0].mxu0
        %v9200 = vadd.f32 0.0, %v9199
        %v9201 = vpop.f32.mrb[0].mxu0
        %9202 = vdwg.mxu0
        %9203 = vrot.lane.b32.xlu0 %v1008, 32
        %v9204 = vpop.permute.xlu0 %9203
        %v9207 = vsel %vm1778, %v9095, 0
        %9209 = vmatprep.subr.bf16.mxu0 0
        %9210 = vmatpush1.bf16.msra.mxu0 %v9204
        %9211 = vmatprep.subr.bf16.mxu0 0
        %9212 = vmatpush1.bf16.msra.mxu0 0
        %9213 = vmatprep.subr.bf16.mxu0 0
        %9214 = vmatpush1.bf16.msra.mxu0 0
        %9215 = vmatprep.subr.bf16.mxu0 0
        %9216 = vmatpush1.bf16.msra.mxu0 0
        %9217 = vmatprep.subr.bf16.mxu0 0
        %9218 = vmatpush1.bf16.msra.mxu0 0
        %9219 = vmatprep.subr.bf16.mxu0 0
        %9220 = vmatpush1.bf16.msra.mxu0 0
        %9221 = vmatprep.subr.bf16.mxu0 0
        %9222 = vmatpush1.bf16.msra.mxu0 0
        %9223 = vmatprep.subr.bf16.mxu0 0
        %9224 = vmatpush1.bf16.msra.mxu0 0
        %9225 = vmatprep.subr.bf16.mxu0 0
        %9226 = vmatpush1.bf16.msra.mxu0 0
        %9227 = vmatprep.subr.bf16.mxu0 0
        %9228 = vmatpush1.bf16.msra.mxu0 0
        %9229 = vmatprep.subr.bf16.mxu0 0
        %9230 = vmatpush1.bf16.msra.mxu0 0
        %9231 = vmatprep.subr.bf16.mxu0 0
        %9232 = vmatpush1.bf16.msra.mxu0 0
        %9233 = vmatprep.subr.bf16.mxu0 0
        %9234 = vmatpush1.bf16.msra.mxu0 0
        %9235 = vmatprep.subr.bf16.mxu0 0
        %9236 = vmatpush1.bf16.msra.mxu0 0
        %9237 = vmatprep.subr.bf16.mxu0 0
        %9238 = vmatpush1.bf16.msra.mxu0 0
        %9239 = vmatprep.subr.bf16.mxu0 0
        %9240 = vmatpush1.bf16.msra.mxu0 0
        %9241 = vmatprep.mubr.bf16.mxu0 0
        %9242 = vmatmul.mubr.bf16.gmra.mrb[0].mxu0 %v9207
        %v9243 = vpop.f32.mrb[0].mxu0
        %v9244 = vadd.f32 0.0, %v9243
        %v9245 = vpop.f32.mrb[0].mxu0
        %v9246 = vpop.f32.mrb[0].mxu0
        %v9247 = vadd.f32 0.0, %v9246
        %v9248 = vpop.f32.mrb[0].mxu0
        %9249 = vdwg.mxu0
        %9250 = vrot.lane.b32.xlu0 %v1009, 32
        %v9251 = vpop.permute.xlu0 %9250
        %v9254 = vsel %vm1778, %v9096, 0
        %9256 = vmatprep.subr.bf16.mxu0 0
        %9257 = vmatpush1.bf16.msra.mxu0 %v9251
        %9258 = vmatprep.subr.bf16.mxu0 0
        %9259 = vmatpush1.bf16.msra.mxu0 0
        %9260 = vmatprep.subr.bf16.mxu0 0
        %9261 = vmatpush1.bf16.msra.mxu0 0
        %9262 = vmatprep.subr.bf16.mxu0 0
        %9263 = vmatpush1.bf16.msra.mxu0 0
        %9264 = vmatprep.subr.bf16.mxu0 0
        %9265 = vmatpush1.bf16.msra.mxu0 0
        %9266 = vmatprep.subr.bf16.mxu0 0
        %9267 = vmatpush1.bf16.msra.mxu0 0
        %9268 = vmatprep.subr.bf16.mxu0 0
        %9269 = vmatpush1.bf16.msra.mxu0 0
        %9270 = vmatprep.subr.bf16.mxu0 0
        %9271 = vmatpush1.bf16.msra.mxu0 0
        %9272 = vmatprep.subr.bf16.mxu0 0
        %9273 = vmatpush1.bf16.msra.mxu0 0
        %9274 = vmatprep.subr.bf16.mxu0 0
        %9275 = vmatpush1.bf16.msra.mxu0 0
        %9276 = vmatprep.subr.bf16.mxu0 0
        %9277 = vmatpush1.bf16.msra.mxu0 0
        %9278 = vmatprep.subr.bf16.mxu0 0
        %9279 = vmatpush1.bf16.msra.mxu0 0
        %9280 = vmatprep.subr.bf16.mxu0 0
        %9281 = vmatpush1.bf16.msra.mxu0 0
        %9282 = vmatprep.subr.bf16.mxu0 0
        %9283 = vmatpush1.bf16.msra.mxu0 0
        %9284 = vmatprep.subr.bf16.mxu0 0
        %9285 = vmatpush1.bf16.msra.mxu0 0
        %9286 = vmatprep.subr.bf16.mxu0 0
        %9287 = vmatpush1.bf16.msra.mxu0 0
        %9288 = vmatprep.mubr.bf16.mxu0 0
        %9289 = vmatmul.mubr.bf16.gmra.mrb[0].mxu0 %v9254
        %v9290 = vpop.f32.mrb[0].mxu0
        %v9291 = vadd.f32 0.0, %v9290
        %v9292 = vpop.f32.mrb[0].mxu0
        %v9293 = vpop.f32.mrb[0].mxu0
        %v9294 = vadd.f32 0.0, %v9293
        %v9295 = vpop.f32.mrb[0].mxu0
        %9296 = vdwg.mxu0
        %9297 = vrot.lane.b32.xlu0 %v1010, 32
        %v9298 = vpop.permute.xlu0 %9297
        %v9301 = vsel %vm1778, %v9097, 0
        %9303 = vmatprep.subr.bf16.mxu0 0
        %9304 = vmatpush1.bf16.msra.mxu0 %v9298
        %9305 = vmatprep.subr.bf16.mxu0 0
        %9306 = vmatpush1.bf16.msra.mxu0 0
        %9307 = vmatprep.subr.bf16.mxu0 0
        %9308 = vmatpush1.bf16.msra.mxu0 0
        %9309 = vmatprep.subr.bf16.mxu0 0
        %9310 = vmatpush1.bf16.msra.mxu0 0
        %9311 = vmatprep.subr.bf16.mxu0 0
        %9312 = vmatpush1.bf16.msra.mxu0 0
        %9313 = vmatprep.subr.bf16.mxu0 0
        %9314 = vmatpush1.bf16.msra.mxu0 0
        %9315 = vmatprep.subr.bf16.mxu0 0
        %9316 = vmatpush1.bf16.msra.mxu0 0
        %9317 = vmatprep.subr.bf16.mxu0 0
        %9318 = vmatpush1.bf16.msra.mxu0 0
        %9319 = vmatprep.subr.bf16.mxu0 0
        %9320 = vmatpush1.bf16.msra.mxu0 0
        %9321 = vmatprep.subr.bf16.mxu0 0
        %9322 = vmatpush1.bf16.msra.mxu0 0
        %9323 = vmatprep.subr.bf16.mxu0 0
        %9324 = vmatpush1.bf16.msra.mxu0 0
        %9325 = vmatprep.subr.bf16.mxu0 0
        %9326 = vmatpush1.bf16.msra.mxu0 0
        %9327 = vmatprep.subr.bf16.mxu0 0
        %9328 = vmatpush1.bf16.msra.mxu0 0
        %9329 = vmatprep.subr.bf16.mxu0 0
        %9330 = vmatpush1.bf16.msra.mxu0 0
        %9331 = vmatprep.subr.bf16.mxu0 0
        %9332 = vmatpush1.bf16.msra.mxu0 0
        %9333 = vmatprep.subr.bf16.mxu0 0
        %9334 = vmatpush1.bf16.msra.mxu0 0
        %9335 = vmatprep.mubr.bf16.mxu0 0
        %9336 = vmatmul.mubr.bf16.gmra.mrb[0].mxu0 %v9301
        %v9337 = vpop.f32.mrb[0].mxu0
        %v9338 = vadd.f32 0.0, %v9337
        %v9339 = vpop.f32.mrb[0].mxu0
        %v9340 = vpop.f32.mrb[0].mxu0
        %v9341 = vadd.f32 0.0, %v9340
        %v9342 = vpop.f32.mrb[0].mxu0
        %9343 = vdwg.mxu0
        %9344 = vrot.lane.b32.xlu0 %v1011, 32
        %v9345 = vpop.permute.xlu0 %9344
        %v9348 = vsel %vm1778, %v9098, 0
        %9350 = vmatprep.subr.bf16.mxu0 0
        %9351 = vmatpush1.bf16.msra.mxu0 %v9345
        %9352 = vmatprep.subr.bf16.mxu0 0
        %9353 = vmatpush1.bf16.msra.mxu0 0
        %9354 = vmatprep.subr.bf16.mxu0 0
        %9355 = vmatpush1.bf16.msra.mxu0 0
        %9356 = vmatprep.subr.bf16.mxu0 0
        %9357 = vmatpush1.bf16.msra.mxu0 0
        %9358 = vmatprep.subr.bf16.mxu0 0
        %9359 = vmatpush1.bf16.msra.mxu0 0
        %9360 = vmatprep.subr.bf16.mxu0 0
        %9361 = vmatpush1.bf16.msra.mxu0 0
        %9362 = vmatprep.subr.bf16.mxu0 0
        %9363 = vmatpush1.bf16.msra.mxu0 0
        %9364 = vmatprep.subr.bf16.mxu0 0
        %9365 = vmatpush1.bf16.msra.mxu0 0
        %9366 = vmatprep.subr.bf16.mxu0 0
        %9367 = vmatpush1.bf16.msra.mxu0 0
        %9368 = vmatprep.subr.bf16.mxu0 0
        %9369 = vmatpush1.bf16.msra.mxu0 0
        %9370 = vmatprep.subr.bf16.mxu0 0
        %9371 = vmatpush1.bf16.msra.mxu0 0
        %9372 = vmatprep.subr.bf16.mxu0 0
        %9373 = vmatpush1.bf16.msra.mxu0 0
        %9374 = vmatprep.subr.bf16.mxu0 0
        %9375 = vmatpush1.bf16.msra.mxu0 0
        %9376 = vmatprep.subr.bf16.mxu0 0
        %9377 = vmatpush1.bf16.msra.mxu0 0
        %9378 = vmatprep.subr.bf16.mxu0 0
        %9379 = vmatpush1.bf16.msra.mxu0 0
        %9380 = vmatprep.subr.bf16.mxu0 0
        %9381 = vmatpush1.bf16.msra.mxu0 0
        %9382 = vmatprep.mubr.bf16.mxu0 0
        %9383 = vmatmul.mubr.bf16.gmra.mrb[0].mxu0 %v9348
        %v9384 = vpop.f32.mrb[0].mxu0
        %v9385 = vadd.f32 0.0, %v9384
        %v9386 = vpop.f32.mrb[0].mxu0
        %v9387 = vpop.f32.mrb[0].mxu0
        %v9388 = vadd.f32 0.0, %v9387
        %v9389 = vpop.f32.mrb[0].mxu0
        %9390 = vdwg.mxu0
        %9391 = vrot.lane.b32.xlu0 %v1012, 32
        %v9392 = vpop.permute.xlu0 %9391
        %v9395 = vsel %vm1778, %v9099, 0
        %9397 = vmatprep.subr.bf16.mxu0 0
        %9398 = vmatpush1.bf16.msra.mxu0 %v9392
        %9399 = vmatprep.subr.bf16.mxu0 0
        %9400 = vmatpush1.bf16.msra.mxu0 0
        %9401 = vmatprep.subr.bf16.mxu0 0
        %9402 = vmatpush1.bf16.msra.mxu0 0
        %9403 = vmatprep.subr.bf16.mxu0 0
        %9404 = vmatpush1.bf16.msra.mxu0 0
        %9405 = vmatprep.subr.bf16.mxu0 0
        %9406 = vmatpush1.bf16.msra.mxu0 0
        %9407 = vmatprep.subr.bf16.mxu0 0
        %9408 = vmatpush1.bf16.msra.mxu0 0
        %9409 = vmatprep.subr.bf16.mxu0 0
        %9410 = vmatpush1.bf16.msra.mxu0 0
        %9411 = vmatprep.subr.bf16.mxu0 0
        %9412 = vmatpush1.bf16.msra.mxu0 0
        %9413 = vmatprep.subr.bf16.mxu0 0
        %9414 = vmatpush1.bf16.msra.mxu0 0
        %9415 = vmatprep.subr.bf16.mxu0 0
        %9416 = vmatpush1.bf16.msra.mxu0 0
        %9417 = vmatprep.subr.bf16.mxu0 0
        %9418 = vmatpush1.bf16.msra.mxu0 0
        %9419 = vmatprep.subr.bf16.mxu0 0
        %9420 = vmatpush1.bf16.msra.mxu0 0
        %9421 = vmatprep.subr.bf16.mxu0 0
        %9422 = vmatpush1.bf16.msra.mxu0 0
        %9423 = vmatprep.subr.bf16.mxu0 0
        %9424 = vmatpush1.bf16.msra.mxu0 0
        %9425 = vmatprep.subr.bf16.mxu0 0
        %9426 = vmatpush1.bf16.msra.mxu0 0
        %9427 = vmatprep.subr.bf16.mxu0 0
        %9428 = vmatpush1.bf16.msra.mxu0 0
        %9429 = vmatprep.mubr.bf16.mxu0 0
        %9430 = vmatmul.mubr.bf16.gmra.mrb[0].mxu0 %v9395
        %v9431 = vpop.f32.mrb[0].mxu0
        %v9432 = vadd.f32 0.0, %v9431
        %v9433 = vpop.f32.mrb[0].mxu0
        %v9434 = vpop.f32.mrb[0].mxu0
        %v9435 = vadd.f32 0.0, %v9434
        %v9436 = vpop.f32.mrb[0].mxu0
        %9437 = vdwg.mxu0
        %9438 = vrot.lane.b32.xlu0 %v1013, 32
        %v9439 = vpop.permute.xlu0 %9438
        %v9442 = vsel %vm1778, %v9100, 0
        %9444 = vmatprep.subr.bf16.mxu0 0
        %9445 = vmatpush1.bf16.msra.mxu0 %v9439
        %9446 = vmatprep.subr.bf16.mxu0 0
        %9447 = vmatpush1.bf16.msra.mxu0 0
        %9448 = vmatprep.subr.bf16.mxu0 0
        %9449 = vmatpush1.bf16.msra.mxu0 0
        %9450 = vmatprep.subr.bf16.mxu0 0
        %9451 = vmatpush1.bf16.msra.mxu0 0
        %9452 = vmatprep.subr.bf16.mxu0 0
        %9453 = vmatpush1.bf16.msra.mxu0 0
        %9454 = vmatprep.subr.bf16.mxu0 0
        %9455 = vmatpush1.bf16.msra.mxu0 0
        %9456 = vmatprep.subr.bf16.mxu0 0
        %9457 = vmatpush1.bf16.msra.mxu0 0
        %9458 = vmatprep.subr.bf16.mxu0 0
        %9459 = vmatpush1.bf16.msra.mxu0 0
        %9460 = vmatprep.subr.bf16.mxu0 0
        %9461 = vmatpush1.bf16.msra.mxu0 0
        %9462 = vmatprep.subr.bf16.mxu0 0
        %9463 = vmatpush1.bf16.msra.mxu0 0
        %9464 = vmatprep.subr.bf16.mxu0 0
        %9465 = vmatpush1.bf16.msra.mxu0 0
        %9466 = vmatprep.subr.bf16.mxu0 0
        %9467 = vmatpush1.bf16.msra.mxu0 0
        %9468 = vmatprep.subr.bf16.mxu0 0
        %9469 = vmatpush1.bf16.msra.mxu0 0
        %9470 = vmatprep.subr.bf16.mxu0 0
        %9471 = vmatpush1.bf16.msra.mxu0 0
        %9472 = vmatprep.subr.bf16.mxu0 0
        %9473 = vmatpush1.bf16.msra.mxu0 0
        %9474 = vmatprep.subr.bf16.mxu0 0
        %9475 = vmatpush1.bf16.msra.mxu0 0
        %9476 = vmatprep.mubr.bf16.mxu0 0
        %9477 = vmatmul.mubr.bf16.gmra.mrb[0].mxu0 %v9442
        %v9478 = vpop.f32.mrb[0].mxu0
        %v9479 = vadd.f32 0.0, %v9478
        %v9480 = vpop.f32.mrb[0].mxu0
        %v9481 = vpop.f32.mrb[0].mxu0
        %v9482 = vadd.f32 0.0, %v9481
        %v9483 = vpop.f32.mrb[0].mxu0
        %9484 = vdwg.mxu0
        %9485 = vrot.lane.b32.xlu0 %v1014, 32
        %v9486 = vpop.permute.xlu0 %9485
        %v9489 = vsel %vm1778, %v9101, 0
        %9491 = vmatprep.subr.bf16.mxu0 0
        %9492 = vmatpush1.bf16.msra.mxu0 %v9486
        %9493 = vmatprep.subr.bf16.mxu0 0
        %9494 = vmatpush1.bf16.msra.mxu0 0
        %9495 = vmatprep.subr.bf16.mxu0 0
        %9496 = vmatpush1.bf16.msra.mxu0 0
        %9497 = vmatprep.subr.bf16.mxu0 0
        %9498 = vmatpush1.bf16.msra.mxu0 0
        %9499 = vmatprep.subr.bf16.mxu0 0
        %9500 = vmatpush1.bf16.msra.mxu0 0
        %9501 = vmatprep.subr.bf16.mxu0 0
        %9502 = vmatpush1.bf16.msra.mxu0 0
        %9503 = vmatprep.subr.bf16.mxu0 0
        %9504 = vmatpush1.bf16.msra.mxu0 0
        %9505 = vmatprep.subr.bf16.mxu0 0
        %9506 = vmatpush1.bf16.msra.mxu0 0
        %9507 = vmatprep.subr.bf16.mxu0 0
        %9508 = vmatpush1.bf16.msra.mxu0 0
        %9509 = vmatprep.subr.bf16.mxu0 0
        %9510 = vmatpush1.bf16.msra.mxu0 0
        %9511 = vmatprep.subr.bf16.mxu0 0
        %9512 = vmatpush1.bf16.msra.mxu0 0
        %9513 = vmatprep.subr.bf16.mxu0 0
        %9514 = vmatpush1.bf16.msra.mxu0 0
        %9515 = vmatprep.subr.bf16.mxu0 0
        %9516 = vmatpush1.bf16.msra.mxu0 0
        %9517 = vmatprep.subr.bf16.mxu0 0
        %9518 = vmatpush1.bf16.msra.mxu0 0
        %9519 = vmatprep.subr.bf16.mxu0 0
        %9520 = vmatpush1.bf16.msra.mxu0 0
        %9521 = vmatprep.subr.bf16.mxu0 0
        %9522 = vmatpush1.bf16.msra.mxu0 0
        %9523 = vmatprep.mubr.bf16.mxu0 0
        %9524 = vmatmul.mubr.bf16.gmra.mrb[0].mxu0 %v9489
        %v9525 = vpop.f32.mrb[0].mxu0
        %v9526 = vadd.f32 0.0, %v9525
        %v9527 = vpop.f32.mrb[0].mxu0
        %v9528 = vpop.f32.mrb[0].mxu0
        %v9529 = vadd.f32 0.0, %v9528
        %v9530 = vpop.f32.mrb[0].mxu0
        %9531 = vdwg.mxu0
        %9532 = vrot.lane.b32.xlu0 %v1015, 32
        %v9533 = vpop.permute.xlu0 %9532
        %v9536 = vsel %vm1778, %v9102, 0
        %9538 = vmatprep.subr.bf16.mxu0 0
        %9539 = vmatpush1.bf16.msra.mxu0 %v9533
        %9540 = vmatprep.subr.bf16.mxu0 0
        %9541 = vmatpush1.bf16.msra.mxu0 0
        %9542 = vmatprep.subr.bf16.mxu0 0
        %9543 = vmatpush1.bf16.msra.mxu0 0
        %9544 = vmatprep.subr.bf16.mxu0 0
        %9545 = vmatpush1.bf16.msra.mxu0 0
        %9546 = vmatprep.subr.bf16.mxu0 0
        %9547 = vmatpush1.bf16.msra.mxu0 0
        %9548 = vmatprep.subr.bf16.mxu0 0
        %9549 = vmatpush1.bf16.msra.mxu0 0
        %9550 = vmatprep.subr.bf16.mxu0 0
        %9551 = vmatpush1.bf16.msra.mxu0 0
        %9552 = vmatprep.subr.bf16.mxu0 0
        %9553 = vmatpush1.bf16.msra.mxu0 0
        %9554 = vmatprep.subr.bf16.mxu0 0
        %9555 = vmatpush1.bf16.msra.mxu0 0
        %9556 = vmatprep.subr.bf16.mxu0 0
        %9557 = vmatpush1.bf16.msra.mxu0 0
        %9558 = vmatprep.subr.bf16.mxu0 0
        %9559 = vmatpush1.bf16.msra.mxu0 0
        %9560 = vmatprep.subr.bf16.mxu0 0
        %9561 = vmatpush1.bf16.msra.mxu0 0
        %9562 = vmatprep.subr.bf16.mxu0 0
        %9563 = vmatpush1.bf16.msra.mxu0 0
        %9564 = vmatprep.subr.bf16.mxu0 0
        %9565 = vmatpush1.bf16.msra.mxu0 0
        %9566 = vmatprep.subr.bf16.mxu0 0
        %9567 = vmatpush1.bf16.msra.mxu0 0
        %9568 = vmatprep.subr.bf16.mxu0 0
        %9569 = vmatpush1.bf16.msra.mxu0 0
        %9570 = vmatprep.mubr.bf16.mxu0 0
        %9571 = vmatmul.mubr.bf16.gmra.mrb[0].mxu0 %v9536
        %v9572 = vpop.f32.mrb[0].mxu0
        %v9573 = vadd.f32 0.0, %v9572
        %v9574 = vpop.f32.mrb[0].mxu0
        %v9575 = vpop.f32.mrb[0].mxu0
        %v9576 = vadd.f32 0.0, %v9575
        %v9577 = vpop.f32.mrb[0].mxu0
        %9578 = vdwg.mxu0
        %9579 = vrot.lane.b32.xlu0 %v1016, 32
        %v9580 = vpop.permute.xlu0 %9579
        %v9583 = vsel %vm1778, %v9103, 0
        %9585 = vmatprep.subr.bf16.mxu0 0
        %9586 = vmatpush1.bf16.msra.mxu0 %v9580
        %9587 = vmatprep.subr.bf16.mxu0 0
        %9588 = vmatpush1.bf16.msra.mxu0 0
        %9589 = vmatprep.subr.bf16.mxu0 0
        %9590 = vmatpush1.bf16.msra.mxu0 0
        %9591 = vmatprep.subr.bf16.mxu0 0
        %9592 = vmatpush1.bf16.msra.mxu0 0
        %9593 = vmatprep.subr.bf16.mxu0 0
        %9594 = vmatpush1.bf16.msra.mxu0 0
        %9595 = vmatprep.subr.bf16.mxu0 0
        %9596 = vmatpush1.bf16.msra.mxu0 0
        %9597 = vmatprep.subr.bf16.mxu0 0
        %9598 = vmatpush1.bf16.msra.mxu0 0
        %9599 = vmatprep.subr.bf16.mxu0 0
        %9600 = vmatpush1.bf16.msra.mxu0 0
        %9601 = vmatprep.subr.bf16.mxu0 0
        %9602 = vmatpush1.bf16.msra.mxu0 0
        %9603 = vmatprep.subr.bf16.mxu0 0
        %9604 = vmatpush1.bf16.msra.mxu0 0
        %9605 = vmatprep.subr.bf16.mxu0 0
        %9606 = vmatpush1.bf16.msra.mxu0 0
        %9607 = vmatprep.subr.bf16.mxu0 0
        %9608 = vmatpush1.bf16.msra.mxu0 0
        %9609 = vmatprep.subr.bf16.mxu0 0
        %9610 = vmatpush1.bf16.msra.mxu0 0
        %9611 = vmatprep.subr.bf16.mxu0 0
        %9612 = vmatpush1.bf16.msra.mxu0 0
        %9613 = vmatprep.subr.bf16.mxu0 0
        %9614 = vmatpush1.bf16.msra.mxu0 0
        %9615 = vmatprep.subr.bf16.mxu0 0
        %9616 = vmatpush1.bf16.msra.mxu0 0
        %9617 = vmatprep.mubr.bf16.mxu0 0
        %9618 = vmatmul.mubr.bf16.gmra.mrb[0].mxu0 %v9583
        %v9619 = vpop.f32.mrb[0].mxu0
        %v9620 = vadd.f32 0.0, %v9619
        %v9621 = vpop.f32.mrb[0].mxu0
        %v9622 = vpop.f32.mrb[0].mxu0
        %v9623 = vadd.f32 0.0, %v9622
        %v9624 = vpop.f32.mrb[0].mxu0
        %9625 = vdwg.mxu0
        %9626 = vrot.lane.b32.xlu0 %v1017, 32
        %v9627 = vpop.permute.xlu0 %9626
        %v9630 = vsel %vm1778, %v9104, 0
        %9632 = vmatprep.subr.bf16.mxu0 0
        %9633 = vmatpush1.bf16.msra.mxu0 %v9627
        %9634 = vmatprep.subr.bf16.mxu0 0
        %9635 = vmatpush1.bf16.msra.mxu0 0
        %9636 = vmatprep.subr.bf16.mxu0 0
        %9637 = vmatpush1.bf16.msra.mxu0 0
        %9638 = vmatprep.subr.bf16.mxu0 0
        %9639 = vmatpush1.bf16.msra.mxu0 0
        %9640 = vmatprep.subr.bf16.mxu0 0
        %9641 = vmatpush1.bf16.msra.mxu0 0
        %9642 = vmatprep.subr.bf16.mxu0 0
        %9643 = vmatpush1.bf16.msra.mxu0 0
        %9644 = vmatprep.subr.bf16.mxu0 0
        %9645 = vmatpush1.bf16.msra.mxu0 0
        %9646 = vmatprep.subr.bf16.mxu0 0
        %9647 = vmatpush1.bf16.msra.mxu0 0
        %9648 = vmatprep.subr.bf16.mxu0 0
        %9649 = vmatpush1.bf16.msra.mxu0 0
        %9650 = vmatprep.subr.bf16.mxu0 0
        %9651 = vmatpush1.bf16.msra.mxu0 0
        %9652 = vmatprep.subr.bf16.mxu0 0
        %9653 = vmatpush1.bf16.msra.mxu0 0
        %9654 = vmatprep.subr.bf16.mxu0 0
        %9655 = vmatpush1.bf16.msra.mxu0 0
        %9656 = vmatprep.subr.bf16.mxu0 0
        %9657 = vmatpush1.bf16.msra.mxu0 0
        %9658 = vmatprep.subr.bf16.mxu0 0
        %9659 = vmatpush1.bf16.msra.mxu0 0
        %9660 = vmatprep.subr.bf16.mxu0 0
        %9661 = vmatpush1.bf16.msra.mxu0 0
        %9662 = vmatprep.subr.bf16.mxu0 0
        %9663 = vmatpush1.bf16.msra.mxu0 0
        %9664 = vmatprep.mubr.bf16.mxu0 0
        %9665 = vmatmul.mubr.bf16.gmra.mrb[0].mxu0 %v9630
        %v9666 = vpop.f32.mrb[0].mxu0
        %v9667 = vadd.f32 0.0, %v9666
        %v9668 = vpop.f32.mrb[0].mxu0
        %v9669 = vpop.f32.mrb[0].mxu0
        %v9670 = vadd.f32 0.0, %v9669
        %v9671 = vpop.f32.mrb[0].mxu0
        %9672 = vdwg.mxu0
        %9673 = vrot.lane.b32.xlu0 %v1018, 32
        %v9674 = vpop.permute.xlu0 %9673
        %v9677 = vsel %vm1778, %v9105, 0
        %9679 = vmatprep.subr.bf16.mxu0 0
        %9680 = vmatpush1.bf16.msra.mxu0 %v9674
        %9681 = vmatprep.subr.bf16.mxu0 0
        %9682 = vmatpush1.bf16.msra.mxu0 0
        %9683 = vmatprep.subr.bf16.mxu0 0
        %9684 = vmatpush1.bf16.msra.mxu0 0
        %9685 = vmatprep.subr.bf16.mxu0 0
        %9686 = vmatpush1.bf16.msra.mxu0 0
        %9687 = vmatprep.subr.bf16.mxu0 0
        %9688 = vmatpush1.bf16.msra.mxu0 0
        %9689 = vmatprep.subr.bf16.mxu0 0
        %9690 = vmatpush1.bf16.msra.mxu0 0
        %9691 = vmatprep.subr.bf16.mxu0 0
        %9692 = vmatpush1.bf16.msra.mxu0 0
        %9693 = vmatprep.subr.bf16.mxu0 0
        %9694 = vmatpush1.bf16.msra.mxu0 0
        %9695 = vmatprep.subr.bf16.mxu0 0
        %9696 = vmatpush1.bf16.msra.mxu0 0
        %9697 = vmatprep.subr.bf16.mxu0 0
        %9698 = vmatpush1.bf16.msra.mxu0 0
        %9699 = vmatprep.subr.bf16.mxu0 0
        %9700 = vmatpush1.bf16.msra.mxu0 0
        %9701 = vmatprep.subr.bf16.mxu0 0
        %9702 = vmatpush1.bf16.msra.mxu0 0
        %9703 = vmatprep.subr.bf16.mxu0 0
        %9704 = vmatpush1.bf16.msra.mxu0 0
        %9705 = vmatprep.subr.bf16.mxu0 0
        %9706 = vmatpush1.bf16.msra.mxu0 0
        %9707 = vmatprep.subr.bf16.mxu0 0
        %9708 = vmatpush1.bf16.msra.mxu0 0
        %9709 = vmatprep.subr.bf16.mxu0 0
        %9710 = vmatpush1.bf16.msra.mxu0 0
        %9711 = vmatprep.mubr.bf16.mxu0 0
        %9712 = vmatmul.mubr.bf16.gmra.mrb[0].mxu0 %v9677
        %v9713 = vpop.f32.mrb[0].mxu0
        %v9714 = vadd.f32 0.0, %v9713
        %v9715 = vpop.f32.mrb[0].mxu0
        %v9716 = vpop.f32.mrb[0].mxu0
        %v9717 = vadd.f32 0.0, %v9716
        %v9718 = vpop.f32.mrb[0].mxu0
        %9719 = vdwg.mxu0
        %9720 = vrot.lane.b32.xlu0 %v1019, 32
        %v9721 = vpop.permute.xlu0 %9720
        %v9724 = vsel %vm1778, %v9106, 0
        %9726 = vmatprep.subr.bf16.mxu0 0
        %9727 = vmatpush1.bf16.msra.mxu0 %v9721
        %9728 = vmatprep.subr.bf16.mxu0 0
        %9729 = vmatpush1.bf16.msra.mxu0 0
        %9730 = vmatprep.subr.bf16.mxu0 0
        %9731 = vmatpush1.bf16.msra.mxu0 0
        %9732 = vmatprep.subr.bf16.mxu0 0
        %9733 = vmatpush1.bf16.msra.mxu0 0
        %9734 = vmatprep.subr.bf16.mxu0 0
        %9735 = vmatpush1.bf16.msra.mxu0 0
        %9736 = vmatprep.subr.bf16.mxu0 0
        %9737 = vmatpush1.bf16.msra.mxu0 0
        %9738 = vmatprep.subr.bf16.mxu0 0
        %9739 = vmatpush1.bf16.msra.mxu0 0
        %9740 = vmatprep.subr.bf16.mxu0 0
        %9741 = vmatpush1.bf16.msra.mxu0 0
        %9742 = vmatprep.subr.bf16.mxu0 0
        %9743 = vmatpush1.bf16.msra.mxu0 0
        %9744 = vmatprep.subr.bf16.mxu0 0
        %9745 = vmatpush1.bf16.msra.mxu0 0
        %9746 = vmatprep.subr.bf16.mxu0 0
        %9747 = vmatpush1.bf16.msra.mxu0 0
        %9748 = vmatprep.subr.bf16.mxu0 0
        %9749 = vmatpush1.bf16.msra.mxu0 0
        %9750 = vmatprep.subr.bf16.mxu0 0
        %9751 = vmatpush1.bf16.msra.mxu0 0
        %9752 = vmatprep.subr.bf16.mxu0 0
        %9753 = vmatpush1.bf16.msra.mxu0 0
        %9754 = vmatprep.subr.bf16.mxu0 0
        %9755 = vmatpush1.bf16.msra.mxu0 0
        %9756 = vmatprep.subr.bf16.mxu0 0
        %9757 = vmatpush1.bf16.msra.mxu0 0
        %9758 = vmatprep.mubr.bf16.mxu0 0
        %9759 = vmatmul.mubr.bf16.gmra.mrb[0].mxu0 %v9724
        %v9760 = vpop.f32.mrb[0].mxu0
        %v9761 = vadd.f32 0.0, %v9760
        %v9762 = vpop.f32.mrb[0].mxu0
        %v9763 = vpop.f32.mrb[0].mxu0
        %v9764 = vadd.f32 0.0, %v9763
        %v9765 = vpop.f32.mrb[0].mxu0
        %9766 = vdwg.mxu0
        %9767 = vrot.lane.b32.xlu0 %v1020, 32
        %v9768 = vpop.permute.xlu0 %9767
        %v9771 = vsel %vm1778, %v9107, 0
        %9773 = vmatprep.subr.bf16.mxu0 0
        %9774 = vmatpush1.bf16.msra.mxu0 %v9768
        %9775 = vmatprep.subr.bf16.mxu0 0
        %9776 = vmatpush1.bf16.msra.mxu0 0
        %9777 = vmatprep.subr.bf16.mxu0 0
        %9778 = vmatpush1.bf16.msra.mxu0 0
        %9779 = vmatprep.subr.bf16.mxu0 0
        %9780 = vmatpush1.bf16.msra.mxu0 0
        %9781 = vmatprep.subr.bf16.mxu0 0
        %9782 = vmatpush1.bf16.msra.mxu0 0
        %9783 = vmatprep.subr.bf16.mxu0 0
        %9784 = vmatpush1.bf16.msra.mxu0 0
        %9785 = vmatprep.subr.bf16.mxu0 0
        %9786 = vmatpush1.bf16.msra.mxu0 0
        %9787 = vmatprep.subr.bf16.mxu0 0
        %9788 = vmatpush1.bf16.msra.mxu0 0
        %9789 = vmatprep.subr.bf16.mxu0 0
        %9790 = vmatpush1.bf16.msra.mxu0 0
        %9791 = vmatprep.subr.bf16.mxu0 0
        %9792 = vmatpush1.bf16.msra.mxu0 0
        %9793 = vmatprep.subr.bf16.mxu0 0
        %9794 = vmatpush1.bf16.msra.mxu0 0
        %9795 = vmatprep.subr.bf16.mxu0 0
        %9796 = vmatpush1.bf16.msra.mxu0 0
        %9797 = vmatprep.subr.bf16.mxu0 0
        %9798 = vmatpush1.bf16.msra.mxu0 0
        %9799 = vmatprep.subr.bf16.mxu0 0
        %9800 = vmatpush1.bf16.msra.mxu0 0
        %9801 = vmatprep.subr.bf16.mxu0 0
        %9802 = vmatpush1.bf16.msra.mxu0 0
        %9803 = vmatprep.subr.bf16.mxu0 0
        %9804 = vmatpush1.bf16.msra.mxu0 0
        %9805 = vmatprep.mubr.bf16.mxu0 0
        %9806 = vmatmul.mubr.bf16.gmra.mrb[0].mxu0 %v9771
        %v9807 = vpop.f32.mrb[0].mxu0
        %v9808 = vadd.f32 0.0, %v9807
        %v9809 = vpop.f32.mrb[0].mxu0
        %v9810 = vpop.f32.mrb[0].mxu0
        %v9811 = vadd.f32 0.0, %v9810
        %v9812 = vpop.f32.mrb[0].mxu0
        %9813 = vdwg.mxu0
        %9814 = vrot.lane.b32.xlu0 %v1021, 32
        %v9815 = vpop.permute.xlu0 %9814
        %v9818 = vsel %vm1778, %v9108, 0
        %9820 = vmatprep.subr.bf16.mxu0 0
        %9821 = vmatpush1.bf16.msra.mxu0 %v9815
        %9822 = vmatprep.subr.bf16.mxu0 0
        %9823 = vmatpush1.bf16.msra.mxu0 0
        %9824 = vmatprep.subr.bf16.mxu0 0
        %9825 = vmatpush1.bf16.msra.mxu0 0
        %9826 = vmatprep.subr.bf16.mxu0 0
        %9827 = vmatpush1.bf16.msra.mxu0 0
        %9828 = vmatprep.subr.bf16.mxu0 0
        %9829 = vmatpush1.bf16.msra.mxu0 0
        %9830 = vmatprep.subr.bf16.mxu0 0
        %9831 = vmatpush1.bf16.msra.mxu0 0
        %9832 = vmatprep.subr.bf16.mxu0 0
        %9833 = vmatpush1.bf16.msra.mxu0 0
        %9834 = vmatprep.subr.bf16.mxu0 0
        %9835 = vmatpush1.bf16.msra.mxu0 0
        %9836 = vmatprep.subr.bf16.mxu0 0
        %9837 = vmatpush1.bf16.msra.mxu0 0
        %9838 = vmatprep.subr.bf16.mxu0 0
        %9839 = vmatpush1.bf16.msra.mxu0 0
        %9840 = vmatprep.subr.bf16.mxu0 0
        %9841 = vmatpush1.bf16.msra.mxu0 0
        %9842 = vmatprep.subr.bf16.mxu0 0
        %9843 = vmatpush1.bf16.msra.mxu0 0
        %9844 = vmatprep.subr.bf16.mxu0 0
        %9845 = vmatpush1.bf16.msra.mxu0 0
        %9846 = vmatprep.subr.bf16.mxu0 0
        %9847 = vmatpush1.bf16.msra.mxu0 0
        %9848 = vmatprep.subr.bf16.mxu0 0
        %9849 = vmatpush1.bf16.msra.mxu0 0
        %9850 = vmatprep.subr.bf16.mxu0 0
        %9851 = vmatpush1.bf16.msra.mxu0 0
        %9852 = vmatprep.mubr.bf16.mxu0 0
        %9853 = vmatmul.mubr.bf16.gmra.mrb[0].mxu0 %v9818
        %v9854 = vpop.f32.mrb[0].mxu0
        %v9855 = vadd.f32 0.0, %v9854
        %v9856 = vpop.f32.mrb[0].mxu0
        %v9857 = vpop.f32.mrb[0].mxu0
        %v9858 = vadd.f32 0.0, %v9857
        %v9859 = vpop.f32.mrb[0].mxu0
        %9860 = vdwg.mxu0
        %v9861 = vrcp.pop %v8999
        %v9862 = vrcp.pop %v9002
        %v9863 = vrcp.pop %v9005
        %v9864 = vrcp.pop %v9008
        %v9865 = vrcp.pop %v9011
        %v9866 = vrcp.pop %v9014
        %v9867 = vrcp.pop %v9017
        %v9868 = vrcp.pop %v9020
        %v9869 = vrcp.pop %v9023
        %v9870 = vrcp.pop %v9026
        %v9871 = vrcp.pop %v9029
        %v9872 = vrcp.pop %v9032
        %v9873 = vrcp.pop %v9035
        %v9874 = vrcp.pop %v9038
        %v9875 = vrcp.pop %v9041
        %v9876 = vrcp.pop %v9044
        %v9877 = vrcp.pop %v9047
        %v9878 = vrcp.pop %v9050
        %v9879 = vrcp.pop %v9053
        %v9880 = vrcp.pop %v9056
        %v9881 = vrcp.pop %v9059
        %v9882 = vrcp.pop %v9062
        %v9883 = vrcp.pop %v9065
        %v9884 = vrcp.pop %v9068
        %v9885 = vrcp.pop %v9071
        %v9886 = vrcp.pop %v9074
        %v9887 = vrcp.pop %v9077
        %v9888 = vrcp.pop %v9080
        %v9889 = vrcp.pop %v9083
        %v9890 = vrcp.pop %v9086
        %v9891 = vrcp.pop %v9089
        %v9892 = vrcp.pop %v9092
        %v9893 = vmul.f32 %v9150, %v9861
        %v9894 = vmul.f32 %v9153, %v9862
        %v9895 = vmul.f32 %v9197, %v9863
        %v9896 = vmul.f32 %v9200, %v9864
        %v9897 = vmul.f32 %v9244, %v9865
        %v9898 = vmul.f32 %v9247, %v9866
        %v9899 = vmul.f32 %v9291, %v9867
        %v9900 = vmul.f32 %v9294, %v9868
        %v9901 = vmul.f32 %v9338, %v9869
        %v9902 = vmul.f32 %v9341, %v9870
        %v9903 = vmul.f32 %v9385, %v9871
        %v9904 = vmul.f32 %v9388, %v9872
        %v9905 = vmul.f32 %v9432, %v9873
        %v9906 = vmul.f32 %v9435, %v9874
        %v9907 = vmul.f32 %v9479, %v9875
        %v9908 = vmul.f32 %v9482, %v9876
        %v9909 = vmul.f32 %v9526, %v9877
        %v9910 = vmul.f32 %v9529, %v9878
        %v9911 = vmul.f32 %v9573, %v9879
        %v9912 = vmul.f32 %v9576, %v9880
        %v9913 = vmul.f32 %v9620, %v9881
        %v9914 = vmul.f32 %v9623, %v9882
        %v9915 = vmul.f32 %v9667, %v9883
        %v9916 = vmul.f32 %v9670, %v9884
        %v9917 = vmul.f32 %v9714, %v9885
        %v9918 = vmul.f32 %v9717, %v9886
        %v9919 = vmul.f32 %v9761, %v9887
        %v9920 = vmul.f32 %v9764, %v9888
        %v9921 = vmul.f32 %v9808, %v9889
        %v9922 = vmul.f32 %v9811, %v9890
        %v9923 = vmul.f32 %v9855, %v9891
        %v9924 = vmul.f32 %v9858, %v9892
        %9957 = vrot.lane.b32.xlu0 %v9893, 96
        %v9958 = vpop.permute.xlu0 %9957
        %9959 = vrot.lane.b32.xlu0 %v9894, 96
        %v9960 = vpop.permute.xlu0 %9959
        %9961 = vrot.lane.b32.xlu0 %v9895, 96
        %v9962 = vpop.permute.xlu0 %9961
        %9963 = vrot.lane.b32.xlu0 %v9896, 96
        %v9964 = vpop.permute.xlu0 %9963
        %9965 = vrot.lane.b32.xlu0 %v9897, 96
        %v9966 = vpop.permute.xlu0 %9965
        %9967 = vrot.lane.b32.xlu0 %v9898, 96
        %v9968 = vpop.permute.xlu0 %9967
        %9969 = vrot.lane.b32.xlu0 %v9899, 96
        %v9970 = vpop.permute.xlu0 %9969
        %9971 = vrot.lane.b32.xlu0 %v9900, 96
        %v9972 = vpop.permute.xlu0 %9971
        %9973 = vrot.lane.b32.xlu0 %v9901, 96
        %v9974 = vpop.permute.xlu0 %9973
        %9975 = vrot.lane.b32.xlu0 %v9902, 96
        %v9976 = vpop.permute.xlu0 %9975
        %9977 = vrot.lane.b32.xlu0 %v9903, 96
        %v9978 = vpop.permute.xlu0 %9977
        %9979 = vrot.lane.b32.xlu0 %v9904, 96
        %v9980 = vpop.permute.xlu0 %9979
        %9981 = vrot.lane.b32.xlu0 %v9905, 96
        %v9982 = vpop.permute.xlu0 %9981
        %9983 = vrot.lane.b32.xlu0 %v9906, 96
        %v9984 = vpop.permute.xlu0 %9983
        %9985 = vrot.lane.b32.xlu0 %v9907, 96
        %v9986 = vpop.permute.xlu0 %9985
        %9987 = vrot.lane.b32.xlu0 %v9908, 96
        %v9988 = vpop.permute.xlu0 %9987
        %9989 = vrot.lane.b32.xlu0 %v9909, 96
        %v9990 = vpop.permute.xlu0 %9989
        %9991 = vrot.lane.b32.xlu0 %v9910, 96
        %v9992 = vpop.permute.xlu0 %9991
        %9993 = vrot.lane.b32.xlu0 %v9911, 96
        %v9994 = vpop.permute.xlu0 %9993
        %9995 = vrot.lane.b32.xlu0 %v9912, 96
        %v9996 = vpop.permute.xlu0 %9995
        %9997 = vrot.lane.b32.xlu0 %v9913, 96
        %v9998 = vpop.permute.xlu0 %9997
        %9999 = vrot.lane.b32.xlu0 %v9914, 96
        %v10000 = vpop.permute.xlu0 %9999
        %10001 = vrot.lane.b32.xlu0 %v9915, 96
        %v10002 = vpop.permute.xlu0 %10001
        %10003 = vrot.lane.b32.xlu0 %v9916, 96
        %v10004 = vpop.permute.xlu0 %10003
        %10005 = vrot.lane.b32.xlu0 %v9917, 96
        %v10006 = vpop.permute.xlu0 %10005
        %10007 = vrot.lane.b32.xlu0 %v9918, 96
        %v10008 = vpop.permute.xlu0 %10007
        %10009 = vrot.lane.b32.xlu0 %v9919, 96
        %v10010 = vpop.permute.xlu0 %10009
        %10011 = vrot.lane.b32.xlu0 %v9920, 96
        %v10012 = vpop.permute.xlu0 %10011
        %10013 = vrot.lane.b32.xlu0 %v9921, 96
        %v10014 = vpop.permute.xlu0 %10013
        %10015 = vrot.lane.b32.xlu0 %v9922, 96
        %v10016 = vpop.permute.xlu0 %10015
        %10017 = vrot.lane.b32.xlu0 %v9923, 96
        %v10018 = vpop.permute.xlu0 %10017
        %10019 = vrot.lane.b32.xlu0 %v9924, 96
        %v10020 = vpop.permute.xlu0 %10019
        %v10053 = vmul.f32 %v911, %v9958
        %v10054 = vmul.f32 %v913, %v9960
        %v10055 = vmul.f32 %v915, %v9962
        %v10056 = vmul.f32 %v917, %v9964
        %v10057 = vmul.f32 %v919, %v9966
        %v10058 = vmul.f32 %v921, %v9968
        %v10059 = vmul.f32 %v923, %v9970
        %v10060 = vmul.f32 %v925, %v9972
        %v10061 = vmul.f32 %v927, %v9974
        %v10062 = vmul.f32 %v929, %v9976
        %v10063 = vmul.f32 %v931, %v9978
        %v10064 = vmul.f32 %v933, %v9980
        %v10065 = vmul.f32 %v935, %v9982
        %v10066 = vmul.f32 %v937, %v9984
        %v10067 = vmul.f32 %v939, %v9986
        %v10068 = vmul.f32 %v941, %v9988
        %v10069 = vmul.f32 %v943, %v9990
        %v10070 = vmul.f32 %v945, %v9992
        %v10071 = vmul.f32 %v947, %v9994
        %v10072 = vmul.f32 %v949, %v9996
        %v10073 = vmul.f32 %v951, %v9998
        %v10074 = vmul.f32 %v953, %v10000
        %v10075 = vmul.f32 %v955, %v10002
        %v10076 = vmul.f32 %v957, %v10004
        %v10077 = vmul.f32 %v959, %v10006
        %v10078 = vmul.f32 %v961, %v10008
        %v10079 = vmul.f32 %v963, %v10010
        %v10080 = vmul.f32 %v965, %v10012
        %v10081 = vmul.f32 %v967, %v10014
        %v10082 = vmul.f32 %v969, %v10016
        %v10083 = vmul.f32 %v971, %v10018
        %v10084 = vmul.f32 %v973, %v10020
        %v10085 = vpack.c.bf16 %v10054, %v10053
        %v10086 = vpack.c.bf16 %v10056, %v10055
        %v10087 = vpack.c.bf16 %v10058, %v10057
        %v10088 = vpack.c.bf16 %v10060, %v10059
        %v10089 = vpack.c.bf16 %v10062, %v10061
        %v10090 = vpack.c.bf16 %v10064, %v10063
        %v10091 = vpack.c.bf16 %v10066, %v10065
        %v10092 = vpack.c.bf16 %v10068, %v10067
        %v10093 = vpack.c.bf16 %v10070, %v10069
        %v10094 = vpack.c.bf16 %v10072, %v10071
        %v10095 = vpack.c.bf16 %v10074, %v10073
        %v10096 = vpack.c.bf16 %v10076, %v10075
        %v10097 = vpack.c.bf16 %v10078, %v10077
        %v10098 = vpack.c.bf16 %v10080, %v10079
        %v10099 = vpack.c.bf16 %v10082, %v10081
        %v10100 = vpack.c.bf16 %v10084, %v10083
        %v10101 = vld [vmem:[%s3 + $0x30] sm:$0xf]
        %v10102 = vld [vmem:[%s3 + $0x34] sm:$0xf]
        %v10103 = vld [vmem:[%s3 + $0x38] sm:$0xf]
        %v10104 = vld [vmem:[%s3 + $0x3c] sm:$0xf]
        %10121 = vrot.lane.b32.xlu0 %v10085, 32
        %v10122 = vpop.permute.xlu0 %10121
        %10123 = vrot.lane.b32.xlu0 %v10086, 32
        %v10124 = vpop.permute.xlu0 %10123
        %10125 = vrot.lane.b32.xlu0 %v10087, 32
        %v10126 = vpop.permute.xlu0 %10125
        %10127 = vrot.lane.b32.xlu0 %v10088, 32
        %v10128 = vpop.permute.xlu0 %10127
        %10129 = vrot.lane.b32.xlu0 %v10089, 32
        %v10130 = vpop.permute.xlu0 %10129
        %10131 = vrot.lane.b32.xlu0 %v10090, 32
        %v10132 = vpop.permute.xlu0 %10131
        %10133 = vrot.lane.b32.xlu0 %v10091, 32
        %v10134 = vpop.permute.xlu0 %10133
        %10135 = vrot.lane.b32.xlu0 %v10092, 32
        %v10136 = vpop.permute.xlu0 %10135
        %10137 = vrot.lane.b32.xlu0 %v10093, 32
        %v10138 = vpop.permute.xlu0 %10137
        %10139 = vrot.lane.b32.xlu0 %v10094, 32
        %v10140 = vpop.permute.xlu0 %10139
        %10141 = vrot.lane.b32.xlu0 %v10095, 32
        %v10142 = vpop.permute.xlu0 %10141
        %10143 = vrot.lane.b32.xlu0 %v10096, 32
        %v10144 = vpop.permute.xlu0 %10143
        %10145 = vrot.lane.b32.xlu0 %v10097, 32
        %v10146 = vpop.permute.xlu0 %10145
        %10147 = vrot.lane.b32.xlu0 %v10098, 32
        %v10148 = vpop.permute.xlu0 %10147
        %10149 = vrot.lane.b32.xlu0 %v10099, 32
        %v10150 = vpop.permute.xlu0 %10149
        %10151 = vrot.lane.b32.xlu0 %v10100, 32
        %v10152 = vpop.permute.xlu0 %10151
        %v10157 = vunpack.c.l.b16 %v10101
        %v10158 = vunpack.c.l.b16 %v10102
        %v10159 = vunpack.c.l.b16 %v10103
        %v10160 = vunpack.c.l.b16 %v10104
        %v10161 = vpack.c.b16 %v10158, %v10157
        %v10162 = vpack.c.b16 %v10160, %v10159
        %v10166 = vsel %vm347, %v10122, 0
        %v10169 = vsel %vm347, %v10124, 0
        %v10172 = vsel %vm347, %v10126, 0
        %v10175 = vsel %vm347, %v10128, 0
        %v10178 = vsel %vm347, %v10130, 0
        %v10181 = vsel %vm347, %v10132, 0
        %v10184 = vsel %vm347, %v10134, 0
        %v10187 = vsel %vm347, %v10136, 0
        %v10190 = vsel %vm347, %v10138, 0
        %v10193 = vsel %vm347, %v10140, 0
        %v10196 = vsel %vm347, %v10142, 0
        %v10199 = vsel %vm347, %v10144, 0
        %v10202 = vsel %vm347, %v10146, 0
        %v10205 = vsel %vm347, %v10148, 0
        %v10208 = vsel %vm347, %v10150, 0
        %v10211 = vsel %vm347, %v10152, 0
        %10213 = vmatprep.subr.bf16.mxu0 0
        %10214 = vmatpush1.bf16.msra.mxu0 %v10161
        %10215 = vmatprep.subr.bf16.mxu0 0
        %10216 = vmatpush1.bf16.msra.mxu0 %v10162
        %10217 = vmatprep.subr.bf16.mxu0 0
        %10218 = vmatpush1.bf16.msra.mxu0 0
        %10219 = vmatprep.subr.bf16.mxu0 0
        %10220 = vmatpush1.bf16.msra.mxu0 0
        %10221 = vmatprep.subr.bf16.mxu0 0
        %10222 = vmatpush1.bf16.msra.mxu0 0
        %10223 = vmatprep.subr.bf16.mxu0 0
        %10224 = vmatpush1.bf16.msra.mxu0 0
        %10225 = vmatprep.subr.bf16.mxu0 0
        %10226 = vmatpush1.bf16.msra.mxu0 0
        %10227 = vmatprep.subr.bf16.mxu0 0
        %10228 = vmatpush1.bf16.msra.mxu0 0
        %10229 = vmatprep.subr.bf16.mxu0 0
        %10230 = vmatpush1.bf16.msra.mxu0 0
        %10231 = vmatprep.subr.bf16.mxu0 0
        %10232 = vmatpush1.bf16.msra.mxu0 0
        %10233 = vmatprep.subr.bf16.mxu0 0
        %10234 = vmatpush1.bf16.msra.mxu0 0
        %10235 = vmatprep.subr.bf16.mxu0 0
        %10236 = vmatpush1.bf16.msra.mxu0 0
        %10237 = vmatprep.subr.bf16.mxu0 0
        %10238 = vmatpush1.bf16.msra.mxu0 0
        %10239 = vmatprep.subr.bf16.mxu0 0
        %10240 = vmatpush1.bf16.msra.mxu0 0
        %10241 = vmatprep.subr.bf16.mxu0 0
        %10242 = vmatpush1.bf16.msra.mxu0 0
        %10243 = vmatprep.subr.bf16.mxu0 0
        %10244 = vmatpush1.bf16.msra.mxu0 0
        %10245 = vmatprep.mubr.bf16.mxu0 0
        %10246 = vmatmul.mubr.bf16.gmra.mrb[0].mxu0 %v10166
        %v10247 = vpop.f32.mrb[0].mxu0
        %v10248 = vadd.f32 0.0, %v10247
        %v10249 = vpop.f32.mrb[0].mxu0
        %v10250 = vpop.f32.mrb[0].mxu0
        %v10251 = vadd.f32 0.0, %v10250
        %v10252 = vpop.f32.mrb[0].mxu0
        %10253 = vmatprep.mubr.bf16.mxu0 0
        %10254 = vmatmul.mubr.bf16.gmra.mrb[0].mxu0 %v10169
        %v10255 = vpop.f32.mrb[0].mxu0
        %v10256 = vadd.f32 0.0, %v10255
        %v10257 = vpop.f32.mrb[0].mxu0
        %v10258 = vpop.f32.mrb[0].mxu0
        %v10259 = vadd.f32 0.0, %v10258
        %v10260 = vpop.f32.mrb[0].mxu0
        %10261 = vmatprep.mubr.bf16.mxu0 0
        %10262 = vmatmul.mubr.bf16.gmra.mrb[0].mxu0 %v10172
        %v10263 = vpop.f32.mrb[0].mxu0
        %v10264 = vadd.f32 0.0, %v10263
        %v10265 = vpop.f32.mrb[0].mxu0
        %v10266 = vpop.f32.mrb[0].mxu0
        %v10267 = vadd.f32 0.0, %v10266
        %v10268 = vpop.f32.mrb[0].mxu0
        %10269 = vmatprep.mubr.bf16.mxu0 0
        %10270 = vmatmul.mubr.bf16.gmra.mrb[0].mxu0 %v10175
        %v10271 = vpop.f32.mrb[0].mxu0
        %v10272 = vadd.f32 0.0, %v10271
        %v10273 = vpop.f32.mrb[0].mxu0
        %v10274 = vpop.f32.mrb[0].mxu0
        %v10275 = vadd.f32 0.0, %v10274
        %v10276 = vpop.f32.mrb[0].mxu0
        %10277 = vmatprep.mubr.bf16.mxu0 0
        %10278 = vmatmul.mubr.bf16.gmra.mrb[0].mxu0 %v10178
        %v10279 = vpop.f32.mrb[0].mxu0
        %v10280 = vadd.f32 0.0, %v10279
        %v10281 = vpop.f32.mrb[0].mxu0
        %v10282 = vpop.f32.mrb[0].mxu0
        %v10283 = vadd.f32 0.0, %v10282
        %v10284 = vpop.f32.mrb[0].mxu0
        %10285 = vmatprep.mubr.bf16.mxu0 0
        %10286 = vmatmul.mubr.bf16.gmra.mrb[0].mxu0 %v10181
        %v10287 = vpop.f32.mrb[0].mxu0
        %v10288 = vadd.f32 0.0, %v10287
        %v10289 = vpop.f32.mrb[0].mxu0
        %v10290 = vpop.f32.mrb[0].mxu0
        %v10291 = vadd.f32 0.0, %v10290
        %v10292 = vpop.f32.mrb[0].mxu0
        %10293 = vmatprep.mubr.bf16.mxu0 0
        %10294 = vmatmul.mubr.bf16.gmra.mrb[0].mxu0 %v10184
        %v10295 = vpop.f32.mrb[0].mxu0
        %v10296 = vadd.f32 0.0, %v10295
        %v10297 = vpop.f32.mrb[0].mxu0
        %v10298 = vpop.f32.mrb[0].mxu0
        %v10299 = vadd.f32 0.0, %v10298
        %v10300 = vpop.f32.mrb[0].mxu0
        %10301 = vmatprep.mubr.bf16.mxu0 0
        %10302 = vmatmul.mubr.bf16.gmra.mrb[0].mxu0 %v10187
        %v10303 = vpop.f32.mrb[0].mxu0
        %v10304 = vadd.f32 0.0, %v10303
        %v10305 = vpop.f32.mrb[0].mxu0
        %v10306 = vpop.f32.mrb[0].mxu0
        %v10307 = vadd.f32 0.0, %v10306
        %v10308 = vpop.f32.mrb[0].mxu0
        %10309 = vmatprep.mubr.bf16.mxu0 0
        %10310 = vmatmul.mubr.bf16.gmra.mrb[0].mxu0 %v10190
        %v10311 = vpop.f32.mrb[0].mxu0
        %v10312 = vadd.f32 0.0, %v10311
        %v10313 = vpop.f32.mrb[0].mxu0
        %v10314 = vpop.f32.mrb[0].mxu0
        %v10315 = vadd.f32 0.0, %v10314
        %v10316 = vpop.f32.mrb[0].mxu0
        %10317 = vmatprep.mubr.bf16.mxu0 0
        %10318 = vmatmul.mubr.bf16.gmra.mrb[0].mxu0 %v10193
        %v10319 = vpop.f32.mrb[0].mxu0
        %v10320 = vadd.f32 0.0, %v10319
        %v10321 = vpop.f32.mrb[0].mxu0
        %v10322 = vpop.f32.mrb[0].mxu0
        %v10323 = vadd.f32 0.0, %v10322
        %v10324 = vpop.f32.mrb[0].mxu0
        %10325 = vmatprep.mubr.bf16.mxu0 0
        %10326 = vmatmul.mubr.bf16.gmra.mrb[0].mxu0 %v10196
        %v10327 = vpop.f32.mrb[0].mxu0
        %v10328 = vadd.f32 0.0, %v10327
        %v10329 = vpop.f32.mrb[0].mxu0
        %v10330 = vpop.f32.mrb[0].mxu0
        %v10331 = vadd.f32 0.0, %v10330
        %v10332 = vpop.f32.mrb[0].mxu0
        %10333 = vmatprep.mubr.bf16.mxu0 0
        %10334 = vmatmul.mubr.bf16.gmra.mrb[0].mxu0 %v10199
        %v10335 = vpop.f32.mrb[0].mxu0
        %v10336 = vadd.f32 0.0, %v10335
        %v10337 = vpop.f32.mrb[0].mxu0
        %v10338 = vpop.f32.mrb[0].mxu0
        %v10339 = vadd.f32 0.0, %v10338
        %v10340 = vpop.f32.mrb[0].mxu0
        %10341 = vmatprep.mubr.bf16.mxu0 0
        %10342 = vmatmul.mubr.bf16.gmra.mrb[0].mxu0 %v10202
        %v10343 = vpop.f32.mrb[0].mxu0
        %v10344 = vadd.f32 0.0, %v10343
        %v10345 = vpop.f32.mrb[0].mxu0
        %v10346 = vpop.f32.mrb[0].mxu0
        %v10347 = vadd.f32 0.0, %v10346
        %v10348 = vpop.f32.mrb[0].mxu0
        %10349 = vmatprep.mubr.bf16.mxu0 0
        %10350 = vmatmul.mubr.bf16.gmra.mrb[0].mxu0 %v10205
        %v10351 = vpop.f32.mrb[0].mxu0
        %v10352 = vadd.f32 0.0, %v10351
        %v10353 = vpop.f32.mrb[0].mxu0
        %v10354 = vpop.f32.mrb[0].mxu0
        %v10355 = vadd.f32 0.0, %v10354
        %v10356 = vpop.f32.mrb[0].mxu0
        %10357 = vmatprep.mubr.bf16.mxu0 0
        %10358 = vmatmul.mubr.bf16.gmra.mrb[0].mxu0 %v10208
        %v10359 = vpop.f32.mrb[0].mxu0
        %v10360 = vadd.f32 0.0, %v10359
        %v10361 = vpop.f32.mrb[0].mxu0
        %v10362 = vpop.f32.mrb[0].mxu0
        %v10363 = vadd.f32 0.0, %v10362
        %v10364 = vpop.f32.mrb[0].mxu0
        %10365 = vmatprep.mubr.bf16.mxu0 0
        %10366 = vmatmul.mubr.bf16.gmra.mrb[0].mxu0 %v10211
        %v10367 = vpop.f32.mrb[0].mxu0
        %v10368 = vadd.f32 0.0, %v10367
        %v10369 = vpop.f32.mrb[0].mxu0
        %v10370 = vpop.f32.mrb[0].mxu0
        %v10371 = vadd.f32 0.0, %v10370
        %v10372 = vpop.f32.mrb[0].mxu0
        %10373 = vdwg.mxu0
        %v10374 = vadd.f32 %v7952, %v10248
        %v10375 = vadd.f32 %v7953, %v10251
        %v10376 = vadd.f32 %v7954, %v10256
        %v10377 = vadd.f32 %v7955, %v10259
        %v10378 = vadd.f32 %v7956, %v10264
        %v10379 = vadd.f32 %v7957, %v10267
        %v10380 = vadd.f32 %v7958, %v10272
        %v10381 = vadd.f32 %v7959, %v10275
        %v10382 = vadd.f32 %v7960, %v10280
        %v10383 = vadd.f32 %v7961, %v10283
        %v10384 = vadd.f32 %v7962, %v10288
        %v10385 = vadd.f32 %v7963, %v10291
        %v10386 = vadd.f32 %v7964, %v10296
        %v10387 = vadd.f32 %v7965, %v10299
        %v10388 = vadd.f32 %v7966, %v10304
        %v10389 = vadd.f32 %v7967, %v10307
        %v10390 = vadd.f32 %v7968, %v10312
        %v10391 = vadd.f32 %v7969, %v10315
        %v10392 = vadd.f32 %v7970, %v10320
        %v10393 = vadd.f32 %v7971, %v10323
        %v10394 = vadd.f32 %v7972, %v10328
        %v10395 = vadd.f32 %v7973, %v10331
        %v10396 = vadd.f32 %v7974, %v10336
        %v10397 = vadd.f32 %v7975, %v10339
        %v10398 = vadd.f32 %v7976, %v10344
        %v10399 = vadd.f32 %v7977, %v10347
        %v10400 = vadd.f32 %v7978, %v10352
        %v10401 = vadd.f32 %v7979, %v10355
        %v10402 = vadd.f32 %v7980, %v10360
        %v10403 = vadd.f32 %v7981, %v10363
        %v10404 = vadd.f32 %v7982, %v10368
        %v10405 = vadd.f32 %v7983, %v10371
        %10406 = vst.msk [vmem:[%s232] sm:$0xff] %vm347, %v10374
        %10407 = vst.msk [vmem:[%s232 + $0x8] sm:$0xff] %vm347, %v10375
        %10408 = vst.msk [vmem:[%s232 + $0x10] sm:$0xff] %vm347, %v10376
        %10409 = vst.msk [vmem:[%s232 + $0x18] sm:$0xff] %vm347, %v10377
        %10410 = vst.msk [vmem:[%s232 + $0x20] sm:$0xff] %vm347, %v10378
        %10411 = vst.msk [vmem:[%s232 + $0x28] sm:$0xff] %vm347, %v10379
        %10412 = vst.msk [vmem:[%s232 + $0x30] sm:$0xff] %vm347, %v10380
        %10413 = vst.msk [vmem:[%s232 + $0x38] sm:$0xff] %vm347, %v10381
        %10414 = vst.msk [vmem:[%s232 + $0x40] sm:$0xff] %vm347, %v10382
        %10415 = vst.msk [vmem:[%s232 + $0x48] sm:$0xff] %vm347, %v10383
        %10416 = vst.msk [vmem:[%s232 + $0x50] sm:$0xff] %vm347, %v10384
        %10417 = vst.msk [vmem:[%s232 + $0x58] sm:$0xff] %vm347, %v10385
        %10418 = vst.msk [vmem:[%s232 + $0x60] sm:$0xff] %vm347, %v10386
        %10419 = vst.msk [vmem:[%s232 + $0x68] sm:$0xff] %vm347, %v10387
        %10420 = vst.msk [vmem:[%s232 + $0x70] sm:$0xff] %vm347, %v10388
        %10421 = vst.msk [vmem:[%s232 + $0x78] sm:$0xff] %vm347, %v10389
        %10422 = vst.msk [vmem:[%s232 + $0x80] sm:$0xff] %vm347, %v10390
        %10423 = vst.msk [vmem:[%s232 + $0x88] sm:$0xff] %vm347, %v10391
        %10424 = vst.msk [vmem:[%s232 + $0x90] sm:$0xff] %vm347, %v10392
        %10425 = vst.msk [vmem:[%s232 + $0x98] sm:$0xff] %vm347, %v10393
        %10426 = vst.msk [vmem:[%s232 + $0xa0] sm:$0xff] %vm347, %v10394
        %10427 = vst.msk [vmem:[%s232 + $0xa8] sm:$0xff] %vm347, %v10395
        %10428 = vst.msk [vmem:[%s232 + $0xb0] sm:$0xff] %vm347, %v10396
        %10429 = vst.msk [vmem:[%s232 + $0xb8] sm:$0xff] %vm347, %v10397
        %10430 = vst.msk [vmem:[%s232 + $0xc0] sm:$0xff] %vm347, %v10398
        %10431 = vst.msk [vmem:[%s232 + $0xc8] sm:$0xff] %vm347, %v10399
        %10432 = vst.msk [vmem:[%s232 + $0xd0] sm:$0xff] %vm347, %v10400
        %10433 = vst.msk [vmem:[%s232 + $0xd8] sm:$0xff] %vm347, %v10401
        %10434 = vst.msk [vmem:[%s232 + $0xe0] sm:$0xff] %vm347, %v10402
        %10435 = vst.msk [vmem:[%s232 + $0xe8] sm:$0xff] %vm347, %v10403
        %10436 = vst.msk [vmem:[%s232 + $0xf0] sm:$0xff] %vm347, %v10404
        %10437 = vst.msk [vmem:[%s232 + $0xf8] sm:$0xff] %vm347, %v10405
        %s10438 = sand.u32 %s136, 1
        %s10439 = scalar_lea.sflag [#allocation3], %s10438
        %s10440 = sand.u32 %s136, 1
        %s10441 = smul.addr %s10440, 256
        %s10442 = scalar_lea.vmem [#allocation2], %s10441
        // Predicated region
        $region37: #{triangle_attention.3} parent=35 // pred_check
          %p10443 = pneg %p146
        $region38: #{triangle_attention.3} parent=35 // pred_check_branch
          %10445 = sbr.rel (%p10443) target = $region40
        $region39: #{triangle_attention.3} parent=35 // pred_region
          %s10446 = smul.u32 16, %s23
          %s10448 = ssub.s32 4096, 4096
          %10449 = vsyncadd %s10439, %s10448
          %s10450 = smul.addr %s10446, 2
          %s10451 = smul.addr %s22, 32
          %s10452 = sadd.s32 %s10450, %s10451
          %s10453 = smul.addr %s10452, 128
          %s10454 = scalar_lea.hbm %s4, %s10453
          %s10455 = sshll.u32 %s10442, 4
          %s10456 = int_to_ptr.vmem [resolvable:$true] %s10455
          %10461 = dma.vmem_to_hbm [thread:$0]  %s10456, 4096, %s10454, %s10439, 128, 128, 8
        $region40: #{triangle_attention.3} parent=35 // pred_fallthru
          _
      $region36: #{triangle_attention.3} parent=5 // pred_fallthru
        _
      %p10462 = scmp.le.s32.totalorder 2, %s13
      // Predicated region
      $region41: #{triangle_attention.3} parent=5 // pred_check
        %p10463 = pneg %p10462
      $region42: #{triangle_attention.3} parent=5 // pred_check_branch
        %10465 = sbr.rel (%p10463) target = $region44
      $region43: #{triangle_attention.3} parent=5 // pred_region
        %s10466 = ssub.s32 %s13, 2
        // Predicated region
        $region45: #{triangle_attention.3} parent=43 // pred_check
          %p10467 = pneg %p152
        $region46: #{triangle_attention.3} parent=43 // pred_check_branch
          %10469 = sbr.rel (%p10467) target = $region48
        $region47: #{triangle_attention.3} parent=43 // pred_region
          %s10470 = sand.u32 %s137, 1
          %s10471 = scalar_lea.sflag [#allocation3], %s10470
          %s10472 = sand.u32 %s137, 1
          %s10473 = smul.addr %s10472, 256
          %s10474 = scalar_lea.vmem [#allocation2], %s10473
          %10475 = dma.done %s10471, 4096
        $region48: #{triangle_attention.3} parent=43 // pred_fallthru
          _
      $region44: #{triangle_attention.3} parent=5 // pred_fallthru
        _
    $region6: #{triangle_attention.3} parent=1 // loop_footer
      %s17 = sadd.s32 1, %s13
    $region7: #{triangle_attention.3} parent=1 // loop_footer_branch
      %12 = sbr.rel target = $region3
    $region8: #{triangle_attention.3} parent=1 // loop_exit
      _
    %10476 = vsyncpa [#allocation3], 1
    %s10477 = scalar_lea.sflag [#allocation3], 1
    %10478 = vsyncpa %s10477, 1

</llo_original>
